<compile_context>
chip_gen: v7x
topology: tpu7x:2x2x1
jax: 0.10.0
libtpu: 0.0.40
codegen_flags: <defaults>
</compile_context>

<pallas_src>
import functools

import jax
import jax.numpy as jnp
from jax.experimental import pallas as pl
from jax.experimental.pallas import tpu as pltpu

TM = 512              # rows of the flattened (padded) spatial dim per conv grid step
TR_EPI = 1024         # rows per BN/ReLU epilogue grid step (M_pad is a multiple of 1024)
_E = 16               # extra accumulator rows each side (absorbs the kw = +-1 column shift)
_CH = 64              # finalize row-chunk -> live f32 accumulator <= 32 vregs
_EPS = 1e-5           # BatchNorm2d default eps
_VMEM_LIMIT = 48 * 1024 * 1024


def _round_up(a, m):
    return -(-a // m) * m


# --------------------------- Pallas kernels ---------------------------------

def _conv3x3_kernel(xc_ref, xp_ref, xn_ref, mc_ref, mp_ref, mn_ref, sc_ref, sh_ref, w_ref,
                    y_ref, st_ref, ext_ref, z0_ref, z1_ref, z2_ref,
                    *, TMr, HB, Wp, fuse_bn):
    """3x3 conv on a halo-extended bf16 row tile with fused BN sum/sumsq side-output.

    grid = (m,): one step per TMr-row tile of the flattened padded spatial dim.
    The full packed weight tensor (9, Cin_pad, Cout_pad) is resident in VMEM.
    If fuse_bn, the previous conv's BN scale/shift + ReLU + pad-mask are applied while
    staging the (raw bf16 conv-output) input into the halo buffer.
    """

    # ---- stage current rows + clamped neighbour halos into one contiguous bf16 buffer.
    def stage(dst, x_ref, m_ref):
        rows = x_ref.shape[0]
        if fuse_bn:
            v = x_ref[...].astype(jnp.float32)
            v = jnp.maximum(v * sc_ref[...] + sh_ref[...], 0.0) * m_ref[...]
            ext_ref[dst:dst + rows, :] = v.astype(jnp.bfloat16)
        else:   # input already carries exact zero padding
            ext_ref[dst:dst + rows, :] = x_ref[...]

    stage(0, xp_ref, mp_ref)
    stage(HB, xc_ref, mc_ref)
    stage(HB + TMr, xn_ref, mn_ref)

    # ---- 9 taps as 3 column groups.  Every ext slice is sublane-aligned for packed bf16
    # (HB, Wp, _E are multiples of 16); the kw = +-1 shift is applied later on f32 output rows.
    zrefs = (z0_ref, z1_ref, z2_ref)
    for kw in range(3):                        # dw = kw - 1
        zr = zrefs[kw]
        for kh in range(3):                    # dh = kh - 1
            off = HB - _E + (kh - 1) * Wp
            xs = ext_ref[off:off + TMr + 2 * _E, :]
            part = jnp.dot(xs, w_ref[kh * 3 + kw], preferred_element_type=jnp.float32)
            if kh == 0:
                zr[...] = part
            else:
                zr[...] += part

    # ---- finalize in 64-row chunks: combine +-1-row shifted column accumulators,
    # emit bf16 y, accumulate masked BN sum / sum-of-squares from the quantized y.
    F = y_ref.shape[1]
    s0 = jnp.zeros((1, F), jnp.float32)
    s1 = jnp.zeros((1, F), jnp.float32)
    for c in range(TMr // _CH):
        r0 = c * _CH
        yf = (z0_ref[_E - 1 + r0:_E - 1 + r0 + _CH, :]
              + z1_ref[_E + r0:_E + r0 + _CH, :]
              + z2_ref[_E + 1 + r0:_E + 1 + r0 + _CH, :])
        yb = yf.astype(y_ref.dtype)
        y_ref[r0:r0 + _CH, :] = yb
        am = yb.astype(jnp.float32) * mc_ref[r0:r0 + _CH, :]   # exclude pad / row-pad positions
        s0 = s0 + jnp.sum(am, axis=0, keepdims=True)
        s1 = s1 + jnp.sum(am * am, axis=0, keepdims=True)
    st_ref[0, 0:1, :] = s0
    st_ref[0, 1:2, :] = s1


def _bn_relu_kernel(y_ref, scale_ref, shift_ref, mask_ref, o_ref):
    # y * scale + shift, ReLU, re-zero padding rows, emit bf16 for the downstream glue.
    z = jnp.maximum(y_ref[...].astype(jnp.float32) * scale_ref[...] + shift_ref[...], 0.0)
    o_ref[...] = (z * mask_ref[...]).astype(o_ref.dtype)


def _conv1x1_kernel(x_ref, w_ref, b_ref, o_ref):
    o_ref[...] = jnp.dot(x_ref[...], w_ref[...],
                         preferred_element_type=jnp.float32) + b_ref[...]


# --------------------------- kernel wrappers ---------------------------------

def conv3x3(x_flat, w9, mask, scale, shift, *, Wp, fuse_bn):
    """x_flat: (M_pad, Cin_pad) bf16 flattened spatially-padded NHWC activation.
       w9:     (9, Cin_pad, Cout_pad) bf16 packed weights (kept resident in VMEM).
       Returns bf16 conv output + per-tile BN partial stats (f32)."""
    M_pad, cin_pad = x_flat.shape
    cout_pad = w9.shape[2]
    assert M_pad % TM == 0
    nm = M_pad // TM

    # halo rows: HB >= Wp + _E, a multiple of 16, dividing TM.
    assert Wp + _E <= TM, f"padded row width {Wp} too large for TM={TM}"
    HB = next(h for h in (32, 64, 128, 256, 512) if TM % h == 0 and h >= Wp + _E)
    NH = M_pad // HB
    R = TM // HB

    kern = functools.partial(_conv3x3_kernel, TMr=TM, HB=HB, Wp=Wp, fuse_bn=fuse_bn)

    y, stats = pl.pallas_call(
        kern,
        out_shape=(jax.ShapeDtypeStruct((M_pad, cout_pad), jnp.bfloat16),
                   jax.ShapeDtypeStruct((nm, 2, cout_pad), jnp.float32)),
        grid=(nm,),
        in_specs=[
            pl.BlockSpec((TM, cin_pad), lambda m: (m, 0)),                               # current rows
            pl.BlockSpec((HB, cin_pad), lambda m: (jnp.maximum(m * R - 1, 0), 0)),       # prev halo
            pl.BlockSpec((HB, cin_pad), lambda m: (jnp.minimum(m * R + R, NH - 1), 0)),  # next halo
            pl.BlockSpec((TM, 1), lambda m: (m, 0)),                                     # mask (cur)
            pl.BlockSpec((HB, 1), lambda m: (jnp.maximum(m * R - 1, 0), 0)),             # mask (prev)
            pl.BlockSpec((HB, 1), lambda m: (jnp.minimum(m * R + R, NH - 1), 0)),        # mask (next)
            pl.BlockSpec((1, cin_pad), lambda m: (0, 0)),                                # BN scale
            pl.BlockSpec((1, cin_pad), lambda m: (0, 0)),                                # BN shift
            pl.BlockSpec((9, cin_pad, cout_pad), lambda m: (0, 0, 0)),                   # resident weights
        ],
        out_specs=(
            pl.BlockSpec((TM, cout_pad), lambda m: (m, 0)),
            pl.BlockSpec((1, 2, cout_pad), lambda m: (m, 0, 0)),
        ),
        scratch_shapes=[
            pltpu.VMEM((TM + 2 * HB, cin_pad), jnp.bfloat16),      # halo-extended input
            pltpu.VMEM((TM + 2 * _E, cout_pad), jnp.float32),      # kw=0 column accumulator
            pltpu.VMEM((TM + 2 * _E, cout_pad), jnp.float32),      # kw=1 column accumulator
            pltpu.VMEM((TM + 2 * _E, cout_pad), jnp.float32),      # kw=2 column accumulator
        ],
        compiler_params=pltpu.CompilerParams(
            dimension_semantics=("parallel",),
            vmem_limit_bytes=_VMEM_LIMIT),
    )(x_flat, x_flat, x_flat, mask, mask, mask, scale, shift, w9)
    return y, stats


def bn_relu(y, scale, shift, mask):
    M_pad, c_pad = y.shape
    assert M_pad % TR_EPI == 0
    return pl.pallas_call(
        _bn_relu_kernel,
        out_shape=jax.ShapeDtypeStruct((M_pad, c_pad), jnp.bfloat16),
        grid=(M_pad // TR_EPI,),
        in_specs=[pl.BlockSpec((TR_EPI, c_pad), lambda i: (i, 0)),
                  pl.BlockSpec((1, c_pad), lambda i: (0, 0)),
                  pl.BlockSpec((1, c_pad), lambda i: (0, 0)),
                  pl.BlockSpec((TR_EPI, 1), lambda i: (i, 0))],
        out_specs=pl.BlockSpec((TR_EPI, c_pad), lambda i: (i, 0)),
        compiler_params=pltpu.CompilerParams(
            dimension_semantics=("parallel",),
            vmem_limit_bytes=_VMEM_LIMIT),
    )(y, scale, shift, mask)


def conv1x1(x_nhwc, w_mat, b_row, cout):
    N, H, W, C = x_nhwc.shape
    cin_pad, cout_pad = w_mat.shape
    M = N * H * W
    TR = 256
    M_pad = _round_up(M, TR)
    flat = jnp.pad(x_nhwc.astype(jnp.bfloat16),
                   ((0, 0), (0, 0), (0, 0), (0, cin_pad - C))).reshape(M, cin_pad)
    flat = jnp.pad(flat, ((0, M_pad - M), (0, 0)))
    y = pl.pallas_call(
        _conv1x1_kernel,
        out_shape=jax.ShapeDtypeStruct((M_pad, cout_pad), jnp.float32),
        grid=(M_pad // TR,),
        in_specs=[pl.BlockSpec((TR, cin_pad), lambda i: (i, 0)),
                  pl.BlockSpec((cin_pad, cout_pad), lambda i: (0, 0)),
                  pl.BlockSpec((1, cout_pad), lambda i: (0, 0))],
        out_specs=pl.BlockSpec((TR, cout_pad), lambda i: (i, 0)),
        compiler_params=pltpu.CompilerParams(
            dimension_semantics=("parallel",),
            vmem_limit_bytes=_VMEM_LIMIT),
    )(flat, w_mat, b_row)
    return y[:M, :cout].reshape(N, H, W, cout)


# --------------------------- layer glue (JAX) --------------------------------

def _to_conv_layout(x_nhwc, cin_pad):
    """NHWC -> spatially zero-padded, width/channel-padded, flattened bf16 rows + mask.

    The padded row width Wp is rounded up to a multiple of 16 so the kh*Wp tap offsets
    stay sublane-aligned for packed bf16 inside the conv kernel's halo buffer."""
    N, H, W, C = x_nhwc.shape
    Hp = H + 2
    Wp = _round_up(W + 2, 16)
    M = N * Hp * Wp
    M_pad = _round_up(M, TR_EPI)   # multiple of 1024 => >=2 parallel conv tiles, 1024-row epilogue
    xp = jnp.pad(x_nhwc.astype(jnp.bfloat16),
                 ((0, 0), (1, 1), (1, Wp - W - 1), (0, cin_pad - C)))
    flat = jnp.pad(xp.reshape(M, cin_pad), ((0, M_pad - M), (0, 0)))
    r = jnp.arange(M_pad, dtype=jnp.int32)
    hp = (r // Wp) % Hp
    wp = r % Wp
    interior = (r < M) & (hp >= 1) & (hp <= H) & (wp >= 1) & (wp <= W)
    mask = interior.astype(jnp.float32)[:, None]
    return flat, mask, (N, H, W, Hp, Wp, M, M_pad)


def _bn_affine(s0, s1, gamma, beta, count):
    """Train-mode BatchNorm scale/shift from sum and sum-of-squares (biased variance)."""
    mean = s0 / count
    var = jnp.maximum(s1 / count - mean * mean, 0.0)
    inv = jax.lax.rsqrt(var + _EPS)
    scale = gamma * inv
    shift = beta - mean * scale
    return scale, shift


def _bn_scale_shift(stats, gamma_pad, beta_pad, count):
    s = jnp.sum(stats, axis=0)                       # (2, C_pad)
    scale, shift = _bn_affine(s[0], s[1], gamma_pad, beta_pad, count)
    return scale[None, :], shift[None, :]


def double_conv_fwd(x_nhwc, p):
    """Conv3x3 -> BN(train) -> ReLU, twice.

    Conv biases are exact no-ops under batch-stat BN and are dropped (in the reference too).
    The first BN+ReLU+mask is fused into the second conv's halo staging."""
    cin_pad = p['w1'].shape[1]
    cout_pad = p['w2'].shape[2]
    flat, mask, geom = _to_conv_layout(x_nhwc, cin_pad)
    N, H, W, Hp, Wp, M, M_pad = geom
    count = N * H * W

    one = jnp.ones((1, cin_pad), jnp.float32)
    zero = jnp.zeros((1, cin_pad), jnp.float32)
    y1, st1 = conv3x3(flat, p['w1'], mask, one, zero, Wp=Wp, fuse_bn=False)
    sc1, sh1 = _bn_scale_shift(st1, p['g1'], p['be1'], count)

    y2, st2 = conv3x3(y1, p['w2'], mask, sc1, sh1, Wp=Wp, fuse_bn=True)
    sc2, sh2 = _bn_scale_shift(st2, p['g2'], p['be2'], count)
    a2 = bn_relu(y2, sc2, sh2, mask)                 # bf16, padding re-zeroed

    out = a2[:M].reshape(N, Hp, Wp, cout_pad)[:, 1:H + 1, 1:W + 1, :p['cout']]
    return out                                       # bf16 NHWC


def _maxpool2(x):
    N, H, W, C = x.shape
    return x.reshape(N, H // 2, 2, W // 2, 2, C).max(axis=(2, 4))


def _up_bilinear2(x):
    """F.interpolate(scale_factor=2, mode='bilinear', align_corners=True), computed in f32."""
    N, H, W, C = x.shape

    def weights(n_in, n_out):
        if n_in == 1:
            pos = jnp.zeros((n_out,), jnp.float32)
        else:
            pos = jnp.arange(n_out, dtype=jnp.float32) * ((n_in - 1) / (n_out - 1))
        i0 = jnp.clip(jnp.floor(pos).astype(jnp.int32), 0, n_in - 1)
        i1 = jnp.clip(i0 + 1, 0, n_in - 1)
        return i0, i1, pos - i0.astype(jnp.float32)

    h0, h1, fh = weights(H, 2 * H)
    w0, w1, fw = weights(W, 2 * W)
    xf = x.astype(jnp.float32)
    xh = xf[:, h0] * (1.0 - fh)[None, :, None, None] + xf[:, h1] * fh[None, :, None, None]
    xo = xh[:, :, w0] * (1.0 - fw)[None, None, :, None] + xh[:, :, w1] * fw[None, None, :, None]
    return xo


def _up_cat(a, skip):
    """bilinear x2 upsample + centre pad + torch.cat([skip, up], channel dim), kept in bf16."""
    au = _up_bilinear2(a).astype(jnp.bfloat16)
    dy = skip.shape[1] - au.shape[1]
    dx = skip.shape[2] - au.shape[2]
    au = jnp.pad(au, ((0, 0), (dy // 2, dy - dy // 2), (dx // 2, dx - dx // 2), (0, 0)))
    return jnp.concatenate([skip.astype(jnp.bfloat16), au], axis=-1)


def unet_forward(x_nchw, prep):
    x = jnp.transpose(x_nchw, (0, 2, 3, 1))                 # NCHW -> NHWC
    assert x.shape[1] % 16 == 0 and x.shape[2] % 16 == 0
    x1 = double_conv_fwd(x, prep['inc'])
    x2 = double_conv_fwd(_maxpool2(x1), prep['down1'])
    x3 = double_conv_fwd(_maxpool2(x2), prep['down2'])
    x4 = double_conv_fwd(_maxpool2(x3), prep['down3'])
    x5 = double_conv_fwd(_maxpool2(x4), prep['down4'])
    u = double_conv_fwd(_up_cat(x5, x4), prep['up1'])
    u = double_conv_fwd(_up_cat(u, x3), prep['up2'])
    u = double_conv_fwd(_up_cat(u, x2), prep['up3'])
    u = double_conv_fwd(_up_cat(u, x1), prep['up4'])
    logits = conv1x1(u, prep['outc']['w'], prep['outc']['b'], prep['outc']['cout'])
    return jnp.transpose(logits, (0, 3, 1, 2))              # NHWC -> NCHW


# --------------------------- parameters --------------------------------------

def _init_dc(key, cin, cout):
    ks = jax.random.split(key, 4)
    # b1/b2 mirror the PyTorch parameter set but the forward is exactly bias-invariant
    # under train-mode BN, so neither path uses them.
    return {
        'w1': jax.random.normal(ks[0], (cout, cin, 3, 3), jnp.float32) * 0.1,
        'b1': jax.random.normal(ks[1], (cout,), jnp.float32) * 0.1,
        'g1': jnp.ones((cout,), jnp.float32), 'be1': jnp.zeros((cout,), jnp.float32),
        'w2': jax.random.normal(ks[2], (cout, cout, 3, 3), jnp.float32) * 0.1,
        'b2': jax.random.normal(ks[3], (cout,), jnp.float32) * 0.1,
        'g2': jnp.ones((cout,), jnp.float32), 'be2': jnp.zeros((cout,), jnp.float32),
    }


def init_unet_params(key, n_channels, n_classes):
    ks = jax.random.split(key, 11)
    return {
        'inc': _init_dc(ks[0], n_channels, 64),
        'down1': _init_dc(ks[1], 64, 128), 'down2': _init_dc(ks[2], 128, 256),
        'down3': _init_dc(ks[3], 256, 512), 'down4': _init_dc(ks[4], 512, 512),
        'up1': _init_dc(ks[5], 1024, 256), 'up2': _init_dc(ks[6], 512, 128),
        'up3': _init_dc(ks[7], 256, 64), 'up4': _init_dc(ks[8], 128, 64),
        'outc': {'w': jax.random.normal(ks[9], (n_classes, 64, 1, 1), jnp.float32) * 0.1,
                 'b': jax.random.normal(ks[10], (n_classes,), jnp.float32) * 0.1},
    }


def _pack_w3x3(w_oihw):
    cout, cin = w_oihw.shape[0], w_oihw.shape[1]
    cin_p, cout_p = _round_up(cin, 128), _round_up(cout, 128)
    w = jnp.transpose(w_oihw, (2, 3, 1, 0)).reshape(9, cin, cout)      # (kh*3+kw, cin, cout)
    return jnp.pad(w, ((0, 0), (0, cin_p - cin), (0, cout_p - cout))).astype(jnp.bfloat16)


def _pad_vec(v, n):
    return jnp.pad(v, (0, n - v.shape[0])).astype(jnp.float32)


def prepare_params(raw):
    """Pack weights once (channels-last matmul layout, bf16, lane-padded)."""
    prep = {}
    for name in ('inc', 'down1', 'down2', 'down3', 'down4', 'up1', 'up2', 'up3', 'up4'):
        p = raw[name]
        cout = p['w1'].shape[0]
        cpad = _round_up(cout, 128)
        prep[name] = {
            'w1': _pack_w3x3(p['w1']), 'g1': _pad_vec(p['g1'], cpad), 'be1': _pad_vec(p['be1'], cpad),
            'w2': _pack_w3x3(p['w2']), 'g2': _pad_vec(p['g2'], cpad), 'be2': _pad_vec(p['be2'], cpad),
            'cout': cout,
        }
    wo, bo = raw['outc']['w'], raw['outc']['b']
    ncls, cin = wo.shape[0], wo.shape[1]
    cin_p, cout_p = _round_up(cin, 128), _round_up(ncls, 128)
    wm = jnp.pad(wo.reshape(ncls, cin).T, ((0, cin_p - cin), (0, cout_p - ncls))).astype(jnp.bfloat16)
    prep['outc'] = {'w': wm,
                    'b': jnp.pad(bo, (0, cout_p - ncls)).astype(jnp.float32).reshape(1, cout_p),
                    'cout': ncls}
    return prep


# --------------------------- pure-JAX reference -------------------------------
# Independent XLA implementation (lax.conv).  BN statistics use the same single-pass
# sum / sum-of-squares formula and the same bf16 quantization points as the kernel path, so
# the comparison reflects algorithmic correctness rather than precision-formula drift.
# Conv biases are omitted in BOTH paths: they cancel exactly under train-mode batch-stat BN.

def _ref_unet_forward(x_nchw, raw):
    def cbr(h, w, g, be):
        hb = h.astype(jnp.bfloat16)
        wb = jnp.transpose(w, (2, 3, 1, 0)).astype(jnp.bfloat16)       # HWIO
        y = jax.lax.conv_general_dilated(
            hb, wb, (1, 1), [(1, 1), (1, 1)],
            dimension_numbers=("NHWC", "HWIO", "NHWC"),
            preferred_element_type=jnp.float32)
        yq = y.astype(jnp.bfloat16).astype(jnp.float32)                 # same point as kernel
        count = yq.shape[0] * yq.shape[1] * yq.shape[2]
        scale, shift = _bn_affine(jnp.sum(yq, axis=(0, 1, 2)),
                                  jnp.sum(yq * yq, axis=(0, 1, 2)), g, be, count)
        return jnp.maximum(yq * scale + shift, 0.0).astype(jnp.bfloat16)

    def dc(h, p):
        h = cbr(h, p['w1'], p['g1'], p['be1'])
        return cbr(h, p['w2'], p['g2'], p['be2'])

    x = jnp.transpose(x_nchw, (0, 2, 3, 1))
    x1 = dc(x, raw['inc'])
    x2 = dc(_maxpool2(x1), raw['down1'])
    x3 = dc(_maxpool2(x2), raw['down2'])
    x4 = dc(_maxpool2(x3), raw['down3'])
    x5 = dc(_maxpool2(x4), raw['down4'])
    u = dc(_up_cat(x5, x4), raw['up1'])
    u = dc(_up_cat(u, x3), raw['up2'])
    u = dc(_up_cat(u, x2), raw['up3'])
    u = dc(_up_cat(u, x1), raw['up4'])
    wo = jnp.transpose(raw['outc']['w'], (2, 3, 1, 0)).astype(jnp.bfloat16)
    logits = jax.lax.conv_general_dilated(
        u.astype(jnp.bfloat16), wo, (1, 1), [(0, 0), (0, 0)],
        dimension_numbers=("NHWC", "HWIO", "NHWC"),
        preferred_element_type=jnp.float32) + raw['outc']['b']
    return jnp.transpose(logits, (0, 3, 1, 2))


# --------------------------------- main ---------------------------------------

if __name__ == "__main__":
    key = jax.random.PRNGKey(0)
    kx, kp = jax.random.split(key)

    N, n_channels, n_classes, H, W = 2, 1, 2, 32, 32
    x = jax.random.normal(kx, (N, n_channels, H, W), jnp.float32)

    raw_params = init_unet_params(kp, n_channels, n_classes)
    prep_params = prepare_params(raw_params)

    out = jax.block_until_ready(unet_forward(x, prep_params))
    assert out.shape == (N, n_classes, H, W), out.shape

    ref = jax.block_until_ready(_ref_unet_forward(x, raw_params))
    err = float(jnp.max(jnp.abs(out - ref)))
    mae = float(jnp.mean(jnp.abs(out - ref)))
    # 18 conv+BN layers with bf16 requantization at every layer: tiny reduction-order
    # differences between the MXU tap decomposition and lax.conv are amplified layer over
    # layer, so the max-abs bound is loose while the mean-abs bound stays tight; genuine
    # indexing / fusion bugs show up as O(1) errors and are still caught.
    assert err < 1e-1 and mae < 2e-2, (err, mae)

    print("KERNEL_OK")
</pallas_src>

<mosaic_0001>
module attributes {stable_mosaic.version = 11 : i64} {
  func.func @_conv3x3_kernel(%arg0: i32, %arg1: memref<512x128xbf16, #tpu.memory_space<vmem>>, %arg2: memref<64x128xbf16, #tpu.memory_space<vmem>>, %arg3: memref<64x128xbf16, #tpu.memory_space<vmem>>, %arg4: memref<512x1xf32, #tpu.memory_space<vmem>>, %arg5: memref<64x1xf32, #tpu.memory_space<vmem>>, %arg6: memref<64x1xf32, #tpu.memory_space<vmem>>, %arg7: memref<1x128xf32, #tpu.memory_space<vmem>>, %arg8: memref<1x128xf32, #tpu.memory_space<vmem>>, %arg9: memref<9x128x128xbf16, #tpu.memory_space<vmem>>, %arg10: memref<512x128xbf16, #tpu.memory_space<vmem>>, %arg11: memref<1x2x128xf32, #tpu.memory_space<vmem>>, %arg12: memref<640x128xbf16, #tpu.memory_space<vmem>>, %arg13: memref<544x128xf32, #tpu.memory_space<vmem>>, %arg14: memref<544x128xf32, #tpu.memory_space<vmem>>, %arg15: memref<544x128xf32, #tpu.memory_space<vmem>>) attributes {dimension_semantics = [#tpu.dimension_semantics<parallel>], iteration_bounds = array<i64: 8>, scalar_prefetch = 0 : i64, scratch_operands = 4 : i64, tpu.core_type = #tpu.core_type<tc>, window_params = [{transform_indices = @transform_0, window_bounds = array<i64: 512, 128>}, {transform_indices = @transform_1, window_bounds = array<i64: 64, 128>}, {transform_indices = @transform_2, window_bounds = array<i64: 64, 128>}, {transform_indices = @transform_3, window_bounds = array<i64: 512, 1>}, {transform_indices = @transform_4, window_bounds = array<i64: 64, 1>}, {transform_indices = @transform_5, window_bounds = array<i64: 64, 1>}, {pipeline_mode = #tpu.pipeline_mode<synchronous>, transform_indices = @transform_6, window_bounds = array<i64: 1, 128>}, {pipeline_mode = #tpu.pipeline_mode<synchronous>, transform_indices = @transform_7, window_bounds = array<i64: 1, 128>}, {pipeline_mode = #tpu.pipeline_mode<synchronous>, transform_indices = @transform_8, window_bounds = array<i64: 9, 128, 128>}, {transform_indices = @transform_9, window_bounds = array<i64: 512, 128>}, {transform_indices = @transform_10, window_bounds = array<i64: 1, 2, 128>}]} {
    %c0 = arith.constant 0 : index
    %c0_0 = arith.constant 0 : index
    %0 = vector.load %arg2[%c0, %c0_0] : memref<64x128xbf16, #tpu.memory_space<vmem>>, vector<64x128xbf16>
    %c0_1 = arith.constant 0 : index
    %c0_2 = arith.constant 0 : index
    %1 = vector.load %arg12[%c0_1, %c0_2] : memref<640x128xbf16, #tpu.memory_space<vmem>>, vector<64x128xbf16>
    tpu.vector_store %arg12[%c0_1, %c0_2], %0 {strides = array<i32>} : memref<640x128xbf16, #tpu.memory_space<vmem>>, vector<64x128xbf16>,
    %c0_3 = arith.constant 0 : index
    %c0_4 = arith.constant 0 : index
    %2 = vector.load %arg1[%c0_3, %c0_4] : memref<512x128xbf16, #tpu.memory_space<vmem>>, vector<512x128xbf16>
    %c64 = arith.constant 64 : index
    %c0_5 = arith.constant 0 : index
    %3 = vector.load %arg12[%c64, %c0_5] : memref<640x128xbf16, #tpu.memory_space<vmem>>, vector<512x128xbf16>
    tpu.vector_store %arg12[%c64, %c0_5], %2 {strides = array<i32>} : memref<640x128xbf16, #tpu.memory_space<vmem>>, vector<512x128xbf16>,
    %c0_6 = arith.constant 0 : index
    %c0_7 = arith.constant 0 : index
    %4 = vector.load %arg3[%c0_6, %c0_7] : memref<64x128xbf16, #tpu.memory_space<vmem>>, vector<64x128xbf16>
    %c576 = arith.constant 576 : index
    %c0_8 = arith.constant 0 : index
    %5 = vector.load %arg12[%c576, %c0_8] : memref<640x128xbf16, #tpu.memory_space<vmem>>, vector<64x128xbf16>
    tpu.vector_store %arg12[%c576, %c0_8], %4 {strides = array<i32>} : memref<640x128xbf16, #tpu.memory_space<vmem>>, vector<64x128xbf16>,
    %c0_9 = arith.constant 0 : index
    %c0_10 = arith.constant 0 : index
    %6 = vector.load %arg12[%c0_9, %c0_10] : memref<640x128xbf16, #tpu.memory_space<vmem>>, vector<544x128xbf16>
    %c0_11 = arith.constant 0 : index
    %c0_12 = arith.constant 0 : index
    %c0_13 = arith.constant 0 : index
    %7 = vector.load %arg9[%c0_11, %c0_12, %c0_13] : memref<9x128x128xbf16, #tpu.memory_space<vmem>>, vector<1x128x128xbf16>
    %8 = vector.shape_cast %7 : vector<1x128x128xbf16> to vector<128x128xbf16>
    %cst = arith.constant dense<0.000000e+00> : vector<544x128xf32>
    %9 = tpu.matmul %6, %8, %cst {dimension_numbers = #tpu.dot_dimension_numbers<[1], [0], [0], [1], [0, 0, 1, 1], [], []>} : vector<544x128xbf16>, vector<128x128xbf16>, vector<544x128xf32> -> vector<544x128xf32>
    %c0_14 = arith.constant 0 : index
    %c0_15 = arith.constant 0 : index
    %10 = vector.load %arg13[%c0_14, %c0_15] : memref<544x128xf32, #tpu.memory_space<vmem>>, vector<544x128xf32>
    tpu.vector_store %arg13[%c0_14, %c0_15], %9 {strides = array<i32>} : memref<544x128xf32, #tpu.memory_space<vmem>>, vector<544x128xf32>,
    %c48 = arith.constant 48 : index
    %c0_16 = arith.constant 0 : index
    %11 = vector.load %arg12[%c48, %c0_16] : memref<640x128xbf16, #tpu.memory_space<vmem>>, vector<544x128xbf16>
    %c3 = arith.constant 3 : index
    %c0_17 = arith.constant 0 : index
    %c0_18 = arith.constant 0 : index
    %12 = vector.load %arg9[%c3, %c0_17, %c0_18] : memref<9x128x128xbf16, #tpu.memory_space<vmem>>, vector<1x128x128xbf16>
    %13 = vector.shape_cast %12 : vector<1x128x128xbf16> to vector<128x128xbf16>
    %cst_19 = arith.constant dense<0.000000e+00> : vector<544x128xf32>
    %14 = tpu.matmul %11, %13, %cst_19 {dimension_numbers = #tpu.dot_dimension_numbers<[1], [0], [0], [1], [0, 0, 1, 1], [], []>} : vector<544x128xbf16>, vector<128x128xbf16>, vector<544x128xf32> -> vector<544x128xf32>
    %c0_20 = arith.constant 0 : index
    %c0_21 = arith.constant 0 : index
    %15 = vector.load %arg13[%c0_20, %c0_21] : memref<544x128xf32, #tpu.memory_space<vmem>>, vector<544x128xf32>
    %16 = arith.addf %15, %14 : vector<544x128xf32>
    %c0_22 = arith.constant 0 : index
    %c0_23 = arith.constant 0 : index
    %17 = vector.load %arg13[%c0_22, %c0_23] : memref<544x128xf32, #tpu.memory_space<vmem>>, vector<544x128xf32>
    tpu.vector_store %arg13[%c0_22, %c0_23], %16 {strides = array<i32>} : memref<544x128xf32, #tpu.memory_space<vmem>>, vector<544x128xf32>,
    %c96 = arith.constant 96 : index
    %c0_24 = arith.constant 0 : index
    %18 = vector.load %arg12[%c96, %c0_24] : memref<640x128xbf16, #tpu.memory_space<vmem>>, vector<544x128xbf16>
    %c6 = arith.constant 6 : index
    %c0_25 = arith.constant 0 : index
    %c0_26 = arith.constant 0 : index
    %19 = vector.load %arg9[%c6, %c0_25, %c0_26] : memref<9x128x128xbf16, #tpu.memory_space<vmem>>, vector<1x128x128xbf16>
    %20 = vector.shape_cast %19 : vector<1x128x128xbf16> to vector<128x128xbf16>
    %cst_27 = arith.constant dense<0.000000e+00> : vector<544x128xf32>
    %21 = tpu.matmul %18, %20, %cst_27 {dimension_numbers = #tpu.dot_dimension_numbers<[1], [0], [0], [1], [0, 0, 1, 1], [], []>} : vector<544x128xbf16>, vector<128x128xbf16>, vector<544x128xf32> -> vector<544x128xf32>
    %c0_28 = arith.constant 0 : index
    %c0_29 = arith.constant 0 : index
    %22 = vector.load %arg13[%c0_28, %c0_29] : memref<544x128xf32, #tpu.memory_space<vmem>>, vector<544x128xf32>
    %23 = arith.addf %22, %21 : vector<544x128xf32>
    %c0_30 = arith.constant 0 : index
    %c0_31 = arith.constant 0 : index
    %24 = vector.load %arg13[%c0_30, %c0_31] : memref<544x128xf32, #tpu.memory_space<vmem>>, vector<544x128xf32>
    tpu.vector_store %arg13[%c0_30, %c0_31], %23 {strides = array<i32>} : memref<544x128xf32, #tpu.memory_space<vmem>>, vector<544x128xf32>,
    %c0_32 = arith.constant 0 : index
    %c0_33 = arith.constant 0 : index
    %25 = vector.load %arg12[%c0_32, %c0_33] : memref<640x128xbf16, #tpu.memory_space<vmem>>, vector<544x128xbf16>
    %c1 = arith.constant 1 : index
    %c0_34 = arith.constant 0 : index
    %c0_35 = arith.constant 0 : index
    %26 = vector.load %arg9[%c1, %c0_34, %c0_35] : memref<9x128x128xbf16, #tpu.memory_space<vmem>>, vector<1x128x128xbf16>
    %27 = vector.shape_cast %26 : vector<1x128x128xbf16> to vector<128x128xbf16>
    %cst_36 = arith.constant dense<0.000000e+00> : vector<544x128xf32>
    %28 = tpu.matmul %25, %27, %cst_36 {dimension_numbers = #tpu.dot_dimension_numbers<[1], [0], [0], [1], [0, 0, 1, 1], [], []>} : vector<544x128xbf16>, vector<128x128xbf16>, vector<544x128xf32> -> vector<544x128xf32>
    %c0_37 = arith.constant 0 : index
    %c0_38 = arith.constant 0 : index
    %29 = vector.load %arg14[%c0_37, %c0_38] : memref<544x128xf32, #tpu.memory_space<vmem>>, vector<544x128xf32>
    tpu.vector_store %arg14[%c0_37, %c0_38], %28 {strides = array<i32>} : memref<544x128xf32, #tpu.memory_space<vmem>>, vector<544x128xf32>,
    %c48_39 = arith.constant 48 : index
    %c0_40 = arith.constant 0 : index
    %30 = vector.load %arg12[%c48_39, %c0_40] : memref<640x128xbf16, #tpu.memory_space<vmem>>, vector<544x128xbf16>
    %c4 = arith.constant 4 : index
    %c0_41 = arith.constant 0 : index
    %c0_42 = arith.constant 0 : index
    %31 = vector.load %arg9[%c4, %c0_41, %c0_42] : memref<9x128x128xbf16, #tpu.memory_space<vmem>>, vector<1x128x128xbf16>
    %32 = vector.shape_cast %31 : vector<1x128x128xbf16> to vector<128x128xbf16>
    %cst_43 = arith.constant dense<0.000000e+00> : vector<544x128xf32>
    %33 = tpu.matmul %30, %32, %cst_43 {dimension_numbers = #tpu.dot_dimension_numbers<[1], [0], [0], [1], [0, 0, 1, 1], [], []>} : vector<544x128xbf16>, vector<128x128xbf16>, vector<544x128xf32> -> vector<544x128xf32>
    %c0_44 = arith.constant 0 : index
    %c0_45 = arith.constant 0 : index
    %34 = vector.load %arg14[%c0_44, %c0_45] : memref<544x128xf32, #tpu.memory_space<vmem>>, vector<544x128xf32>
    %35 = arith.addf %34, %33 : vector<544x128xf32>
    %c0_46 = arith.constant 0 : index
    %c0_47 = arith.constant 0 : index
    %36 = vector.load %arg14[%c0_46, %c0_47] : memref<544x128xf32, #tpu.memory_space<vmem>>, vector<544x128xf32>
    tpu.vector_store %arg14[%c0_46, %c0_47], %35 {strides = array<i32>} : memref<544x128xf32, #tpu.memory_space<vmem>>, vector<544x128xf32>,
    %c96_48 = arith.constant 96 : index
    %c0_49 = arith.constant 0 : index
    %37 = vector.load %arg12[%c96_48, %c0_49] : memref<640x128xbf16, #tpu.memory_space<vmem>>, vector<544x128xbf16>
    %c7 = arith.constant 7 : index
    %c0_50 = arith.constant 0 : index
    %c0_51 = arith.constant 0 : index
    %38 = vector.load %arg9[%c7, %c0_50, %c0_51] : memref<9x128x128xbf16, #tpu.memory_space<vmem>>, vector<1x128x128xbf16>
    %39 = vector.shape_cast %38 : vector<1x128x128xbf16> to vector<128x128xbf16>
    %cst_52 = arith.constant dense<0.000000e+00> : vector<544x128xf32>
    %40 = tpu.matmul %37, %39, %cst_52 {dimension_numbers = #tpu.dot_dimension_numbers<[1], [0], [0], [1], [0, 0, 1, 1], [], []>} : vector<544x128xbf16>, vector<128x128xbf16>, vector<544x128xf32> -> vector<544x128xf32>
    %c0_53 = arith.constant 0 : index
    %c0_54 = arith.constant 0 : index
    %41 = vector.load %arg14[%c0_53, %c0_54] : memref<544x128xf32, #tpu.memory_space<vmem>>, vector<544x128xf32>
    %42 = arith.addf %41, %40 : vector<544x128xf32>
    %c0_55 = arith.constant 0 : index
    %c0_56 = arith.constant 0 : index
    %43 = vector.load %arg14[%c0_55, %c0_56] : memref<544x128xf32, #tpu.memory_space<vmem>>, vector<544x128xf32>
    tpu.vector_store %arg14[%c0_55, %c0_56], %42 {strides = array<i32>} : memref<544x128xf32, #tpu.memory_space<vmem>>, vector<544x128xf32>,
    %c0_57 = arith.constant 0 : index
    %c0_58 = arith.constant 0 : index
    %44 = vector.load %arg12[%c0_57, %c0_58] : memref<640x128xbf16, #tpu.memory_space<vmem>>, vector<544x128xbf16>
    %c2 = arith.constant 2 : index
    %c0_59 = arith.constant 0 : index
    %c0_60 = arith.constant 0 : index
    %45 = vector.load %arg9[%c2, %c0_59, %c0_60] : memref<9x128x128xbf16, #tpu.memory_space<vmem>>, vector<1x128x128xbf16>
    %46 = vector.shape_cast %45 : vector<1x128x128xbf16> to vector<128x128xbf16>
    %cst_61 = arith.constant dense<0.000000e+00> : vector<544x128xf32>
    %47 = tpu.matmul %44, %46, %cst_61 {dimension_numbers = #tpu.dot_dimension_numbers<[1], [0], [0], [1], [0, 0, 1, 1], [], []>} : vector<544x128xbf16>, vector<128x128xbf16>, vector<544x128xf32> -> vector<544x128xf32>
    %c0_62 = arith.constant 0 : index
    %c0_63 = arith.constant 0 : index
    %48 = vector.load %arg15[%c0_62, %c0_63] : memref<544x128xf32, #tpu.memory_space<vmem>>, vector<544x128xf32>
    tpu.vector_store %arg15[%c0_62, %c0_63], %47 {strides = array<i32>} : memref<544x128xf32, #tpu.memory_space<vmem>>, vector<544x128xf32>,
    %c48_64 = arith.constant 48 : index
    %c0_65 = arith.constant 0 : index
    %49 = vector.load %arg12[%c48_64, %c0_65] : memref<640x128xbf16, #tpu.memory_space<vmem>>, vector<544x128xbf16>
    %c5 = arith.constant 5 : index
    %c0_66 = arith.constant 0 : index
    %c0_67 = arith.constant 0 : index
    %50 = vector.load %arg9[%c5, %c0_66, %c0_67] : memref<9x128x128xbf16, #tpu.memory_space<vmem>>, vector<1x128x128xbf16>
    %51 = vector.shape_cast %50 : vector<1x128x128xbf16> to vector<128x128xbf16>
    %cst_68 = arith.constant dense<0.000000e+00> : vector<544x128xf32>
    %52 = tpu.matmul %49, %51, %cst_68 {dimension_numbers = #tpu.dot_dimension_numbers<[1], [0], [0], [1], [0, 0, 1, 1], [], []>} : vector<544x128xbf16>, vector<128x128xbf16>, vector<544x128xf32> -> vector<544x128xf32>
    %c0_69 = arith.constant 0 : index
    %c0_70 = arith.constant 0 : index
    %53 = vector.load %arg15[%c0_69, %c0_70] : memref<544x128xf32, #tpu.memory_space<vmem>>, vector<544x128xf32>
    %54 = arith.addf %53, %52 : vector<544x128xf32>
    %c0_71 = arith.constant 0 : index
    %c0_72 = arith.constant 0 : index
    %55 = vector.load %arg15[%c0_71, %c0_72] : memref<544x128xf32, #tpu.memory_space<vmem>>, vector<544x128xf32>
    tpu.vector_store %arg15[%c0_71, %c0_72], %54 {strides = array<i32>} : memref<544x128xf32, #tpu.memory_space<vmem>>, vector<544x128xf32>,
    %c96_73 = arith.constant 96 : index
    %c0_74 = arith.constant 0 : index
    %56 = vector.load %arg12[%c96_73, %c0_74] : memref<640x128xbf16, #tpu.memory_space<vmem>>, vector<544x128xbf16>
    %c8 = arith.constant 8 : index
    %c0_75 = arith.constant 0 : index
    %c0_76 = arith.constant 0 : index
    %57 = vector.load %arg9[%c8, %c0_75, %c0_76] : memref<9x128x128xbf16, #tpu.memory_space<vmem>>, vector<1x128x128xbf16>
    %58 = vector.shape_cast %57 : vector<1x128x128xbf16> to vector<128x128xbf16>
    %cst_77 = arith.constant dense<0.000000e+00> : vector<544x128xf32>
    %59 = tpu.matmul %56, %58, %cst_77 {dimension_numbers = #tpu.dot_dimension_numbers<[1], [0], [0], [1], [0, 0, 1, 1], [], []>} : vector<544x128xbf16>, vector<128x128xbf16>, vector<544x128xf32> -> vector<544x128xf32>
    %c0_78 = arith.constant 0 : index
    %c0_79 = arith.constant 0 : index
    %60 = vector.load %arg15[%c0_78, %c0_79] : memref<544x128xf32, #tpu.memory_space<vmem>>, vector<544x128xf32>
    %61 = arith.addf %60, %59 : vector<544x128xf32>
    %c0_80 = arith.constant 0 : index
    %c0_81 = arith.constant 0 : index
    %62 = vector.load %arg15[%c0_80, %c0_81] : memref<544x128xf32, #tpu.memory_space<vmem>>, vector<544x128xf32>
    tpu.vector_store %arg15[%c0_80, %c0_81], %61 {strides = array<i32>} : memref<544x128xf32, #tpu.memory_space<vmem>>, vector<544x128xf32>,
    %cst_82 = arith.constant 0.000000e+00 : f32
    %63 = vector.broadcast %cst_82 : f32 to vector<1x128xf32>
    %cst_83 = arith.constant 0.000000e+00 : f32
    %64 = vector.broadcast %cst_83 : f32 to vector<1x128xf32>
    %c15 = arith.constant 15 : index
    %c0_84 = arith.constant 0 : index
    %65 = vector.load %arg13[%c15, %c0_84] : memref<544x128xf32, #tpu.memory_space<vmem>>, vector<64x128xf32>
    %c16 = arith.constant 16 : index
    %c0_85 = arith.constant 0 : index
    %66 = vector.load %arg14[%c16, %c0_85] : memref<544x128xf32, #tpu.memory_space<vmem>>, vector<64x128xf32>
    %67 = arith.addf %65, %66 : vector<64x128xf32>
    %c17 = arith.constant 17 : index
    %c0_86 = arith.constant 0 : index
    %68 = vector.load %arg15[%c17, %c0_86] : memref<544x128xf32, #tpu.memory_space<vmem>>, vector<64x128xf32>
    %69 = arith.addf %67, %68 : vector<64x128xf32>
    %70 = arith.truncf %69 : vector<64x128xf32> to vector<64x128xbf16>
    %c0_87 = arith.constant 0 : index
    %c0_88 = arith.constant 0 : index
    %71 = vector.load %arg10[%c0_87, %c0_88] : memref<512x128xbf16, #tpu.memory_space<vmem>>, vector<64x128xbf16>
    tpu.vector_store %arg10[%c0_87, %c0_88], %70 {strides = array<i32>} : memref<512x128xbf16, #tpu.memory_space<vmem>>, vector<64x128xbf16>,
    %72 = arith.extf %70 : vector<64x128xbf16> to vector<64x128xf32>
    %c0_89 = arith.constant 0 : index
    %c0_90 = arith.constant 0 : index
    %73 = vector.load %arg4[%c0_89, %c0_90] : memref<512x1xf32, #tpu.memory_space<vmem>>, vector<64x1xf32>
    %74 = vector.broadcast %73 : vector<64x1xf32> to vector<64x128xf32>
    %75 = arith.mulf %72, %74 : vector<64x128xf32>
    %cst_91 = arith.constant dense<0.000000e+00> : vector<128xf32>
    %76 = vector.multi_reduction <add>, %75, %cst_91 [0] : vector<64x128xf32> to vector<128xf32>
    %77 = vector.shape_cast %76 : vector<128xf32> to vector<1x128xf32>
    %78 = arith.addf %63, %77 : vector<1x128xf32>
    %79 = arith.mulf %75, %75 : vector<64x128xf32>
    %cst_92 = arith.constant dense<0.000000e+00> : vector<128xf32>
    %80 = vector.multi_reduction <add>, %79, %cst_92 [0] : vector<64x128xf32> to vector<128xf32>
    %81 = vector.shape_cast %80 : vector<128xf32> to vector<1x128xf32>
    %82 = arith.addf %64, %81 : vector<1x128xf32>
    %c79 = arith.constant 79 : index
    %c0_93 = arith.constant 0 : index
    %83 = vector.load %arg13[%c79, %c0_93] : memref<544x128xf32, #tpu.memory_space<vmem>>, vector<64x128xf32>
    %c80 = arith.constant 80 : index
    %c0_94 = arith.constant 0 : index
    %84 = vector.load %arg14[%c80, %c0_94] : memref<544x128xf32, #tpu.memory_space<vmem>>, vector<64x128xf32>
    %85 = arith.addf %83, %84 : vector<64x128xf32>
    %c81 = arith.constant 81 : index
    %c0_95 = arith.constant 0 : index
    %86 = vector.load %arg15[%c81, %c0_95] : memref<544x128xf32, #tpu.memory_space<vmem>>, vector<64x128xf32>
    %87 = arith.addf %85, %86 : vector<64x128xf32>
    %88 = arith.truncf %87 : vector<64x128xf32> to vector<64x128xbf16>
    %c64_96 = arith.constant 64 : index
    %c0_97 = arith.constant 0 : index
    %89 = vector.load %arg10[%c64_96, %c0_97] : memref<512x128xbf16, #tpu.memory_space<vmem>>, vector<64x128xbf16>
    tpu.vector_store %arg10[%c64_96, %c0_97], %88 {strides = array<i32>} : memref<512x128xbf16, #tpu.memory_space<vmem>>, vector<64x128xbf16>,
    %90 = arith.extf %88 : vector<64x128xbf16> to vector<64x128xf32>
    %c64_98 = arith.constant 64 : index
    %c0_99 = arith.constant 0 : index
    %91 = vector.load %arg4[%c64_98, %c0_99] : memref<512x1xf32, #tpu.memory_space<vmem>>, vector<64x1xf32>
    %92 = vector.broadcast %91 : vector<64x1xf32> to vector<64x128xf32>
    %93 = arith.mulf %90, %92 : vector<64x128xf32>
    %cst_100 = arith.constant dense<0.000000e+00> : vector<128xf32>
    %94 = vector.multi_reduction <add>, %93, %cst_100 [0] : vector<64x128xf32> to vector<128xf32>
    %95 = vector.shape_cast %94 : vector<128xf32> to vector<1x128xf32>
    %96 = arith.addf %78, %95 : vector<1x128xf32>
    %97 = arith.mulf %93, %93 : vector<64x128xf32>
    %cst_101 = arith.constant dense<0.000000e+00> : vector<128xf32>
    %98 = vector.multi_reduction <add>, %97, %cst_101 [0] : vector<64x128xf32> to vector<128xf32>
    %99 = vector.shape_cast %98 : vector<128xf32> to vector<1x128xf32>
    %100 = arith.addf %82, %99 : vector<1x128xf32>
    %c143 = arith.constant 143 : index
    %c0_102 = arith.constant 0 : index
    %101 = vector.load %arg13[%c143, %c0_102] : memref<544x128xf32, #tpu.memory_space<vmem>>, vector<64x128xf32>
    %c144 = arith.constant 144 : index
    %c0_103 = arith.constant 0 : index
    %102 = vector.load %arg14[%c144, %c0_103] : memref<544x128xf32, #tpu.memory_space<vmem>>, vector<64x128xf32>
    %103 = arith.addf %101, %102 : vector<64x128xf32>
    %c145 = arith.constant 145 : index
    %c0_104 = arith.constant 0 : index
    %104 = vector.load %arg15[%c145, %c0_104] : memref<544x128xf32, #tpu.memory_space<vmem>>, vector<64x128xf32>
    %105 = arith.addf %103, %104 : vector<64x128xf32>
    %106 = arith.truncf %105 : vector<64x128xf32> to vector<64x128xbf16>
    %c128 = arith.constant 128 : index
    %c0_105 = arith.constant 0 : index
    %107 = vector.load %arg10[%c128, %c0_105] : memref<512x128xbf16, #tpu.memory_space<vmem>>, vector<64x128xbf16>
    tpu.vector_store %arg10[%c128, %c0_105], %106 {strides = array<i32>} : memref<512x128xbf16, #tpu.memory_space<vmem>>, vector<64x128xbf16>,
    %108 = arith.extf %106 : vector<64x128xbf16> to vector<64x128xf32>
    %c128_106 = arith.constant 128 : index
    %c0_107 = arith.constant 0 : index
    %109 = vector.load %arg4[%c128_106, %c0_107] : memref<512x1xf32, #tpu.memory_space<vmem>>, vector<64x1xf32>
    %110 = vector.broadcast %109 : vector<64x1xf32> to vector<64x128xf32>
    %111 = arith.mulf %108, %110 : vector<64x128xf32>
    %cst_108 = arith.constant dense<0.000000e+00> : vector<128xf32>
    %112 = vector.multi_reduction <add>, %111, %cst_108 [0] : vector<64x128xf32> to vector<128xf32>
    %113 = vector.shape_cast %112 : vector<128xf32> to vector<1x128xf32>
    %114 = arith.addf %96, %113 : vector<1x128xf32>
    %115 = arith.mulf %111, %111 : vector<64x128xf32>
    %cst_109 = arith.constant dense<0.000000e+00> : vector<128xf32>
    %116 = vector.multi_reduction <add>, %115, %cst_109 [0] : vector<64x128xf32> to vector<128xf32>
    %117 = vector.shape_cast %116 : vector<128xf32> to vector<1x128xf32>
    %118 = arith.addf %100, %117 : vector<1x128xf32>
    %c207 = arith.constant 207 : index
    %c0_110 = arith.constant 0 : index
    %119 = vector.load %arg13[%c207, %c0_110] : memref<544x128xf32, #tpu.memory_space<vmem>>, vector<64x128xf32>
    %c208 = arith.constant 208 : index
    %c0_111 = arith.constant 0 : index
    %120 = vector.load %arg14[%c208, %c0_111] : memref<544x128xf32, #tpu.memory_space<vmem>>, vector<64x128xf32>
    %121 = arith.addf %119, %120 : vector<64x128xf32>
    %c209 = arith.constant 209 : index
    %c0_112 = arith.constant 0 : index
    %122 = vector.load %arg15[%c209, %c0_112] : memref<544x128xf32, #tpu.memory_space<vmem>>, vector<64x128xf32>
    %123 = arith.addf %121, %122 : vector<64x128xf32>
    %124 = arith.truncf %123 : vector<64x128xf32> to vector<64x128xbf16>
    %c192 = arith.constant 192 : index
    %c0_113 = arith.constant 0 : index
    %125 = vector.load %arg10[%c192, %c0_113] : memref<512x128xbf16, #tpu.memory_space<vmem>>, vector<64x128xbf16>
    tpu.vector_store %arg10[%c192, %c0_113], %124 {strides = array<i32>} : memref<512x128xbf16, #tpu.memory_space<vmem>>, vector<64x128xbf16>,
    %126 = arith.extf %124 : vector<64x128xbf16> to vector<64x128xf32>
    %c192_114 = arith.constant 192 : index
    %c0_115 = arith.constant 0 : index
    %127 = vector.load %arg4[%c192_114, %c0_115] : memref<512x1xf32, #tpu.memory_space<vmem>>, vector<64x1xf32>
    %128 = vector.broadcast %127 : vector<64x1xf32> to vector<64x128xf32>
    %129 = arith.mulf %126, %128 : vector<64x128xf32>
    %cst_116 = arith.constant dense<0.000000e+00> : vector<128xf32>
    %130 = vector.multi_reduction <add>, %129, %cst_116 [0] : vector<64x128xf32> to vector<128xf32>
    %131 = vector.shape_cast %130 : vector<128xf32> to vector<1x128xf32>
    %132 = arith.addf %114, %131 : vector<1x128xf32>
    %133 = arith.mulf %129, %129 : vector<64x128xf32>
    %cst_117 = arith.constant dense<0.000000e+00> : vector<128xf32>
    %134 = vector.multi_reduction <add>, %133, %cst_117 [0] : vector<64x128xf32> to vector<128xf32>
    %135 = vector.shape_cast %134 : vector<128xf32> to vector<1x128xf32>
    %136 = arith.addf %118, %135 : vector<1x128xf32>
    %c271 = arith.constant 271 : index
    %c0_118 = arith.constant 0 : index
    %137 = vector.load %arg13[%c271, %c0_118] : memref<544x128xf32, #tpu.memory_space<vmem>>, vector<64x128xf32>
    %c272 = arith.constant 272 : index
    %c0_119 = arith.constant 0 : index
    %138 = vector.load %arg14[%c272, %c0_119] : memref<544x128xf32, #tpu.memory_space<vmem>>, vector<64x128xf32>
    %139 = arith.addf %137, %138 : vector<64x128xf32>
    %c273 = arith.constant 273 : index
    %c0_120 = arith.constant 0 : index
    %140 = vector.load %arg15[%c273, %c0_120] : memref<544x128xf32, #tpu.memory_space<vmem>>, vector<64x128xf32>
    %141 = arith.addf %139, %140 : vector<64x128xf32>
    %142 = arith.truncf %141 : vector<64x128xf32> to vector<64x128xbf16>
    %c256 = arith.constant 256 : index
    %c0_121 = arith.constant 0 : index
    %143 = vector.load %arg10[%c256, %c0_121] : memref<512x128xbf16, #tpu.memory_space<vmem>>, vector<64x128xbf16>
    tpu.vector_store %arg10[%c256, %c0_121], %142 {strides = array<i32>} : memref<512x128xbf16, #tpu.memory_space<vmem>>, vector<64x128xbf16>,
    %144 = arith.extf %142 : vector<64x128xbf16> to vector<64x128xf32>
    %c256_122 = arith.constant 256 : index
    %c0_123 = arith.constant 0 : index
    %145 = vector.load %arg4[%c256_122, %c0_123] : memref<512x1xf32, #tpu.memory_space<vmem>>, vector<64x1xf32>
    %146 = vector.broadcast %145 : vector<64x1xf32> to vector<64x128xf32>
    %147 = arith.mulf %144, %146 : vector<64x128xf32>
    %cst_124 = arith.constant dense<0.000000e+00> : vector<128xf32>
    %148 = vector.multi_reduction <add>, %147, %cst_124 [0] : vector<64x128xf32> to vector<128xf32>
    %149 = vector.shape_cast %148 : vector<128xf32> to vector<1x128xf32>
    %150 = arith.addf %132, %149 : vector<1x128xf32>
    %151 = arith.mulf %147, %147 : vector<64x128xf32>
    %cst_125 = arith.constant dense<0.000000e+00> : vector<128xf32>
    %152 = vector.multi_reduction <add>, %151, %cst_125 [0] : vector<64x128xf32> to vector<128xf32>
    %153 = vector.shape_cast %152 : vector<128xf32> to vector<1x128xf32>
    %154 = arith.addf %136, %153 : vector<1x128xf32>
    %c335 = arith.constant 335 : index
    %c0_126 = arith.constant 0 : index
    %155 = vector.load %arg13[%c335, %c0_126] : memref<544x128xf32, #tpu.memory_space<vmem>>, vector<64x128xf32>
    %c336 = arith.constant 336 : index
    %c0_127 = arith.constant 0 : index
    %156 = vector.load %arg14[%c336, %c0_127] : memref<544x128xf32, #tpu.memory_space<vmem>>, vector<64x128xf32>
    %157 = arith.addf %155, %156 : vector<64x128xf32>
    %c337 = arith.constant 337 : index
    %c0_128 = arith.constant 0 : index
    %158 = vector.load %arg15[%c337, %c0_128] : memref<544x128xf32, #tpu.memory_space<vmem>>, vector<64x128xf32>
    %159 = arith.addf %157, %158 : vector<64x128xf32>
    %160 = arith.truncf %159 : vector<64x128xf32> to vector<64x128xbf16>
    %c320 = arith.constant 320 : index
    %c0_129 = arith.constant 0 : index
    %161 = vector.load %arg10[%c320, %c0_129] : memref<512x128xbf16, #tpu.memory_space<vmem>>, vector<64x128xbf16>
    tpu.vector_store %arg10[%c320, %c0_129], %160 {strides = array<i32>} : memref<512x128xbf16, #tpu.memory_space<vmem>>, vector<64x128xbf16>,
    %162 = arith.extf %160 : vector<64x128xbf16> to vector<64x128xf32>
    %c320_130 = arith.constant 320 : index
    %c0_131 = arith.constant 0 : index
    %163 = vector.load %arg4[%c320_130, %c0_131] : memref<512x1xf32, #tpu.memory_space<vmem>>, vector<64x1xf32>
    %164 = vector.broadcast %163 : vector<64x1xf32> to vector<64x128xf32>
    %165 = arith.mulf %162, %164 : vector<64x128xf32>
    %cst_132 = arith.constant dense<0.000000e+00> : vector<128xf32>
    %166 = vector.multi_reduction <add>, %165, %cst_132 [0] : vector<64x128xf32> to vector<128xf32>
    %167 = vector.shape_cast %166 : vector<128xf32> to vector<1x128xf32>
    %168 = arith.addf %150, %167 : vector<1x128xf32>
    %169 = arith.mulf %165, %165 : vector<64x128xf32>
    %cst_133 = arith.constant dense<0.000000e+00> : vector<128xf32>
    %170 = vector.multi_reduction <add>, %169, %cst_133 [0] : vector<64x128xf32> to vector<128xf32>
    %171 = vector.shape_cast %170 : vector<128xf32> to vector<1x128xf32>
    %172 = arith.addf %154, %171 : vector<1x128xf32>
    %c399 = arith.constant 399 : index
    %c0_134 = arith.constant 0 : index
    %173 = vector.load %arg13[%c399, %c0_134] : memref<544x128xf32, #tpu.memory_space<vmem>>, vector<64x128xf32>
    %c400 = arith.constant 400 : index
    %c0_135 = arith.constant 0 : index
    %174 = vector.load %arg14[%c400, %c0_135] : memref<544x128xf32, #tpu.memory_space<vmem>>, vector<64x128xf32>
    %175 = arith.addf %173, %174 : vector<64x128xf32>
    %c401 = arith.constant 401 : index
    %c0_136 = arith.constant 0 : index
    %176 = vector.load %arg15[%c401, %c0_136] : memref<544x128xf32, #tpu.memory_space<vmem>>, vector<64x128xf32>
    %177 = arith.addf %175, %176 : vector<64x128xf32>
    %178 = arith.truncf %177 : vector<64x128xf32> to vector<64x128xbf16>
    %c384 = arith.constant 384 : index
    %c0_137 = arith.constant 0 : index
    %179 = vector.load %arg10[%c384, %c0_137] : memref<512x128xbf16, #tpu.memory_space<vmem>>, vector<64x128xbf16>
    tpu.vector_store %arg10[%c384, %c0_137], %178 {strides = array<i32>} : memref<512x128xbf16, #tpu.memory_space<vmem>>, vector<64x128xbf16>,
    %180 = arith.extf %178 : vector<64x128xbf16> to vector<64x128xf32>
    %c384_138 = arith.constant 384 : index
    %c0_139 = arith.constant 0 : index
    %181 = vector.load %arg4[%c384_138, %c0_139] : memref<512x1xf32, #tpu.memory_space<vmem>>, vector<64x1xf32>
    %182 = vector.broadcast %181 : vector<64x1xf32> to vector<64x128xf32>
    %183 = arith.mulf %180, %182 : vector<64x128xf32>
    %cst_140 = arith.constant dense<0.000000e+00> : vector<128xf32>
    %184 = vector.multi_reduction <add>, %183, %cst_140 [0] : vector<64x128xf32> to vector<128xf32>
    %185 = vector.shape_cast %184 : vector<128xf32> to vector<1x128xf32>
    %186 = arith.addf %168, %185 : vector<1x128xf32>
    %187 = arith.mulf %183, %183 : vector<64x128xf32>
    %cst_141 = arith.constant dense<0.000000e+00> : vector<128xf32>
    %188 = vector.multi_reduction <add>, %187, %cst_141 [0] : vector<64x128xf32> to vector<128xf32>
    %189 = vector.shape_cast %188 : vector<128xf32> to vector<1x128xf32>
    %190 = arith.addf %172, %189 : vector<1x128xf32>
    %c463 = arith.constant 463 : index
    %c0_142 = arith.constant 0 : index
    %191 = vector.load %arg13[%c463, %c0_142] : memref<544x128xf32, #tpu.memory_space<vmem>>, vector<64x128xf32>
    %c464 = arith.constant 464 : index
    %c0_143 = arith.constant 0 : index
    %192 = vector.load %arg14[%c464, %c0_143] : memref<544x128xf32, #tpu.memory_space<vmem>>, vector<64x128xf32>
    %193 = arith.addf %191, %192 : vector<64x128xf32>
    %c465 = arith.constant 465 : index
    %c0_144 = arith.constant 0 : index
    %194 = vector.load %arg15[%c465, %c0_144] : memref<544x128xf32, #tpu.memory_space<vmem>>, vector<64x128xf32>
    %195 = arith.addf %193, %194 : vector<64x128xf32>
    %196 = arith.truncf %195 : vector<64x128xf32> to vector<64x128xbf16>
    %c448 = arith.constant 448 : index
    %c0_145 = arith.constant 0 : index
    %197 = vector.load %arg10[%c448, %c0_145] : memref<512x128xbf16, #tpu.memory_space<vmem>>, vector<64x128xbf16>
    tpu.vector_store %arg10[%c448, %c0_145], %196 {strides = array<i32>} : memref<512x128xbf16, #tpu.memory_space<vmem>>, vector<64x128xbf16>,
    %198 = arith.extf %196 : vector<64x128xbf16> to vector<64x128xf32>
    %c448_146 = arith.constant 448 : index
    %c0_147 = arith.constant 0 : index
    %199 = vector.load %arg4[%c448_146, %c0_147] : memref<512x1xf32, #tpu.memory_space<vmem>>, vector<64x1xf32>
    %200 = vector.broadcast %199 : vector<64x1xf32> to vector<64x128xf32>
    %201 = arith.mulf %198, %200 : vector<64x128xf32>
    %cst_148 = arith.constant dense<0.000000e+00> : vector<128xf32>
    %202 = vector.multi_reduction <add>, %201, %cst_148 [0] : vector<64x128xf32> to vector<128xf32>
    %203 = vector.shape_cast %202 : vector<128xf32> to vector<1x128xf32>
    %204 = arith.addf %186, %203 : vector<1x128xf32>
    %205 = arith.mulf %201, %201 : vector<64x128xf32>
    %cst_149 = arith.constant dense<0.000000e+00> : vector<128xf32>
    %206 = vector.multi_reduction <add>, %205, %cst_149 [0] : vector<64x128xf32> to vector<128xf32>
    %207 = vector.shape_cast %206 : vector<128xf32> to vector<1x128xf32>
    %208 = arith.addf %190, %207 : vector<1x128xf32>
    %c0_150 = arith.constant 0 : index
    %c0_151 = arith.constant 0 : index
    %c0_152 = arith.constant 0 : index
    %209 = vector.load %arg11[%c0_150, %c0_151, %c0_152] : memref<1x2x128xf32, #tpu.memory_space<vmem>>, vector<1x1x128xf32>
    %210 = vector.shape_cast %209 : vector<1x1x128xf32> to vector<1x128xf32>
    %211 = vector.shape_cast %204 : vector<1x128xf32> to vector<1x1x128xf32>
    tpu.vector_store %arg11[%c0_150, %c0_151, %c0_152], %211 {strides = array<i32>} : memref<1x2x128xf32, #tpu.memory_space<vmem>>, vector<1x1x128xf32>,
    %c0_153 = arith.constant 0 : index
    %c1_154 = arith.constant 1 : index
    %c0_155 = arith.constant 0 : index
    %212 = vector.load %arg11[%c0_153, %c1_154, %c0_155] : memref<1x2x128xf32, #tpu.memory_space<vmem>>, vector<1x1x128xf32>
    %213 = vector.shape_cast %212 : vector<1x1x128xf32> to vector<1x128xf32>
    %214 = vector.shape_cast %208 : vector<1x128xf32> to vector<1x1x128xf32>
    tpu.vector_store %arg11[%c0_153, %c1_154, %c0_155], %214 {strides = array<i32>} : memref<1x2x128xf32, #tpu.memory_space<vmem>>, vector<1x1x128xf32>,
    return
  }
  func.func @transform_0(%arg0: i32) -> (i32, i32) {
    %c0_i32 = arith.constant 0 : i32
    %c0_i32_0 = arith.constant 0 : i32
    return %arg0, %c0_i32 : i32, i32
  }
  func.func @transform_1(%arg0: i32) -> (i32, i32) {
    %c8_i32 = arith.constant 8 : i32
    %0 = arith.muli %arg0, %c8_i32 : i32
    %c1_i32 = arith.constant 1 : i32
    %1 = arith.subi %0, %c1_i32 : i32
    %c0_i32 = arith.constant 0 : i32
    %2 = arith.maxsi %1, %c0_i32 : i32
    %c0_i32_0 = arith.constant 0 : i32
    %c0_i32_1 = arith.constant 0 : i32
    return %2, %c0_i32_0 : i32, i32
  }
  func.func @transform_2(%arg0: i32) -> (i32, i32) {
    %c8_i32 = arith.constant 8 : i32
    %0 = arith.muli %arg0, %c8_i32 : i32
    %c8_i32_0 = arith.constant 8 : i32
    %1 = arith.addi %0, %c8_i32_0 : i32
    %c63_i32 = arith.constant 63 : i32
    %2 = arith.minsi %1, %c63_i32 : i32
    %c0_i32 = arith.constant 0 : i32
    %c0_i32_1 = arith.constant 0 : i32
    return %2, %c0_i32 : i32, i32
  }
  func.func @transform_3(%arg0: i32) -> (i32, i32) {
    %c0_i32 = arith.constant 0 : i32
    %c0_i32_0 = arith.constant 0 : i32
    return %arg0, %c0_i32 : i32, i32
  }
  func.func @transform_4(%arg0: i32) -> (i32, i32) {
    %c8_i32 = arith.constant 8 : i32
    %0 = arith.muli %arg0, %c8_i32 : i32
    %c1_i32 = arith.constant 1 : i32
    %1 = arith.subi %0, %c1_i32 : i32
    %c0_i32 = arith.constant 0 : i32
    %2 = arith.maxsi %1, %c0_i32 : i32
    %c0_i32_0 = arith.constant 0 : i32
    %c0_i32_1 = arith.constant 0 : i32
    return %2, %c0_i32_0 : i32, i32
  }
  func.func @transform_5(%arg0: i32) -> (i32, i32) {
    %c8_i32 = arith.constant 8 : i32
    %0 = arith.muli %arg0, %c8_i32 : i32
    %c8_i32_0 = arith.constant 8 : i32
    %1 = arith.addi %0, %c8_i32_0 : i32
    %c63_i32 = arith.constant 63 : i32
    %2 = arith.minsi %1, %c63_i32 : i32
    %c0_i32 = arith.constant 0 : i32
    %c0_i32_1 = arith.constant 0 : i32
    return %2, %c0_i32 : i32, i32
  }
  func.func @transform_6(%arg0: i32) -> (i32, i32) {
    %c0_i32 = arith.constant 0 : i32
    %c0_i32_0 = arith.constant 0 : i32
    %c0_i32_1 = arith.constant 0 : i32
    return %c0_i32, %c0_i32_0 : i32, i32
  }
  func.func @transform_7(%arg0: i32) -> (i32, i32) {
    %c0_i32 = arith.constant 0 : i32
    %c0_i32_0 = arith.constant 0 : i32
    %c0_i32_1 = arith.constant 0 : i32
    return %c0_i32, %c0_i32_0 : i32, i32
  }
  func.func @transform_8(%arg0: i32) -> (i32, i32, i32) {
    %c0_i32 = arith.constant 0 : i32
    %c0_i32_0 = arith.constant 0 : i32
    %c0_i32_1 = arith.constant 0 : i32
    %c0_i32_2 = arith.constant 0 : i32
    return %c0_i32, %c0_i32_0, %c0_i32_1 : i32, i32, i32
  }
  func.func @transform_9(%arg0: i32) -> (i32, i32) {
    %c0_i32 = arith.constant 0 : i32
    %c0_i32_0 = arith.constant 0 : i32
    return %arg0, %c0_i32 : i32, i32
  }
  func.func @transform_10(%arg0: i32) -> (i32, i32, i32) {
    %c0_i32 = arith.constant 0 : i32
    %c0_i32_0 = arith.constant 0 : i32
    %c0_i32_1 = arith.constant 0 : i32
    return %arg0, %c0_i32, %c0_i32_0 : i32, i32, i32
  }
}

</mosaic_0001>

<llo_original>
// kernel: tpu_custom_call.1
$region0: #{tpu_custom_call.1}
  #allocation0 [shape = 'u32[]', space=smem, size = 0x4, offset = 0x4, fixed_abs, tag = 'smem constant byte address 0x4 - core index']
  #allocation1 [shape = 'u32[144,128]{1,0:T(1,128)}', space=vmem, size = 0x12000, scoped, tag = 'internal scratch']
  #allocation2 [shape = 'bf16[640,128]{1,0:T(16,128)(2,1)}', space=vmem, size = 0x28000, scoped, tag = 'scratch operand']
  #allocation3 [shape = 'f32[544,128]{1,0:T(8,128)}', space=vmem, size = 0x44000, scoped, tag = 'scratch operand']
  #allocation4 [shape = 'f32[544,128]{1,0:T(8,128)}', space=vmem, size = 0x44000, scoped, tag = 'scratch operand']
  #allocation5 [shape = 'f32[544,128]{1,0:T(8,128)}', space=vmem, size = 0x44000, scoped, tag = 'scratch operand']
  %s0 = inlined_call_operand.vmem [shape: bf16[4096,128], index: 0, kind: input, shape index: {}]
  %s1 = inlined_call_operand.vmem [shape: bf16[4096,128], index: 1, kind: input, shape index: {}]
  %s2 = inlined_call_operand.vmem [shape: bf16[4096,128], index: 2, kind: input, shape index: {}]
  %s3 = inlined_call_operand.vmem [shape: f32[4096,1], index: 3, kind: input, shape index: {}]
  %s4 = inlined_call_operand.vmem [shape: f32[4096,1], index: 4, kind: input, shape index: {}]
  %s5 = inlined_call_operand.vmem [shape: f32[4096,1], index: 5, kind: input, shape index: {}]
  %s6 = inlined_call_operand.vmem [shape: f32[1,128], index: 6, kind: input, shape index: {}]
  %s7 = inlined_call_operand.vmem [shape: f32[1,128], index: 7, kind: input, shape index: {}]
  %s8 = inlined_call_operand.vmem [shape: bf16[9,128,128], index: 8, kind: input, shape index: {}]
  %s9 = inlined_call_operand.hbm [shape: bf16[4096,128], index: 9, kind: output, shape index: {0}]
  %s10 = inlined_call_operand.hbm [shape: f32[8,2,128], index: 10, kind: output, shape index: {1}]
  %11 = xla_tuple %s9, %s10
  %s12 = sld [smem:[#allocation0]]
  $region77: #{tpu_custom_call.1} parent=0
    _
  %s14 = ssub.s32 1, %s12
  %s15 = scalar_select 0, %s14, %s12
  $region1: #{tpu_custom_call.1} parent=0
    #allocation6 [shape = 'u8[262144]{0}', space=vmem, size = 0x40000, scoped, tag = 'output window, operand 0']
    #allocation7 [shape = 's32[2]{0}', space=sflag, size = 0x8, scoped, tag = 'scoped memory for tpu_custom_call.1']
    #allocation8 [shape = 'u8[2048]{0}', space=vmem, size = 0x800, scoped, tag = 'output window, operand 1']
    #allocation9 [shape = 's32[2]{0}', space=sflag, size = 0x8, scoped, tag = 'scoped memory for tpu_custom_call.1']
    %16 = vsyncpa [#allocation7], 0
    %s17 = scalar_lea.sflag [#allocation7], 1
    %18 = vsyncpa %s17, 0
    %19 = vsyncpa [#allocation9], 0
    %s20 = scalar_lea.sflag [#allocation9], 1
    %21 = vsyncpa %s20, 0
    loop: start=0, step=1, limit=10
    $region2: #{tpu_custom_call.1} parent=1 // loop_pre_header
      _
    $region3: #{tpu_custom_call.1} parent=1 // loop_header
      %s23 = sphi 0, %s27
      %p24 = scmp.ge.s32.totalorder %s23, 10
      %s33 = sphi 0, %s35
      %s36 = sphi 0, %s33
      %s37 = sphi 0, %s36
      %s53 = sphi 0, %s37
      %s67 = sphi 0, %s69
      %s70 = sphi 0, %s67
      %s71 = sphi 0, %s70
      %s87 = sphi 0, %s71
      %s101 = sphi 0, %s103
      %s104 = sphi 0, %s101
      %s105 = sphi 0, %s104
      %s121 = sphi 0, %s105
      %s127 = sphi 0, %s129
      %s130 = sphi 0, %s127
      %s131 = sphi 0, %s130
      %s147 = sphi 0, %s131
      %s161 = sphi 0, %s163
      %s164 = sphi 0, %s161
      %s165 = sphi 0, %s164
      %s181 = sphi 0, %s165
      %s195 = sphi 0, %s197
      %s198 = sphi 0, %s195
      %s199 = sphi 0, %s198
      %s215 = sphi 0, %s199
      %s219 = sphi 0, %s219
      %s221 = sphi 0, %s219
      %s222 = sphi 0, %s221
      %s236 = sphi 0, %s222
      %s240 = sphi 0, %s240
      %s242 = sphi 0, %s240
      %s243 = sphi 0, %s242
      %s257 = sphi 0, %s243
      %s261 = sphi 0, %s261
      %s263 = sphi 0, %s261
      %s264 = sphi 0, %s263
      %s278 = sphi 0, %s264
      %s284 = sphi 0, %s286
      %s287 = sphi 0, %s284
      %s288 = sphi 0, %s287
      %s304 = sphi 0, %s288
      %s310 = sphi 0, %s312
      %s313 = sphi 0, %s310
      %s314 = sphi 0, %s313
      %s330 = sphi 0, %s314
    $region4: #{tpu_custom_call.1} parent=1 // loop_header_branch
      %26 = sbr.rel (%p24) target = $region8
    $region5: #{tpu_custom_call.1} parent=1 // loop_body
      %s28 = ssub.s32 %s23, 1
      %s29 = ssub.s32 %s23, 2
      %s30 = sadd.s32 %s23, 1
      %s31 = ssub.s32 %s23, %s30
      %p32 = scmp.eq.s32.totalorder %s31, 0
      %s34 = sadd.s32 %s33, 1
      %s35 = scalar_select %p32, %s33, %s34
      %p38 = pneg %p32
      %p39 = scmp.eq.s32.totalorder %s23, 7
      %p40 = por %p38, %p39
      %p41 = scmp.ne.s32.totalorder %s33, %s36
      %p42 = scmp.eq.s32.totalorder %s23, 0
      %p43 = por %p41, %p42
      %p44 = scmp.ne.s32.totalorder %s33, %s36
      %p45 = scmp.eq.s32.totalorder %s28, 7
      %p46 = por %p44, %p45
      %p47 = scmp.ne.s32.totalorder %s36, %s37
      %p48 = scmp.eq.s32.totalorder %s28, 0
      %p49 = por %p47, %p48
      %p50 = scmp.ne.s32.totalorder %s36, %s37
      %p51 = scmp.eq.s32.totalorder %s29, 7
      %p52 = por %p50, %p51
      %p54 = scmp.ne.s32.totalorder %s37, %s53
      %p55 = scmp.eq.s32.totalorder %s29, 0
      %p56 = por %p54, %p55
      %s57 = smul.u32 %s23, 8
      %s58 = ssub.s32 %s57, 1
      %p59 = scmp.gt.s32.totalorder %s58, 0
      %s60 = scalar_select %p59, %s58, 0
      %s61 = smul.u32 %s30, 8
      %s62 = ssub.s32 %s61, 1
      %p63 = scmp.gt.s32.totalorder %s62, 0
      %s64 = scalar_select %p63, %s62, 0
      %s65 = ssub.s32 %s60, %s64
      %p66 = scmp.eq.s32.totalorder %s65, 0
      %s68 = sadd.s32 %s67, 1
      %s69 = scalar_select %p66, %s67, %s68
      %p72 = pneg %p66
      %p73 = scmp.eq.s32.totalorder %s23, 7
      %p74 = por %p72, %p73
      %p75 = scmp.ne.s32.totalorder %s67, %s70
      %p76 = scmp.eq.s32.totalorder %s23, 0
      %p77 = por %p75, %p76
      %p78 = scmp.ne.s32.totalorder %s67, %s70
      %p79 = scmp.eq.s32.totalorder %s28, 7
      %p80 = por %p78, %p79
      %p81 = scmp.ne.s32.totalorder %s70, %s71
      %p82 = scmp.eq.s32.totalorder %s28, 0
      %p83 = por %p81, %p82
      %p84 = scmp.ne.s32.totalorder %s70, %s71
      %p85 = scmp.eq.s32.totalorder %s29, 7
      %p86 = por %p84, %p85
      %p88 = scmp.ne.s32.totalorder %s71, %s87
      %p89 = scmp.eq.s32.totalorder %s29, 0
      %p90 = por %p88, %p89
      %s91 = smul.u32 %s23, 8
      %s92 = sadd.s32 %s91, 8
      %p93 = scmp.lt.s32.totalorder %s92, 63
      %s94 = scalar_select %p93, %s92, 63
      %s95 = smul.u32 %s30, 8
      %s96 = sadd.s32 %s95, 8
      %p97 = scmp.lt.s32.totalorder %s96, 63
      %s98 = scalar_select %p97, %s96, 63
      %s99 = ssub.s32 %s94, %s98
      %p100 = scmp.eq.s32.totalorder %s99, 0
      %s102 = sadd.s32 %s101, 1
      %s103 = scalar_select %p100, %s101, %s102
      %p106 = pneg %p100
      %p107 = scmp.eq.s32.totalorder %s23, 7
      %p108 = por %p106, %p107
      %p109 = scmp.ne.s32.totalorder %s101, %s104
      %p110 = scmp.eq.s32.totalorder %s23, 0
      %p111 = por %p109, %p110
      %p112 = scmp.ne.s32.totalorder %s101, %s104
      %p113 = scmp.eq.s32.totalorder %s28, 7
      %p114 = por %p112, %p113
      %p115 = scmp.ne.s32.totalorder %s104, %s105
      %p116 = scmp.eq.s32.totalorder %s28, 0
      %p117 = por %p115, %p116
      %p118 = scmp.ne.s32.totalorder %s104, %s105
      %p119 = scmp.eq.s32.totalorder %s29, 7
      %p120 = por %p118, %p119
      %p122 = scmp.ne.s32.totalorder %s105, %s121
      %p123 = scmp.eq.s32.totalorder %s29, 0
      %p124 = por %p122, %p123
      %s125 = ssub.s32 %s23, %s30
      %p126 = scmp.eq.s32.totalorder %s125, 0
      %s128 = sadd.s32 %s127, 1
      %s129 = scalar_select %p126, %s127, %s128
      %p132 = pneg %p126
      %p133 = scmp.eq.s32.totalorder %s23, 7
      %p134 = por %p132, %p133
      %p135 = scmp.ne.s32.totalorder %s127, %s130
      %p136 = scmp.eq.s32.totalorder %s23, 0
      %p137 = por %p135, %p136
      %p138 = scmp.ne.s32.totalorder %s127, %s130
      %p139 = scmp.eq.s32.totalorder %s28, 7
      %p140 = por %p138, %p139
      %p141 = scmp.ne.s32.totalorder %s130, %s131
      %p142 = scmp.eq.s32.totalorder %s28, 0
      %p143 = por %p141, %p142
      %p144 = scmp.ne.s32.totalorder %s130, %s131
      %p145 = scmp.eq.s32.totalorder %s29, 7
      %p146 = por %p144, %p145
      %p148 = scmp.ne.s32.totalorder %s131, %s147
      %p149 = scmp.eq.s32.totalorder %s29, 0
      %p150 = por %p148, %p149
      %s151 = smul.u32 %s23, 8
      %s152 = ssub.s32 %s151, 1
      %p153 = scmp.gt.s32.totalorder %s152, 0
      %s154 = scalar_select %p153, %s152, 0
      %s155 = smul.u32 %s30, 8
      %s156 = ssub.s32 %s155, 1
      %p157 = scmp.gt.s32.totalorder %s156, 0
      %s158 = scalar_select %p157, %s156, 0
      %s159 = ssub.s32 %s154, %s158
      %p160 = scmp.eq.s32.totalorder %s159, 0
      %s162 = sadd.s32 %s161, 1
      %s163 = scalar_select %p160, %s161, %s162
      %p166 = pneg %p160
      %p167 = scmp.eq.s32.totalorder %s23, 7
      %p168 = por %p166, %p167
      %p169 = scmp.ne.s32.totalorder %s161, %s164
      %p170 = scmp.eq.s32.totalorder %s23, 0
      %p171 = por %p169, %p170
      %p172 = scmp.ne.s32.totalorder %s161, %s164
      %p173 = scmp.eq.s32.totalorder %s28, 7
      %p174 = por %p172, %p173
      %p175 = scmp.ne.s32.totalorder %s164, %s165
      %p176 = scmp.eq.s32.totalorder %s28, 0
      %p177 = por %p175, %p176
      %p178 = scmp.ne.s32.totalorder %s164, %s165
      %p179 = scmp.eq.s32.totalorder %s29, 7
      %p180 = por %p178, %p179
      %p182 = scmp.ne.s32.totalorder %s165, %s181
      %p183 = scmp.eq.s32.totalorder %s29, 0
      %p184 = por %p182, %p183
      %s185 = smul.u32 %s23, 8
      %s186 = sadd.s32 %s185, 8
      %p187 = scmp.lt.s32.totalorder %s186, 63
      %s188 = scalar_select %p187, %s186, 63
      %s189 = smul.u32 %s30, 8
      %s190 = sadd.s32 %s189, 8
      %p191 = scmp.lt.s32.totalorder %s190, 63
      %s192 = scalar_select %p191, %s190, 63
      %s193 = ssub.s32 %s188, %s192
      %p194 = scmp.eq.s32.totalorder %s193, 0
      %s196 = sadd.s32 %s195, 1
      %s197 = scalar_select %p194, %s195, %s196
      %p200 = pneg %p194
      %p201 = scmp.eq.s32.totalorder %s23, 7
      %p202 = por %p200, %p201
      %p203 = scmp.ne.s32.totalorder %s195, %s198
      %p204 = scmp.eq.s32.totalorder %s23, 0
      %p205 = por %p203, %p204
      %p206 = scmp.ne.s32.totalorder %s195, %s198
      %p207 = scmp.eq.s32.totalorder %s28, 7
      %p208 = por %p206, %p207
      %p209 = scmp.ne.s32.totalorder %s198, %s199
      %p210 = scmp.eq.s32.totalorder %s28, 0
      %p211 = por %p209, %p210
      %p212 = scmp.ne.s32.totalorder %s198, %s199
      %p213 = scmp.eq.s32.totalorder %s29, 7
      %p214 = por %p212, %p213
      %p216 = scmp.ne.s32.totalorder %s199, %s215
      %p217 = scmp.eq.s32.totalorder %s29, 0
      %p218 = por %p216, %p217
      %s220 = sadd.s32 %s219, 1
      %p223 = scmp.eq.s32.totalorder %s23, 7
      %p224 = scmp.ne.s32.totalorder %s219, %s221
      %p225 = scmp.eq.s32.totalorder %s23, 0
      %p226 = por %p224, %p225
      %p227 = scmp.ne.s32.totalorder %s219, %s221
      %p228 = scmp.eq.s32.totalorder %s28, 7
      %p229 = por %p227, %p228
      %p230 = scmp.ne.s32.totalorder %s221, %s222
      %p231 = scmp.eq.s32.totalorder %s28, 0
      %p232 = por %p230, %p231
      %p233 = scmp.ne.s32.totalorder %s221, %s222
      %p234 = scmp.eq.s32.totalorder %s29, 7
      %p235 = por %p233, %p234
      %p237 = scmp.ne.s32.totalorder %s222, %s236
      %p238 = scmp.eq.s32.totalorder %s29, 0
      %p239 = por %p237, %p238
      %s241 = sadd.s32 %s240, 1
      %p244 = scmp.eq.s32.totalorder %s23, 7
      %p245 = scmp.ne.s32.totalorder %s240, %s242
      %p246 = scmp.eq.s32.totalorder %s23, 0
      %p247 = por %p245, %p246
      %p248 = scmp.ne.s32.totalorder %s240, %s242
      %p249 = scmp.eq.s32.totalorder %s28, 7
      %p250 = por %p248, %p249
      %p251 = scmp.ne.s32.totalorder %s242, %s243
      %p252 = scmp.eq.s32.totalorder %s28, 0
      %p253 = por %p251, %p252
      %p254 = scmp.ne.s32.totalorder %s242, %s243
      %p255 = scmp.eq.s32.totalorder %s29, 7
      %p256 = por %p254, %p255
      %p258 = scmp.ne.s32.totalorder %s243, %s257
      %p259 = scmp.eq.s32.totalorder %s29, 0
      %p260 = por %p258, %p259
      %s262 = sadd.s32 %s261, 1
      %p265 = scmp.eq.s32.totalorder %s23, 7
      %p266 = scmp.ne.s32.totalorder %s261, %s263
      %p267 = scmp.eq.s32.totalorder %s23, 0
      %p268 = por %p266, %p267
      %p269 = scmp.ne.s32.totalorder %s261, %s263
      %p270 = scmp.eq.s32.totalorder %s28, 7
      %p271 = por %p269, %p270
      %p272 = scmp.ne.s32.totalorder %s263, %s264
      %p273 = scmp.eq.s32.totalorder %s28, 0
      %p274 = por %p272, %p273
      %p275 = scmp.ne.s32.totalorder %s263, %s264
      %p276 = scmp.eq.s32.totalorder %s29, 7
      %p277 = por %p275, %p276
      %p279 = scmp.ne.s32.totalorder %s264, %s278
      %p280 = scmp.eq.s32.totalorder %s29, 0
      %p281 = por %p279, %p280
      %s282 = ssub.s32 %s23, %s30
      %p283 = scmp.eq.s32.totalorder %s282, 0
      %s285 = sadd.s32 %s284, 1
      %s286 = scalar_select %p283, %s284, %s285
      %p289 = pneg %p283
      %p290 = scmp.eq.s32.totalorder %s23, 7
      %p291 = por %p289, %p290
      %p292 = scmp.ne.s32.totalorder %s284, %s287
      %p293 = scmp.eq.s32.totalorder %s23, 0
      %p294 = por %p292, %p293
      %p295 = scmp.ne.s32.totalorder %s284, %s287
      %p296 = scmp.eq.s32.totalorder %s28, 7
      %p297 = por %p295, %p296
      %p298 = scmp.ne.s32.totalorder %s287, %s288
      %p299 = scmp.eq.s32.totalorder %s28, 0
      %p300 = por %p298, %p299
      %p301 = scmp.ne.s32.totalorder %s287, %s288
      %p302 = scmp.eq.s32.totalorder %s29, 7
      %p303 = por %p301, %p302
      %p305 = scmp.ne.s32.totalorder %s288, %s304
      %p306 = scmp.eq.s32.totalorder %s29, 0
      %p307 = por %p305, %p306
      %s308 = ssub.s32 %s23, %s30
      %p309 = scmp.eq.s32.totalorder %s308, 0
      %s311 = sadd.s32 %s310, 1
      %s312 = scalar_select %p309, %s310, %s311
      %p315 = pneg %p309
      %p316 = scmp.eq.s32.totalorder %s23, 7
      %p317 = por %p315, %p316
      %p318 = scmp.ne.s32.totalorder %s310, %s313
      %p319 = scmp.eq.s32.totalorder %s23, 0
      %p320 = por %p318, %p319
      %p321 = scmp.ne.s32.totalorder %s310, %s313
      %p322 = scmp.eq.s32.totalorder %s28, 7
      %p323 = por %p321, %p322
      %p324 = scmp.ne.s32.totalorder %s313, %s314
      %p325 = scmp.eq.s32.totalorder %s28, 0
      %p326 = por %p324, %p325
      %p327 = scmp.ne.s32.totalorder %s313, %s314
      %p328 = scmp.eq.s32.totalorder %s29, 7
      %p329 = por %p327, %p328
      %p331 = scmp.ne.s32.totalorder %s314, %s330
      %p332 = scmp.eq.s32.totalorder %s29, 0
      %p333 = por %p331, %p332
      %p334 = scmp.le.s32.totalorder 1, %s23
      %p335 = scmp.lt.s32.totalorder %s23, 9
      %p336 = pnand %p334, %p335
      %p337 = pneg %p336
      // Predicated region
      $region9: #{tpu_custom_call.1} parent=5 // pred_check
        _
      $region10: #{tpu_custom_call.1} parent=5 // pred_check_branch
        %339 = sbr.rel (%p336) target = $region12
      $region11: #{tpu_custom_call.1} parent=5 // pred_region
        %s340 = ssub.s32 %s23, 1
        // Predicated region
        $region13: #{tpu_custom_call.1} parent=11 // pred_check
          %p341 = pneg %p232
        $region14: #{tpu_custom_call.1} parent=11 // pred_check_branch
          %343 = sbr.rel (%p341) target = $region16
        $region15: #{tpu_custom_call.1} parent=11 // pred_region
          _
        $region16: #{tpu_custom_call.1} parent=11 // pred_fallthru
          _
        // Predicated region
        $region17: #{tpu_custom_call.1} parent=11 // pred_check
          %p344 = pneg %p253
        $region18: #{tpu_custom_call.1} parent=11 // pred_check_branch
          %346 = sbr.rel (%p344) target = $region20
        $region19: #{tpu_custom_call.1} parent=11 // pred_region
          _
        $region20: #{tpu_custom_call.1} parent=11 // pred_fallthru
          _
        // Predicated region
        $region21: #{tpu_custom_call.1} parent=11 // pred_check
          %p347 = pneg %p274
        $region22: #{tpu_custom_call.1} parent=11 // pred_check_branch
          %349 = sbr.rel (%p347) target = $region24
        $region23: #{tpu_custom_call.1} parent=11 // pred_region
          _
        $region24: #{tpu_custom_call.1} parent=11 // pred_fallthru
          _
      $region12: #{tpu_custom_call.1} parent=5 // pred_fallthru
        _
      %p350 = scmp.lt.s32.totalorder %s23, 8
      // Predicated region
      $region25: #{tpu_custom_call.1} parent=5 // pred_check
        %p351 = pneg %p350
      $region26: #{tpu_custom_call.1} parent=5 // pred_check_branch
        %353 = sbr.rel (%p351) target = $region28
      $region27: #{tpu_custom_call.1} parent=5 // pred_region
        // Predicated region
        $region29: #{tpu_custom_call.1} parent=27 // pred_check
          %p354 = pneg %p43
        $region30: #{tpu_custom_call.1} parent=27 // pred_check_branch
          %356 = sbr.rel (%p354) target = $region32
        $region31: #{tpu_custom_call.1} parent=27 // pred_region
          %s357 = smul.u32 64, %s23
          %p358 = scmp.lt.s32.totalorder %s357, 511
          %s359 = scalar_select %p358, %s357, 511
          %s360 = smul.addr %s359, 4
          %s361 = scalar_lea.vmem %s0, %s360
          %s362 = smul.u32 64, %s23
        $region32: #{tpu_custom_call.1} parent=27 // pred_fallthru
          _
        // Predicated region
        $region33: #{tpu_custom_call.1} parent=27 // pred_check
          %p363 = pneg %p77
        $region34: #{tpu_custom_call.1} parent=27 // pred_check_branch
          %365 = sbr.rel (%p363) target = $region36
        $region35: #{tpu_custom_call.1} parent=27 // pred_region
          %s366 = smul.u32 %s23, 8
          %s367 = ssub.s32 %s366, 1
          %p368 = scmp.gt.s32.totalorder %s367, 0
          %s369 = scalar_select %p368, %s367, 0
          %s370 = smul.u32 8, %s369
          %p371 = scmp.lt.s32.totalorder %s370, 511
          %s372 = scalar_select %p371, %s370, 511
          %s373 = smul.addr %s372, 4
          %s374 = scalar_lea.vmem %s1, %s373
          %s375 = smul.u32 %s23, 8
          %s376 = ssub.s32 %s375, 1
          %p377 = scmp.gt.s32.totalorder %s376, 0
          %s378 = scalar_select %p377, %s376, 0
          %s379 = smul.u32 8, %s378
        $region36: #{tpu_custom_call.1} parent=27 // pred_fallthru
          _
        // Predicated region
        $region37: #{tpu_custom_call.1} parent=27 // pred_check
          %p380 = pneg %p111
        $region38: #{tpu_custom_call.1} parent=27 // pred_check_branch
          %382 = sbr.rel (%p380) target = $region40
        $region39: #{tpu_custom_call.1} parent=27 // pred_region
          %s383 = smul.u32 %s23, 8
          %s384 = sadd.s32 %s383, 8
          %p385 = scmp.lt.s32.totalorder %s384, 63
          %s386 = scalar_select %p385, %s384, 63
          %s387 = smul.u32 8, %s386
          %p388 = scmp.lt.s32.totalorder %s387, 511
          %s389 = scalar_select %p388, %s387, 511
          %s390 = smul.addr %s389, 4
          %s391 = scalar_lea.vmem %s2, %s390
          %s392 = smul.u32 %s23, 8
          %s393 = sadd.s32 %s392, 8
          %p394 = scmp.lt.s32.totalorder %s393, 63
          %s395 = scalar_select %p394, %s393, 63
          %s396 = smul.u32 8, %s395
        $region40: #{tpu_custom_call.1} parent=27 // pred_fallthru
          _
        // Predicated region
        $region41: #{tpu_custom_call.1} parent=27 // pred_check
          %p397 = pneg %p137
        $region42: #{tpu_custom_call.1} parent=27 // pred_check_branch
          %399 = sbr.rel (%p397) target = $region44
        $region43: #{tpu_custom_call.1} parent=27 // pred_region
          %s400 = smul.u32 64, %s23
          %p401 = scmp.lt.s32.totalorder %s400, 511
          %s402 = scalar_select %p401, %s400, 511
          %s403 = smul.addr %s402, 8
          %s404 = scalar_lea.vmem %s3, %s403
          %s405 = smul.u32 64, %s23
        $region44: #{tpu_custom_call.1} parent=27 // pred_fallthru
          _
        // Predicated region
        $region45: #{tpu_custom_call.1} parent=27 // pred_check
          %p406 = pneg %p171
        $region46: #{tpu_custom_call.1} parent=27 // pred_check_branch
          %408 = sbr.rel (%p406) target = $region48
        $region47: #{tpu_custom_call.1} parent=27 // pred_region
          %s409 = smul.u32 %s23, 8
          %s410 = ssub.s32 %s409, 1
          %p411 = scmp.gt.s32.totalorder %s410, 0
          %s412 = scalar_select %p411, %s410, 0
          %s413 = smul.u32 8, %s412
          %p414 = scmp.lt.s32.totalorder %s413, 511
          %s415 = scalar_select %p414, %s413, 511
          %s416 = smul.addr %s415, 8
          %s417 = scalar_lea.vmem %s4, %s416
          %s418 = smul.u32 %s23, 8
          %s419 = ssub.s32 %s418, 1
          %p420 = scmp.gt.s32.totalorder %s419, 0
          %s421 = scalar_select %p420, %s419, 0
          %s422 = smul.u32 8, %s421
        $region48: #{tpu_custom_call.1} parent=27 // pred_fallthru
          _
        // Predicated region
        $region49: #{tpu_custom_call.1} parent=27 // pred_check
          %p423 = pneg %p205
        $region50: #{tpu_custom_call.1} parent=27 // pred_check_branch
          %425 = sbr.rel (%p423) target = $region52
        $region51: #{tpu_custom_call.1} parent=27 // pred_region
          %s426 = smul.u32 %s23, 8
          %s427 = sadd.s32 %s426, 8
          %p428 = scmp.lt.s32.totalorder %s427, 63
          %s429 = scalar_select %p428, %s427, 63
          %s430 = smul.u32 8, %s429
          %p431 = scmp.lt.s32.totalorder %s430, 511
          %s432 = scalar_select %p431, %s430, 511
          %s433 = smul.addr %s432, 8
          %s434 = scalar_lea.vmem %s5, %s433
          %s435 = smul.u32 %s23, 8
          %s436 = sadd.s32 %s435, 8
          %p437 = scmp.lt.s32.totalorder %s436, 63
          %s438 = scalar_select %p437, %s436, 63
          %s439 = smul.u32 8, %s438
        $region52: #{tpu_custom_call.1} parent=27 // pred_fallthru
          _
      $region28: #{tpu_custom_call.1} parent=5 // pred_fallthru
        _
      %p440 = scmp.le.s32.totalorder 1, %s23
      %p441 = scmp.lt.s32.totalorder %s23, 9
      %p442 = pnand %p440, %p441
      %p443 = pneg %p442
      // Predicated region
      $region53: #{tpu_custom_call.1} parent=5 // pred_check
        _
      $region54: #{tpu_custom_call.1} parent=5 // pred_check_branch
        %445 = sbr.rel (%p442) target = $region56
      $region55: #{tpu_custom_call.1} parent=5 // pred_region
        %s446 = ssub.s32 %s23, 1
        %s447 = smul.u32 64, %s28
        %p448 = scmp.lt.s32.totalorder %s447, 511
        %s449 = scalar_select %p448, %s447, 511
        %s450 = smul.addr %s449, 4
        %s451 = scalar_lea.vmem %s0, %s450
        %p452 = pneg %p49
        %p453 = pneg %p46
        %s454 = smul.u32 %s28, 8
        %s455 = ssub.s32 %s454, 1
        %p456 = scmp.gt.s32.totalorder %s455, 0
        %s457 = scalar_select %p456, %s455, 0
        %s458 = smul.u32 8, %s457
        %p459 = scmp.lt.s32.totalorder %s458, 511
        %s460 = scalar_select %p459, %s458, 511
        %s461 = smul.addr %s460, 4
        %s462 = scalar_lea.vmem %s1, %s461
        %p463 = pneg %p83
        %p464 = pneg %p80
        %s465 = smul.u32 %s28, 8
        %s466 = sadd.s32 %s465, 8
        %p467 = scmp.lt.s32.totalorder %s466, 63
        %s468 = scalar_select %p467, %s466, 63
        %s469 = smul.u32 8, %s468
        %p470 = scmp.lt.s32.totalorder %s469, 511
        %s471 = scalar_select %p470, %s469, 511
        %s472 = smul.addr %s471, 4
        %s473 = scalar_lea.vmem %s2, %s472
        %p474 = pneg %p117
        %p475 = pneg %p114
        %s476 = smul.u32 64, %s28
        %p477 = scmp.lt.s32.totalorder %s476, 511
        %s478 = scalar_select %p477, %s476, 511
        %s479 = smul.addr %s478, 8
        %s480 = scalar_lea.vmem %s3, %s479
        %p481 = pneg %p143
        %p482 = pneg %p140
        %s483 = smul.u32 %s28, 8
        %s484 = ssub.s32 %s483, 1
        %p485 = scmp.gt.s32.totalorder %s484, 0
        %s486 = scalar_select %p485, %s484, 0
        %s487 = smul.u32 8, %s486
        %p488 = scmp.lt.s32.totalorder %s487, 511
        %s489 = scalar_select %p488, %s487, 511
        %s490 = smul.addr %s489, 8
        %s491 = scalar_lea.vmem %s4, %s490
        %p492 = pneg %p177
        %p493 = pneg %p174
        %s494 = smul.u32 %s28, 8
        %s495 = sadd.s32 %s494, 8
        %p496 = scmp.lt.s32.totalorder %s495, 63
        %s497 = scalar_select %p496, %s495, 63
        %s498 = smul.u32 8, %s497
        %p499 = scmp.lt.s32.totalorder %s498, 511
        %s500 = scalar_select %p499, %s498, 511
        %s501 = smul.addr %s500, 8
        %s502 = scalar_lea.vmem %s5, %s501
        %p503 = pneg %p211
        %p504 = pneg %p208
        %p505 = pneg %p232
        %p506 = pneg %p229
        %p507 = pneg %p253
        %p508 = pneg %p250
        %p509 = pneg %p274
        %p510 = pneg %p271
        %p511 = pneg %p300
        %p512 = pneg %p297
        %s513 = sand.u32 %s287, 1
        %s514 = scalar_lea.sflag [#allocation7], %s513
        %s515 = sand.u32 %s287, 1
        %s516 = smul.addr %s515, 256
        %s517 = scalar_lea.vmem [#allocation6], %s516
        %p518 = pneg %p326
        %p519 = pneg %p323
        %s520 = sand.u32 %s313, 1
        %s521 = scalar_lea.sflag [#allocation9], %s520
        %s522 = sand.u32 %s313, 1
        %s523 = smul.addr %s522, 2
        %s524 = scalar_lea.vmem [#allocation8], %s523
        %s525 = smul.u32 64, %s28
        %p526 = scmp.lt.s32.totalorder %s525, 511
        %s527 = scalar_select %p526, %s525, 511
        %s528 = smul.addr %s527, 4
        %s529 = scalar_lea.vmem %s0, %s528
        %s530 = smul.u32 64, %s28
        %s531 = smul.u32 %s28, 8
        %s532 = ssub.s32 %s531, 1
        %p533 = scmp.gt.s32.totalorder %s532, 0
        %s534 = scalar_select %p533, %s532, 0
        %s535 = smul.u32 8, %s534
        %p536 = scmp.lt.s32.totalorder %s535, 511
        %s537 = scalar_select %p536, %s535, 511
        %s538 = smul.addr %s537, 4
        %s539 = scalar_lea.vmem %s1, %s538
        %s540 = smul.u32 %s28, 8
        %s541 = ssub.s32 %s540, 1
        %p542 = scmp.gt.s32.totalorder %s541, 0
        %s543 = scalar_select %p542, %s541, 0
        %s544 = smul.u32 8, %s543
        %s545 = smul.u32 %s28, 8
        %s546 = sadd.s32 %s545, 8
        %p547 = scmp.lt.s32.totalorder %s546, 63
        %s548 = scalar_select %p547, %s546, 63
        %s549 = smul.u32 8, %s548
        %p550 = scmp.lt.s32.totalorder %s549, 511
        %s551 = scalar_select %p550, %s549, 511
        %s552 = smul.addr %s551, 4
        %s553 = scalar_lea.vmem %s2, %s552
        %s554 = smul.u32 %s28, 8
        %s555 = sadd.s32 %s554, 8
        %p556 = scmp.lt.s32.totalorder %s555, 63
        %s557 = scalar_select %p556, %s555, 63
        %s558 = smul.u32 8, %s557
        %s559 = smul.u32 64, %s28
        %p560 = scmp.lt.s32.totalorder %s559, 511
        %s561 = scalar_select %p560, %s559, 511
        %s562 = smul.addr %s561, 8
        %s563 = scalar_lea.vmem %s3, %s562
        %s564 = smul.u32 64, %s28
        %s565 = smul.u32 %s28, 8
        %s566 = ssub.s32 %s565, 1
        %p567 = scmp.gt.s32.totalorder %s566, 0
        %s568 = scalar_select %p567, %s566, 0
        %s569 = smul.u32 8, %s568
        %p570 = scmp.lt.s32.totalorder %s569, 511
        %s571 = scalar_select %p570, %s569, 511
        %s572 = smul.addr %s571, 8
        %s573 = scalar_lea.vmem %s4, %s572
        %s574 = smul.u32 %s28, 8
        %s575 = ssub.s32 %s574, 1
        %p576 = scmp.gt.s32.totalorder %s575, 0
        %s577 = scalar_select %p576, %s575, 0
        %s578 = smul.u32 8, %s577
        %s579 = smul.u32 %s28, 8
        %s580 = sadd.s32 %s579, 8
        %p581 = scmp.lt.s32.totalorder %s580, 63
        %s582 = scalar_select %p581, %s580, 63
        %s583 = smul.u32 8, %s582
        %p584 = scmp.lt.s32.totalorder %s583, 511
        %s585 = scalar_select %p584, %s583, 511
        %s586 = smul.addr %s585, 8
        %s587 = scalar_lea.vmem %s5, %s586
        %s588 = smul.u32 %s28, 8
        %s589 = sadd.s32 %s588, 8
        %p590 = scmp.lt.s32.totalorder %s589, 63
        %s591 = scalar_select %p590, %s589, 63
        %s592 = smul.u32 8, %s591
        %s593 = smul.u32 64, %s28
        %v595 = vld [vmem:[%s539] sm:$0xf]
        %v596 = vld [vmem:[%s539 + $0x4] sm:$0xf]
        %v597 = vld [vmem:[%s539 + $0x8] sm:$0xf]
        %v598 = vld [vmem:[%s539 + $0xc] sm:$0xf]
        %v599 = vld [vmem:[%s539 + $0x10] sm:$0xf]
        %v600 = vld [vmem:[%s539 + $0x14] sm:$0xf]
        %v601 = vld [vmem:[%s539 + $0x18] sm:$0xf]
        %v602 = vld [vmem:[%s539 + $0x1c] sm:$0xf]
        %v611 = vunpack.c.l.b16 %v595
        %v612 = vunpack.c.l.b16 %v596
        %v613 = vunpack.c.l.b16 %v597
        %v614 = vunpack.c.l.b16 %v598
        %v615 = vunpack.c.l.b16 %v599
        %v616 = vunpack.c.l.b16 %v600
        %v617 = vunpack.c.l.b16 %v601
        %v618 = vunpack.c.l.b16 %v602
        %v619 = vpack.c.b16 %v612, %v611
        %v620 = vpack.c.b16 %v614, %v613
        %v621 = vpack.c.b16 %v616, %v615
        %v622 = vpack.c.b16 %v618, %v617
        %627 = vst [vmem:[#allocation2] sm:$0xff] %v619
        %628 = vst [vmem:[#allocation2 + $0x8] sm:$0xff] %v620
        %629 = vst [vmem:[#allocation2 + $0x10] sm:$0xff] %v621
        %630 = vst [vmem:[#allocation2 + $0x18] sm:$0xff] %v622
        %v631 = vld [vmem:[%s529] sm:$0xf]
        %v632 = vld [vmem:[%s529 + $0x4] sm:$0xf]
        %v633 = vld [vmem:[%s529 + $0x8] sm:$0xf]
        %v634 = vld [vmem:[%s529 + $0xc] sm:$0xf]
        %v635 = vld [vmem:[%s529 + $0x10] sm:$0xf]
        %v636 = vld [vmem:[%s529 + $0x14] sm:$0xf]
        %v637 = vld [vmem:[%s529 + $0x18] sm:$0xf]
        %v638 = vld [vmem:[%s529 + $0x1c] sm:$0xf]
        %v639 = vld [vmem:[%s529 + $0x20] sm:$0xf]
        %v640 = vld [vmem:[%s529 + $0x24] sm:$0xf]
        %v641 = vld [vmem:[%s529 + $0x28] sm:$0xf]
        %v642 = vld [vmem:[%s529 + $0x2c] sm:$0xf]
        %v643 = vld [vmem:[%s529 + $0x30] sm:$0xf]
        %v644 = vld [vmem:[%s529 + $0x34] sm:$0xf]
        %v645 = vld [vmem:[%s529 + $0x38] sm:$0xf]
        %v646 = vld [vmem:[%s529 + $0x3c] sm:$0xf]
        %v647 = vld [vmem:[%s529 + $0x40] sm:$0xf]
        %v648 = vld [vmem:[%s529 + $0x44] sm:$0xf]
        %v649 = vld [vmem:[%s529 + $0x48] sm:$0xf]
        %v650 = vld [vmem:[%s529 + $0x4c] sm:$0xf]
        %v651 = vld [vmem:[%s529 + $0x50] sm:$0xf]
        %v652 = vld [vmem:[%s529 + $0x54] sm:$0xf]
        %v653 = vld [vmem:[%s529 + $0x58] sm:$0xf]
        %v654 = vld [vmem:[%s529 + $0x5c] sm:$0xf]
        %v655 = vld [vmem:[%s529 + $0x60] sm:$0xf]
        %v656 = vld [vmem:[%s529 + $0x64] sm:$0xf]
        %v657 = vld [vmem:[%s529 + $0x68] sm:$0xf]
        %v658 = vld [vmem:[%s529 + $0x6c] sm:$0xf]
        %v659 = vld [vmem:[%s529 + $0x70] sm:$0xf]
        %v660 = vld [vmem:[%s529 + $0x74] sm:$0xf]
        %v661 = vld [vmem:[%s529 + $0x78] sm:$0xf]
        %v662 = vld [vmem:[%s529 + $0x7c] sm:$0xf]
        %v663 = vld [vmem:[%s529 + $0x80] sm:$0xf]
        %v664 = vld [vmem:[%s529 + $0x84] sm:$0xf]
        %v665 = vld [vmem:[%s529 + $0x88] sm:$0xf]
        %v666 = vld [vmem:[%s529 + $0x8c] sm:$0xf]
        %v667 = vld [vmem:[%s529 + $0x90] sm:$0xf]
        %v668 = vld [vmem:[%s529 + $0x94] sm:$0xf]
        %v669 = vld [vmem:[%s529 + $0x98] sm:$0xf]
        %v670 = vld [vmem:[%s529 + $0x9c] sm:$0xf]
        %v671 = vld [vmem:[%s529 + $0xa0] sm:$0xf]
        %v672 = vld [vmem:[%s529 + $0xa4] sm:$0xf]
        %v673 = vld [vmem:[%s529 + $0xa8] sm:$0xf]
        %v674 = vld [vmem:[%s529 + $0xac] sm:$0xf]
        %v675 = vld [vmem:[%s529 + $0xb0] sm:$0xf]
        %v676 = vld [vmem:[%s529 + $0xb4] sm:$0xf]
        %v677 = vld [vmem:[%s529 + $0xb8] sm:$0xf]
        %v678 = vld [vmem:[%s529 + $0xbc] sm:$0xf]
        %v679 = vld [vmem:[%s529 + $0xc0] sm:$0xf]
        %v680 = vld [vmem:[%s529 + $0xc4] sm:$0xf]
        %v681 = vld [vmem:[%s529 + $0xc8] sm:$0xf]
        %v682 = vld [vmem:[%s529 + $0xcc] sm:$0xf]
        %v683 = vld [vmem:[%s529 + $0xd0] sm:$0xf]
        %v684 = vld [vmem:[%s529 + $0xd4] sm:$0xf]
        %v685 = vld [vmem:[%s529 + $0xd8] sm:$0xf]
        %v686 = vld [vmem:[%s529 + $0xdc] sm:$0xf]
        %v687 = vld [vmem:[%s529 + $0xe0] sm:$0xf]
        %v688 = vld [vmem:[%s529 + $0xe4] sm:$0xf]
        %v689 = vld [vmem:[%s529 + $0xe8] sm:$0xf]
        %v690 = vld [vmem:[%s529 + $0xec] sm:$0xf]
        %v691 = vld [vmem:[%s529 + $0xf0] sm:$0xf]
        %v692 = vld [vmem:[%s529 + $0xf4] sm:$0xf]
        %v693 = vld [vmem:[%s529 + $0xf8] sm:$0xf]
        %v694 = vld [vmem:[%s529 + $0xfc] sm:$0xf]
        %v759 = vunpack.c.l.b16 %v631
        %v760 = vunpack.c.l.b16 %v632
        %v761 = vunpack.c.l.b16 %v633
        %v762 = vunpack.c.l.b16 %v634
        %v763 = vunpack.c.l.b16 %v635
        %v764 = vunpack.c.l.b16 %v636
        %v765 = vunpack.c.l.b16 %v637
        %v766 = vunpack.c.l.b16 %v638
        %v767 = vunpack.c.l.b16 %v639
        %v768 = vunpack.c.l.b16 %v640
        %v769 = vunpack.c.l.b16 %v641
        %v770 = vunpack.c.l.b16 %v642
        %v771 = vunpack.c.l.b16 %v643
        %v772 = vunpack.c.l.b16 %v644
        %v773 = vunpack.c.l.b16 %v645
        %v774 = vunpack.c.l.b16 %v646
        %v775 = vunpack.c.l.b16 %v647
        %v776 = vunpack.c.l.b16 %v648
        %v777 = vunpack.c.l.b16 %v649
        %v778 = vunpack.c.l.b16 %v650
        %v779 = vunpack.c.l.b16 %v651
        %v780 = vunpack.c.l.b16 %v652
        %v781 = vunpack.c.l.b16 %v653
        %v782 = vunpack.c.l.b16 %v654
        %v783 = vunpack.c.l.b16 %v655
        %v784 = vunpack.c.l.b16 %v656
        %v785 = vunpack.c.l.b16 %v657
        %v786 = vunpack.c.l.b16 %v658
        %v787 = vunpack.c.l.b16 %v659
        %v788 = vunpack.c.l.b16 %v660
        %v789 = vunpack.c.l.b16 %v661
        %v790 = vunpack.c.l.b16 %v662
        %v791 = vunpack.c.l.b16 %v663
        %v792 = vunpack.c.l.b16 %v664
        %v793 = vunpack.c.l.b16 %v665
        %v794 = vunpack.c.l.b16 %v666
        %v795 = vunpack.c.l.b16 %v667
        %v796 = vunpack.c.l.b16 %v668
        %v797 = vunpack.c.l.b16 %v669
        %v798 = vunpack.c.l.b16 %v670
        %v799 = vunpack.c.l.b16 %v671
        %v800 = vunpack.c.l.b16 %v672
        %v801 = vunpack.c.l.b16 %v673
        %v802 = vunpack.c.l.b16 %v674
        %v803 = vunpack.c.l.b16 %v675
        %v804 = vunpack.c.l.b16 %v676
        %v805 = vunpack.c.l.b16 %v677
        %v806 = vunpack.c.l.b16 %v678
        %v807 = vunpack.c.l.b16 %v679
        %v808 = vunpack.c.l.b16 %v680
        %v809 = vunpack.c.l.b16 %v681
        %v810 = vunpack.c.l.b16 %v682
        %v811 = vunpack.c.l.b16 %v683
        %v812 = vunpack.c.l.b16 %v684
        %v813 = vunpack.c.l.b16 %v685
        %v814 = vunpack.c.l.b16 %v686
        %v815 = vunpack.c.l.b16 %v687
        %v816 = vunpack.c.l.b16 %v688
        %v817 = vunpack.c.l.b16 %v689
        %v818 = vunpack.c.l.b16 %v690
        %v819 = vunpack.c.l.b16 %v691
        %v820 = vunpack.c.l.b16 %v692
        %v821 = vunpack.c.l.b16 %v693
        %v822 = vunpack.c.l.b16 %v694
        %v823 = vpack.c.b16 %v760, %v759
        %v824 = vpack.c.b16 %v762, %v761
        %v825 = vpack.c.b16 %v764, %v763
        %v826 = vpack.c.b16 %v766, %v765
        %v827 = vpack.c.b16 %v768, %v767
        %v828 = vpack.c.b16 %v770, %v769
        %v829 = vpack.c.b16 %v772, %v771
        %v830 = vpack.c.b16 %v774, %v773
        %v831 = vpack.c.b16 %v776, %v775
        %v832 = vpack.c.b16 %v778, %v777
        %v833 = vpack.c.b16 %v780, %v779
        %v834 = vpack.c.b16 %v782, %v781
        %v835 = vpack.c.b16 %v784, %v783
        %v836 = vpack.c.b16 %v786, %v785
        %v837 = vpack.c.b16 %v788, %v787
        %v838 = vpack.c.b16 %v790, %v789
        %v839 = vpack.c.b16 %v792, %v791
        %v840 = vpack.c.b16 %v794, %v793
        %v841 = vpack.c.b16 %v796, %v795
        %v842 = vpack.c.b16 %v798, %v797
        %v843 = vpack.c.b16 %v800, %v799
        %v844 = vpack.c.b16 %v802, %v801
        %v845 = vpack.c.b16 %v804, %v803
        %v846 = vpack.c.b16 %v806, %v805
        %v847 = vpack.c.b16 %v808, %v807
        %v848 = vpack.c.b16 %v810, %v809
        %v849 = vpack.c.b16 %v812, %v811
        %v850 = vpack.c.b16 %v814, %v813
        %v851 = vpack.c.b16 %v816, %v815
        %v852 = vpack.c.b16 %v818, %v817
        %v853 = vpack.c.b16 %v820, %v819
        %v854 = vpack.c.b16 %v822, %v821
        %887 = vst [vmem:[#allocation2 + $0x20] sm:$0xff] %v823
        %888 = vst [vmem:[#allocation2 + $0x28] sm:$0xff] %v824
        %889 = vst [vmem:[#allocation2 + $0x30] sm:$0xff] %v825
        %890 = vst [vmem:[#allocation2 + $0x38] sm:$0xff] %v826
        %891 = vst [vmem:[#allocation2 + $0x40] sm:$0xff] %v827
        %892 = vst [vmem:[#allocation2 + $0x48] sm:$0xff] %v828
        %893 = vst [vmem:[#allocation2 + $0x50] sm:$0xff] %v829
        %894 = vst [vmem:[#allocation2 + $0x58] sm:$0xff] %v830
        %895 = vst [vmem:[#allocation2 + $0x60] sm:$0xff] %v831
        %896 = vst [vmem:[#allocation2 + $0x68] sm:$0xff] %v832
        %897 = vst [vmem:[#allocation2 + $0x70] sm:$0xff] %v833
        %898 = vst [vmem:[#allocation2 + $0x78] sm:$0xff] %v834
        %899 = vst [vmem:[#allocation2 + $0x80] sm:$0xff] %v835
        %900 = vst [vmem:[#allocation2 + $0x88] sm:$0xff] %v836
        %901 = vst [vmem:[#allocation2 + $0x90] sm:$0xff] %v837
        %902 = vst [vmem:[#allocation2 + $0x98] sm:$0xff] %v838
        %903 = vst [vmem:[#allocation2 + $0xa0] sm:$0xff] %v839
        %904 = vst [vmem:[#allocation2 + $0xa8] sm:$0xff] %v840
        %905 = vst [vmem:[#allocation2 + $0xb0] sm:$0xff] %v841
        %906 = vst [vmem:[#allocation2 + $0xb8] sm:$0xff] %v842
        %907 = vst [vmem:[#allocation2 + $0xc0] sm:$0xff] %v843
        %908 = vst [vmem:[#allocation2 + $0xc8] sm:$0xff] %v844
        %909 = vst [vmem:[#allocation2 + $0xd0] sm:$0xff] %v845
        %910 = vst [vmem:[#allocation2 + $0xd8] sm:$0xff] %v846
        %911 = vst [vmem:[#allocation2 + $0xe0] sm:$0xff] %v847
        %912 = vst [vmem:[#allocation2 + $0xe8] sm:$0xff] %v848
        %913 = vst [vmem:[#allocation2 + $0xf0] sm:$0xff] %v849
        %914 = vst [vmem:[#allocation2 + $0xf8] sm:$0xff] %v850
        %915 = vst [vmem:[#allocation2 + $0x100] sm:$0xff] %v851
        %916 = vst [vmem:[#allocation2 + $0x108] sm:$0xff] %v852
        %917 = vst [vmem:[#allocation2 + $0x110] sm:$0xff] %v853
        %918 = vst [vmem:[#allocation2 + $0x118] sm:$0xff] %v854
        %v919 = vld [vmem:[%s553] sm:$0xf]
        %v920 = vld [vmem:[%s553 + $0x4] sm:$0xf]
        %v921 = vld [vmem:[%s553 + $0x8] sm:$0xf]
        %v922 = vld [vmem:[%s553 + $0xc] sm:$0xf]
        %v923 = vld [vmem:[%s553 + $0x10] sm:$0xf]
        %v924 = vld [vmem:[%s553 + $0x14] sm:$0xf]
        %v925 = vld [vmem:[%s553 + $0x18] sm:$0xf]
        %v926 = vld [vmem:[%s553 + $0x1c] sm:$0xf]
        %v935 = vunpack.c.l.b16 %v919
        %v936 = vunpack.c.l.b16 %v920
        %v937 = vunpack.c.l.b16 %v921
        %v938 = vunpack.c.l.b16 %v922
        %v939 = vunpack.c.l.b16 %v923
        %v940 = vunpack.c.l.b16 %v924
        %v941 = vunpack.c.l.b16 %v925
        %v942 = vunpack.c.l.b16 %v926
        %v943 = vpack.c.b16 %v936, %v935
        %v944 = vpack.c.b16 %v938, %v937
        %v945 = vpack.c.b16 %v940, %v939
        %v946 = vpack.c.b16 %v942, %v941
        %951 = vst [vmem:[#allocation2 + $0x120] sm:$0xff] %v943
        %952 = vst [vmem:[#allocation2 + $0x128] sm:$0xff] %v944
        %953 = vst [vmem:[#allocation2 + $0x130] sm:$0xff] %v945
        %954 = vst [vmem:[#allocation2 + $0x138] sm:$0xff] %v946
        %v955 = vld [vmem:[#allocation2] sm:$0xff]
        %v956 = vld [vmem:[#allocation2 + $0x8] sm:$0xff]
        %v957 = vld [vmem:[#allocation2 + $0x10] sm:$0xff]
        %v958 = vld [vmem:[#allocation2 + $0x18] sm:$0xff]
        %v959 = vld [vmem:[#allocation2 + $0x20] sm:$0xff]
        %v960 = vld [vmem:[#allocation2 + $0x28] sm:$0xff]
        %v961 = vld [vmem:[#allocation2 + $0x30] sm:$0xff]
        %v962 = vld [vmem:[#allocation2 + $0x38] sm:$0xff]
        %v963 = vld [vmem:[#allocation2 + $0x40] sm:$0xff]
        %v964 = vld [vmem:[#allocation2 + $0x48] sm:$0xff]
        %v965 = vld [vmem:[#allocation2 + $0x50] sm:$0xff]
        %v966 = vld [vmem:[#allocation2 + $0x58] sm:$0xff]
        %v967 = vld [vmem:[#allocation2 + $0x60] sm:$0xff]
        %v968 = vld [vmem:[#allocation2 + $0x68] sm:$0xff]
        %v969 = vld [vmem:[#allocation2 + $0x70] sm:$0xff]
        %v970 = vld [vmem:[#allocation2 + $0x78] sm:$0xff]
        %v971 = vld [vmem:[#allocation2 + $0x80] sm:$0xff]
        %v972 = vld [vmem:[#allocation2 + $0x88] sm:$0xff]
        %v973 = vld [vmem:[#allocation2 + $0x90] sm:$0xff]
        %v974 = vld [vmem:[#allocation2 + $0x98] sm:$0xff]
        %v975 = vld [vmem:[#allocation2 + $0xa0] sm:$0xff]
        %v976 = vld [vmem:[#allocation2 + $0xa8] sm:$0xff]
        %v977 = vld [vmem:[#allocation2 + $0xb0] sm:$0xff]
        %v978 = vld [vmem:[#allocation2 + $0xb8] sm:$0xff]
        %v979 = vld [vmem:[#allocation2 + $0xc0] sm:$0xff]
        %v980 = vld [vmem:[#allocation2 + $0xc8] sm:$0xff]
        %v981 = vld [vmem:[#allocation2 + $0xd0] sm:$0xff]
        %v982 = vld [vmem:[#allocation2 + $0xd8] sm:$0xff]
        %v983 = vld [vmem:[#allocation2 + $0xe0] sm:$0xff]
        %v984 = vld [vmem:[#allocation2 + $0xe8] sm:$0xff]
        %v985 = vld [vmem:[#allocation2 + $0xf0] sm:$0xff]
        %v986 = vld [vmem:[#allocation2 + $0xf8] sm:$0xff]
        %v987 = vld [vmem:[#allocation2 + $0x100] sm:$0xff]
        %v988 = vld [vmem:[#allocation2 + $0x108] sm:$0xff]
        %v989 = vld [vmem:[%s8] sm:$0xf]
        %v990 = vld [vmem:[%s8 + $0x4] sm:$0xf]
        %v991 = vld [vmem:[%s8 + $0x8] sm:$0xf]
        %v992 = vld [vmem:[%s8 + $0xc] sm:$0xf]
        %v993 = vld [vmem:[%s8 + $0x10] sm:$0xf]
        %v994 = vld [vmem:[%s8 + $0x14] sm:$0xf]
        %v995 = vld [vmem:[%s8 + $0x18] sm:$0xf]
        %v996 = vld [vmem:[%s8 + $0x1c] sm:$0xf]
        %v997 = vld [vmem:[%s8 + $0x20] sm:$0xf]
        %v998 = vld [vmem:[%s8 + $0x24] sm:$0xf]
        %v999 = vld [vmem:[%s8 + $0x28] sm:$0xf]
        %v1000 = vld [vmem:[%s8 + $0x2c] sm:$0xf]
        %v1001 = vld [vmem:[%s8 + $0x30] sm:$0xf]
        %v1002 = vld [vmem:[%s8 + $0x34] sm:$0xf]
        %v1003 = vld [vmem:[%s8 + $0x38] sm:$0xf]
        %v1004 = vld [vmem:[%s8 + $0x3c] sm:$0xf]
        %v1021 = vunpack.c.l.b16 %v989
        %v1022 = vunpack.c.l.b16 %v990
        %v1023 = vunpack.c.l.b16 %v991
        %v1024 = vunpack.c.l.b16 %v992
        %v1025 = vunpack.c.l.b16 %v993
        %v1026 = vunpack.c.l.b16 %v994
        %v1027 = vunpack.c.l.b16 %v995
        %v1028 = vunpack.c.l.b16 %v996
        %v1029 = vunpack.c.l.b16 %v997
        %v1030 = vunpack.c.l.b16 %v998
        %v1031 = vunpack.c.l.b16 %v999
        %v1032 = vunpack.c.l.b16 %v1000
        %v1033 = vunpack.c.l.b16 %v1001
        %v1034 = vunpack.c.l.b16 %v1002
        %v1035 = vunpack.c.l.b16 %v1003
        %v1036 = vunpack.c.l.b16 %v1004
        %v1037 = vpack.c.b16 %v1022, %v1021
        %v1038 = vpack.c.b16 %v1024, %v1023
        %v1039 = vpack.c.b16 %v1026, %v1025
        %v1040 = vpack.c.b16 %v1028, %v1027
        %v1041 = vpack.c.b16 %v1030, %v1029
        %v1042 = vpack.c.b16 %v1032, %v1031
        %v1043 = vpack.c.b16 %v1034, %v1033
        %v1044 = vpack.c.b16 %v1036, %v1035
        %1053 = vmatprep.subr.bf16.mxu0 0
        %1054 = vmatpush1.bf16.msra.mxu0 %v1037
        %1055 = vmatprep.subr.bf16.mxu0 0
        %1056 = vmatpush1.bf16.msra.mxu0 %v1038
        %1057 = vmatprep.subr.bf16.mxu0 0
        %1058 = vmatpush1.bf16.msra.mxu0 %v1039
        %1059 = vmatprep.subr.bf16.mxu0 0
        %1060 = vmatpush1.bf16.msra.mxu0 %v1040
        %1061 = vmatprep.subr.bf16.mxu0 0
        %1062 = vmatpush1.bf16.msra.mxu0 %v1041
        %1063 = vmatprep.subr.bf16.mxu0 0
        %1064 = vmatpush1.bf16.msra.mxu0 %v1042
        %1065 = vmatprep.subr.bf16.mxu0 0
        %1066 = vmatpush1.bf16.msra.mxu0 %v1043
        %1067 = vmatprep.subr.bf16.mxu0 0
        %1068 = vmatpush1.bf16.msra.mxu0 %v1044
        %1069 = vmatprep.subr.bf16.mxu0 0
        %1070 = vmatpush1.bf16.msra.mxu0 0
        %1071 = vmatprep.subr.bf16.mxu0 0
        %1072 = vmatpush1.bf16.msra.mxu0 0
        %1073 = vmatprep.subr.bf16.mxu0 0
        %1074 = vmatpush1.bf16.msra.mxu0 0
        %1075 = vmatprep.subr.bf16.mxu0 0
        %1076 = vmatpush1.bf16.msra.mxu0 0
        %1077 = vmatprep.subr.bf16.mxu0 0
        %1078 = vmatpush1.bf16.msra.mxu0 0
        %1079 = vmatprep.subr.bf16.mxu0 0
        %1080 = vmatpush1.bf16.msra.mxu0 0
        %1081 = vmatprep.subr.bf16.mxu0 0
        %1082 = vmatpush1.bf16.msra.mxu0 0
        %1083 = vmatprep.subr.bf16.mxu0 0
        %1084 = vmatpush1.bf16.msra.mxu0 0
        %1085 = vmatprep.mubr.bf16.mxu0 0
        %1086 = vmatmul.mubr.bf16.gmra.mrb[0].mxu0 %v955
        %v1087 = vpop.f32.mrb[0].mxu0
        %v1088 = vadd.f32 0.0, %v1087
        %v1089 = vpop.f32.mrb[0].mxu0
        %v1090 = vpop.f32.mrb[0].mxu0
        %v1091 = vadd.f32 0.0, %v1090
        %v1092 = vpop.f32.mrb[0].mxu0
        %1093 = vmatprep.mubr.bf16.mxu0 0
        %1094 = vmatmul.mubr.bf16.gmra.mrb[0].mxu0 %v956
        %v1095 = vpop.f32.mrb[0].mxu0
        %v1096 = vadd.f32 0.0, %v1095
        %v1097 = vpop.f32.mrb[0].mxu0
        %v1098 = vpop.f32.mrb[0].mxu0
        %v1099 = vadd.f32 0.0, %v1098
        %v1100 = vpop.f32.mrb[0].mxu0
        %1101 = vmatprep.mubr.bf16.mxu0 0
        %1102 = vmatmul.mubr.bf16.gmra.mrb[0].mxu0 %v957
        %v1103 = vpop.f32.mrb[0].mxu0
        %v1104 = vadd.f32 0.0, %v1103
        %v1105 = vpop.f32.mrb[0].mxu0
        %v1106 = vpop.f32.mrb[0].mxu0
        %v1107 = vadd.f32 0.0, %v1106
        %v1108 = vpop.f32.mrb[0].mxu0
        %1109 = vmatprep.mubr.bf16.mxu0 0
        %1110 = vmatmul.mubr.bf16.gmra.mrb[0].mxu0 %v958
        %v1111 = vpop.f32.mrb[0].mxu0
        %v1112 = vadd.f32 0.0, %v1111
        %v1113 = vpop.f32.mrb[0].mxu0
        %v1114 = vpop.f32.mrb[0].mxu0
        %v1115 = vadd.f32 0.0, %v1114
        %v1116 = vpop.f32.mrb[0].mxu0
        %1117 = vmatprep.mubr.bf16.mxu0 0
        %1118 = vmatmul.mubr.bf16.gmra.mrb[0].mxu0 %v959
        %v1119 = vpop.f32.mrb[0].mxu0
        %v1120 = vadd.f32 0.0, %v1119
        %v1121 = vpop.f32.mrb[0].mxu0
        %v1122 = vpop.f32.mrb[0].mxu0
        %v1123 = vadd.f32 0.0, %v1122
        %v1124 = vpop.f32.mrb[0].mxu0
        %1125 = vmatprep.mubr.bf16.mxu0 0
        %1126 = vmatmul.mubr.bf16.gmra.mrb[0].mxu0 %v960
        %v1127 = vpop.f32.mrb[0].mxu0
        %v1128 = vadd.f32 0.0, %v1127
        %v1129 = vpop.f32.mrb[0].mxu0
        %v1130 = vpop.f32.mrb[0].mxu0
        %v1131 = vadd.f32 0.0, %v1130
        %v1132 = vpop.f32.mrb[0].mxu0
        %1133 = vmatprep.mubr.bf16.mxu0 0
        %1134 = vmatmul.mubr.bf16.gmra.mrb[0].mxu0 %v961
        %v1135 = vpop.f32.mrb[0].mxu0
        %v1136 = vadd.f32 0.0, %v1135
        %v1137 = vpop.f32.mrb[0].mxu0
        %v1138 = vpop.f32.mrb[0].mxu0
        %v1139 = vadd.f32 0.0, %v1138
        %v1140 = vpop.f32.mrb[0].mxu0
        %1141 = vmatprep.mubr.bf16.mxu0 0
        %1142 = vmatmul.mubr.bf16.gmra.mrb[0].mxu0 %v962
        %v1143 = vpop.f32.mrb[0].mxu0
        %v1144 = vadd.f32 0.0, %v1143
        %v1145 = vpop.f32.mrb[0].mxu0
        %v1146 = vpop.f32.mrb[0].mxu0
        %v1147 = vadd.f32 0.0, %v1146
        %v1148 = vpop.f32.mrb[0].mxu0
        %1149 = vmatprep.mubr.bf16.mxu0 0
        %1150 = vmatmul.mubr.bf16.gmra.mrb[0].mxu0 %v963
        %v1151 = vpop.f32.mrb[0].mxu0
        %v1152 = vadd.f32 0.0, %v1151
        %v1153 = vpop.f32.mrb[0].mxu0
        %v1154 = vpop.f32.mrb[0].mxu0
        %v1155 = vadd.f32 0.0, %v1154
        %v1156 = vpop.f32.mrb[0].mxu0
        %1157 = vmatprep.mubr.bf16.mxu0 0
        %1158 = vmatmul.mubr.bf16.gmra.mrb[0].mxu0 %v964
        %v1159 = vpop.f32.mrb[0].mxu0
        %v1160 = vadd.f32 0.0, %v1159
        %v1161 = vpop.f32.mrb[0].mxu0
        %v1162 = vpop.f32.mrb[0].mxu0
        %v1163 = vadd.f32 0.0, %v1162
        %v1164 = vpop.f32.mrb[0].mxu0
        %1165 = vmatprep.mubr.bf16.mxu0 0
        %1166 = vmatmul.mubr.bf16.gmra.mrb[0].mxu0 %v965
        %v1167 = vpop.f32.mrb[0].mxu0
        %v1168 = vadd.f32 0.0, %v1167
        %v1169 = vpop.f32.mrb[0].mxu0
        %v1170 = vpop.f32.mrb[0].mxu0
        %v1171 = vadd.f32 0.0, %v1170
        %v1172 = vpop.f32.mrb[0].mxu0
        %1173 = vmatprep.mubr.bf16.mxu0 0
        %1174 = vmatmul.mubr.bf16.gmra.mrb[0].mxu0 %v966
        %v1175 = vpop.f32.mrb[0].mxu0
        %v1176 = vadd.f32 0.0, %v1175
        %v1177 = vpop.f32.mrb[0].mxu0
        %v1178 = vpop.f32.mrb[0].mxu0
        %v1179 = vadd.f32 0.0, %v1178
        %v1180 = vpop.f32.mrb[0].mxu0
        %1181 = vmatprep.mubr.bf16.mxu0 0
        %1182 = vmatmul.mubr.bf16.gmra.mrb[0].mxu0 %v967
        %v1183 = vpop.f32.mrb[0].mxu0
        %v1184 = vadd.f32 0.0, %v1183
        %v1185 = vpop.f32.mrb[0].mxu0
        %v1186 = vpop.f32.mrb[0].mxu0
        %v1187 = vadd.f32 0.0, %v1186
        %v1188 = vpop.f32.mrb[0].mxu0
        %1189 = vmatprep.mubr.bf16.mxu0 0
        %1190 = vmatmul.mubr.bf16.gmra.mrb[0].mxu0 %v968
        %v1191 = vpop.f32.mrb[0].mxu0
        %v1192 = vadd.f32 0.0, %v1191
        %v1193 = vpop.f32.mrb[0].mxu0
        %v1194 = vpop.f32.mrb[0].mxu0
        %v1195 = vadd.f32 0.0, %v1194
        %v1196 = vpop.f32.mrb[0].mxu0
        %1197 = vmatprep.mubr.bf16.mxu0 0
        %1198 = vmatmul.mubr.bf16.gmra.mrb[0].mxu0 %v969
        %v1199 = vpop.f32.mrb[0].mxu0
        %v1200 = vadd.f32 0.0, %v1199
        %v1201 = vpop.f32.mrb[0].mxu0
        %v1202 = vpop.f32.mrb[0].mxu0
        %v1203 = vadd.f32 0.0, %v1202
        %v1204 = vpop.f32.mrb[0].mxu0
        %1205 = vmatprep.mubr.bf16.mxu0 0
        %1206 = vmatmul.mubr.bf16.gmra.mrb[0].mxu0 %v970
        %v1207 = vpop.f32.mrb[0].mxu0
        %v1208 = vadd.f32 0.0, %v1207
        %v1209 = vpop.f32.mrb[0].mxu0
        %v1210 = vpop.f32.mrb[0].mxu0
        %v1211 = vadd.f32 0.0, %v1210
        %v1212 = vpop.f32.mrb[0].mxu0
        %1213 = vmatprep.mubr.bf16.mxu0 0
        %1214 = vmatmul.mubr.bf16.gmra.mrb[0].mxu0 %v971
        %v1215 = vpop.f32.mrb[0].mxu0
        %v1216 = vadd.f32 0.0, %v1215
        %v1217 = vpop.f32.mrb[0].mxu0
        %v1218 = vpop.f32.mrb[0].mxu0
        %v1219 = vadd.f32 0.0, %v1218
        %v1220 = vpop.f32.mrb[0].mxu0
        %1221 = vmatprep.mubr.bf16.mxu0 0
        %1222 = vmatmul.mubr.bf16.gmra.mrb[0].mxu0 %v972
        %v1223 = vpop.f32.mrb[0].mxu0
        %v1224 = vadd.f32 0.0, %v1223
        %v1225 = vpop.f32.mrb[0].mxu0
        %v1226 = vpop.f32.mrb[0].mxu0
        %v1227 = vadd.f32 0.0, %v1226
        %v1228 = vpop.f32.mrb[0].mxu0
        %1229 = vmatprep.mubr.bf16.mxu0 0
        %1230 = vmatmul.mubr.bf16.gmra.mrb[0].mxu0 %v973
        %v1231 = vpop.f32.mrb[0].mxu0
        %v1232 = vadd.f32 0.0, %v1231
        %v1233 = vpop.f32.mrb[0].mxu0
        %v1234 = vpop.f32.mrb[0].mxu0
        %v1235 = vadd.f32 0.0, %v1234
        %v1236 = vpop.f32.mrb[0].mxu0
        %1237 = vmatprep.mubr.bf16.mxu0 0
        %1238 = vmatmul.mubr.bf16.gmra.mrb[0].mxu0 %v974
        %v1239 = vpop.f32.mrb[0].mxu0
        %v1240 = vadd.f32 0.0, %v1239
        %v1241 = vpop.f32.mrb[0].mxu0
        %v1242 = vpop.f32.mrb[0].mxu0
        %v1243 = vadd.f32 0.0, %v1242
        %v1244 = vpop.f32.mrb[0].mxu0
        %1245 = vmatprep.mubr.bf16.mxu0 0
        %1246 = vmatmul.mubr.bf16.gmra.mrb[0].mxu0 %v975
        %v1247 = vpop.f32.mrb[0].mxu0
        %v1248 = vadd.f32 0.0, %v1247
        %v1249 = vpop.f32.mrb[0].mxu0
        %v1250 = vpop.f32.mrb[0].mxu0
        %v1251 = vadd.f32 0.0, %v1250
        %v1252 = vpop.f32.mrb[0].mxu0
        %1253 = vmatprep.mubr.bf16.mxu0 0
        %1254 = vmatmul.mubr.bf16.gmra.mrb[0].mxu0 %v976
        %v1255 = vpop.f32.mrb[0].mxu0
        %v1256 = vadd.f32 0.0, %v1255
        %v1257 = vpop.f32.mrb[0].mxu0
        %v1258 = vpop.f32.mrb[0].mxu0
        %v1259 = vadd.f32 0.0, %v1258
        %v1260 = vpop.f32.mrb[0].mxu0
        %1261 = vmatprep.mubr.bf16.mxu0 0
        %1262 = vmatmul.mubr.bf16.gmra.mrb[0].mxu0 %v977
        %v1263 = vpop.f32.mrb[0].mxu0
        %v1264 = vadd.f32 0.0, %v1263
        %v1265 = vpop.f32.mrb[0].mxu0
        %v1266 = vpop.f32.mrb[0].mxu0
        %v1267 = vadd.f32 0.0, %v1266
        %v1268 = vpop.f32.mrb[0].mxu0
        %1269 = vmatprep.mubr.bf16.mxu0 0
        %1270 = vmatmul.mubr.bf16.gmra.mrb[0].mxu0 %v978
        %v1271 = vpop.f32.mrb[0].mxu0
        %v1272 = vadd.f32 0.0, %v1271
        %v1273 = vpop.f32.mrb[0].mxu0
        %v1274 = vpop.f32.mrb[0].mxu0
        %v1275 = vadd.f32 0.0, %v1274
        %v1276 = vpop.f32.mrb[0].mxu0
        %1277 = vmatprep.mubr.bf16.mxu0 0
        %1278 = vmatmul.mubr.bf16.gmra.mrb[0].mxu0 %v979
        %v1279 = vpop.f32.mrb[0].mxu0
        %v1280 = vadd.f32 0.0, %v1279
        %v1281 = vpop.f32.mrb[0].mxu0
        %v1282 = vpop.f32.mrb[0].mxu0
        %v1283 = vadd.f32 0.0, %v1282
        %v1284 = vpop.f32.mrb[0].mxu0
        %1285 = vmatprep.mubr.bf16.mxu0 0
        %1286 = vmatmul.mubr.bf16.gmra.mrb[0].mxu0 %v980
        %v1287 = vpop.f32.mrb[0].mxu0
        %v1288 = vadd.f32 0.0, %v1287
        %v1289 = vpop.f32.mrb[0].mxu0
        %v1290 = vpop.f32.mrb[0].mxu0
        %v1291 = vadd.f32 0.0, %v1290
        %v1292 = vpop.f32.mrb[0].mxu0
        %1293 = vmatprep.mubr.bf16.mxu0 0
        %1294 = vmatmul.mubr.bf16.gmra.mrb[0].mxu0 %v981
        %v1295 = vpop.f32.mrb[0].mxu0
        %v1296 = vadd.f32 0.0, %v1295
        %v1297 = vpop.f32.mrb[0].mxu0
        %v1298 = vpop.f32.mrb[0].mxu0
        %v1299 = vadd.f32 0.0, %v1298
        %v1300 = vpop.f32.mrb[0].mxu0
        %1301 = vmatprep.mubr.bf16.mxu0 0
        %1302 = vmatmul.mubr.bf16.gmra.mrb[0].mxu0 %v982
        %v1303 = vpop.f32.mrb[0].mxu0
        %v1304 = vadd.f32 0.0, %v1303
        %v1305 = vpop.f32.mrb[0].mxu0
        %v1306 = vpop.f32.mrb[0].mxu0
        %v1307 = vadd.f32 0.0, %v1306
        %v1308 = vpop.f32.mrb[0].mxu0
        %1309 = vmatprep.mubr.bf16.mxu0 0
        %1310 = vmatmul.mubr.bf16.gmra.mrb[0].mxu0 %v983
        %v1311 = vpop.f32.mrb[0].mxu0
        %v1312 = vadd.f32 0.0, %v1311
        %v1313 = vpop.f32.mrb[0].mxu0
        %v1314 = vpop.f32.mrb[0].mxu0
        %v1315 = vadd.f32 0.0, %v1314
        %v1316 = vpop.f32.mrb[0].mxu0
        %1317 = vmatprep.mubr.bf16.mxu0 0
        %1318 = vmatmul.mubr.bf16.gmra.mrb[0].mxu0 %v984
        %v1319 = vpop.f32.mrb[0].mxu0
        %v1320 = vadd.f32 0.0, %v1319
        %v1321 = vpop.f32.mrb[0].mxu0
        %v1322 = vpop.f32.mrb[0].mxu0
        %v1323 = vadd.f32 0.0, %v1322
        %v1324 = vpop.f32.mrb[0].mxu0
        %1325 = vmatprep.mubr.bf16.mxu0 0
        %1326 = vmatmul.mubr.bf16.gmra.mrb[0].mxu0 %v985
        %v1327 = vpop.f32.mrb[0].mxu0
        %v1328 = vadd.f32 0.0, %v1327
        %v1329 = vpop.f32.mrb[0].mxu0
        %v1330 = vpop.f32.mrb[0].mxu0
        %v1331 = vadd.f32 0.0, %v1330
        %v1332 = vpop.f32.mrb[0].mxu0
        %1333 = vmatprep.mubr.bf16.mxu0 0
        %1334 = vmatmul.mubr.bf16.gmra.mrb[0].mxu0 %v986
        %v1335 = vpop.f32.mrb[0].mxu0
        %v1336 = vadd.f32 0.0, %v1335
        %v1337 = vpop.f32.mrb[0].mxu0
        %v1338 = vpop.f32.mrb[0].mxu0
        %v1339 = vadd.f32 0.0, %v1338
        %v1340 = vpop.f32.mrb[0].mxu0
        %1341 = vmatprep.mubr.bf16.mxu0 0
        %1342 = vmatmul.mubr.bf16.gmra.mrb[0].mxu0 %v987
        %v1343 = vpop.f32.mrb[0].mxu0
        %v1344 = vadd.f32 0.0, %v1343
        %v1345 = vpop.f32.mrb[0].mxu0
        %v1346 = vpop.f32.mrb[0].mxu0
        %v1347 = vadd.f32 0.0, %v1346
        %v1348 = vpop.f32.mrb[0].mxu0
        %1349 = vmatprep.mubr.bf16.mxu0 0
        %1350 = vmatmul.mubr.bf16.gmra.mrb[0].mxu0 %v988
        %v1351 = vpop.f32.mrb[0].mxu0
        %v1352 = vadd.f32 0.0, %v1351
        %v1353 = vpop.f32.mrb[0].mxu0
        %v1354 = vpop.f32.mrb[0].mxu0
        %v1355 = vadd.f32 0.0, %v1354
        %v1356 = vpop.f32.mrb[0].mxu0
        %1357 = vdwg.mxu0
        %1358 = vst [vmem:[#allocation3] sm:$0xff] %v1088
        %1359 = vst [vmem:[#allocation3 + $0x8] sm:$0xff] %v1091
        %1360 = vst [vmem:[#allocation3 + $0x10] sm:$0xff] %v1096
        %1361 = vst [vmem:[#allocation3 + $0x18] sm:$0xff] %v1099
        %1362 = vst [vmem:[#allocation3 + $0x20] sm:$0xff] %v1104
        %1363 = vst [vmem:[#allocation3 + $0x28] sm:$0xff] %v1107
        %1364 = vst [vmem:[#allocation3 + $0x30] sm:$0xff] %v1112
        %1365 = vst [vmem:[#allocation3 + $0x38] sm:$0xff] %v1115
        %1366 = vst [vmem:[#allocation3 + $0x40] sm:$0xff] %v1120
        %1367 = vst [vmem:[#allocation3 + $0x48] sm:$0xff] %v1123
        %1368 = vst [vmem:[#allocation3 + $0x50] sm:$0xff] %v1128
        %1369 = vst [vmem:[#allocation3 + $0x58] sm:$0xff] %v1131
        %1370 = vst [vmem:[#allocation3 + $0x60] sm:$0xff] %v1136
        %1371 = vst [vmem:[#allocation3 + $0x68] sm:$0xff] %v1139
        %1372 = vst [vmem:[#allocation3 + $0x70] sm:$0xff] %v1144
        %1373 = vst [vmem:[#allocation3 + $0x78] sm:$0xff] %v1147
        %1374 = vst [vmem:[#allocation3 + $0x80] sm:$0xff] %v1152
        %1375 = vst [vmem:[#allocation3 + $0x88] sm:$0xff] %v1155
        %1376 = vst [vmem:[#allocation3 + $0x90] sm:$0xff] %v1160
        %1377 = vst [vmem:[#allocation3 + $0x98] sm:$0xff] %v1163
        %1378 = vst [vmem:[#allocation3 + $0xa0] sm:$0xff] %v1168
        %1379 = vst [vmem:[#allocation3 + $0xa8] sm:$0xff] %v1171
        %1380 = vst [vmem:[#allocation3 + $0xb0] sm:$0xff] %v1176
        %1381 = vst [vmem:[#allocation3 + $0xb8] sm:$0xff] %v1179
        %1382 = vst [vmem:[#allocation3 + $0xc0] sm:$0xff] %v1184
        %1383 = vst [vmem:[#allocation3 + $0xc8] sm:$0xff] %v1187
        %1384 = vst [vmem:[#allocation3 + $0xd0] sm:$0xff] %v1192
        %1385 = vst [vmem:[#allocation3 + $0xd8] sm:$0xff] %v1195
        %1386 = vst [vmem:[#allocation3 + $0xe0] sm:$0xff] %v1200
        %1387 = vst [vmem:[#allocation3 + $0xe8] sm:$0xff] %v1203
        %1388 = vst [vmem:[#allocation3 + $0xf0] sm:$0xff] %v1208
        %1389 = vst [vmem:[#allocation3 + $0xf8] sm:$0xff] %v1211
        %1390 = vst [vmem:[#allocation3 + $0x100] sm:$0xff] %v1216
        %1391 = vst [vmem:[#allocation3 + $0x108] sm:$0xff] %v1219
        %1392 = vst [vmem:[#allocation3 + $0x110] sm:$0xff] %v1224
        %1393 = vst [vmem:[#allocation3 + $0x118] sm:$0xff] %v1227
        %1394 = vst [vmem:[#allocation3 + $0x120] sm:$0xff] %v1232
        %1395 = vst [vmem:[#allocation3 + $0x128] sm:$0xff] %v1235
        %1396 = vst [vmem:[#allocation3 + $0x130] sm:$0xff] %v1240
        %1397 = vst [vmem:[#allocation3 + $0x138] sm:$0xff] %v1243
        %1398 = vst [vmem:[#allocation3 + $0x140] sm:$0xff] %v1248
        %1399 = vst [vmem:[#allocation3 + $0x148] sm:$0xff] %v1251
        %1400 = vst [vmem:[#allocation3 + $0x150] sm:$0xff] %v1256
        %1401 = vst [vmem:[#allocation3 + $0x158] sm:$0xff] %v1259
        %1402 = vst [vmem:[#allocation3 + $0x160] sm:$0xff] %v1264
        %1403 = vst [vmem:[#allocation3 + $0x168] sm:$0xff] %v1267
        %1404 = vst [vmem:[#allocation3 + $0x170] sm:$0xff] %v1272
        %1405 = vst [vmem:[#allocation3 + $0x178] sm:$0xff] %v1275
        %1406 = vst [vmem:[#allocation3 + $0x180] sm:$0xff] %v1280
        %1407 = vst [vmem:[#allocation3 + $0x188] sm:$0xff] %v1283
        %1408 = vst [vmem:[#allocation3 + $0x190] sm:$0xff] %v1288
        %1409 = vst [vmem:[#allocation3 + $0x198] sm:$0xff] %v1291
        %1410 = vst [vmem:[#allocation3 + $0x1a0] sm:$0xff] %v1296
        %1411 = vst [vmem:[#allocation3 + $0x1a8] sm:$0xff] %v1299
        %1412 = vst [vmem:[#allocation3 + $0x1b0] sm:$0xff] %v1304
        %1413 = vst [vmem:[#allocation3 + $0x1b8] sm:$0xff] %v1307
        %1414 = vst [vmem:[#allocation3 + $0x1c0] sm:$0xff] %v1312
        %1415 = vst [vmem:[#allocation3 + $0x1c8] sm:$0xff] %v1315
        %1416 = vst [vmem:[#allocation3 + $0x1d0] sm:$0xff] %v1320
        %1417 = vst [vmem:[#allocation3 + $0x1d8] sm:$0xff] %v1323
        %1418 = vst [vmem:[#allocation3 + $0x1e0] sm:$0xff] %v1328
        %1419 = vst [vmem:[#allocation3 + $0x1e8] sm:$0xff] %v1331
        %1420 = vst [vmem:[#allocation3 + $0x1f0] sm:$0xff] %v1336
        %1421 = vst [vmem:[#allocation3 + $0x1f8] sm:$0xff] %v1339
        %1422 = vst [vmem:[#allocation3 + $0x200] sm:$0xff] %v1344
        %1423 = vst [vmem:[#allocation3 + $0x208] sm:$0xff] %v1347
        %1424 = vst [vmem:[#allocation3 + $0x210] sm:$0xff] %v1352
        %1425 = vst [vmem:[#allocation3 + $0x218] sm:$0xff] %v1355
        %v1426 = vld [vmem:[#allocation2 + $0x18] sm:$0xff]
        %v1427 = vld [vmem:[#allocation2 + $0x20] sm:$0xff]
        %v1428 = vld [vmem:[#allocation2 + $0x28] sm:$0xff]
        %v1429 = vld [vmem:[#allocation2 + $0x30] sm:$0xff]
        %v1430 = vld [vmem:[#allocation2 + $0x38] sm:$0xff]
        %v1431 = vld [vmem:[#allocation2 + $0x40] sm:$0xff]
        %v1432 = vld [vmem:[#allocation2 + $0x48] sm:$0xff]
        %v1433 = vld [vmem:[#allocation2 + $0x50] sm:$0xff]
        %v1434 = vld [vmem:[#allocation2 + $0x58] sm:$0xff]
        %v1435 = vld [vmem:[#allocation2 + $0x60] sm:$0xff]
        %v1436 = vld [vmem:[#allocation2 + $0x68] sm:$0xff]
        %v1437 = vld [vmem:[#allocation2 + $0x70] sm:$0xff]
        %v1438 = vld [vmem:[#allocation2 + $0x78] sm:$0xff]
        %v1439 = vld [vmem:[#allocation2 + $0x80] sm:$0xff]
        %v1440 = vld [vmem:[#allocation2 + $0x88] sm:$0xff]
        %v1441 = vld [vmem:[#allocation2 + $0x90] sm:$0xff]
        %v1442 = vld [vmem:[#allocation2 + $0x98] sm:$0xff]
        %v1443 = vld [vmem:[#allocation2 + $0xa0] sm:$0xff]
        %v1444 = vld [vmem:[#allocation2 + $0xa8] sm:$0xff]
        %v1445 = vld [vmem:[#allocation2 + $0xb0] sm:$0xff]
        %v1446 = vld [vmem:[#allocation2 + $0xb8] sm:$0xff]
        %v1447 = vld [vmem:[#allocation2 + $0xc0] sm:$0xff]
        %v1448 = vld [vmem:[#allocation2 + $0xc8] sm:$0xff]
        %v1449 = vld [vmem:[#allocation2 + $0xd0] sm:$0xff]
        %v1450 = vld [vmem:[#allocation2 + $0xd8] sm:$0xff]
        %v1451 = vld [vmem:[#allocation2 + $0xe0] sm:$0xff]
        %v1452 = vld [vmem:[#allocation2 + $0xe8] sm:$0xff]
        %v1453 = vld [vmem:[#allocation2 + $0xf0] sm:$0xff]
        %v1454 = vld [vmem:[#allocation2 + $0xf8] sm:$0xff]
        %v1455 = vld [vmem:[#allocation2 + $0x100] sm:$0xff]
        %v1456 = vld [vmem:[#allocation2 + $0x108] sm:$0xff]
        %v1457 = vld [vmem:[#allocation2 + $0x110] sm:$0xff]
        %v1458 = vld [vmem:[#allocation2 + $0x118] sm:$0xff]
        %v1459 = vld [vmem:[#allocation2 + $0x120] sm:$0xff]
        %s1460 = scalar_lea.vmem %s8, 192
        %v1461 = vld [vmem:[%s1460] sm:$0xf]
        %v1462 = vld [vmem:[%s1460 + $0x4] sm:$0xf]
        %v1463 = vld [vmem:[%s1460 + $0x8] sm:$0xf]
        %v1464 = vld [vmem:[%s1460 + $0xc] sm:$0xf]
        %v1465 = vld [vmem:[%s1460 + $0x10] sm:$0xf]
        %v1466 = vld [vmem:[%s1460 + $0x14] sm:$0xf]
        %v1467 = vld [vmem:[%s1460 + $0x18] sm:$0xf]
        %v1468 = vld [vmem:[%s1460 + $0x1c] sm:$0xf]
        %v1469 = vld [vmem:[%s1460 + $0x20] sm:$0xf]
        %v1470 = vld [vmem:[%s1460 + $0x24] sm:$0xf]
        %v1471 = vld [vmem:[%s1460 + $0x28] sm:$0xf]
        %v1472 = vld [vmem:[%s1460 + $0x2c] sm:$0xf]
        %v1473 = vld [vmem:[%s1460 + $0x30] sm:$0xf]
        %v1474 = vld [vmem:[%s1460 + $0x34] sm:$0xf]
        %v1475 = vld [vmem:[%s1460 + $0x38] sm:$0xf]
        %v1476 = vld [vmem:[%s1460 + $0x3c] sm:$0xf]
        %v1493 = vunpack.c.l.b16 %v1461
        %v1494 = vunpack.c.l.b16 %v1462
        %v1495 = vunpack.c.l.b16 %v1463
        %v1496 = vunpack.c.l.b16 %v1464
        %v1497 = vunpack.c.l.b16 %v1465
        %v1498 = vunpack.c.l.b16 %v1466
        %v1499 = vunpack.c.l.b16 %v1467
        %v1500 = vunpack.c.l.b16 %v1468
        %v1501 = vunpack.c.l.b16 %v1469
        %v1502 = vunpack.c.l.b16 %v1470
        %v1503 = vunpack.c.l.b16 %v1471
        %v1504 = vunpack.c.l.b16 %v1472
        %v1505 = vunpack.c.l.b16 %v1473
        %v1506 = vunpack.c.l.b16 %v1474
        %v1507 = vunpack.c.l.b16 %v1475
        %v1508 = vunpack.c.l.b16 %v1476
        %v1509 = vpack.c.b16 %v1494, %v1493
        %v1510 = vpack.c.b16 %v1496, %v1495
        %v1511 = vpack.c.b16 %v1498, %v1497
        %v1512 = vpack.c.b16 %v1500, %v1499
        %v1513 = vpack.c.b16 %v1502, %v1501
        %v1514 = vpack.c.b16 %v1504, %v1503
        %v1515 = vpack.c.b16 %v1506, %v1505
        %v1516 = vpack.c.b16 %v1508, %v1507
        %1525 = vmatprep.subr.bf16.mxu0 0
        %1526 = vmatpush1.bf16.msra.mxu0 %v1509
        %1527 = vmatprep.subr.bf16.mxu0 0
        %1528 = vmatpush1.bf16.msra.mxu0 %v1510
        %1529 = vmatprep.subr.bf16.mxu0 0
        %1530 = vmatpush1.bf16.msra.mxu0 %v1511
        %1531 = vmatprep.subr.bf16.mxu0 0
        %1532 = vmatpush1.bf16.msra.mxu0 %v1512
        %1533 = vmatprep.subr.bf16.mxu0 0
        %1534 = vmatpush1.bf16.msra.mxu0 %v1513
        %1535 = vmatprep.subr.bf16.mxu0 0
        %1536 = vmatpush1.bf16.msra.mxu0 %v1514
        %1537 = vmatprep.subr.bf16.mxu0 0
        %1538 = vmatpush1.bf16.msra.mxu0 %v1515
        %1539 = vmatprep.subr.bf16.mxu0 0
        %1540 = vmatpush1.bf16.msra.mxu0 %v1516
        %1541 = vmatprep.subr.bf16.mxu0 0
        %1542 = vmatpush1.bf16.msra.mxu0 0
        %1543 = vmatprep.subr.bf16.mxu0 0
        %1544 = vmatpush1.bf16.msra.mxu0 0
        %1545 = vmatprep.subr.bf16.mxu0 0
        %1546 = vmatpush1.bf16.msra.mxu0 0
        %1547 = vmatprep.subr.bf16.mxu0 0
        %1548 = vmatpush1.bf16.msra.mxu0 0
        %1549 = vmatprep.subr.bf16.mxu0 0
        %1550 = vmatpush1.bf16.msra.mxu0 0
        %1551 = vmatprep.subr.bf16.mxu0 0
        %1552 = vmatpush1.bf16.msra.mxu0 0
        %1553 = vmatprep.subr.bf16.mxu0 0
        %1554 = vmatpush1.bf16.msra.mxu0 0
        %1555 = vmatprep.subr.bf16.mxu0 0
        %1556 = vmatpush1.bf16.msra.mxu0 0
        %1557 = vmatprep.mubr.bf16.mxu0 0
        %1558 = vmatmul.mubr.bf16.gmra.mrb[0].mxu0 %v1426
        %v1559 = vpop.f32.mrb[0].mxu0
        %v1560 = vadd.f32 0.0, %v1559
        %v1561 = vpop.f32.mrb[0].mxu0
        %v1562 = vpop.f32.mrb[0].mxu0
        %v1563 = vadd.f32 0.0, %v1562
        %v1564 = vpop.f32.mrb[0].mxu0
        %1565 = vmatprep.mubr.bf16.mxu0 0
        %1566 = vmatmul.mubr.bf16.gmra.mrb[0].mxu0 %v1427
        %v1567 = vpop.f32.mrb[0].mxu0
        %v1568 = vadd.f32 0.0, %v1567
        %v1569 = vpop.f32.mrb[0].mxu0
        %v1570 = vpop.f32.mrb[0].mxu0
        %v1571 = vadd.f32 0.0, %v1570
        %v1572 = vpop.f32.mrb[0].mxu0
        %1573 = vmatprep.mubr.bf16.mxu0 0
        %1574 = vmatmul.mubr.bf16.gmra.mrb[0].mxu0 %v1428
        %v1575 = vpop.f32.mrb[0].mxu0
        %v1576 = vadd.f32 0.0, %v1575
        %v1577 = vpop.f32.mrb[0].mxu0
        %v1578 = vpop.f32.mrb[0].mxu0
        %v1579 = vadd.f32 0.0, %v1578
        %v1580 = vpop.f32.mrb[0].mxu0
        %1581 = vmatprep.mubr.bf16.mxu0 0
        %1582 = vmatmul.mubr.bf16.gmra.mrb[0].mxu0 %v1429
        %v1583 = vpop.f32.mrb[0].mxu0
        %v1584 = vadd.f32 0.0, %v1583
        %v1585 = vpop.f32.mrb[0].mxu0
        %v1586 = vpop.f32.mrb[0].mxu0
        %v1587 = vadd.f32 0.0, %v1586
        %v1588 = vpop.f32.mrb[0].mxu0
        %1589 = vmatprep.mubr.bf16.mxu0 0
        %1590 = vmatmul.mubr.bf16.gmra.mrb[0].mxu0 %v1430
        %v1591 = vpop.f32.mrb[0].mxu0
        %v1592 = vadd.f32 0.0, %v1591
        %v1593 = vpop.f32.mrb[0].mxu0
        %v1594 = vpop.f32.mrb[0].mxu0
        %v1595 = vadd.f32 0.0, %v1594
        %v1596 = vpop.f32.mrb[0].mxu0
        %1597 = vmatprep.mubr.bf16.mxu0 0
        %1598 = vmatmul.mubr.bf16.gmra.mrb[0].mxu0 %v1431
        %v1599 = vpop.f32.mrb[0].mxu0
        %v1600 = vadd.f32 0.0, %v1599
        %v1601 = vpop.f32.mrb[0].mxu0
        %v1602 = vpop.f32.mrb[0].mxu0
        %v1603 = vadd.f32 0.0, %v1602
        %v1604 = vpop.f32.mrb[0].mxu0
        %1605 = vmatprep.mubr.bf16.mxu0 0
        %1606 = vmatmul.mubr.bf16.gmra.mrb[0].mxu0 %v1432
        %v1607 = vpop.f32.mrb[0].mxu0
        %v1608 = vadd.f32 0.0, %v1607
        %v1609 = vpop.f32.mrb[0].mxu0
        %v1610 = vpop.f32.mrb[0].mxu0
        %v1611 = vadd.f32 0.0, %v1610
        %v1612 = vpop.f32.mrb[0].mxu0
        %1613 = vmatprep.mubr.bf16.mxu0 0
        %1614 = vmatmul.mubr.bf16.gmra.mrb[0].mxu0 %v1433
        %v1615 = vpop.f32.mrb[0].mxu0
        %v1616 = vadd.f32 0.0, %v1615
        %v1617 = vpop.f32.mrb[0].mxu0
        %v1618 = vpop.f32.mrb[0].mxu0
        %v1619 = vadd.f32 0.0, %v1618
        %v1620 = vpop.f32.mrb[0].mxu0
        %1621 = vmatprep.mubr.bf16.mxu0 0
        %1622 = vmatmul.mubr.bf16.gmra.mrb[0].mxu0 %v1434
        %v1623 = vpop.f32.mrb[0].mxu0
        %v1624 = vadd.f32 0.0, %v1623
        %v1625 = vpop.f32.mrb[0].mxu0
        %v1626 = vpop.f32.mrb[0].mxu0
        %v1627 = vadd.f32 0.0, %v1626
        %v1628 = vpop.f32.mrb[0].mxu0
        %1629 = vmatprep.mubr.bf16.mxu0 0
        %1630 = vmatmul.mubr.bf16.gmra.mrb[0].mxu0 %v1435
        %v1631 = vpop.f32.mrb[0].mxu0
        %v1632 = vadd.f32 0.0, %v1631
        %v1633 = vpop.f32.mrb[0].mxu0
        %v1634 = vpop.f32.mrb[0].mxu0
        %v1635 = vadd.f32 0.0, %v1634
        %v1636 = vpop.f32.mrb[0].mxu0
        %1637 = vmatprep.mubr.bf16.mxu0 0
        %1638 = vmatmul.mubr.bf16.gmra.mrb[0].mxu0 %v1436
        %v1639 = vpop.f32.mrb[0].mxu0
        %v1640 = vadd.f32 0.0, %v1639
        %v1641 = vpop.f32.mrb[0].mxu0
        %v1642 = vpop.f32.mrb[0].mxu0
        %v1643 = vadd.f32 0.0, %v1642
        %v1644 = vpop.f32.mrb[0].mxu0
        %1645 = vmatprep.mubr.bf16.mxu0 0
        %1646 = vmatmul.mubr.bf16.gmra.mrb[0].mxu0 %v1437
        %v1647 = vpop.f32.mrb[0].mxu0
        %v1648 = vadd.f32 0.0, %v1647
        %v1649 = vpop.f32.mrb[0].mxu0
        %v1650 = vpop.f32.mrb[0].mxu0
        %v1651 = vadd.f32 0.0, %v1650
        %v1652 = vpop.f32.mrb[0].mxu0
        %1653 = vmatprep.mubr.bf16.mxu0 0
        %1654 = vmatmul.mubr.bf16.gmra.mrb[0].mxu0 %v1438
        %v1655 = vpop.f32.mrb[0].mxu0
        %v1656 = vadd.f32 0.0, %v1655
        %v1657 = vpop.f32.mrb[0].mxu0
        %v1658 = vpop.f32.mrb[0].mxu0
        %v1659 = vadd.f32 0.0, %v1658
        %v1660 = vpop.f32.mrb[0].mxu0
        %1661 = vmatprep.mubr.bf16.mxu0 0
        %1662 = vmatmul.mubr.bf16.gmra.mrb[0].mxu0 %v1439
        %v1663 = vpop.f32.mrb[0].mxu0
        %v1664 = vadd.f32 0.0, %v1663
        %v1665 = vpop.f32.mrb[0].mxu0
        %v1666 = vpop.f32.mrb[0].mxu0
        %v1667 = vadd.f32 0.0, %v1666
        %v1668 = vpop.f32.mrb[0].mxu0
        %1669 = vmatprep.mubr.bf16.mxu0 0
        %1670 = vmatmul.mubr.bf16.gmra.mrb[0].mxu0 %v1440
        %v1671 = vpop.f32.mrb[0].mxu0
        %v1672 = vadd.f32 0.0, %v1671
        %v1673 = vpop.f32.mrb[0].mxu0
        %v1674 = vpop.f32.mrb[0].mxu0
        %v1675 = vadd.f32 0.0, %v1674
        %v1676 = vpop.f32.mrb[0].mxu0
        %1677 = vmatprep.mubr.bf16.mxu0 0
        %1678 = vmatmul.mubr.bf16.gmra.mrb[0].mxu0 %v1441
        %v1679 = vpop.f32.mrb[0].mxu0
        %v1680 = vadd.f32 0.0, %v1679
        %v1681 = vpop.f32.mrb[0].mxu0
        %v1682 = vpop.f32.mrb[0].mxu0
        %v1683 = vadd.f32 0.0, %v1682
        %v1684 = vpop.f32.mrb[0].mxu0
        %1685 = vmatprep.mubr.bf16.mxu0 0
        %1686 = vmatmul.mubr.bf16.gmra.mrb[0].mxu0 %v1442
        %v1687 = vpop.f32.mrb[0].mxu0
        %v1688 = vadd.f32 0.0, %v1687
        %v1689 = vpop.f32.mrb[0].mxu0
        %v1690 = vpop.f32.mrb[0].mxu0
        %v1691 = vadd.f32 0.0, %v1690
        %v1692 = vpop.f32.mrb[0].mxu0
        %1693 = vmatprep.mubr.bf16.mxu0 0
        %1694 = vmatmul.mubr.bf16.gmra.mrb[0].mxu0 %v1443
        %v1695 = vpop.f32.mrb[0].mxu0
        %v1696 = vadd.f32 0.0, %v1695
        %v1697 = vpop.f32.mrb[0].mxu0
        %v1698 = vpop.f32.mrb[0].mxu0
        %v1699 = vadd.f32 0.0, %v1698
        %v1700 = vpop.f32.mrb[0].mxu0
        %1701 = vmatprep.mubr.bf16.mxu0 0
        %1702 = vmatmul.mubr.bf16.gmra.mrb[0].mxu0 %v1444
        %v1703 = vpop.f32.mrb[0].mxu0
        %v1704 = vadd.f32 0.0, %v1703
        %v1705 = vpop.f32.mrb[0].mxu0
        %v1706 = vpop.f32.mrb[0].mxu0
        %v1707 = vadd.f32 0.0, %v1706
        %v1708 = vpop.f32.mrb[0].mxu0
        %1709 = vmatprep.mubr.bf16.mxu0 0
        %1710 = vmatmul.mubr.bf16.gmra.mrb[0].mxu0 %v1445
        %v1711 = vpop.f32.mrb[0].mxu0
        %v1712 = vadd.f32 0.0, %v1711
        %v1713 = vpop.f32.mrb[0].mxu0
        %v1714 = vpop.f32.mrb[0].mxu0
        %v1715 = vadd.f32 0.0, %v1714
        %v1716 = vpop.f32.mrb[0].mxu0
        %1717 = vmatprep.mubr.bf16.mxu0 0
        %1718 = vmatmul.mubr.bf16.gmra.mrb[0].mxu0 %v1446
        %v1719 = vpop.f32.mrb[0].mxu0
        %v1720 = vadd.f32 0.0, %v1719
        %v1721 = vpop.f32.mrb[0].mxu0
        %v1722 = vpop.f32.mrb[0].mxu0
        %v1723 = vadd.f32 0.0, %v1722
        %v1724 = vpop.f32.mrb[0].mxu0
        %1725 = vmatprep.mubr.bf16.mxu0 0
        %1726 = vmatmul.mubr.bf16.gmra.mrb[0].mxu0 %v1447
        %v1727 = vpop.f32.mrb[0].mxu0
        %v1728 = vadd.f32 0.0, %v1727
        %v1729 = vpop.f32.mrb[0].mxu0
        %v1730 = vpop.f32.mrb[0].mxu0
        %v1731 = vadd.f32 0.0, %v1730
        %v1732 = vpop.f32.mrb[0].mxu0
        %1733 = vmatprep.mubr.bf16.mxu0 0
        %1734 = vmatmul.mubr.bf16.gmra.mrb[0].mxu0 %v1448
        %v1735 = vpop.f32.mrb[0].mxu0
        %v1736 = vadd.f32 0.0, %v1735
        %v1737 = vpop.f32.mrb[0].mxu0
        %v1738 = vpop.f32.mrb[0].mxu0
        %v1739 = vadd.f32 0.0, %v1738
        %v1740 = vpop.f32.mrb[0].mxu0
        %1741 = vmatprep.mubr.bf16.mxu0 0
        %1742 = vmatmul.mubr.bf16.gmra.mrb[0].mxu0 %v1449
        %v1743 = vpop.f32.mrb[0].mxu0
        %v1744 = vadd.f32 0.0, %v1743
        %v1745 = vpop.f32.mrb[0].mxu0
        %v1746 = vpop.f32.mrb[0].mxu0
        %v1747 = vadd.f32 0.0, %v1746
        %v1748 = vpop.f32.mrb[0].mxu0
        %1749 = vmatprep.mubr.bf16.mxu0 0
        %1750 = vmatmul.mubr.bf16.gmra.mrb[0].mxu0 %v1450
        %v1751 = vpop.f32.mrb[0].mxu0
        %v1752 = vadd.f32 0.0, %v1751
        %v1753 = vpop.f32.mrb[0].mxu0
        %v1754 = vpop.f32.mrb[0].mxu0
        %v1755 = vadd.f32 0.0, %v1754
        %v1756 = vpop.f32.mrb[0].mxu0
        %1757 = vmatprep.mubr.bf16.mxu0 0
        %1758 = vmatmul.mubr.bf16.gmra.mrb[0].mxu0 %v1451
        %v1759 = vpop.f32.mrb[0].mxu0
        %v1760 = vadd.f32 0.0, %v1759
        %v1761 = vpop.f32.mrb[0].mxu0
        %v1762 = vpop.f32.mrb[0].mxu0
        %v1763 = vadd.f32 0.0, %v1762
        %v1764 = vpop.f32.mrb[0].mxu0
        %1765 = vmatprep.mubr.bf16.mxu0 0
        %1766 = vmatmul.mubr.bf16.gmra.mrb[0].mxu0 %v1452
        %v1767 = vpop.f32.mrb[0].mxu0
        %v1768 = vadd.f32 0.0, %v1767
        %v1769 = vpop.f32.mrb[0].mxu0
        %v1770 = vpop.f32.mrb[0].mxu0
        %v1771 = vadd.f32 0.0, %v1770
        %v1772 = vpop.f32.mrb[0].mxu0
        %1773 = vmatprep.mubr.bf16.mxu0 0
        %1774 = vmatmul.mubr.bf16.gmra.mrb[0].mxu0 %v1453
        %v1775 = vpop.f32.mrb[0].mxu0
        %v1776 = vadd.f32 0.0, %v1775
        %v1777 = vpop.f32.mrb[0].mxu0
        %v1778 = vpop.f32.mrb[0].mxu0
        %v1779 = vadd.f32 0.0, %v1778
        %v1780 = vpop.f32.mrb[0].mxu0
        %1781 = vmatprep.mubr.bf16.mxu0 0
        %1782 = vmatmul.mubr.bf16.gmra.mrb[0].mxu0 %v1454
        %v1783 = vpop.f32.mrb[0].mxu0
        %v1784 = vadd.f32 0.0, %v1783
        %v1785 = vpop.f32.mrb[0].mxu0
        %v1786 = vpop.f32.mrb[0].mxu0
        %v1787 = vadd.f32 0.0, %v1786
        %v1788 = vpop.f32.mrb[0].mxu0
        %1789 = vmatprep.mubr.bf16.mxu0 0
        %1790 = vmatmul.mubr.bf16.gmra.mrb[0].mxu0 %v1455
        %v1791 = vpop.f32.mrb[0].mxu0
        %v1792 = vadd.f32 0.0, %v1791
        %v1793 = vpop.f32.mrb[0].mxu0
        %v1794 = vpop.f32.mrb[0].mxu0
        %v1795 = vadd.f32 0.0, %v1794
        %v1796 = vpop.f32.mrb[0].mxu0
        %1797 = vmatprep.mubr.bf16.mxu0 0
        %1798 = vmatmul.mubr.bf16.gmra.mrb[0].mxu0 %v1456
        %v1799 = vpop.f32.mrb[0].mxu0
        %v1800 = vadd.f32 0.0, %v1799
        %v1801 = vpop.f32.mrb[0].mxu0
        %v1802 = vpop.f32.mrb[0].mxu0
        %v1803 = vadd.f32 0.0, %v1802
        %v1804 = vpop.f32.mrb[0].mxu0
        %1805 = vmatprep.mubr.bf16.mxu0 0
        %1806 = vmatmul.mubr.bf16.gmra.mrb[0].mxu0 %v1457
        %v1807 = vpop.f32.mrb[0].mxu0
        %v1808 = vadd.f32 0.0, %v1807
        %v1809 = vpop.f32.mrb[0].mxu0
        %v1810 = vpop.f32.mrb[0].mxu0
        %v1811 = vadd.f32 0.0, %v1810
        %v1812 = vpop.f32.mrb[0].mxu0
        %1813 = vmatprep.mubr.bf16.mxu0 0
        %1814 = vmatmul.mubr.bf16.gmra.mrb[0].mxu0 %v1458
        %v1815 = vpop.f32.mrb[0].mxu0
        %v1816 = vadd.f32 0.0, %v1815
        %v1817 = vpop.f32.mrb[0].mxu0
        %v1818 = vpop.f32.mrb[0].mxu0
        %v1819 = vadd.f32 0.0, %v1818
        %v1820 = vpop.f32.mrb[0].mxu0
        %1821 = vmatprep.mubr.bf16.mxu0 0
        %1822 = vmatmul.mubr.bf16.gmra.mrb[0].mxu0 %v1459
        %v1823 = vpop.f32.mrb[0].mxu0
        %v1824 = vadd.f32 0.0, %v1823
        %v1825 = vpop.f32.mrb[0].mxu0
        %v1826 = vpop.f32.mrb[0].mxu0
        %v1827 = vadd.f32 0.0, %v1826
        %v1828 = vpop.f32.mrb[0].mxu0
        %1829 = vdwg.mxu0
        %v1830 = vld [vmem:[#allocation3] sm:$0xff]
        %v1831 = vld [vmem:[#allocation3 + $0x8] sm:$0xff]
        %v1832 = vld [vmem:[#allocation3 + $0x10] sm:$0xff]
        %v1833 = vld [vmem:[#allocation3 + $0x18] sm:$0xff]
        %v1834 = vld [vmem:[#allocation3 + $0x20] sm:$0xff]
        %v1835 = vld [vmem:[#allocation3 + $0x28] sm:$0xff]
        %v1836 = vld [vmem:[#allocation3 + $0x30] sm:$0xff]
        %v1837 = vld [vmem:[#allocation3 + $0x38] sm:$0xff]
        %v1838 = vld [vmem:[#allocation3 + $0x40] sm:$0xff]
        %v1839 = vld [vmem:[#allocation3 + $0x48] sm:$0xff]
        %v1840 = vld [vmem:[#allocation3 + $0x50] sm:$0xff]
        %v1841 = vld [vmem:[#allocation3 + $0x58] sm:$0xff]
        %v1842 = vld [vmem:[#allocation3 + $0x60] sm:$0xff]
        %v1843 = vld [vmem:[#allocation3 + $0x68] sm:$0xff]
        %v1844 = vld [vmem:[#allocation3 + $0x70] sm:$0xff]
        %v1845 = vld [vmem:[#allocation3 + $0x78] sm:$0xff]
        %v1846 = vld [vmem:[#allocation3 + $0x80] sm:$0xff]
        %v1847 = vld [vmem:[#allocation3 + $0x88] sm:$0xff]
        %v1848 = vld [vmem:[#allocation3 + $0x90] sm:$0xff]
        %v1849 = vld [vmem:[#allocation3 + $0x98] sm:$0xff]
        %v1850 = vld [vmem:[#allocation3 + $0xa0] sm:$0xff]
        %v1851 = vld [vmem:[#allocation3 + $0xa8] sm:$0xff]
        %v1852 = vld [vmem:[#allocation3 + $0xb0] sm:$0xff]
        %v1853 = vld [vmem:[#allocation3 + $0xb8] sm:$0xff]
        %v1854 = vld [vmem:[#allocation3 + $0xc0] sm:$0xff]
        %v1855 = vld [vmem:[#allocation3 + $0xc8] sm:$0xff]
        %v1856 = vld [vmem:[#allocation3 + $0xd0] sm:$0xff]
        %v1857 = vld [vmem:[#allocation3 + $0xd8] sm:$0xff]
        %v1858 = vld [vmem:[#allocation3 + $0xe0] sm:$0xff]
        %v1859 = vld [vmem:[#allocation3 + $0xe8] sm:$0xff]
        %v1860 = vld [vmem:[#allocation3 + $0xf0] sm:$0xff]
        %v1861 = vld [vmem:[#allocation3 + $0xf8] sm:$0xff]
        %v1862 = vld [vmem:[#allocation3 + $0x100] sm:$0xff]
        %v1863 = vld [vmem:[#allocation3 + $0x108] sm:$0xff]
        %v1864 = vld [vmem:[#allocation3 + $0x110] sm:$0xff]
        %v1865 = vld [vmem:[#allocation3 + $0x118] sm:$0xff]
        %v1866 = vld [vmem:[#allocation3 + $0x120] sm:$0xff]
        %v1867 = vld [vmem:[#allocation3 + $0x128] sm:$0xff]
        %v1868 = vld [vmem:[#allocation3 + $0x130] sm:$0xff]
        %v1869 = vld [vmem:[#allocation3 + $0x138] sm:$0xff]
        %v1870 = vld [vmem:[#allocation3 + $0x140] sm:$0xff]
        %v1871 = vld [vmem:[#allocation3 + $0x148] sm:$0xff]
        %v1872 = vld [vmem:[#allocation3 + $0x150] sm:$0xff]
        %v1873 = vld [vmem:[#allocation3 + $0x158] sm:$0xff]
        %v1874 = vld [vmem:[#allocation3 + $0x160] sm:$0xff]
        %v1875 = vld [vmem:[#allocation3 + $0x168] sm:$0xff]
        %v1876 = vld [vmem:[#allocation3 + $0x170] sm:$0xff]
        %v1877 = vld [vmem:[#allocation3 + $0x178] sm:$0xff]
        %v1878 = vld [vmem:[#allocation3 + $0x180] sm:$0xff]
        %v1879 = vld [vmem:[#allocation3 + $0x188] sm:$0xff]
        %v1880 = vld [vmem:[#allocation3 + $0x190] sm:$0xff]
        %v1881 = vld [vmem:[#allocation3 + $0x198] sm:$0xff]
        %v1882 = vld [vmem:[#allocation3 + $0x1a0] sm:$0xff]
        %v1883 = vld [vmem:[#allocation3 + $0x1a8] sm:$0xff]
        %v1884 = vld [vmem:[#allocation3 + $0x1b0] sm:$0xff]
        %v1885 = vld [vmem:[#allocation3 + $0x1b8] sm:$0xff]
        %v1886 = vld [vmem:[#allocation3 + $0x1c0] sm:$0xff]
        %v1887 = vld [vmem:[#allocation3 + $0x1c8] sm:$0xff]
        %v1888 = vld [vmem:[#allocation3 + $0x1d0] sm:$0xff]
        %v1889 = vld [vmem:[#allocation3 + $0x1d8] sm:$0xff]
        %v1890 = vld [vmem:[#allocation3 + $0x1e0] sm:$0xff]
        %v1891 = vld [vmem:[#allocation3 + $0x1e8] sm:$0xff]
        %v1892 = vld [vmem:[#allocation3 + $0x1f0] sm:$0xff]
        %v1893 = vld [vmem:[#allocation3 + $0x1f8] sm:$0xff]
        %v1894 = vld [vmem:[#allocation3 + $0x200] sm:$0xff]
        %v1895 = vld [vmem:[#allocation3 + $0x208] sm:$0xff]
        %v1896 = vld [vmem:[#allocation3 + $0x210] sm:$0xff]
        %v1897 = vld [vmem:[#allocation3 + $0x218] sm:$0xff]
        %v1898 = vadd.f32 %v1830, %v1560
        %v1899 = vadd.f32 %v1831, %v1563
        %v1900 = vadd.f32 %v1832, %v1568
        %v1901 = vadd.f32 %v1833, %v1571
        %v1902 = vadd.f32 %v1834, %v1576
        %v1903 = vadd.f32 %v1835, %v1579
        %v1904 = vadd.f32 %v1836, %v1584
        %v1905 = vadd.f32 %v1837, %v1587
        %v1906 = vadd.f32 %v1838, %v1592
        %v1907 = vadd.f32 %v1839, %v1595
        %v1908 = vadd.f32 %v1840, %v1600
        %v1909 = vadd.f32 %v1841, %v1603
        %v1910 = vadd.f32 %v1842, %v1608
        %v1911 = vadd.f32 %v1843, %v1611
        %v1912 = vadd.f32 %v1844, %v1616
        %v1913 = vadd.f32 %v1845, %v1619
        %v1914 = vadd.f32 %v1846, %v1624
        %v1915 = vadd.f32 %v1847, %v1627
        %v1916 = vadd.f32 %v1848, %v1632
        %v1917 = vadd.f32 %v1849, %v1635
        %v1918 = vadd.f32 %v1850, %v1640
        %v1919 = vadd.f32 %v1851, %v1643
        %v1920 = vadd.f32 %v1852, %v1648
        %v1921 = vadd.f32 %v1853, %v1651
        %v1922 = vadd.f32 %v1854, %v1656
        %v1923 = vadd.f32 %v1855, %v1659
        %v1924 = vadd.f32 %v1856, %v1664
        %v1925 = vadd.f32 %v1857, %v1667
        %v1926 = vadd.f32 %v1858, %v1672
        %v1927 = vadd.f32 %v1859, %v1675
        %v1928 = vadd.f32 %v1860, %v1680
        %v1929 = vadd.f32 %v1861, %v1683
        %v1930 = vadd.f32 %v1862, %v1688
        %v1931 = vadd.f32 %v1863, %v1691
        %v1932 = vadd.f32 %v1864, %v1696
        %v1933 = vadd.f32 %v1865, %v1699
        %v1934 = vadd.f32 %v1866, %v1704
        %v1935 = vadd.f32 %v1867, %v1707
        %v1936 = vadd.f32 %v1868, %v1712
        %v1937 = vadd.f32 %v1869, %v1715
        %v1938 = vadd.f32 %v1870, %v1720
        %v1939 = vadd.f32 %v1871, %v1723
        %v1940 = vadd.f32 %v1872, %v1728
        %v1941 = vadd.f32 %v1873, %v1731
        %v1942 = vadd.f32 %v1874, %v1736
        %v1943 = vadd.f32 %v1875, %v1739
        %v1944 = vadd.f32 %v1876, %v1744
        %v1945 = vadd.f32 %v1877, %v1747
        %v1946 = vadd.f32 %v1878, %v1752
        %v1947 = vadd.f32 %v1879, %v1755
        %v1948 = vadd.f32 %v1880, %v1760
        %v1949 = vadd.f32 %v1881, %v1763
        %v1950 = vadd.f32 %v1882, %v1768
        %v1951 = vadd.f32 %v1883, %v1771
        %v1952 = vadd.f32 %v1884, %v1776
        %v1953 = vadd.f32 %v1885, %v1779
        %v1954 = vadd.f32 %v1886, %v1784
        %v1955 = vadd.f32 %v1887, %v1787
        %v1956 = vadd.f32 %v1888, %v1792
        %v1957 = vadd.f32 %v1889, %v1795
        %v1958 = vadd.f32 %v1890, %v1800
        %v1959 = vadd.f32 %v1891, %v1803
        %v1960 = vadd.f32 %v1892, %v1808
        %v1961 = vadd.f32 %v1893, %v1811
        %v1962 = vadd.f32 %v1894, %v1816
        %v1963 = vadd.f32 %v1895, %v1819
        %v1964 = vadd.f32 %v1896, %v1824
        %v1965 = vadd.f32 %v1897, %v1827
        %1966 = vst [vmem:[#allocation3] sm:$0xff] %v1898
        %1967 = vst [vmem:[#allocation3 + $0x8] sm:$0xff] %v1899
        %1968 = vst [vmem:[#allocation3 + $0x10] sm:$0xff] %v1900
        %1969 = vst [vmem:[#allocation3 + $0x18] sm:$0xff] %v1901
        %1970 = vst [vmem:[#allocation3 + $0x20] sm:$0xff] %v1902
        %1971 = vst [vmem:[#allocation3 + $0x28] sm:$0xff] %v1903
        %1972 = vst [vmem:[#allocation3 + $0x30] sm:$0xff] %v1904
        %1973 = vst [vmem:[#allocation3 + $0x38] sm:$0xff] %v1905
        %1974 = vst [vmem:[#allocation3 + $0x40] sm:$0xff] %v1906
        %1975 = vst [vmem:[#allocation3 + $0x48] sm:$0xff] %v1907
        %1976 = vst [vmem:[#allocation3 + $0x50] sm:$0xff] %v1908
        %1977 = vst [vmem:[#allocation3 + $0x58] sm:$0xff] %v1909
        %1978 = vst [vmem:[#allocation3 + $0x60] sm:$0xff] %v1910
        %1979 = vst [vmem:[#allocation3 + $0x68] sm:$0xff] %v1911
        %1980 = vst [vmem:[#allocation3 + $0x70] sm:$0xff] %v1912
        %1981 = vst [vmem:[#allocation3 + $0x78] sm:$0xff] %v1913
        %1982 = vst [vmem:[#allocation3 + $0x80] sm:$0xff] %v1914
        %1983 = vst [vmem:[#allocation3 + $0x88] sm:$0xff] %v1915
        %1984 = vst [vmem:[#allocation3 + $0x90] sm:$0xff] %v1916
        %1985 = vst [vmem:[#allocation3 + $0x98] sm:$0xff] %v1917
        %1986 = vst [vmem:[#allocation3 + $0xa0] sm:$0xff] %v1918
        %1987 = vst [vmem:[#allocation3 + $0xa8] sm:$0xff] %v1919
        %1988 = vst [vmem:[#allocation3 + $0xb0] sm:$0xff] %v1920
        %1989 = vst [vmem:[#allocation3 + $0xb8] sm:$0xff] %v1921
        %1990 = vst [vmem:[#allocation3 + $0xc0] sm:$0xff] %v1922
        %1991 = vst [vmem:[#allocation3 + $0xc8] sm:$0xff] %v1923
        %1992 = vst [vmem:[#allocation3 + $0xd0] sm:$0xff] %v1924
        %1993 = vst [vmem:[#allocation3 + $0xd8] sm:$0xff] %v1925
        %1994 = vst [vmem:[#allocation3 + $0xe0] sm:$0xff] %v1926
        %1995 = vst [vmem:[#allocation3 + $0xe8] sm:$0xff] %v1927
        %1996 = vst [vmem:[#allocation3 + $0xf0] sm:$0xff] %v1928
        %1997 = vst [vmem:[#allocation3 + $0xf8] sm:$0xff] %v1929
        %1998 = vst [vmem:[#allocation3 + $0x100] sm:$0xff] %v1930
        %1999 = vst [vmem:[#allocation3 + $0x108] sm:$0xff] %v1931
        %2000 = vst [vmem:[#allocation3 + $0x110] sm:$0xff] %v1932
        %2001 = vst [vmem:[#allocation3 + $0x118] sm:$0xff] %v1933
        %2002 = vst [vmem:[#allocation3 + $0x120] sm:$0xff] %v1934
        %2003 = vst [vmem:[#allocation3 + $0x128] sm:$0xff] %v1935
        %2004 = vst [vmem:[#allocation3 + $0x130] sm:$0xff] %v1936
        %2005 = vst [vmem:[#allocation3 + $0x138] sm:$0xff] %v1937
        %2006 = vst [vmem:[#allocation3 + $0x140] sm:$0xff] %v1938
        %2007 = vst [vmem:[#allocation3 + $0x148] sm:$0xff] %v1939
        %2008 = vst [vmem:[#allocation3 + $0x150] sm:$0xff] %v1940
        %2009 = vst [vmem:[#allocation3 + $0x158] sm:$0xff] %v1941
        %2010 = vst [vmem:[#allocation3 + $0x160] sm:$0xff] %v1942
        %2011 = vst [vmem:[#allocation3 + $0x168] sm:$0xff] %v1943
        %2012 = vst [vmem:[#allocation3 + $0x170] sm:$0xff] %v1944
        %2013 = vst [vmem:[#allocation3 + $0x178] sm:$0xff] %v1945
        %2014 = vst [vmem:[#allocation3 + $0x180] sm:$0xff] %v1946
        %2015 = vst [vmem:[#allocation3 + $0x188] sm:$0xff] %v1947
        %2016 = vst [vmem:[#allocation3 + $0x190] sm:$0xff] %v1948
        %2017 = vst [vmem:[#allocation3 + $0x198] sm:$0xff] %v1949
        %2018 = vst [vmem:[#allocation3 + $0x1a0] sm:$0xff] %v1950
        %2019 = vst [vmem:[#allocation3 + $0x1a8] sm:$0xff] %v1951
        %2020 = vst [vmem:[#allocation3 + $0x1b0] sm:$0xff] %v1952
        %2021 = vst [vmem:[#allocation3 + $0x1b8] sm:$0xff] %v1953
        %2022 = vst [vmem:[#allocation3 + $0x1c0] sm:$0xff] %v1954
        %2023 = vst [vmem:[#allocation3 + $0x1c8] sm:$0xff] %v1955
        %2024 = vst [vmem:[#allocation3 + $0x1d0] sm:$0xff] %v1956
        %2025 = vst [vmem:[#allocation3 + $0x1d8] sm:$0xff] %v1957
        %2026 = vst [vmem:[#allocation3 + $0x1e0] sm:$0xff] %v1958
        %2027 = vst [vmem:[#allocation3 + $0x1e8] sm:$0xff] %v1959
        %2028 = vst [vmem:[#allocation3 + $0x1f0] sm:$0xff] %v1960
        %2029 = vst [vmem:[#allocation3 + $0x1f8] sm:$0xff] %v1961
        %2030 = vst [vmem:[#allocation3 + $0x200] sm:$0xff] %v1962
        %2031 = vst [vmem:[#allocation3 + $0x208] sm:$0xff] %v1963
        %2032 = vst [vmem:[#allocation3 + $0x210] sm:$0xff] %v1964
        %2033 = vst [vmem:[#allocation3 + $0x218] sm:$0xff] %v1965
        %v2034 = vld [vmem:[#allocation2 + $0x30] sm:$0xff]
        %v2035 = vld [vmem:[#allocation2 + $0x38] sm:$0xff]
        %v2036 = vld [vmem:[#allocation2 + $0x40] sm:$0xff]
        %v2037 = vld [vmem:[#allocation2 + $0x48] sm:$0xff]
        %v2038 = vld [vmem:[#allocation2 + $0x50] sm:$0xff]
        %v2039 = vld [vmem:[#allocation2 + $0x58] sm:$0xff]
        %v2040 = vld [vmem:[#allocation2 + $0x60] sm:$0xff]
        %v2041 = vld [vmem:[#allocation2 + $0x68] sm:$0xff]
        %v2042 = vld [vmem:[#allocation2 + $0x70] sm:$0xff]
        %v2043 = vld [vmem:[#allocation2 + $0x78] sm:$0xff]
        %v2044 = vld [vmem:[#allocation2 + $0x80] sm:$0xff]
        %v2045 = vld [vmem:[#allocation2 + $0x88] sm:$0xff]
        %v2046 = vld [vmem:[#allocation2 + $0x90] sm:$0xff]
        %v2047 = vld [vmem:[#allocation2 + $0x98] sm:$0xff]
        %v2048 = vld [vmem:[#allocation2 + $0xa0] sm:$0xff]
        %v2049 = vld [vmem:[#allocation2 + $0xa8] sm:$0xff]
        %v2050 = vld [vmem:[#allocation2 + $0xb0] sm:$0xff]
        %v2051 = vld [vmem:[#allocation2 + $0xb8] sm:$0xff]
        %v2052 = vld [vmem:[#allocation2 + $0xc0] sm:$0xff]
        %v2053 = vld [vmem:[#allocation2 + $0xc8] sm:$0xff]
        %v2054 = vld [vmem:[#allocation2 + $0xd0] sm:$0xff]
        %v2055 = vld [vmem:[#allocation2 + $0xd8] sm:$0xff]
        %v2056 = vld [vmem:[#allocation2 + $0xe0] sm:$0xff]
        %v2057 = vld [vmem:[#allocation2 + $0xe8] sm:$0xff]
        %v2058 = vld [vmem:[#allocation2 + $0xf0] sm:$0xff]
        %v2059 = vld [vmem:[#allocation2 + $0xf8] sm:$0xff]
        %v2060 = vld [vmem:[#allocation2 + $0x100] sm:$0xff]
        %v2061 = vld [vmem:[#allocation2 + $0x108] sm:$0xff]
        %v2062 = vld [vmem:[#allocation2 + $0x110] sm:$0xff]
        %v2063 = vld [vmem:[#allocation2 + $0x118] sm:$0xff]
        %v2064 = vld [vmem:[#allocation2 + $0x120] sm:$0xff]
        %v2065 = vld [vmem:[#allocation2 + $0x128] sm:$0xff]
        %v2066 = vld [vmem:[#allocation2 + $0x130] sm:$0xff]
        %v2067 = vld [vmem:[#allocation2 + $0x138] sm:$0xff]
        %s2068 = scalar_lea.vmem %s8, 384
        %v2069 = vld [vmem:[%s2068] sm:$0xf]
        %v2070 = vld [vmem:[%s2068 + $0x4] sm:$0xf]
        %v2071 = vld [vmem:[%s2068 + $0x8] sm:$0xf]
        %v2072 = vld [vmem:[%s2068 + $0xc] sm:$0xf]
        %v2073 = vld [vmem:[%s2068 + $0x10] sm:$0xf]
        %v2074 = vld [vmem:[%s2068 + $0x14] sm:$0xf]
        %v2075 = vld [vmem:[%s2068 + $0x18] sm:$0xf]
        %v2076 = vld [vmem:[%s2068 + $0x1c] sm:$0xf]
        %v2077 = vld [vmem:[%s2068 + $0x20] sm:$0xf]
        %v2078 = vld [vmem:[%s2068 + $0x24] sm:$0xf]
        %v2079 = vld [vmem:[%s2068 + $0x28] sm:$0xf]
        %v2080 = vld [vmem:[%s2068 + $0x2c] sm:$0xf]
        %v2081 = vld [vmem:[%s2068 + $0x30] sm:$0xf]
        %v2082 = vld [vmem:[%s2068 + $0x34] sm:$0xf]
        %v2083 = vld [vmem:[%s2068 + $0x38] sm:$0xf]
        %v2084 = vld [vmem:[%s2068 + $0x3c] sm:$0xf]
        %v2101 = vunpack.c.l.b16 %v2069
        %v2102 = vunpack.c.l.b16 %v2070
        %v2103 = vunpack.c.l.b16 %v2071
        %v2104 = vunpack.c.l.b16 %v2072
        %v2105 = vunpack.c.l.b16 %v2073
        %v2106 = vunpack.c.l.b16 %v2074
        %v2107 = vunpack.c.l.b16 %v2075
        %v2108 = vunpack.c.l.b16 %v2076
        %v2109 = vunpack.c.l.b16 %v2077
        %v2110 = vunpack.c.l.b16 %v2078
        %v2111 = vunpack.c.l.b16 %v2079
        %v2112 = vunpack.c.l.b16 %v2080
        %v2113 = vunpack.c.l.b16 %v2081
        %v2114 = vunpack.c.l.b16 %v2082
        %v2115 = vunpack.c.l.b16 %v2083
        %v2116 = vunpack.c.l.b16 %v2084
        %v2117 = vpack.c.b16 %v2102, %v2101
        %v2118 = vpack.c.b16 %v2104, %v2103
        %v2119 = vpack.c.b16 %v2106, %v2105
        %v2120 = vpack.c.b16 %v2108, %v2107
        %v2121 = vpack.c.b16 %v2110, %v2109
        %v2122 = vpack.c.b16 %v2112, %v2111
        %v2123 = vpack.c.b16 %v2114, %v2113
        %v2124 = vpack.c.b16 %v2116, %v2115
        %2133 = vmatprep.subr.bf16.mxu0 0
        %2134 = vmatpush1.bf16.msra.mxu0 %v2117
        %2135 = vmatprep.subr.bf16.mxu0 0
        %2136 = vmatpush1.bf16.msra.mxu0 %v2118
        %2137 = vmatprep.subr.bf16.mxu0 0
        %2138 = vmatpush1.bf16.msra.mxu0 %v2119
        %2139 = vmatprep.subr.bf16.mxu0 0
        %2140 = vmatpush1.bf16.msra.mxu0 %v2120
        %2141 = vmatprep.subr.bf16.mxu0 0
        %2142 = vmatpush1.bf16.msra.mxu0 %v2121
        %2143 = vmatprep.subr.bf16.mxu0 0
        %2144 = vmatpush1.bf16.msra.mxu0 %v2122
        %2145 = vmatprep.subr.bf16.mxu0 0
        %2146 = vmatpush1.bf16.msra.mxu0 %v2123
        %2147 = vmatprep.subr.bf16.mxu0 0
        %2148 = vmatpush1.bf16.msra.mxu0 %v2124
        %2149 = vmatprep.subr.bf16.mxu0 0
        %2150 = vmatpush1.bf16.msra.mxu0 0
        %2151 = vmatprep.subr.bf16.mxu0 0
        %2152 = vmatpush1.bf16.msra.mxu0 0
        %2153 = vmatprep.subr.bf16.mxu0 0
        %2154 = vmatpush1.bf16.msra.mxu0 0
        %2155 = vmatprep.subr.bf16.mxu0 0
        %2156 = vmatpush1.bf16.msra.mxu0 0
        %2157 = vmatprep.subr.bf16.mxu0 0
        %2158 = vmatpush1.bf16.msra.mxu0 0
        %2159 = vmatprep.subr.bf16.mxu0 0
        %2160 = vmatpush1.bf16.msra.mxu0 0
        %2161 = vmatprep.subr.bf16.mxu0 0
        %2162 = vmatpush1.bf16.msra.mxu0 0
        %2163 = vmatprep.subr.bf16.mxu0 0
        %2164 = vmatpush1.bf16.msra.mxu0 0
        %2165 = vmatprep.mubr.bf16.mxu0 0
        %2166 = vmatmul.mubr.bf16.gmra.mrb[0].mxu0 %v2034
        %v2167 = vpop.f32.mrb[0].mxu0
        %v2168 = vadd.f32 0.0, %v2167
        %v2169 = vpop.f32.mrb[0].mxu0
        %v2170 = vpop.f32.mrb[0].mxu0
        %v2171 = vadd.f32 0.0, %v2170
        %v2172 = vpop.f32.mrb[0].mxu0
        %2173 = vmatprep.mubr.bf16.mxu0 0
        %2174 = vmatmul.mubr.bf16.gmra.mrb[0].mxu0 %v2035
        %v2175 = vpop.f32.mrb[0].mxu0
        %v2176 = vadd.f32 0.0, %v2175
        %v2177 = vpop.f32.mrb[0].mxu0
        %v2178 = vpop.f32.mrb[0].mxu0
        %v2179 = vadd.f32 0.0, %v2178
        %v2180 = vpop.f32.mrb[0].mxu0
        %2181 = vmatprep.mubr.bf16.mxu0 0
        %2182 = vmatmul.mubr.bf16.gmra.mrb[0].mxu0 %v2036
        %v2183 = vpop.f32.mrb[0].mxu0
        %v2184 = vadd.f32 0.0, %v2183
        %v2185 = vpop.f32.mrb[0].mxu0
        %v2186 = vpop.f32.mrb[0].mxu0
        %v2187 = vadd.f32 0.0, %v2186
        %v2188 = vpop.f32.mrb[0].mxu0
        %2189 = vmatprep.mubr.bf16.mxu0 0
        %2190 = vmatmul.mubr.bf16.gmra.mrb[0].mxu0 %v2037
        %v2191 = vpop.f32.mrb[0].mxu0
        %v2192 = vadd.f32 0.0, %v2191
        %v2193 = vpop.f32.mrb[0].mxu0
        %v2194 = vpop.f32.mrb[0].mxu0
        %v2195 = vadd.f32 0.0, %v2194
        %v2196 = vpop.f32.mrb[0].mxu0
        %2197 = vmatprep.mubr.bf16.mxu0 0
        %2198 = vmatmul.mubr.bf16.gmra.mrb[0].mxu0 %v2038
        %v2199 = vpop.f32.mrb[0].mxu0
        %v2200 = vadd.f32 0.0, %v2199
        %v2201 = vpop.f32.mrb[0].mxu0
        %v2202 = vpop.f32.mrb[0].mxu0
        %v2203 = vadd.f32 0.0, %v2202
        %v2204 = vpop.f32.mrb[0].mxu0
        %2205 = vmatprep.mubr.bf16.mxu0 0
        %2206 = vmatmul.mubr.bf16.gmra.mrb[0].mxu0 %v2039
        %v2207 = vpop.f32.mrb[0].mxu0
        %v2208 = vadd.f32 0.0, %v2207
        %v2209 = vpop.f32.mrb[0].mxu0
        %v2210 = vpop.f32.mrb[0].mxu0
        %v2211 = vadd.f32 0.0, %v2210
        %v2212 = vpop.f32.mrb[0].mxu0
        %2213 = vmatprep.mubr.bf16.mxu0 0
        %2214 = vmatmul.mubr.bf16.gmra.mrb[0].mxu0 %v2040
        %v2215 = vpop.f32.mrb[0].mxu0
        %v2216 = vadd.f32 0.0, %v2215
        %v2217 = vpop.f32.mrb[0].mxu0
        %v2218 = vpop.f32.mrb[0].mxu0
        %v2219 = vadd.f32 0.0, %v2218
        %v2220 = vpop.f32.mrb[0].mxu0
        %2221 = vmatprep.mubr.bf16.mxu0 0
        %2222 = vmatmul.mubr.bf16.gmra.mrb[0].mxu0 %v2041
        %v2223 = vpop.f32.mrb[0].mxu0
        %v2224 = vadd.f32 0.0, %v2223
        %v2225 = vpop.f32.mrb[0].mxu0
        %v2226 = vpop.f32.mrb[0].mxu0
        %v2227 = vadd.f32 0.0, %v2226
        %v2228 = vpop.f32.mrb[0].mxu0
        %2229 = vmatprep.mubr.bf16.mxu0 0
        %2230 = vmatmul.mubr.bf16.gmra.mrb[0].mxu0 %v2042
        %v2231 = vpop.f32.mrb[0].mxu0
        %v2232 = vadd.f32 0.0, %v2231
        %v2233 = vpop.f32.mrb[0].mxu0
        %v2234 = vpop.f32.mrb[0].mxu0
        %v2235 = vadd.f32 0.0, %v2234
        %v2236 = vpop.f32.mrb[0].mxu0
        %2237 = vmatprep.mubr.bf16.mxu0 0
        %2238 = vmatmul.mubr.bf16.gmra.mrb[0].mxu0 %v2043
        %v2239 = vpop.f32.mrb[0].mxu0
        %v2240 = vadd.f32 0.0, %v2239
        %v2241 = vpop.f32.mrb[0].mxu0
        %v2242 = vpop.f32.mrb[0].mxu0
        %v2243 = vadd.f32 0.0, %v2242
        %v2244 = vpop.f32.mrb[0].mxu0
        %2245 = vmatprep.mubr.bf16.mxu0 0
        %2246 = vmatmul.mubr.bf16.gmra.mrb[0].mxu0 %v2044
        %v2247 = vpop.f32.mrb[0].mxu0
        %v2248 = vadd.f32 0.0, %v2247
        %v2249 = vpop.f32.mrb[0].mxu0
        %v2250 = vpop.f32.mrb[0].mxu0
        %v2251 = vadd.f32 0.0, %v2250
        %v2252 = vpop.f32.mrb[0].mxu0
        %2253 = vmatprep.mubr.bf16.mxu0 0
        %2254 = vmatmul.mubr.bf16.gmra.mrb[0].mxu0 %v2045
        %v2255 = vpop.f32.mrb[0].mxu0
        %v2256 = vadd.f32 0.0, %v2255
        %v2257 = vpop.f32.mrb[0].mxu0
        %v2258 = vpop.f32.mrb[0].mxu0
        %v2259 = vadd.f32 0.0, %v2258
        %v2260 = vpop.f32.mrb[0].mxu0
        %2261 = vmatprep.mubr.bf16.mxu0 0
        %2262 = vmatmul.mubr.bf16.gmra.mrb[0].mxu0 %v2046
        %v2263 = vpop.f32.mrb[0].mxu0
        %v2264 = vadd.f32 0.0, %v2263
        %v2265 = vpop.f32.mrb[0].mxu0
        %v2266 = vpop.f32.mrb[0].mxu0
        %v2267 = vadd.f32 0.0, %v2266
        %v2268 = vpop.f32.mrb[0].mxu0
        %2269 = vmatprep.mubr.bf16.mxu0 0
        %2270 = vmatmul.mubr.bf16.gmra.mrb[0].mxu0 %v2047
        %v2271 = vpop.f32.mrb[0].mxu0
        %v2272 = vadd.f32 0.0, %v2271
        %v2273 = vpop.f32.mrb[0].mxu0
        %v2274 = vpop.f32.mrb[0].mxu0
        %v2275 = vadd.f32 0.0, %v2274
        %v2276 = vpop.f32.mrb[0].mxu0
        %2277 = vmatprep.mubr.bf16.mxu0 0
        %2278 = vmatmul.mubr.bf16.gmra.mrb[0].mxu0 %v2048
        %v2279 = vpop.f32.mrb[0].mxu0
        %v2280 = vadd.f32 0.0, %v2279
        %v2281 = vpop.f32.mrb[0].mxu0
        %v2282 = vpop.f32.mrb[0].mxu0
        %v2283 = vadd.f32 0.0, %v2282
        %v2284 = vpop.f32.mrb[0].mxu0
        %2285 = vmatprep.mubr.bf16.mxu0 0
        %2286 = vmatmul.mubr.bf16.gmra.mrb[0].mxu0 %v2049
        %v2287 = vpop.f32.mrb[0].mxu0
        %v2288 = vadd.f32 0.0, %v2287
        %v2289 = vpop.f32.mrb[0].mxu0
        %v2290 = vpop.f32.mrb[0].mxu0
        %v2291 = vadd.f32 0.0, %v2290
        %v2292 = vpop.f32.mrb[0].mxu0
        %2293 = vmatprep.mubr.bf16.mxu0 0
        %2294 = vmatmul.mubr.bf16.gmra.mrb[0].mxu0 %v2050
        %v2295 = vpop.f32.mrb[0].mxu0
        %v2296 = vadd.f32 0.0, %v2295
        %v2297 = vpop.f32.mrb[0].mxu0
        %v2298 = vpop.f32.mrb[0].mxu0
        %v2299 = vadd.f32 0.0, %v2298
        %v2300 = vpop.f32.mrb[0].mxu0
        %2301 = vmatprep.mubr.bf16.mxu0 0
        %2302 = vmatmul.mubr.bf16.gmra.mrb[0].mxu0 %v2051
        %v2303 = vpop.f32.mrb[0].mxu0
        %v2304 = vadd.f32 0.0, %v2303
        %v2305 = vpop.f32.mrb[0].mxu0
        %v2306 = vpop.f32.mrb[0].mxu0
        %v2307 = vadd.f32 0.0, %v2306
        %v2308 = vpop.f32.mrb[0].mxu0
        %2309 = vmatprep.mubr.bf16.mxu0 0
        %2310 = vmatmul.mubr.bf16.gmra.mrb[0].mxu0 %v2052
        %v2311 = vpop.f32.mrb[0].mxu0
        %v2312 = vadd.f32 0.0, %v2311
        %v2313 = vpop.f32.mrb[0].mxu0
        %v2314 = vpop.f32.mrb[0].mxu0
        %v2315 = vadd.f32 0.0, %v2314
        %v2316 = vpop.f32.mrb[0].mxu0
        %2317 = vmatprep.mubr.bf16.mxu0 0
        %2318 = vmatmul.mubr.bf16.gmra.mrb[0].mxu0 %v2053
        %v2319 = vpop.f32.mrb[0].mxu0
        %v2320 = vadd.f32 0.0, %v2319
        %v2321 = vpop.f32.mrb[0].mxu0
        %v2322 = vpop.f32.mrb[0].mxu0
        %v2323 = vadd.f32 0.0, %v2322
        %v2324 = vpop.f32.mrb[0].mxu0
        %2325 = vmatprep.mubr.bf16.mxu0 0
        %2326 = vmatmul.mubr.bf16.gmra.mrb[0].mxu0 %v2054
        %v2327 = vpop.f32.mrb[0].mxu0
        %v2328 = vadd.f32 0.0, %v2327
        %v2329 = vpop.f32.mrb[0].mxu0
        %v2330 = vpop.f32.mrb[0].mxu0
        %v2331 = vadd.f32 0.0, %v2330
        %v2332 = vpop.f32.mrb[0].mxu0
        %2333 = vmatprep.mubr.bf16.mxu0 0
        %2334 = vmatmul.mubr.bf16.gmra.mrb[0].mxu0 %v2055
        %v2335 = vpop.f32.mrb[0].mxu0
        %v2336 = vadd.f32 0.0, %v2335
        %v2337 = vpop.f32.mrb[0].mxu0
        %v2338 = vpop.f32.mrb[0].mxu0
        %v2339 = vadd.f32 0.0, %v2338
        %v2340 = vpop.f32.mrb[0].mxu0
        %2341 = vmatprep.mubr.bf16.mxu0 0
        %2342 = vmatmul.mubr.bf16.gmra.mrb[0].mxu0 %v2056
        %v2343 = vpop.f32.mrb[0].mxu0
        %v2344 = vadd.f32 0.0, %v2343
        %v2345 = vpop.f32.mrb[0].mxu0
        %v2346 = vpop.f32.mrb[0].mxu0
        %v2347 = vadd.f32 0.0, %v2346
        %v2348 = vpop.f32.mrb[0].mxu0
        %2349 = vmatprep.mubr.bf16.mxu0 0
        %2350 = vmatmul.mubr.bf16.gmra.mrb[0].mxu0 %v2057
        %v2351 = vpop.f32.mrb[0].mxu0
        %v2352 = vadd.f32 0.0, %v2351
        %v2353 = vpop.f32.mrb[0].mxu0
        %v2354 = vpop.f32.mrb[0].mxu0
        %v2355 = vadd.f32 0.0, %v2354
        %v2356 = vpop.f32.mrb[0].mxu0
        %2357 = vmatprep.mubr.bf16.mxu0 0
        %2358 = vmatmul.mubr.bf16.gmra.mrb[0].mxu0 %v2058
        %v2359 = vpop.f32.mrb[0].mxu0
        %v2360 = vadd.f32 0.0, %v2359
        %v2361 = vpop.f32.mrb[0].mxu0
        %v2362 = vpop.f32.mrb[0].mxu0
        %v2363 = vadd.f32 0.0, %v2362
        %v2364 = vpop.f32.mrb[0].mxu0
        %2365 = vmatprep.mubr.bf16.mxu0 0
        %2366 = vmatmul.mubr.bf16.gmra.mrb[0].mxu0 %v2059
        %v2367 = vpop.f32.mrb[0].mxu0
        %v2368 = vadd.f32 0.0, %v2367
        %v2369 = vpop.f32.mrb[0].mxu0
        %v2370 = vpop.f32.mrb[0].mxu0
        %v2371 = vadd.f32 0.0, %v2370
        %v2372 = vpop.f32.mrb[0].mxu0
        %2373 = vmatprep.mubr.bf16.mxu0 0
        %2374 = vmatmul.mubr.bf16.gmra.mrb[0].mxu0 %v2060
        %v2375 = vpop.f32.mrb[0].mxu0
        %v2376 = vadd.f32 0.0, %v2375
        %v2377 = vpop.f32.mrb[0].mxu0
        %v2378 = vpop.f32.mrb[0].mxu0
        %v2379 = vadd.f32 0.0, %v2378
        %v2380 = vpop.f32.mrb[0].mxu0
        %2381 = vmatprep.mubr.bf16.mxu0 0
        %2382 = vmatmul.mubr.bf16.gmra.mrb[0].mxu0 %v2061
        %v2383 = vpop.f32.mrb[0].mxu0
        %v2384 = vadd.f32 0.0, %v2383
        %v2385 = vpop.f32.mrb[0].mxu0
        %v2386 = vpop.f32.mrb[0].mxu0
        %v2387 = vadd.f32 0.0, %v2386
        %v2388 = vpop.f32.mrb[0].mxu0
        %2389 = vmatprep.mubr.bf16.mxu0 0
        %2390 = vmatmul.mubr.bf16.gmra.mrb[0].mxu0 %v2062
        %v2391 = vpop.f32.mrb[0].mxu0
        %v2392 = vadd.f32 0.0, %v2391
        %v2393 = vpop.f32.mrb[0].mxu0
        %v2394 = vpop.f32.mrb[0].mxu0
        %v2395 = vadd.f32 0.0, %v2394
        %v2396 = vpop.f32.mrb[0].mxu0
        %2397 = vmatprep.mubr.bf16.mxu0 0
        %2398 = vmatmul.mubr.bf16.gmra.mrb[0].mxu0 %v2063
        %v2399 = vpop.f32.mrb[0].mxu0
        %v2400 = vadd.f32 0.0, %v2399
        %v2401 = vpop.f32.mrb[0].mxu0
        %v2402 = vpop.f32.mrb[0].mxu0
        %v2403 = vadd.f32 0.0, %v2402
        %v2404 = vpop.f32.mrb[0].mxu0
        %2405 = vmatprep.mubr.bf16.mxu0 0
        %2406 = vmatmul.mubr.bf16.gmra.mrb[0].mxu0 %v2064
        %v2407 = vpop.f32.mrb[0].mxu0
        %v2408 = vadd.f32 0.0, %v2407
        %v2409 = vpop.f32.mrb[0].mxu0
        %v2410 = vpop.f32.mrb[0].mxu0
        %v2411 = vadd.f32 0.0, %v2410
        %v2412 = vpop.f32.mrb[0].mxu0
        %2413 = vmatprep.mubr.bf16.mxu0 0
        %2414 = vmatmul.mubr.bf16.gmra.mrb[0].mxu0 %v2065
        %v2415 = vpop.f32.mrb[0].mxu0
        %v2416 = vadd.f32 0.0, %v2415
        %v2417 = vpop.f32.mrb[0].mxu0
        %v2418 = vpop.f32.mrb[0].mxu0
        %v2419 = vadd.f32 0.0, %v2418
        %v2420 = vpop.f32.mrb[0].mxu0
        %2421 = vmatprep.mubr.bf16.mxu0 0
        %2422 = vmatmul.mubr.bf16.gmra.mrb[0].mxu0 %v2066
        %v2423 = vpop.f32.mrb[0].mxu0
        %v2424 = vadd.f32 0.0, %v2423
        %v2425 = vpop.f32.mrb[0].mxu0
        %v2426 = vpop.f32.mrb[0].mxu0
        %v2427 = vadd.f32 0.0, %v2426
        %v2428 = vpop.f32.mrb[0].mxu0
        %2429 = vmatprep.mubr.bf16.mxu0 0
        %2430 = vmatmul.mubr.bf16.gmra.mrb[0].mxu0 %v2067
        %v2431 = vpop.f32.mrb[0].mxu0
        %v2432 = vadd.f32 0.0, %v2431
        %v2433 = vpop.f32.mrb[0].mxu0
        %v2434 = vpop.f32.mrb[0].mxu0
        %v2435 = vadd.f32 0.0, %v2434
        %v2436 = vpop.f32.mrb[0].mxu0
        %2437 = vdwg.mxu0
        %v2438 = vld [vmem:[#allocation3] sm:$0xff]
        %v2439 = vld [vmem:[#allocation3 + $0x8] sm:$0xff]
        %v2440 = vld [vmem:[#allocation3 + $0x10] sm:$0xff]
        %v2441 = vld [vmem:[#allocation3 + $0x18] sm:$0xff]
        %v2442 = vld [vmem:[#allocation3 + $0x20] sm:$0xff]
        %v2443 = vld [vmem:[#allocation3 + $0x28] sm:$0xff]
        %v2444 = vld [vmem:[#allocation3 + $0x30] sm:$0xff]
        %v2445 = vld [vmem:[#allocation3 + $0x38] sm:$0xff]
        %v2446 = vld [vmem:[#allocation3 + $0x40] sm:$0xff]
        %v2447 = vld [vmem:[#allocation3 + $0x48] sm:$0xff]
        %v2448 = vld [vmem:[#allocation3 + $0x50] sm:$0xff]
        %v2449 = vld [vmem:[#allocation3 + $0x58] sm:$0xff]
        %v2450 = vld [vmem:[#allocation3 + $0x60] sm:$0xff]
        %v2451 = vld [vmem:[#allocation3 + $0x68] sm:$0xff]
        %v2452 = vld [vmem:[#allocation3 + $0x70] sm:$0xff]
        %v2453 = vld [vmem:[#allocation3 + $0x78] sm:$0xff]
        %v2454 = vld [vmem:[#allocation3 + $0x80] sm:$0xff]
        %v2455 = vld [vmem:[#allocation3 + $0x88] sm:$0xff]
        %v2456 = vld [vmem:[#allocation3 + $0x90] sm:$0xff]
        %v2457 = vld [vmem:[#allocation3 + $0x98] sm:$0xff]
        %v2458 = vld [vmem:[#allocation3 + $0xa0] sm:$0xff]
        %v2459 = vld [vmem:[#allocation3 + $0xa8] sm:$0xff]
        %v2460 = vld [vmem:[#allocation3 + $0xb0] sm:$0xff]
        %v2461 = vld [vmem:[#allocation3 + $0xb8] sm:$0xff]
        %v2462 = vld [vmem:[#allocation3 + $0xc0] sm:$0xff]
        %v2463 = vld [vmem:[#allocation3 + $0xc8] sm:$0xff]
        %v2464 = vld [vmem:[#allocation3 + $0xd0] sm:$0xff]
        %v2465 = vld [vmem:[#allocation3 + $0xd8] sm:$0xff]
        %v2466 = vld [vmem:[#allocation3 + $0xe0] sm:$0xff]
        %v2467 = vld [vmem:[#allocation3 + $0xe8] sm:$0xff]
        %v2468 = vld [vmem:[#allocation3 + $0xf0] sm:$0xff]
        %v2469 = vld [vmem:[#allocation3 + $0xf8] sm:$0xff]
        %v2470 = vld [vmem:[#allocation3 + $0x100] sm:$0xff]
        %v2471 = vld [vmem:[#allocation3 + $0x108] sm:$0xff]
        %v2472 = vld [vmem:[#allocation3 + $0x110] sm:$0xff]
        %v2473 = vld [vmem:[#allocation3 + $0x118] sm:$0xff]
        %v2474 = vld [vmem:[#allocation3 + $0x120] sm:$0xff]
        %v2475 = vld [vmem:[#allocation3 + $0x128] sm:$0xff]
        %v2476 = vld [vmem:[#allocation3 + $0x130] sm:$0xff]
        %v2477 = vld [vmem:[#allocation3 + $0x138] sm:$0xff]
        %v2478 = vld [vmem:[#allocation3 + $0x140] sm:$0xff]
        %v2479 = vld [vmem:[#allocation3 + $0x148] sm:$0xff]
        %v2480 = vld [vmem:[#allocation3 + $0x150] sm:$0xff]
        %v2481 = vld [vmem:[#allocation3 + $0x158] sm:$0xff]
        %v2482 = vld [vmem:[#allocation3 + $0x160] sm:$0xff]
        %v2483 = vld [vmem:[#allocation3 + $0x168] sm:$0xff]
        %v2484 = vld [vmem:[#allocation3 + $0x170] sm:$0xff]
        %v2485 = vld [vmem:[#allocation3 + $0x178] sm:$0xff]
        %v2486 = vld [vmem:[#allocation3 + $0x180] sm:$0xff]
        %v2487 = vld [vmem:[#allocation3 + $0x188] sm:$0xff]
        %v2488 = vld [vmem:[#allocation3 + $0x190] sm:$0xff]
        %v2489 = vld [vmem:[#allocation3 + $0x198] sm:$0xff]
        %v2490 = vld [vmem:[#allocation3 + $0x1a0] sm:$0xff]
        %v2491 = vld [vmem:[#allocation3 + $0x1a8] sm:$0xff]
        %v2492 = vld [vmem:[#allocation3 + $0x1b0] sm:$0xff]
        %v2493 = vld [vmem:[#allocation3 + $0x1b8] sm:$0xff]
        %v2494 = vld [vmem:[#allocation3 + $0x1c0] sm:$0xff]
        %v2495 = vld [vmem:[#allocation3 + $0x1c8] sm:$0xff]
        %v2496 = vld [vmem:[#allocation3 + $0x1d0] sm:$0xff]
        %v2497 = vld [vmem:[#allocation3 + $0x1d8] sm:$0xff]
        %v2498 = vld [vmem:[#allocation3 + $0x1e0] sm:$0xff]
        %v2499 = vld [vmem:[#allocation3 + $0x1e8] sm:$0xff]
        %v2500 = vld [vmem:[#allocation3 + $0x1f0] sm:$0xff]
        %v2501 = vld [vmem:[#allocation3 + $0x1f8] sm:$0xff]
        %v2502 = vld [vmem:[#allocation3 + $0x200] sm:$0xff]
        %v2503 = vld [vmem:[#allocation3 + $0x208] sm:$0xff]
        %v2504 = vld [vmem:[#allocation3 + $0x210] sm:$0xff]
        %v2505 = vld [vmem:[#allocation3 + $0x218] sm:$0xff]
        %v2506 = vadd.f32 %v2438, %v2168
        %v2507 = vadd.f32 %v2439, %v2171
        %v2508 = vadd.f32 %v2440, %v2176
        %v2509 = vadd.f32 %v2441, %v2179
        %v2510 = vadd.f32 %v2442, %v2184
        %v2511 = vadd.f32 %v2443, %v2187
        %v2512 = vadd.f32 %v2444, %v2192
        %v2513 = vadd.f32 %v2445, %v2195
        %v2514 = vadd.f32 %v2446, %v2200
        %v2515 = vadd.f32 %v2447, %v2203
        %v2516 = vadd.f32 %v2448, %v2208
        %v2517 = vadd.f32 %v2449, %v2211
        %v2518 = vadd.f32 %v2450, %v2216
        %v2519 = vadd.f32 %v2451, %v2219
        %v2520 = vadd.f32 %v2452, %v2224
        %v2521 = vadd.f32 %v2453, %v2227
        %v2522 = vadd.f32 %v2454, %v2232
        %v2523 = vadd.f32 %v2455, %v2235
        %v2524 = vadd.f32 %v2456, %v2240
        %v2525 = vadd.f32 %v2457, %v2243
        %v2526 = vadd.f32 %v2458, %v2248
        %v2527 = vadd.f32 %v2459, %v2251
        %v2528 = vadd.f32 %v2460, %v2256
        %v2529 = vadd.f32 %v2461, %v2259
        %v2530 = vadd.f32 %v2462, %v2264
        %v2531 = vadd.f32 %v2463, %v2267
        %v2532 = vadd.f32 %v2464, %v2272
        %v2533 = vadd.f32 %v2465, %v2275
        %v2534 = vadd.f32 %v2466, %v2280
        %v2535 = vadd.f32 %v2467, %v2283
        %v2536 = vadd.f32 %v2468, %v2288
        %v2537 = vadd.f32 %v2469, %v2291
        %v2538 = vadd.f32 %v2470, %v2296
        %v2539 = vadd.f32 %v2471, %v2299
        %v2540 = vadd.f32 %v2472, %v2304
        %v2541 = vadd.f32 %v2473, %v2307
        %v2542 = vadd.f32 %v2474, %v2312
        %v2543 = vadd.f32 %v2475, %v2315
        %v2544 = vadd.f32 %v2476, %v2320
        %v2545 = vadd.f32 %v2477, %v2323
        %v2546 = vadd.f32 %v2478, %v2328
        %v2547 = vadd.f32 %v2479, %v2331
        %v2548 = vadd.f32 %v2480, %v2336
        %v2549 = vadd.f32 %v2481, %v2339
        %v2550 = vadd.f32 %v2482, %v2344
        %v2551 = vadd.f32 %v2483, %v2347
        %v2552 = vadd.f32 %v2484, %v2352
        %v2553 = vadd.f32 %v2485, %v2355
        %v2554 = vadd.f32 %v2486, %v2360
        %v2555 = vadd.f32 %v2487, %v2363
        %v2556 = vadd.f32 %v2488, %v2368
        %v2557 = vadd.f32 %v2489, %v2371
        %v2558 = vadd.f32 %v2490, %v2376
        %v2559 = vadd.f32 %v2491, %v2379
        %v2560 = vadd.f32 %v2492, %v2384
        %v2561 = vadd.f32 %v2493, %v2387
        %v2562 = vadd.f32 %v2494, %v2392
        %v2563 = vadd.f32 %v2495, %v2395
        %v2564 = vadd.f32 %v2496, %v2400
        %v2565 = vadd.f32 %v2497, %v2403
        %v2566 = vadd.f32 %v2498, %v2408
        %v2567 = vadd.f32 %v2499, %v2411
        %v2568 = vadd.f32 %v2500, %v2416
        %v2569 = vadd.f32 %v2501, %v2419
        %v2570 = vadd.f32 %v2502, %v2424
        %v2571 = vadd.f32 %v2503, %v2427
        %v2572 = vadd.f32 %v2504, %v2432
        %v2573 = vadd.f32 %v2505, %v2435
        %2574 = vst [vmem:[#allocation3] sm:$0xff] %v2506
        %2575 = vst [vmem:[#allocation3 + $0x8] sm:$0xff] %v2507
        %2576 = vst [vmem:[#allocation3 + $0x10] sm:$0xff] %v2508
        %2577 = vst [vmem:[#allocation3 + $0x18] sm:$0xff] %v2509
        %2578 = vst [vmem:[#allocation3 + $0x20] sm:$0xff] %v2510
        %2579 = vst [vmem:[#allocation3 + $0x28] sm:$0xff] %v2511
        %2580 = vst [vmem:[#allocation3 + $0x30] sm:$0xff] %v2512
        %2581 = vst [vmem:[#allocation3 + $0x38] sm:$0xff] %v2513
        %2582 = vst [vmem:[#allocation3 + $0x40] sm:$0xff] %v2514
        %2583 = vst [vmem:[#allocation3 + $0x48] sm:$0xff] %v2515
        %2584 = vst [vmem:[#allocation3 + $0x50] sm:$0xff] %v2516
        %2585 = vst [vmem:[#allocation3 + $0x58] sm:$0xff] %v2517
        %2586 = vst [vmem:[#allocation3 + $0x60] sm:$0xff] %v2518
        %2587 = vst [vmem:[#allocation3 + $0x68] sm:$0xff] %v2519
        %2588 = vst [vmem:[#allocation3 + $0x70] sm:$0xff] %v2520
        %2589 = vst [vmem:[#allocation3 + $0x78] sm:$0xff] %v2521
        %2590 = vst [vmem:[#allocation3 + $0x80] sm:$0xff] %v2522
        %2591 = vst [vmem:[#allocation3 + $0x88] sm:$0xff] %v2523
        %2592 = vst [vmem:[#allocation3 + $0x90] sm:$0xff] %v2524
        %2593 = vst [vmem:[#allocation3 + $0x98] sm:$0xff] %v2525
        %2594 = vst [vmem:[#allocation3 + $0xa0] sm:$0xff] %v2526
        %2595 = vst [vmem:[#allocation3 + $0xa8] sm:$0xff] %v2527
        %2596 = vst [vmem:[#allocation3 + $0xb0] sm:$0xff] %v2528
        %2597 = vst [vmem:[#allocation3 + $0xb8] sm:$0xff] %v2529
        %2598 = vst [vmem:[#allocation3 + $0xc0] sm:$0xff] %v2530
        %2599 = vst [vmem:[#allocation3 + $0xc8] sm:$0xff] %v2531
        %2600 = vst [vmem:[#allocation3 + $0xd0] sm:$0xff] %v2532
        %2601 = vst [vmem:[#allocation3 + $0xd8] sm:$0xff] %v2533
        %2602 = vst [vmem:[#allocation3 + $0xe0] sm:$0xff] %v2534
        %2603 = vst [vmem:[#allocation3 + $0xe8] sm:$0xff] %v2535
        %2604 = vst [vmem:[#allocation3 + $0xf0] sm:$0xff] %v2536
        %2605 = vst [vmem:[#allocation3 + $0xf8] sm:$0xff] %v2537
        %2606 = vst [vmem:[#allocation3 + $0x100] sm:$0xff] %v2538
        %2607 = vst [vmem:[#allocation3 + $0x108] sm:$0xff] %v2539
        %2608 = vst [vmem:[#allocation3 + $0x110] sm:$0xff] %v2540
        %2609 = vst [vmem:[#allocation3 + $0x118] sm:$0xff] %v2541
        %2610 = vst [vmem:[#allocation3 + $0x120] sm:$0xff] %v2542
        %2611 = vst [vmem:[#allocation3 + $0x128] sm:$0xff] %v2543
        %2612 = vst [vmem:[#allocation3 + $0x130] sm:$0xff] %v2544
        %2613 = vst [vmem:[#allocation3 + $0x138] sm:$0xff] %v2545
        %2614 = vst [vmem:[#allocation3 + $0x140] sm:$0xff] %v2546
        %2615 = vst [vmem:[#allocation3 + $0x148] sm:$0xff] %v2547
        %2616 = vst [vmem:[#allocation3 + $0x150] sm:$0xff] %v2548
        %2617 = vst [vmem:[#allocation3 + $0x158] sm:$0xff] %v2549
        %2618 = vst [vmem:[#allocation3 + $0x160] sm:$0xff] %v2550
        %2619 = vst [vmem:[#allocation3 + $0x168] sm:$0xff] %v2551
        %2620 = vst [vmem:[#allocation3 + $0x170] sm:$0xff] %v2552
        %2621 = vst [vmem:[#allocation3 + $0x178] sm:$0xff] %v2553
        %2622 = vst [vmem:[#allocation3 + $0x180] sm:$0xff] %v2554
        %2623 = vst [vmem:[#allocation3 + $0x188] sm:$0xff] %v2555
        %2624 = vst [vmem:[#allocation3 + $0x190] sm:$0xff] %v2556
        %2625 = vst [vmem:[#allocation3 + $0x198] sm:$0xff] %v2557
        %2626 = vst [vmem:[#allocation3 + $0x1a0] sm:$0xff] %v2558
        %2627 = vst [vmem:[#allocation3 + $0x1a8] sm:$0xff] %v2559
        %2628 = vst [vmem:[#allocation3 + $0x1b0] sm:$0xff] %v2560
        %2629 = vst [vmem:[#allocation3 + $0x1b8] sm:$0xff] %v2561
        %2630 = vst [vmem:[#allocation3 + $0x1c0] sm:$0xff] %v2562
        %2631 = vst [vmem:[#allocation3 + $0x1c8] sm:$0xff] %v2563
        %2632 = vst [vmem:[#allocation3 + $0x1d0] sm:$0xff] %v2564
        %2633 = vst [vmem:[#allocation3 + $0x1d8] sm:$0xff] %v2565
        %2634 = vst [vmem:[#allocation3 + $0x1e0] sm:$0xff] %v2566
        %2635 = vst [vmem:[#allocation3 + $0x1e8] sm:$0xff] %v2567
        %2636 = vst [vmem:[#allocation3 + $0x1f0] sm:$0xff] %v2568
        %2637 = vst [vmem:[#allocation3 + $0x1f8] sm:$0xff] %v2569
        %2638 = vst [vmem:[#allocation3 + $0x200] sm:$0xff] %v2570
        %2639 = vst [vmem:[#allocation3 + $0x208] sm:$0xff] %v2571
        %2640 = vst [vmem:[#allocation3 + $0x210] sm:$0xff] %v2572
        %2641 = vst [vmem:[#allocation3 + $0x218] sm:$0xff] %v2573
        %v2642 = vld [vmem:[#allocation2] sm:$0xff]
        %v2643 = vld [vmem:[#allocation2 + $0x8] sm:$0xff]
        %v2644 = vld [vmem:[#allocation2 + $0x10] sm:$0xff]
        %v2645 = vld [vmem:[#allocation2 + $0x18] sm:$0xff]
        %v2646 = vld [vmem:[#allocation2 + $0x20] sm:$0xff]
        %v2647 = vld [vmem:[#allocation2 + $0x28] sm:$0xff]
        %v2648 = vld [vmem:[#allocation2 + $0x30] sm:$0xff]
        %v2649 = vld [vmem:[#allocation2 + $0x38] sm:$0xff]
        %v2650 = vld [vmem:[#allocation2 + $0x40] sm:$0xff]
        %v2651 = vld [vmem:[#allocation2 + $0x48] sm:$0xff]
        %v2652 = vld [vmem:[#allocation2 + $0x50] sm:$0xff]
        %v2653 = vld [vmem:[#allocation2 + $0x58] sm:$0xff]
        %v2654 = vld [vmem:[#allocation2 + $0x60] sm:$0xff]
        %v2655 = vld [vmem:[#allocation2 + $0x68] sm:$0xff]
        %v2656 = vld [vmem:[#allocation2 + $0x70] sm:$0xff]
        %v2657 = vld [vmem:[#allocation2 + $0x78] sm:$0xff]
        %v2658 = vld [vmem:[#allocation2 + $0x80] sm:$0xff]
        %v2659 = vld [vmem:[#allocation2 + $0x88] sm:$0xff]
        %v2660 = vld [vmem:[#allocation2 + $0x90] sm:$0xff]
        %v2661 = vld [vmem:[#allocation2 + $0x98] sm:$0xff]
        %v2662 = vld [vmem:[#allocation2 + $0xa0] sm:$0xff]
        %v2663 = vld [vmem:[#allocation2 + $0xa8] sm:$0xff]
        %v2664 = vld [vmem:[#allocation2 + $0xb0] sm:$0xff]
        %v2665 = vld [vmem:[#allocation2 + $0xb8] sm:$0xff]
        %v2666 = vld [vmem:[#allocation2 + $0xc0] sm:$0xff]
        %v2667 = vld [vmem:[#allocation2 + $0xc8] sm:$0xff]
        %v2668 = vld [vmem:[#allocation2 + $0xd0] sm:$0xff]
        %v2669 = vld [vmem:[#allocation2 + $0xd8] sm:$0xff]
        %v2670 = vld [vmem:[#allocation2 + $0xe0] sm:$0xff]
        %v2671 = vld [vmem:[#allocation2 + $0xe8] sm:$0xff]
        %v2672 = vld [vmem:[#allocation2 + $0xf0] sm:$0xff]
        %v2673 = vld [vmem:[#allocation2 + $0xf8] sm:$0xff]
        %v2674 = vld [vmem:[#allocation2 + $0x100] sm:$0xff]
        %v2675 = vld [vmem:[#allocation2 + $0x108] sm:$0xff]
        %s2676 = scalar_lea.vmem %s8, 64
        %v2677 = vld [vmem:[%s2676] sm:$0xf]
        %v2678 = vld [vmem:[%s2676 + $0x4] sm:$0xf]
        %v2679 = vld [vmem:[%s2676 + $0x8] sm:$0xf]
        %v2680 = vld [vmem:[%s2676 + $0xc] sm:$0xf]
        %v2681 = vld [vmem:[%s2676 + $0x10] sm:$0xf]
        %v2682 = vld [vmem:[%s2676 + $0x14] sm:$0xf]
        %v2683 = vld [vmem:[%s2676 + $0x18] sm:$0xf]
        %v2684 = vld [vmem:[%s2676 + $0x1c] sm:$0xf]
        %v2685 = vld [vmem:[%s2676 + $0x20] sm:$0xf]
        %v2686 = vld [vmem:[%s2676 + $0x24] sm:$0xf]
        %v2687 = vld [vmem:[%s2676 + $0x28] sm:$0xf]
        %v2688 = vld [vmem:[%s2676 + $0x2c] sm:$0xf]
        %v2689 = vld [vmem:[%s2676 + $0x30] sm:$0xf]
        %v2690 = vld [vmem:[%s2676 + $0x34] sm:$0xf]
        %v2691 = vld [vmem:[%s2676 + $0x38] sm:$0xf]
        %v2692 = vld [vmem:[%s2676 + $0x3c] sm:$0xf]
        %v2709 = vunpack.c.l.b16 %v2677
        %v2710 = vunpack.c.l.b16 %v2678
        %v2711 = vunpack.c.l.b16 %v2679
        %v2712 = vunpack.c.l.b16 %v2680
        %v2713 = vunpack.c.l.b16 %v2681
        %v2714 = vunpack.c.l.b16 %v2682
        %v2715 = vunpack.c.l.b16 %v2683
        %v2716 = vunpack.c.l.b16 %v2684
        %v2717 = vunpack.c.l.b16 %v2685
        %v2718 = vunpack.c.l.b16 %v2686
        %v2719 = vunpack.c.l.b16 %v2687
        %v2720 = vunpack.c.l.b16 %v2688
        %v2721 = vunpack.c.l.b16 %v2689
        %v2722 = vunpack.c.l.b16 %v2690
        %v2723 = vunpack.c.l.b16 %v2691
        %v2724 = vunpack.c.l.b16 %v2692
        %v2725 = vpack.c.b16 %v2710, %v2709
        %v2726 = vpack.c.b16 %v2712, %v2711
        %v2727 = vpack.c.b16 %v2714, %v2713
        %v2728 = vpack.c.b16 %v2716, %v2715
        %v2729 = vpack.c.b16 %v2718, %v2717
        %v2730 = vpack.c.b16 %v2720, %v2719
        %v2731 = vpack.c.b16 %v2722, %v2721
        %v2732 = vpack.c.b16 %v2724, %v2723
        %2741 = vmatprep.subr.bf16.mxu0 0
        %2742 = vmatpush1.bf16.msra.mxu0 %v2725
        %2743 = vmatprep.subr.bf16.mxu0 0
        %2744 = vmatpush1.bf16.msra.mxu0 %v2726
        %2745 = vmatprep.subr.bf16.mxu0 0
        %2746 = vmatpush1.bf16.msra.mxu0 %v2727
        %2747 = vmatprep.subr.bf16.mxu0 0
        %2748 = vmatpush1.bf16.msra.mxu0 %v2728
        %2749 = vmatprep.subr.bf16.mxu0 0
        %2750 = vmatpush1.bf16.msra.mxu0 %v2729
        %2751 = vmatprep.subr.bf16.mxu0 0
        %2752 = vmatpush1.bf16.msra.mxu0 %v2730
        %2753 = vmatprep.subr.bf16.mxu0 0
        %2754 = vmatpush1.bf16.msra.mxu0 %v2731
        %2755 = vmatprep.subr.bf16.mxu0 0
        %2756 = vmatpush1.bf16.msra.mxu0 %v2732
        %2757 = vmatprep.subr.bf16.mxu0 0
        %2758 = vmatpush1.bf16.msra.mxu0 0
        %2759 = vmatprep.subr.bf16.mxu0 0
        %2760 = vmatpush1.bf16.msra.mxu0 0
        %2761 = vmatprep.subr.bf16.mxu0 0
        %2762 = vmatpush1.bf16.msra.mxu0 0
        %2763 = vmatprep.subr.bf16.mxu0 0
        %2764 = vmatpush1.bf16.msra.mxu0 0
        %2765 = vmatprep.subr.bf16.mxu0 0
        %2766 = vmatpush1.bf16.msra.mxu0 0
        %2767 = vmatprep.subr.bf16.mxu0 0
        %2768 = vmatpush1.bf16.msra.mxu0 0
        %2769 = vmatprep.subr.bf16.mxu0 0
        %2770 = vmatpush1.bf16.msra.mxu0 0
        %2771 = vmatprep.subr.bf16.mxu0 0
        %2772 = vmatpush1.bf16.msra.mxu0 0
        %2773 = vmatprep.mubr.bf16.mxu0 0
        %2774 = vmatmul.mubr.bf16.gmra.mrb[0].mxu0 %v2642
        %v2775 = vpop.f32.mrb[0].mxu0
        %v2776 = vadd.f32 0.0, %v2775
        %v2777 = vpop.f32.mrb[0].mxu0
        %v2778 = vpop.f32.mrb[0].mxu0
        %v2779 = vadd.f32 0.0, %v2778
        %v2780 = vpop.f32.mrb[0].mxu0
        %2781 = vmatprep.mubr.bf16.mxu0 0
        %2782 = vmatmul.mubr.bf16.gmra.mrb[0].mxu0 %v2643
        %v2783 = vpop.f32.mrb[0].mxu0
        %v2784 = vadd.f32 0.0, %v2783
        %v2785 = vpop.f32.mrb[0].mxu0
        %v2786 = vpop.f32.mrb[0].mxu0
        %v2787 = vadd.f32 0.0, %v2786
        %v2788 = vpop.f32.mrb[0].mxu0
        %2789 = vmatprep.mubr.bf16.mxu0 0
        %2790 = vmatmul.mubr.bf16.gmra.mrb[0].mxu0 %v2644
        %v2791 = vpop.f32.mrb[0].mxu0
        %v2792 = vadd.f32 0.0, %v2791
        %v2793 = vpop.f32.mrb[0].mxu0
        %v2794 = vpop.f32.mrb[0].mxu0
        %v2795 = vadd.f32 0.0, %v2794
        %v2796 = vpop.f32.mrb[0].mxu0
        %2797 = vmatprep.mubr.bf16.mxu0 0
        %2798 = vmatmul.mubr.bf16.gmra.mrb[0].mxu0 %v2645
        %v2799 = vpop.f32.mrb[0].mxu0
        %v2800 = vadd.f32 0.0, %v2799
        %v2801 = vpop.f32.mrb[0].mxu0
        %v2802 = vpop.f32.mrb[0].mxu0
        %v2803 = vadd.f32 0.0, %v2802
        %v2804 = vpop.f32.mrb[0].mxu0
        %2805 = vmatprep.mubr.bf16.mxu0 0
        %2806 = vmatmul.mubr.bf16.gmra.mrb[0].mxu0 %v2646
        %v2807 = vpop.f32.mrb[0].mxu0
        %v2808 = vadd.f32 0.0, %v2807
        %v2809 = vpop.f32.mrb[0].mxu0
        %v2810 = vpop.f32.mrb[0].mxu0
        %v2811 = vadd.f32 0.0, %v2810
        %v2812 = vpop.f32.mrb[0].mxu0
        %2813 = vmatprep.mubr.bf16.mxu0 0
        %2814 = vmatmul.mubr.bf16.gmra.mrb[0].mxu0 %v2647
        %v2815 = vpop.f32.mrb[0].mxu0
        %v2816 = vadd.f32 0.0, %v2815
        %v2817 = vpop.f32.mrb[0].mxu0
        %v2818 = vpop.f32.mrb[0].mxu0
        %v2819 = vadd.f32 0.0, %v2818
        %v2820 = vpop.f32.mrb[0].mxu0
        %2821 = vmatprep.mubr.bf16.mxu0 0
        %2822 = vmatmul.mubr.bf16.gmra.mrb[0].mxu0 %v2648
        %v2823 = vpop.f32.mrb[0].mxu0
        %v2824 = vadd.f32 0.0, %v2823
        %v2825 = vpop.f32.mrb[0].mxu0
        %v2826 = vpop.f32.mrb[0].mxu0
        %v2827 = vadd.f32 0.0, %v2826
        %v2828 = vpop.f32.mrb[0].mxu0
        %2829 = vmatprep.mubr.bf16.mxu0 0
        %2830 = vmatmul.mubr.bf16.gmra.mrb[0].mxu0 %v2649
        %v2831 = vpop.f32.mrb[0].mxu0
        %v2832 = vadd.f32 0.0, %v2831
        %v2833 = vpop.f32.mrb[0].mxu0
        %v2834 = vpop.f32.mrb[0].mxu0
        %v2835 = vadd.f32 0.0, %v2834
        %v2836 = vpop.f32.mrb[0].mxu0
        %2837 = vmatprep.mubr.bf16.mxu0 0
        %2838 = vmatmul.mubr.bf16.gmra.mrb[0].mxu0 %v2650
        %v2839 = vpop.f32.mrb[0].mxu0
        %v2840 = vadd.f32 0.0, %v2839
        %v2841 = vpop.f32.mrb[0].mxu0
        %v2842 = vpop.f32.mrb[0].mxu0
        %v2843 = vadd.f32 0.0, %v2842
        %v2844 = vpop.f32.mrb[0].mxu0
        %2845 = vmatprep.mubr.bf16.mxu0 0
        %2846 = vmatmul.mubr.bf16.gmra.mrb[0].mxu0 %v2651
        %v2847 = vpop.f32.mrb[0].mxu0
        %v2848 = vadd.f32 0.0, %v2847
        %v2849 = vpop.f32.mrb[0].mxu0
        %v2850 = vpop.f32.mrb[0].mxu0
        %v2851 = vadd.f32 0.0, %v2850
        %v2852 = vpop.f32.mrb[0].mxu0
        %2853 = vmatprep.mubr.bf16.mxu0 0
        %2854 = vmatmul.mubr.bf16.gmra.mrb[0].mxu0 %v2652
        %v2855 = vpop.f32.mrb[0].mxu0
        %v2856 = vadd.f32 0.0, %v2855
        %v2857 = vpop.f32.mrb[0].mxu0
        %v2858 = vpop.f32.mrb[0].mxu0
        %v2859 = vadd.f32 0.0, %v2858
        %v2860 = vpop.f32.mrb[0].mxu0
        %2861 = vmatprep.mubr.bf16.mxu0 0
        %2862 = vmatmul.mubr.bf16.gmra.mrb[0].mxu0 %v2653
        %v2863 = vpop.f32.mrb[0].mxu0
        %v2864 = vadd.f32 0.0, %v2863
        %v2865 = vpop.f32.mrb[0].mxu0
        %v2866 = vpop.f32.mrb[0].mxu0
        %v2867 = vadd.f32 0.0, %v2866
        %v2868 = vpop.f32.mrb[0].mxu0
        %2869 = vmatprep.mubr.bf16.mxu0 0
        %2870 = vmatmul.mubr.bf16.gmra.mrb[0].mxu0 %v2654
        %v2871 = vpop.f32.mrb[0].mxu0
        %v2872 = vadd.f32 0.0, %v2871
        %v2873 = vpop.f32.mrb[0].mxu0
        %v2874 = vpop.f32.mrb[0].mxu0
        %v2875 = vadd.f32 0.0, %v2874
        %v2876 = vpop.f32.mrb[0].mxu0
        %2877 = vmatprep.mubr.bf16.mxu0 0
        %2878 = vmatmul.mubr.bf16.gmra.mrb[0].mxu0 %v2655
        %v2879 = vpop.f32.mrb[0].mxu0
        %v2880 = vadd.f32 0.0, %v2879
        %v2881 = vpop.f32.mrb[0].mxu0
        %v2882 = vpop.f32.mrb[0].mxu0
        %v2883 = vadd.f32 0.0, %v2882
        %v2884 = vpop.f32.mrb[0].mxu0
        %2885 = vmatprep.mubr.bf16.mxu0 0
        %2886 = vmatmul.mubr.bf16.gmra.mrb[0].mxu0 %v2656
        %v2887 = vpop.f32.mrb[0].mxu0
        %v2888 = vadd.f32 0.0, %v2887
        %v2889 = vpop.f32.mrb[0].mxu0
        %v2890 = vpop.f32.mrb[0].mxu0
        %v2891 = vadd.f32 0.0, %v2890
        %v2892 = vpop.f32.mrb[0].mxu0
        %2893 = vmatprep.mubr.bf16.mxu0 0
        %2894 = vmatmul.mubr.bf16.gmra.mrb[0].mxu0 %v2657
        %v2895 = vpop.f32.mrb[0].mxu0
        %v2896 = vadd.f32 0.0, %v2895
        %v2897 = vpop.f32.mrb[0].mxu0
        %v2898 = vpop.f32.mrb[0].mxu0
        %v2899 = vadd.f32 0.0, %v2898
        %v2900 = vpop.f32.mrb[0].mxu0
        %2901 = vmatprep.mubr.bf16.mxu0 0
        %2902 = vmatmul.mubr.bf16.gmra.mrb[0].mxu0 %v2658
        %v2903 = vpop.f32.mrb[0].mxu0
        %v2904 = vadd.f32 0.0, %v2903
        %v2905 = vpop.f32.mrb[0].mxu0
        %v2906 = vpop.f32.mrb[0].mxu0
        %v2907 = vadd.f32 0.0, %v2906
        %v2908 = vpop.f32.mrb[0].mxu0
        %2909 = vmatprep.mubr.bf16.mxu0 0
        %2910 = vmatmul.mubr.bf16.gmra.mrb[0].mxu0 %v2659
        %v2911 = vpop.f32.mrb[0].mxu0
        %v2912 = vadd.f32 0.0, %v2911
        %v2913 = vpop.f32.mrb[0].mxu0
        %v2914 = vpop.f32.mrb[0].mxu0
        %v2915 = vadd.f32 0.0, %v2914
        %v2916 = vpop.f32.mrb[0].mxu0
        %2917 = vmatprep.mubr.bf16.mxu0 0
        %2918 = vmatmul.mubr.bf16.gmra.mrb[0].mxu0 %v2660
        %v2919 = vpop.f32.mrb[0].mxu0
        %v2920 = vadd.f32 0.0, %v2919
        %v2921 = vpop.f32.mrb[0].mxu0
        %v2922 = vpop.f32.mrb[0].mxu0
        %v2923 = vadd.f32 0.0, %v2922
        %v2924 = vpop.f32.mrb[0].mxu0
        %2925 = vmatprep.mubr.bf16.mxu0 0
        %2926 = vmatmul.mubr.bf16.gmra.mrb[0].mxu0 %v2661
        %v2927 = vpop.f32.mrb[0].mxu0
        %v2928 = vadd.f32 0.0, %v2927
        %v2929 = vpop.f32.mrb[0].mxu0
        %v2930 = vpop.f32.mrb[0].mxu0
        %v2931 = vadd.f32 0.0, %v2930
        %v2932 = vpop.f32.mrb[0].mxu0
        %2933 = vmatprep.mubr.bf16.mxu0 0
        %2934 = vmatmul.mubr.bf16.gmra.mrb[0].mxu0 %v2662
        %v2935 = vpop.f32.mrb[0].mxu0
        %v2936 = vadd.f32 0.0, %v2935
        %v2937 = vpop.f32.mrb[0].mxu0
        %v2938 = vpop.f32.mrb[0].mxu0
        %v2939 = vadd.f32 0.0, %v2938
        %v2940 = vpop.f32.mrb[0].mxu0
        %2941 = vmatprep.mubr.bf16.mxu0 0
        %2942 = vmatmul.mubr.bf16.gmra.mrb[0].mxu0 %v2663
        %v2943 = vpop.f32.mrb[0].mxu0
        %v2944 = vadd.f32 0.0, %v2943
        %v2945 = vpop.f32.mrb[0].mxu0
        %v2946 = vpop.f32.mrb[0].mxu0
        %v2947 = vadd.f32 0.0, %v2946
        %v2948 = vpop.f32.mrb[0].mxu0
        %2949 = vmatprep.mubr.bf16.mxu0 0
        %2950 = vmatmul.mubr.bf16.gmra.mrb[0].mxu0 %v2664
        %v2951 = vpop.f32.mrb[0].mxu0
        %v2952 = vadd.f32 0.0, %v2951
        %v2953 = vpop.f32.mrb[0].mxu0
        %v2954 = vpop.f32.mrb[0].mxu0
        %v2955 = vadd.f32 0.0, %v2954
        %v2956 = vpop.f32.mrb[0].mxu0
        %2957 = vmatprep.mubr.bf16.mxu0 0
        %2958 = vmatmul.mubr.bf16.gmra.mrb[0].mxu0 %v2665
        %v2959 = vpop.f32.mrb[0].mxu0
        %v2960 = vadd.f32 0.0, %v2959
        %v2961 = vpop.f32.mrb[0].mxu0
        %v2962 = vpop.f32.mrb[0].mxu0
        %v2963 = vadd.f32 0.0, %v2962
        %v2964 = vpop.f32.mrb[0].mxu0
        %2965 = vmatprep.mubr.bf16.mxu0 0
        %2966 = vmatmul.mubr.bf16.gmra.mrb[0].mxu0 %v2666
        %v2967 = vpop.f32.mrb[0].mxu0
        %v2968 = vadd.f32 0.0, %v2967
        %v2969 = vpop.f32.mrb[0].mxu0
        %v2970 = vpop.f32.mrb[0].mxu0
        %v2971 = vadd.f32 0.0, %v2970
        %v2972 = vpop.f32.mrb[0].mxu0
        %2973 = vmatprep.mubr.bf16.mxu0 0
        %2974 = vmatmul.mubr.bf16.gmra.mrb[0].mxu0 %v2667
        %v2975 = vpop.f32.mrb[0].mxu0
        %v2976 = vadd.f32 0.0, %v2975
        %v2977 = vpop.f32.mrb[0].mxu0
        %v2978 = vpop.f32.mrb[0].mxu0
        %v2979 = vadd.f32 0.0, %v2978
        %v2980 = vpop.f32.mrb[0].mxu0
        %2981 = vmatprep.mubr.bf16.mxu0 0
        %2982 = vmatmul.mubr.bf16.gmra.mrb[0].mxu0 %v2668
        %v2983 = vpop.f32.mrb[0].mxu0
        %v2984 = vadd.f32 0.0, %v2983
        %v2985 = vpop.f32.mrb[0].mxu0
        %v2986 = vpop.f32.mrb[0].mxu0
        %v2987 = vadd.f32 0.0, %v2986
        %v2988 = vpop.f32.mrb[0].mxu0
        %2989 = vmatprep.mubr.bf16.mxu0 0
        %2990 = vmatmul.mubr.bf16.gmra.mrb[0].mxu0 %v2669
        %v2991 = vpop.f32.mrb[0].mxu0
        %v2992 = vadd.f32 0.0, %v2991
        %v2993 = vpop.f32.mrb[0].mxu0
        %v2994 = vpop.f32.mrb[0].mxu0
        %v2995 = vadd.f32 0.0, %v2994
        %v2996 = vpop.f32.mrb[0].mxu0
        %2997 = vmatprep.mubr.bf16.mxu0 0
        %2998 = vmatmul.mubr.bf16.gmra.mrb[0].mxu0 %v2670
        %v2999 = vpop.f32.mrb[0].mxu0
        %v3000 = vadd.f32 0.0, %v2999
        %v3001 = vpop.f32.mrb[0].mxu0
        %v3002 = vpop.f32.mrb[0].mxu0
        %v3003 = vadd.f32 0.0, %v3002
        %v3004 = vpop.f32.mrb[0].mxu0
        %3005 = vmatprep.mubr.bf16.mxu0 0
        %3006 = vmatmul.mubr.bf16.gmra.mrb[0].mxu0 %v2671
        %v3007 = vpop.f32.mrb[0].mxu0
        %v3008 = vadd.f32 0.0, %v3007
        %v3009 = vpop.f32.mrb[0].mxu0
        %v3010 = vpop.f32.mrb[0].mxu0
        %v3011 = vadd.f32 0.0, %v3010
        %v3012 = vpop.f32.mrb[0].mxu0
        %3013 = vmatprep.mubr.bf16.mxu0 0
        %3014 = vmatmul.mubr.bf16.gmra.mrb[0].mxu0 %v2672
        %v3015 = vpop.f32.mrb[0].mxu0
        %v3016 = vadd.f32 0.0, %v3015
        %v3017 = vpop.f32.mrb[0].mxu0
        %v3018 = vpop.f32.mrb[0].mxu0
        %v3019 = vadd.f32 0.0, %v3018
        %v3020 = vpop.f32.mrb[0].mxu0
        %3021 = vmatprep.mubr.bf16.mxu0 0
        %3022 = vmatmul.mubr.bf16.gmra.mrb[0].mxu0 %v2673
        %v3023 = vpop.f32.mrb[0].mxu0
        %v3024 = vadd.f32 0.0, %v3023
        %v3025 = vpop.f32.mrb[0].mxu0
        %v3026 = vpop.f32.mrb[0].mxu0
        %v3027 = vadd.f32 0.0, %v3026
        %v3028 = vpop.f32.mrb[0].mxu0
        %3029 = vmatprep.mubr.bf16.mxu0 0
        %3030 = vmatmul.mubr.bf16.gmra.mrb[0].mxu0 %v2674
        %v3031 = vpop.f32.mrb[0].mxu0
        %v3032 = vadd.f32 0.0, %v3031
        %v3033 = vpop.f32.mrb[0].mxu0
        %v3034 = vpop.f32.mrb[0].mxu0
        %v3035 = vadd.f32 0.0, %v3034
        %v3036 = vpop.f32.mrb[0].mxu0
        %3037 = vmatprep.mubr.bf16.mxu0 0
        %3038 = vmatmul.mubr.bf16.gmra.mrb[0].mxu0 %v2675
        %v3039 = vpop.f32.mrb[0].mxu0
        %v3040 = vadd.f32 0.0, %v3039
        %v3041 = vpop.f32.mrb[0].mxu0
        %v3042 = vpop.f32.mrb[0].mxu0
        %v3043 = vadd.f32 0.0, %v3042
        %v3044 = vpop.f32.mrb[0].mxu0
        %3045 = vdwg.mxu0
        %3046 = vst [vmem:[#allocation4] sm:$0xff] %v2776
        %3047 = vst [vmem:[#allocation4 + $0x8] sm:$0xff] %v2779
        %3048 = vst [vmem:[#allocation4 + $0x10] sm:$0xff] %v2784
        %3049 = vst [vmem:[#allocation4 + $0x18] sm:$0xff] %v2787
        %3050 = vst [vmem:[#allocation4 + $0x20] sm:$0xff] %v2792
        %3051 = vst [vmem:[#allocation4 + $0x28] sm:$0xff] %v2795
        %3052 = vst [vmem:[#allocation4 + $0x30] sm:$0xff] %v2800
        %3053 = vst [vmem:[#allocation4 + $0x38] sm:$0xff] %v2803
        %3054 = vst [vmem:[#allocation4 + $0x40] sm:$0xff] %v2808
        %3055 = vst [vmem:[#allocation4 + $0x48] sm:$0xff] %v2811
        %3056 = vst [vmem:[#allocation4 + $0x50] sm:$0xff] %v2816
        %3057 = vst [vmem:[#allocation4 + $0x58] sm:$0xff] %v2819
        %3058 = vst [vmem:[#allocation4 + $0x60] sm:$0xff] %v2824
        %3059 = vst [vmem:[#allocation4 + $0x68] sm:$0xff] %v2827
        %3060 = vst [vmem:[#allocation4 + $0x70] sm:$0xff] %v2832
        %3061 = vst [vmem:[#allocation4 + $0x78] sm:$0xff] %v2835
        %3062 = vst [vmem:[#allocation4 + $0x80] sm:$0xff] %v2840
        %3063 = vst [vmem:[#allocation4 + $0x88] sm:$0xff] %v2843
        %3064 = vst [vmem:[#allocation4 + $0x90] sm:$0xff] %v2848
        %3065 = vst [vmem:[#allocation4 + $0x98] sm:$0xff] %v2851
        %3066 = vst [vmem:[#allocation4 + $0xa0] sm:$0xff] %v2856
        %3067 = vst [vmem:[#allocation4 + $0xa8] sm:$0xff] %v2859
        %3068 = vst [vmem:[#allocation4 + $0xb0] sm:$0xff] %v2864
        %3069 = vst [vmem:[#allocation4 + $0xb8] sm:$0xff] %v2867
        %3070 = vst [vmem:[#allocation4 + $0xc0] sm:$0xff] %v2872
        %3071 = vst [vmem:[#allocation4 + $0xc8] sm:$0xff] %v2875
        %3072 = vst [vmem:[#allocation4 + $0xd0] sm:$0xff] %v2880
        %3073 = vst [vmem:[#allocation4 + $0xd8] sm:$0xff] %v2883
        %3074 = vst [vmem:[#allocation4 + $0xe0] sm:$0xff] %v2888
        %3075 = vst [vmem:[#allocation4 + $0xe8] sm:$0xff] %v2891
        %3076 = vst [vmem:[#allocation4 + $0xf0] sm:$0xff] %v2896
        %3077 = vst [vmem:[#allocation4 + $0xf8] sm:$0xff] %v2899
        %3078 = vst [vmem:[#allocation4 + $0x100] sm:$0xff] %v2904
        %3079 = vst [vmem:[#allocation4 + $0x108] sm:$0xff] %v2907
        %3080 = vst [vmem:[#allocation4 + $0x110] sm:$0xff] %v2912
        %3081 = vst [vmem:[#allocation4 + $0x118] sm:$0xff] %v2915
        %3082 = vst [vmem:[#allocation4 + $0x120] sm:$0xff] %v2920
        %3083 = vst [vmem:[#allocation4 + $0x128] sm:$0xff] %v2923
        %3084 = vst [vmem:[#allocation4 + $0x130] sm:$0xff] %v2928
        %3085 = vst [vmem:[#allocation4 + $0x138] sm:$0xff] %v2931
        %3086 = vst [vmem:[#allocation4 + $0x140] sm:$0xff] %v2936
        %3087 = vst [vmem:[#allocation4 + $0x148] sm:$0xff] %v2939
        %3088 = vst [vmem:[#allocation4 + $0x150] sm:$0xff] %v2944
        %3089 = vst [vmem:[#allocation4 + $0x158] sm:$0xff] %v2947
        %3090 = vst [vmem:[#allocation4 + $0x160] sm:$0xff] %v2952
        %3091 = vst [vmem:[#allocation4 + $0x168] sm:$0xff] %v2955
        %3092 = vst [vmem:[#allocation4 + $0x170] sm:$0xff] %v2960
        %3093 = vst [vmem:[#allocation4 + $0x178] sm:$0xff] %v2963
        %3094 = vst [vmem:[#allocation4 + $0x180] sm:$0xff] %v2968
        %3095 = vst [vmem:[#allocation4 + $0x188] sm:$0xff] %v2971
        %3096 = vst [vmem:[#allocation4 + $0x190] sm:$0xff] %v2976
        %3097 = vst [vmem:[#allocation4 + $0x198] sm:$0xff] %v2979
        %3098 = vst [vmem:[#allocation4 + $0x1a0] sm:$0xff] %v2984
        %3099 = vst [vmem:[#allocation4 + $0x1a8] sm:$0xff] %v2987
        %3100 = vst [vmem:[#allocation4 + $0x1b0] sm:$0xff] %v2992
        %3101 = vst [vmem:[#allocation4 + $0x1b8] sm:$0xff] %v2995
        %3102 = vst [vmem:[#allocation4 + $0x1c0] sm:$0xff] %v3000
        %3103 = vst [vmem:[#allocation4 + $0x1c8] sm:$0xff] %v3003
        %3104 = vst [vmem:[#allocation4 + $0x1d0] sm:$0xff] %v3008
        %3105 = vst [vmem:[#allocation4 + $0x1d8] sm:$0xff] %v3011
        %3106 = vst [vmem:[#allocation4 + $0x1e0] sm:$0xff] %v3016
        %3107 = vst [vmem:[#allocation4 + $0x1e8] sm:$0xff] %v3019
        %3108 = vst [vmem:[#allocation4 + $0x1f0] sm:$0xff] %v3024
        %3109 = vst [vmem:[#allocation4 + $0x1f8] sm:$0xff] %v3027
        %3110 = vst [vmem:[#allocation4 + $0x200] sm:$0xff] %v3032
        %3111 = vst [vmem:[#allocation4 + $0x208] sm:$0xff] %v3035
        %3112 = vst [vmem:[#allocation4 + $0x210] sm:$0xff] %v3040
        %3113 = vst [vmem:[#allocation4 + $0x218] sm:$0xff] %v3043
        %v3114 = vld [vmem:[#allocation2 + $0x18] sm:$0xff]
        %v3115 = vld [vmem:[#allocation2 + $0x20] sm:$0xff]
        %v3116 = vld [vmem:[#allocation2 + $0x28] sm:$0xff]
        %v3117 = vld [vmem:[#allocation2 + $0x30] sm:$0xff]
        %v3118 = vld [vmem:[#allocation2 + $0x38] sm:$0xff]
        %v3119 = vld [vmem:[#allocation2 + $0x40] sm:$0xff]
        %v3120 = vld [vmem:[#allocation2 + $0x48] sm:$0xff]
        %v3121 = vld [vmem:[#allocation2 + $0x50] sm:$0xff]
        %v3122 = vld [vmem:[#allocation2 + $0x58] sm:$0xff]
        %v3123 = vld [vmem:[#allocation2 + $0x60] sm:$0xff]
        %v3124 = vld [vmem:[#allocation2 + $0x68] sm:$0xff]
        %v3125 = vld [vmem:[#allocation2 + $0x70] sm:$0xff]
        %v3126 = vld [vmem:[#allocation2 + $0x78] sm:$0xff]
        %v3127 = vld [vmem:[#allocation2 + $0x80] sm:$0xff]
        %v3128 = vld [vmem:[#allocation2 + $0x88] sm:$0xff]
        %v3129 = vld [vmem:[#allocation2 + $0x90] sm:$0xff]
        %v3130 = vld [vmem:[#allocation2 + $0x98] sm:$0xff]
        %v3131 = vld [vmem:[#allocation2 + $0xa0] sm:$0xff]
        %v3132 = vld [vmem:[#allocation2 + $0xa8] sm:$0xff]
        %v3133 = vld [vmem:[#allocation2 + $0xb0] sm:$0xff]
        %v3134 = vld [vmem:[#allocation2 + $0xb8] sm:$0xff]
        %v3135 = vld [vmem:[#allocation2 + $0xc0] sm:$0xff]
        %v3136 = vld [vmem:[#allocation2 + $0xc8] sm:$0xff]
        %v3137 = vld [vmem:[#allocation2 + $0xd0] sm:$0xff]
        %v3138 = vld [vmem:[#allocation2 + $0xd8] sm:$0xff]
        %v3139 = vld [vmem:[#allocation2 + $0xe0] sm:$0xff]
        %v3140 = vld [vmem:[#allocation2 + $0xe8] sm:$0xff]
        %v3141 = vld [vmem:[#allocation2 + $0xf0] sm:$0xff]
        %v3142 = vld [vmem:[#allocation2 + $0xf8] sm:$0xff]
        %v3143 = vld [vmem:[#allocation2 + $0x100] sm:$0xff]
        %v3144 = vld [vmem:[#allocation2 + $0x108] sm:$0xff]
        %v3145 = vld [vmem:[#allocation2 + $0x110] sm:$0xff]
        %v3146 = vld [vmem:[#allocation2 + $0x118] sm:$0xff]
        %v3147 = vld [vmem:[#allocation2 + $0x120] sm:$0xff]
        %s3148 = scalar_lea.vmem %s8, 256
        %v3149 = vld [vmem:[%s3148] sm:$0xf]
        %v3150 = vld [vmem:[%s3148 + $0x4] sm:$0xf]
        %v3151 = vld [vmem:[%s3148 + $0x8] sm:$0xf]
        %v3152 = vld [vmem:[%s3148 + $0xc] sm:$0xf]
        %v3153 = vld [vmem:[%s3148 + $0x10] sm:$0xf]
        %v3154 = vld [vmem:[%s3148 + $0x14] sm:$0xf]
        %v3155 = vld [vmem:[%s3148 + $0x18] sm:$0xf]
        %v3156 = vld [vmem:[%s3148 + $0x1c] sm:$0xf]
        %v3157 = vld [vmem:[%s3148 + $0x20] sm:$0xf]
        %v3158 = vld [vmem:[%s3148 + $0x24] sm:$0xf]
        %v3159 = vld [vmem:[%s3148 + $0x28] sm:$0xf]
        %v3160 = vld [vmem:[%s3148 + $0x2c] sm:$0xf]
        %v3161 = vld [vmem:[%s3148 + $0x30] sm:$0xf]
        %v3162 = vld [vmem:[%s3148 + $0x34] sm:$0xf]
        %v3163 = vld [vmem:[%s3148 + $0x38] sm:$0xf]
        %v3164 = vld [vmem:[%s3148 + $0x3c] sm:$0xf]
        %v3181 = vunpack.c.l.b16 %v3149
        %v3182 = vunpack.c.l.b16 %v3150
        %v3183 = vunpack.c.l.b16 %v3151
        %v3184 = vunpack.c.l.b16 %v3152
        %v3185 = vunpack.c.l.b16 %v3153
        %v3186 = vunpack.c.l.b16 %v3154
        %v3187 = vunpack.c.l.b16 %v3155
        %v3188 = vunpack.c.l.b16 %v3156
        %v3189 = vunpack.c.l.b16 %v3157
        %v3190 = vunpack.c.l.b16 %v3158
        %v3191 = vunpack.c.l.b16 %v3159
        %v3192 = vunpack.c.l.b16 %v3160
        %v3193 = vunpack.c.l.b16 %v3161
        %v3194 = vunpack.c.l.b16 %v3162
        %v3195 = vunpack.c.l.b16 %v3163
        %v3196 = vunpack.c.l.b16 %v3164
        %v3197 = vpack.c.b16 %v3182, %v3181
        %v3198 = vpack.c.b16 %v3184, %v3183
        %v3199 = vpack.c.b16 %v3186, %v3185
        %v3200 = vpack.c.b16 %v3188, %v3187
        %v3201 = vpack.c.b16 %v3190, %v3189
        %v3202 = vpack.c.b16 %v3192, %v3191
        %v3203 = vpack.c.b16 %v3194, %v3193
        %v3204 = vpack.c.b16 %v3196, %v3195
        %3213 = vmatprep.subr.bf16.mxu0 0
        %3214 = vmatpush1.bf16.msra.mxu0 %v3197
        %3215 = vmatprep.subr.bf16.mxu0 0
        %3216 = vmatpush1.bf16.msra.mxu0 %v3198
        %3217 = vmatprep.subr.bf16.mxu0 0
        %3218 = vmatpush1.bf16.msra.mxu0 %v3199
        %3219 = vmatprep.subr.bf16.mxu0 0
        %3220 = vmatpush1.bf16.msra.mxu0 %v3200
        %3221 = vmatprep.subr.bf16.mxu0 0
        %3222 = vmatpush1.bf16.msra.mxu0 %v3201
        %3223 = vmatprep.subr.bf16.mxu0 0
        %3224 = vmatpush1.bf16.msra.mxu0 %v3202
        %3225 = vmatprep.subr.bf16.mxu0 0
        %3226 = vmatpush1.bf16.msra.mxu0 %v3203
        %3227 = vmatprep.subr.bf16.mxu0 0
        %3228 = vmatpush1.bf16.msra.mxu0 %v3204
        %3229 = vmatprep.subr.bf16.mxu0 0
        %3230 = vmatpush1.bf16.msra.mxu0 0
        %3231 = vmatprep.subr.bf16.mxu0 0
        %3232 = vmatpush1.bf16.msra.mxu0 0
        %3233 = vmatprep.subr.bf16.mxu0 0
        %3234 = vmatpush1.bf16.msra.mxu0 0
        %3235 = vmatprep.subr.bf16.mxu0 0
        %3236 = vmatpush1.bf16.msra.mxu0 0
        %3237 = vmatprep.subr.bf16.mxu0 0
        %3238 = vmatpush1.bf16.msra.mxu0 0
        %3239 = vmatprep.subr.bf16.mxu0 0
        %3240 = vmatpush1.bf16.msra.mxu0 0
        %3241 = vmatprep.subr.bf16.mxu0 0
        %3242 = vmatpush1.bf16.msra.mxu0 0
        %3243 = vmatprep.subr.bf16.mxu0 0
        %3244 = vmatpush1.bf16.msra.mxu0 0
        %3245 = vmatprep.mubr.bf16.mxu0 0
        %3246 = vmatmul.mubr.bf16.gmra.mrb[0].mxu0 %v3114
        %v3247 = vpop.f32.mrb[0].mxu0
        %v3248 = vadd.f32 0.0, %v3247
        %v3249 = vpop.f32.mrb[0].mxu0
        %v3250 = vpop.f32.mrb[0].mxu0
        %v3251 = vadd.f32 0.0, %v3250
        %v3252 = vpop.f32.mrb[0].mxu0
        %3253 = vmatprep.mubr.bf16.mxu0 0
        %3254 = vmatmul.mubr.bf16.gmra.mrb[0].mxu0 %v3115
        %v3255 = vpop.f32.mrb[0].mxu0
        %v3256 = vadd.f32 0.0, %v3255
        %v3257 = vpop.f32.mrb[0].mxu0
        %v3258 = vpop.f32.mrb[0].mxu0
        %v3259 = vadd.f32 0.0, %v3258
        %v3260 = vpop.f32.mrb[0].mxu0
        %3261 = vmatprep.mubr.bf16.mxu0 0
        %3262 = vmatmul.mubr.bf16.gmra.mrb[0].mxu0 %v3116
        %v3263 = vpop.f32.mrb[0].mxu0
        %v3264 = vadd.f32 0.0, %v3263
        %v3265 = vpop.f32.mrb[0].mxu0
        %v3266 = vpop.f32.mrb[0].mxu0
        %v3267 = vadd.f32 0.0, %v3266
        %v3268 = vpop.f32.mrb[0].mxu0
        %3269 = vmatprep.mubr.bf16.mxu0 0
        %3270 = vmatmul.mubr.bf16.gmra.mrb[0].mxu0 %v3117
        %v3271 = vpop.f32.mrb[0].mxu0
        %v3272 = vadd.f32 0.0, %v3271
        %v3273 = vpop.f32.mrb[0].mxu0
        %v3274 = vpop.f32.mrb[0].mxu0
        %v3275 = vadd.f32 0.0, %v3274
        %v3276 = vpop.f32.mrb[0].mxu0
        %3277 = vmatprep.mubr.bf16.mxu0 0
        %3278 = vmatmul.mubr.bf16.gmra.mrb[0].mxu0 %v3118
        %v3279 = vpop.f32.mrb[0].mxu0
        %v3280 = vadd.f32 0.0, %v3279
        %v3281 = vpop.f32.mrb[0].mxu0
        %v3282 = vpop.f32.mrb[0].mxu0
        %v3283 = vadd.f32 0.0, %v3282
        %v3284 = vpop.f32.mrb[0].mxu0
        %3285 = vmatprep.mubr.bf16.mxu0 0
        %3286 = vmatmul.mubr.bf16.gmra.mrb[0].mxu0 %v3119
        %v3287 = vpop.f32.mrb[0].mxu0
        %v3288 = vadd.f32 0.0, %v3287
        %v3289 = vpop.f32.mrb[0].mxu0
        %v3290 = vpop.f32.mrb[0].mxu0
        %v3291 = vadd.f32 0.0, %v3290
        %v3292 = vpop.f32.mrb[0].mxu0
        %3293 = vmatprep.mubr.bf16.mxu0 0
        %3294 = vmatmul.mubr.bf16.gmra.mrb[0].mxu0 %v3120
        %v3295 = vpop.f32.mrb[0].mxu0
        %v3296 = vadd.f32 0.0, %v3295
        %v3297 = vpop.f32.mrb[0].mxu0
        %v3298 = vpop.f32.mrb[0].mxu0
        %v3299 = vadd.f32 0.0, %v3298
        %v3300 = vpop.f32.mrb[0].mxu0
        %3301 = vmatprep.mubr.bf16.mxu0 0
        %3302 = vmatmul.mubr.bf16.gmra.mrb[0].mxu0 %v3121
        %v3303 = vpop.f32.mrb[0].mxu0
        %v3304 = vadd.f32 0.0, %v3303
        %v3305 = vpop.f32.mrb[0].mxu0
        %v3306 = vpop.f32.mrb[0].mxu0
        %v3307 = vadd.f32 0.0, %v3306
        %v3308 = vpop.f32.mrb[0].mxu0
        %3309 = vmatprep.mubr.bf16.mxu0 0
        %3310 = vmatmul.mubr.bf16.gmra.mrb[0].mxu0 %v3122
        %v3311 = vpop.f32.mrb[0].mxu0
        %v3312 = vadd.f32 0.0, %v3311
        %v3313 = vpop.f32.mrb[0].mxu0
        %v3314 = vpop.f32.mrb[0].mxu0
        %v3315 = vadd.f32 0.0, %v3314
        %v3316 = vpop.f32.mrb[0].mxu0
        %3317 = vmatprep.mubr.bf16.mxu0 0
        %3318 = vmatmul.mubr.bf16.gmra.mrb[0].mxu0 %v3123
        %v3319 = vpop.f32.mrb[0].mxu0
        %v3320 = vadd.f32 0.0, %v3319
        %v3321 = vpop.f32.mrb[0].mxu0
        %v3322 = vpop.f32.mrb[0].mxu0
        %v3323 = vadd.f32 0.0, %v3322
        %v3324 = vpop.f32.mrb[0].mxu0
        %3325 = vmatprep.mubr.bf16.mxu0 0
        %3326 = vmatmul.mubr.bf16.gmra.mrb[0].mxu0 %v3124
        %v3327 = vpop.f32.mrb[0].mxu0
        %v3328 = vadd.f32 0.0, %v3327
        %v3329 = vpop.f32.mrb[0].mxu0
        %v3330 = vpop.f32.mrb[0].mxu0
        %v3331 = vadd.f32 0.0, %v3330
        %v3332 = vpop.f32.mrb[0].mxu0
        %3333 = vmatprep.mubr.bf16.mxu0 0
        %3334 = vmatmul.mubr.bf16.gmra.mrb[0].mxu0 %v3125
        %v3335 = vpop.f32.mrb[0].mxu0
        %v3336 = vadd.f32 0.0, %v3335
        %v3337 = vpop.f32.mrb[0].mxu0
        %v3338 = vpop.f32.mrb[0].mxu0
        %v3339 = vadd.f32 0.0, %v3338
        %v3340 = vpop.f32.mrb[0].mxu0
        %3341 = vmatprep.mubr.bf16.mxu0 0
        %3342 = vmatmul.mubr.bf16.gmra.mrb[0].mxu0 %v3126
        %v3343 = vpop.f32.mrb[0].mxu0
        %v3344 = vadd.f32 0.0, %v3343
        %v3345 = vpop.f32.mrb[0].mxu0
        %v3346 = vpop.f32.mrb[0].mxu0
        %v3347 = vadd.f32 0.0, %v3346
        %v3348 = vpop.f32.mrb[0].mxu0
        %3349 = vmatprep.mubr.bf16.mxu0 0
        %3350 = vmatmul.mubr.bf16.gmra.mrb[0].mxu0 %v3127
        %v3351 = vpop.f32.mrb[0].mxu0
        %v3352 = vadd.f32 0.0, %v3351
        %v3353 = vpop.f32.mrb[0].mxu0
        %v3354 = vpop.f32.mrb[0].mxu0
        %v3355 = vadd.f32 0.0, %v3354
        %v3356 = vpop.f32.mrb[0].mxu0
        %3357 = vmatprep.mubr.bf16.mxu0 0
        %3358 = vmatmul.mubr.bf16.gmra.mrb[0].mxu0 %v3128
        %v3359 = vpop.f32.mrb[0].mxu0
        %v3360 = vadd.f32 0.0, %v3359
        %v3361 = vpop.f32.mrb[0].mxu0
        %v3362 = vpop.f32.mrb[0].mxu0
        %v3363 = vadd.f32 0.0, %v3362
        %v3364 = vpop.f32.mrb[0].mxu0
        %3365 = vmatprep.mubr.bf16.mxu0 0
        %3366 = vmatmul.mubr.bf16.gmra.mrb[0].mxu0 %v3129
        %v3367 = vpop.f32.mrb[0].mxu0
        %v3368 = vadd.f32 0.0, %v3367
        %v3369 = vpop.f32.mrb[0].mxu0
        %v3370 = vpop.f32.mrb[0].mxu0
        %v3371 = vadd.f32 0.0, %v3370
        %v3372 = vpop.f32.mrb[0].mxu0
        %3373 = vmatprep.mubr.bf16.mxu0 0
        %3374 = vmatmul.mubr.bf16.gmra.mrb[0].mxu0 %v3130
        %v3375 = vpop.f32.mrb[0].mxu0
        %v3376 = vadd.f32 0.0, %v3375
        %v3377 = vpop.f32.mrb[0].mxu0
        %v3378 = vpop.f32.mrb[0].mxu0
        %v3379 = vadd.f32 0.0, %v3378
        %v3380 = vpop.f32.mrb[0].mxu0
        %3381 = vmatprep.mubr.bf16.mxu0 0
        %3382 = vmatmul.mubr.bf16.gmra.mrb[0].mxu0 %v3131
        %v3383 = vpop.f32.mrb[0].mxu0
        %v3384 = vadd.f32 0.0, %v3383
        %v3385 = vpop.f32.mrb[0].mxu0
        %v3386 = vpop.f32.mrb[0].mxu0
        %v3387 = vadd.f32 0.0, %v3386
        %v3388 = vpop.f32.mrb[0].mxu0
        %3389 = vmatprep.mubr.bf16.mxu0 0
        %3390 = vmatmul.mubr.bf16.gmra.mrb[0].mxu0 %v3132
        %v3391 = vpop.f32.mrb[0].mxu0
        %v3392 = vadd.f32 0.0, %v3391
        %v3393 = vpop.f32.mrb[0].mxu0
        %v3394 = vpop.f32.mrb[0].mxu0
        %v3395 = vadd.f32 0.0, %v3394
        %v3396 = vpop.f32.mrb[0].mxu0
        %3397 = vmatprep.mubr.bf16.mxu0 0
        %3398 = vmatmul.mubr.bf16.gmra.mrb[0].mxu0 %v3133
        %v3399 = vpop.f32.mrb[0].mxu0
        %v3400 = vadd.f32 0.0, %v3399
        %v3401 = vpop.f32.mrb[0].mxu0
        %v3402 = vpop.f32.mrb[0].mxu0
        %v3403 = vadd.f32 0.0, %v3402
        %v3404 = vpop.f32.mrb[0].mxu0
        %3405 = vmatprep.mubr.bf16.mxu0 0
        %3406 = vmatmul.mubr.bf16.gmra.mrb[0].mxu0 %v3134
        %v3407 = vpop.f32.mrb[0].mxu0
        %v3408 = vadd.f32 0.0, %v3407
        %v3409 = vpop.f32.mrb[0].mxu0
        %v3410 = vpop.f32.mrb[0].mxu0
        %v3411 = vadd.f32 0.0, %v3410
        %v3412 = vpop.f32.mrb[0].mxu0
        %3413 = vmatprep.mubr.bf16.mxu0 0
        %3414 = vmatmul.mubr.bf16.gmra.mrb[0].mxu0 %v3135
        %v3415 = vpop.f32.mrb[0].mxu0
        %v3416 = vadd.f32 0.0, %v3415
        %v3417 = vpop.f32.mrb[0].mxu0
        %v3418 = vpop.f32.mrb[0].mxu0
        %v3419 = vadd.f32 0.0, %v3418
        %v3420 = vpop.f32.mrb[0].mxu0
        %3421 = vmatprep.mubr.bf16.mxu0 0
        %3422 = vmatmul.mubr.bf16.gmra.mrb[0].mxu0 %v3136
        %v3423 = vpop.f32.mrb[0].mxu0
        %v3424 = vadd.f32 0.0, %v3423
        %v3425 = vpop.f32.mrb[0].mxu0
        %v3426 = vpop.f32.mrb[0].mxu0
        %v3427 = vadd.f32 0.0, %v3426
        %v3428 = vpop.f32.mrb[0].mxu0
        %3429 = vmatprep.mubr.bf16.mxu0 0
        %3430 = vmatmul.mubr.bf16.gmra.mrb[0].mxu0 %v3137
        %v3431 = vpop.f32.mrb[0].mxu0
        %v3432 = vadd.f32 0.0, %v3431
        %v3433 = vpop.f32.mrb[0].mxu0
        %v3434 = vpop.f32.mrb[0].mxu0
        %v3435 = vadd.f32 0.0, %v3434
        %v3436 = vpop.f32.mrb[0].mxu0
        %3437 = vmatprep.mubr.bf16.mxu0 0
        %3438 = vmatmul.mubr.bf16.gmra.mrb[0].mxu0 %v3138
        %v3439 = vpop.f32.mrb[0].mxu0
        %v3440 = vadd.f32 0.0, %v3439
        %v3441 = vpop.f32.mrb[0].mxu0
        %v3442 = vpop.f32.mrb[0].mxu0
        %v3443 = vadd.f32 0.0, %v3442
        %v3444 = vpop.f32.mrb[0].mxu0
        %3445 = vmatprep.mubr.bf16.mxu0 0
        %3446 = vmatmul.mubr.bf16.gmra.mrb[0].mxu0 %v3139
        %v3447 = vpop.f32.mrb[0].mxu0
        %v3448 = vadd.f32 0.0, %v3447
        %v3449 = vpop.f32.mrb[0].mxu0
        %v3450 = vpop.f32.mrb[0].mxu0
        %v3451 = vadd.f32 0.0, %v3450
        %v3452 = vpop.f32.mrb[0].mxu0
        %3453 = vmatprep.mubr.bf16.mxu0 0
        %3454 = vmatmul.mubr.bf16.gmra.mrb[0].mxu0 %v3140
        %v3455 = vpop.f32.mrb[0].mxu0
        %v3456 = vadd.f32 0.0, %v3455
        %v3457 = vpop.f32.mrb[0].mxu0
        %v3458 = vpop.f32.mrb[0].mxu0
        %v3459 = vadd.f32 0.0, %v3458
        %v3460 = vpop.f32.mrb[0].mxu0
        %3461 = vmatprep.mubr.bf16.mxu0 0
        %3462 = vmatmul.mubr.bf16.gmra.mrb[0].mxu0 %v3141
        %v3463 = vpop.f32.mrb[0].mxu0
        %v3464 = vadd.f32 0.0, %v3463
        %v3465 = vpop.f32.mrb[0].mxu0
        %v3466 = vpop.f32.mrb[0].mxu0
        %v3467 = vadd.f32 0.0, %v3466
        %v3468 = vpop.f32.mrb[0].mxu0
        %3469 = vmatprep.mubr.bf16.mxu0 0
        %3470 = vmatmul.mubr.bf16.gmra.mrb[0].mxu0 %v3142
        %v3471 = vpop.f32.mrb[0].mxu0
        %v3472 = vadd.f32 0.0, %v3471
        %v3473 = vpop.f32.mrb[0].mxu0
        %v3474 = vpop.f32.mrb[0].mxu0
        %v3475 = vadd.f32 0.0, %v3474
        %v3476 = vpop.f32.mrb[0].mxu0
        %3477 = vmatprep.mubr.bf16.mxu0 0
        %3478 = vmatmul.mubr.bf16.gmra.mrb[0].mxu0 %v3143
        %v3479 = vpop.f32.mrb[0].mxu0
        %v3480 = vadd.f32 0.0, %v3479
        %v3481 = vpop.f32.mrb[0].mxu0
        %v3482 = vpop.f32.mrb[0].mxu0
        %v3483 = vadd.f32 0.0, %v3482
        %v3484 = vpop.f32.mrb[0].mxu0
        %3485 = vmatprep.mubr.bf16.mxu0 0
        %3486 = vmatmul.mubr.bf16.gmra.mrb[0].mxu0 %v3144
        %v3487 = vpop.f32.mrb[0].mxu0
        %v3488 = vadd.f32 0.0, %v3487
        %v3489 = vpop.f32.mrb[0].mxu0
        %v3490 = vpop.f32.mrb[0].mxu0
        %v3491 = vadd.f32 0.0, %v3490
        %v3492 = vpop.f32.mrb[0].mxu0
        %3493 = vmatprep.mubr.bf16.mxu0 0
        %3494 = vmatmul.mubr.bf16.gmra.mrb[0].mxu0 %v3145
        %v3495 = vpop.f32.mrb[0].mxu0
        %v3496 = vadd.f32 0.0, %v3495
        %v3497 = vpop.f32.mrb[0].mxu0
        %v3498 = vpop.f32.mrb[0].mxu0
        %v3499 = vadd.f32 0.0, %v3498
        %v3500 = vpop.f32.mrb[0].mxu0
        %3501 = vmatprep.mubr.bf16.mxu0 0
        %3502 = vmatmul.mubr.bf16.gmra.mrb[0].mxu0 %v3146
        %v3503 = vpop.f32.mrb[0].mxu0
        %v3504 = vadd.f32 0.0, %v3503
        %v3505 = vpop.f32.mrb[0].mxu0
        %v3506 = vpop.f32.mrb[0].mxu0
        %v3507 = vadd.f32 0.0, %v3506
        %v3508 = vpop.f32.mrb[0].mxu0
        %3509 = vmatprep.mubr.bf16.mxu0 0
        %3510 = vmatmul.mubr.bf16.gmra.mrb[0].mxu0 %v3147
        %v3511 = vpop.f32.mrb[0].mxu0
        %v3512 = vadd.f32 0.0, %v3511
        %v3513 = vpop.f32.mrb[0].mxu0
        %v3514 = vpop.f32.mrb[0].mxu0
        %v3515 = vadd.f32 0.0, %v3514
        %v3516 = vpop.f32.mrb[0].mxu0
        %3517 = vdwg.mxu0
        %v3518 = vld [vmem:[#allocation4] sm:$0xff]
        %v3519 = vld [vmem:[#allocation4 + $0x8] sm:$0xff]
        %v3520 = vld [vmem:[#allocation4 + $0x10] sm:$0xff]
        %v3521 = vld [vmem:[#allocation4 + $0x18] sm:$0xff]
        %v3522 = vld [vmem:[#allocation4 + $0x20] sm:$0xff]
        %v3523 = vld [vmem:[#allocation4 + $0x28] sm:$0xff]
        %v3524 = vld [vmem:[#allocation4 + $0x30] sm:$0xff]
        %v3525 = vld [vmem:[#allocation4 + $0x38] sm:$0xff]
        %v3526 = vld [vmem:[#allocation4 + $0x40] sm:$0xff]
        %v3527 = vld [vmem:[#allocation4 + $0x48] sm:$0xff]
        %v3528 = vld [vmem:[#allocation4 + $0x50] sm:$0xff]
        %v3529 = vld [vmem:[#allocation4 + $0x58] sm:$0xff]
        %v3530 = vld [vmem:[#allocation4 + $0x60] sm:$0xff]
        %v3531 = vld [vmem:[#allocation4 + $0x68] sm:$0xff]
        %v3532 = vld [vmem:[#allocation4 + $0x70] sm:$0xff]
        %v3533 = vld [vmem:[#allocation4 + $0x78] sm:$0xff]
        %v3534 = vld [vmem:[#allocation4 + $0x80] sm:$0xff]
        %v3535 = vld [vmem:[#allocation4 + $0x88] sm:$0xff]
        %v3536 = vld [vmem:[#allocation4 + $0x90] sm:$0xff]
        %v3537 = vld [vmem:[#allocation4 + $0x98] sm:$0xff]
        %v3538 = vld [vmem:[#allocation4 + $0xa0] sm:$0xff]
        %v3539 = vld [vmem:[#allocation4 + $0xa8] sm:$0xff]
        %v3540 = vld [vmem:[#allocation4 + $0xb0] sm:$0xff]
        %v3541 = vld [vmem:[#allocation4 + $0xb8] sm:$0xff]
        %v3542 = vld [vmem:[#allocation4 + $0xc0] sm:$0xff]
        %v3543 = vld [vmem:[#allocation4 + $0xc8] sm:$0xff]
        %v3544 = vld [vmem:[#allocation4 + $0xd0] sm:$0xff]
        %v3545 = vld [vmem:[#allocation4 + $0xd8] sm:$0xff]
        %v3546 = vld [vmem:[#allocation4 + $0xe0] sm:$0xff]
        %v3547 = vld [vmem:[#allocation4 + $0xe8] sm:$0xff]
        %v3548 = vld [vmem:[#allocation4 + $0xf0] sm:$0xff]
        %v3549 = vld [vmem:[#allocation4 + $0xf8] sm:$0xff]
        %v3550 = vld [vmem:[#allocation4 + $0x100] sm:$0xff]
        %v3551 = vld [vmem:[#allocation4 + $0x108] sm:$0xff]
        %v3552 = vld [vmem:[#allocation4 + $0x110] sm:$0xff]
        %v3553 = vld [vmem:[#allocation4 + $0x118] sm:$0xff]
        %v3554 = vld [vmem:[#allocation4 + $0x120] sm:$0xff]
        %v3555 = vld [vmem:[#allocation4 + $0x128] sm:$0xff]
        %v3556 = vld [vmem:[#allocation4 + $0x130] sm:$0xff]
        %v3557 = vld [vmem:[#allocation4 + $0x138] sm:$0xff]
        %v3558 = vld [vmem:[#allocation4 + $0x140] sm:$0xff]
        %v3559 = vld [vmem:[#allocation4 + $0x148] sm:$0xff]
        %v3560 = vld [vmem:[#allocation4 + $0x150] sm:$0xff]
        %v3561 = vld [vmem:[#allocation4 + $0x158] sm:$0xff]
        %v3562 = vld [vmem:[#allocation4 + $0x160] sm:$0xff]
        %v3563 = vld [vmem:[#allocation4 + $0x168] sm:$0xff]
        %v3564 = vld [vmem:[#allocation4 + $0x170] sm:$0xff]
        %v3565 = vld [vmem:[#allocation4 + $0x178] sm:$0xff]
        %v3566 = vld [vmem:[#allocation4 + $0x180] sm:$0xff]
        %v3567 = vld [vmem:[#allocation4 + $0x188] sm:$0xff]
        %v3568 = vld [vmem:[#allocation4 + $0x190] sm:$0xff]
        %v3569 = vld [vmem:[#allocation4 + $0x198] sm:$0xff]
        %v3570 = vld [vmem:[#allocation4 + $0x1a0] sm:$0xff]
        %v3571 = vld [vmem:[#allocation4 + $0x1a8] sm:$0xff]
        %v3572 = vld [vmem:[#allocation4 + $0x1b0] sm:$0xff]
        %v3573 = vld [vmem:[#allocation4 + $0x1b8] sm:$0xff]
        %v3574 = vld [vmem:[#allocation4 + $0x1c0] sm:$0xff]
        %v3575 = vld [vmem:[#allocation4 + $0x1c8] sm:$0xff]
        %v3576 = vld [vmem:[#allocation4 + $0x1d0] sm:$0xff]
        %v3577 = vld [vmem:[#allocation4 + $0x1d8] sm:$0xff]
        %v3578 = vld [vmem:[#allocation4 + $0x1e0] sm:$0xff]
        %v3579 = vld [vmem:[#allocation4 + $0x1e8] sm:$0xff]
        %v3580 = vld [vmem:[#allocation4 + $0x1f0] sm:$0xff]
        %v3581 = vld [vmem:[#allocation4 + $0x1f8] sm:$0xff]
        %v3582 = vld [vmem:[#allocation4 + $0x200] sm:$0xff]
        %v3583 = vld [vmem:[#allocation4 + $0x208] sm:$0xff]
        %v3584 = vld [vmem:[#allocation4 + $0x210] sm:$0xff]
        %v3585 = vld [vmem:[#allocation4 + $0x218] sm:$0xff]
        %v3586 = vadd.f32 %v3518, %v3248
        %v3587 = vadd.f32 %v3519, %v3251
        %v3588 = vadd.f32 %v3520, %v3256
        %v3589 = vadd.f32 %v3521, %v3259
        %v3590 = vadd.f32 %v3522, %v3264
        %v3591 = vadd.f32 %v3523, %v3267
        %v3592 = vadd.f32 %v3524, %v3272
        %v3593 = vadd.f32 %v3525, %v3275
        %v3594 = vadd.f32 %v3526, %v3280
        %v3595 = vadd.f32 %v3527, %v3283
        %v3596 = vadd.f32 %v3528, %v3288
        %v3597 = vadd.f32 %v3529, %v3291
        %v3598 = vadd.f32 %v3530, %v3296
        %v3599 = vadd.f32 %v3531, %v3299
        %v3600 = vadd.f32 %v3532, %v3304
        %v3601 = vadd.f32 %v3533, %v3307
        %v3602 = vadd.f32 %v3534, %v3312
        %v3603 = vadd.f32 %v3535, %v3315
        %v3604 = vadd.f32 %v3536, %v3320
        %v3605 = vadd.f32 %v3537, %v3323
        %v3606 = vadd.f32 %v3538, %v3328
        %v3607 = vadd.f32 %v3539, %v3331
        %v3608 = vadd.f32 %v3540, %v3336
        %v3609 = vadd.f32 %v3541, %v3339
        %v3610 = vadd.f32 %v3542, %v3344
        %v3611 = vadd.f32 %v3543, %v3347
        %v3612 = vadd.f32 %v3544, %v3352
        %v3613 = vadd.f32 %v3545, %v3355
        %v3614 = vadd.f32 %v3546, %v3360
        %v3615 = vadd.f32 %v3547, %v3363
        %v3616 = vadd.f32 %v3548, %v3368
        %v3617 = vadd.f32 %v3549, %v3371
        %v3618 = vadd.f32 %v3550, %v3376
        %v3619 = vadd.f32 %v3551, %v3379
        %v3620 = vadd.f32 %v3552, %v3384
        %v3621 = vadd.f32 %v3553, %v3387
        %v3622 = vadd.f32 %v3554, %v3392
        %v3623 = vadd.f32 %v3555, %v3395
        %v3624 = vadd.f32 %v3556, %v3400
        %v3625 = vadd.f32 %v3557, %v3403
        %v3626 = vadd.f32 %v3558, %v3408
        %v3627 = vadd.f32 %v3559, %v3411
        %v3628 = vadd.f32 %v3560, %v3416
        %v3629 = vadd.f32 %v3561, %v3419
        %v3630 = vadd.f32 %v3562, %v3424
        %v3631 = vadd.f32 %v3563, %v3427
        %v3632 = vadd.f32 %v3564, %v3432
        %v3633 = vadd.f32 %v3565, %v3435
        %v3634 = vadd.f32 %v3566, %v3440
        %v3635 = vadd.f32 %v3567, %v3443
        %v3636 = vadd.f32 %v3568, %v3448
        %v3637 = vadd.f32 %v3569, %v3451
        %v3638 = vadd.f32 %v3570, %v3456
        %v3639 = vadd.f32 %v3571, %v3459
        %v3640 = vadd.f32 %v3572, %v3464
        %v3641 = vadd.f32 %v3573, %v3467
        %v3642 = vadd.f32 %v3574, %v3472
        %v3643 = vadd.f32 %v3575, %v3475
        %v3644 = vadd.f32 %v3576, %v3480
        %v3645 = vadd.f32 %v3577, %v3483
        %v3646 = vadd.f32 %v3578, %v3488
        %v3647 = vadd.f32 %v3579, %v3491
        %v3648 = vadd.f32 %v3580, %v3496
        %v3649 = vadd.f32 %v3581, %v3499
        %v3650 = vadd.f32 %v3582, %v3504
        %v3651 = vadd.f32 %v3583, %v3507
        %v3652 = vadd.f32 %v3584, %v3512
        %v3653 = vadd.f32 %v3585, %v3515
        %3654 = vst [vmem:[#allocation4] sm:$0xff] %v3586
        %3655 = vst [vmem:[#allocation4 + $0x8] sm:$0xff] %v3587
        %3656 = vst [vmem:[#allocation4 + $0x10] sm:$0xff] %v3588
        %3657 = vst [vmem:[#allocation4 + $0x18] sm:$0xff] %v3589
        %3658 = vst [vmem:[#allocation4 + $0x20] sm:$0xff] %v3590
        %3659 = vst [vmem:[#allocation4 + $0x28] sm:$0xff] %v3591
        %3660 = vst [vmem:[#allocation4 + $0x30] sm:$0xff] %v3592
        %3661 = vst [vmem:[#allocation4 + $0x38] sm:$0xff] %v3593
        %3662 = vst [vmem:[#allocation4 + $0x40] sm:$0xff] %v3594
        %3663 = vst [vmem:[#allocation4 + $0x48] sm:$0xff] %v3595
        %3664 = vst [vmem:[#allocation4 + $0x50] sm:$0xff] %v3596
        %3665 = vst [vmem:[#allocation4 + $0x58] sm:$0xff] %v3597
        %3666 = vst [vmem:[#allocation4 + $0x60] sm:$0xff] %v3598
        %3667 = vst [vmem:[#allocation4 + $0x68] sm:$0xff] %v3599
        %3668 = vst [vmem:[#allocation4 + $0x70] sm:$0xff] %v3600
        %3669 = vst [vmem:[#allocation4 + $0x78] sm:$0xff] %v3601
        %3670 = vst [vmem:[#allocation4 + $0x80] sm:$0xff] %v3602
        %3671 = vst [vmem:[#allocation4 + $0x88] sm:$0xff] %v3603
        %3672 = vst [vmem:[#allocation4 + $0x90] sm:$0xff] %v3604
        %3673 = vst [vmem:[#allocation4 + $0x98] sm:$0xff] %v3605
        %3674 = vst [vmem:[#allocation4 + $0xa0] sm:$0xff] %v3606
        %3675 = vst [vmem:[#allocation4 + $0xa8] sm:$0xff] %v3607
        %3676 = vst [vmem:[#allocation4 + $0xb0] sm:$0xff] %v3608
        %3677 = vst [vmem:[#allocation4 + $0xb8] sm:$0xff] %v3609
        %3678 = vst [vmem:[#allocation4 + $0xc0] sm:$0xff] %v3610
        %3679 = vst [vmem:[#allocation4 + $0xc8] sm:$0xff] %v3611
        %3680 = vst [vmem:[#allocation4 + $0xd0] sm:$0xff] %v3612
        %3681 = vst [vmem:[#allocation4 + $0xd8] sm:$0xff] %v3613
        %3682 = vst [vmem:[#allocation4 + $0xe0] sm:$0xff] %v3614
        %3683 = vst [vmem:[#allocation4 + $0xe8] sm:$0xff] %v3615
        %3684 = vst [vmem:[#allocation4 + $0xf0] sm:$0xff] %v3616
        %3685 = vst [vmem:[#allocation4 + $0xf8] sm:$0xff] %v3617
        %3686 = vst [vmem:[#allocation4 + $0x100] sm:$0xff] %v3618
        %3687 = vst [vmem:[#allocation4 + $0x108] sm:$0xff] %v3619
        %3688 = vst [vmem:[#allocation4 + $0x110] sm:$0xff] %v3620
        %3689 = vst [vmem:[#allocation4 + $0x118] sm:$0xff] %v3621
        %3690 = vst [vmem:[#allocation4 + $0x120] sm:$0xff] %v3622
        %3691 = vst [vmem:[#allocation4 + $0x128] sm:$0xff] %v3623
        %3692 = vst [vmem:[#allocation4 + $0x130] sm:$0xff] %v3624
        %3693 = vst [vmem:[#allocation4 + $0x138] sm:$0xff] %v3625
        %3694 = vst [vmem:[#allocation4 + $0x140] sm:$0xff] %v3626
        %3695 = vst [vmem:[#allocation4 + $0x148] sm:$0xff] %v3627
        %3696 = vst [vmem:[#allocation4 + $0x150] sm:$0xff] %v3628
        %3697 = vst [vmem:[#allocation4 + $0x158] sm:$0xff] %v3629
        %3698 = vst [vmem:[#allocation4 + $0x160] sm:$0xff] %v3630
        %3699 = vst [vmem:[#allocation4 + $0x168] sm:$0xff] %v3631
        %3700 = vst [vmem:[#allocation4 + $0x170] sm:$0xff] %v3632
        %3701 = vst [vmem:[#allocation4 + $0x178] sm:$0xff] %v3633
        %3702 = vst [vmem:[#allocation4 + $0x180] sm:$0xff] %v3634
        %3703 = vst [vmem:[#allocation4 + $0x188] sm:$0xff] %v3635
        %3704 = vst [vmem:[#allocation4 + $0x190] sm:$0xff] %v3636
        %3705 = vst [vmem:[#allocation4 + $0x198] sm:$0xff] %v3637
        %3706 = vst [vmem:[#allocation4 + $0x1a0] sm:$0xff] %v3638
        %3707 = vst [vmem:[#allocation4 + $0x1a8] sm:$0xff] %v3639
        %3708 = vst [vmem:[#allocation4 + $0x1b0] sm:$0xff] %v3640
        %3709 = vst [vmem:[#allocation4 + $0x1b8] sm:$0xff] %v3641
        %3710 = vst [vmem:[#allocation4 + $0x1c0] sm:$0xff] %v3642
        %3711 = vst [vmem:[#allocation4 + $0x1c8] sm:$0xff] %v3643
        %3712 = vst [vmem:[#allocation4 + $0x1d0] sm:$0xff] %v3644
        %3713 = vst [vmem:[#allocation4 + $0x1d8] sm:$0xff] %v3645
        %3714 = vst [vmem:[#allocation4 + $0x1e0] sm:$0xff] %v3646
        %3715 = vst [vmem:[#allocation4 + $0x1e8] sm:$0xff] %v3647
        %3716 = vst [vmem:[#allocation4 + $0x1f0] sm:$0xff] %v3648
        %3717 = vst [vmem:[#allocation4 + $0x1f8] sm:$0xff] %v3649
        %3718 = vst [vmem:[#allocation4 + $0x200] sm:$0xff] %v3650
        %3719 = vst [vmem:[#allocation4 + $0x208] sm:$0xff] %v3651
        %3720 = vst [vmem:[#allocation4 + $0x210] sm:$0xff] %v3652
        %3721 = vst [vmem:[#allocation4 + $0x218] sm:$0xff] %v3653
        %v3722 = vld [vmem:[#allocation2 + $0x30] sm:$0xff]
        %v3723 = vld [vmem:[#allocation2 + $0x38] sm:$0xff]
        %v3724 = vld [vmem:[#allocation2 + $0x40] sm:$0xff]
        %v3725 = vld [vmem:[#allocation2 + $0x48] sm:$0xff]
        %v3726 = vld [vmem:[#allocation2 + $0x50] sm:$0xff]
        %v3727 = vld [vmem:[#allocation2 + $0x58] sm:$0xff]
        %v3728 = vld [vmem:[#allocation2 + $0x60] sm:$0xff]
        %v3729 = vld [vmem:[#allocation2 + $0x68] sm:$0xff]
        %v3730 = vld [vmem:[#allocation2 + $0x70] sm:$0xff]
        %v3731 = vld [vmem:[#allocation2 + $0x78] sm:$0xff]
        %v3732 = vld [vmem:[#allocation2 + $0x80] sm:$0xff]
        %v3733 = vld [vmem:[#allocation2 + $0x88] sm:$0xff]
        %v3734 = vld [vmem:[#allocation2 + $0x90] sm:$0xff]
        %v3735 = vld [vmem:[#allocation2 + $0x98] sm:$0xff]
        %v3736 = vld [vmem:[#allocation2 + $0xa0] sm:$0xff]
        %v3737 = vld [vmem:[#allocation2 + $0xa8] sm:$0xff]
        %v3738 = vld [vmem:[#allocation2 + $0xb0] sm:$0xff]
        %v3739 = vld [vmem:[#allocation2 + $0xb8] sm:$0xff]
        %v3740 = vld [vmem:[#allocation2 + $0xc0] sm:$0xff]
        %v3741 = vld [vmem:[#allocation2 + $0xc8] sm:$0xff]
        %v3742 = vld [vmem:[#allocation2 + $0xd0] sm:$0xff]
        %v3743 = vld [vmem:[#allocation2 + $0xd8] sm:$0xff]
        %v3744 = vld [vmem:[#allocation2 + $0xe0] sm:$0xff]
        %v3745 = vld [vmem:[#allocation2 + $0xe8] sm:$0xff]
        %v3746 = vld [vmem:[#allocation2 + $0xf0] sm:$0xff]
        %v3747 = vld [vmem:[#allocation2 + $0xf8] sm:$0xff]
        %v3748 = vld [vmem:[#allocation2 + $0x100] sm:$0xff]
        %v3749 = vld [vmem:[#allocation2 + $0x108] sm:$0xff]
        %v3750 = vld [vmem:[#allocation2 + $0x110] sm:$0xff]
        %v3751 = vld [vmem:[#allocation2 + $0x118] sm:$0xff]
        %v3752 = vld [vmem:[#allocation2 + $0x120] sm:$0xff]
        %v3753 = vld [vmem:[#allocation2 + $0x128] sm:$0xff]
        %v3754 = vld [vmem:[#allocation2 + $0x130] sm:$0xff]
        %v3755 = vld [vmem:[#allocation2 + $0x138] sm:$0xff]
        %s3756 = scalar_lea.vmem %s8, 448
        %v3757 = vld [vmem:[%s3756] sm:$0xf]
        %v3758 = vld [vmem:[%s3756 + $0x4] sm:$0xf]
        %v3759 = vld [vmem:[%s3756 + $0x8] sm:$0xf]
        %v3760 = vld [vmem:[%s3756 + $0xc] sm:$0xf]
        %v3761 = vld [vmem:[%s3756 + $0x10] sm:$0xf]
        %v3762 = vld [vmem:[%s3756 + $0x14] sm:$0xf]
        %v3763 = vld [vmem:[%s3756 + $0x18] sm:$0xf]
        %v3764 = vld [vmem:[%s3756 + $0x1c] sm:$0xf]
        %v3765 = vld [vmem:[%s3756 + $0x20] sm:$0xf]
        %v3766 = vld [vmem:[%s3756 + $0x24] sm:$0xf]
        %v3767 = vld [vmem:[%s3756 + $0x28] sm:$0xf]
        %v3768 = vld [vmem:[%s3756 + $0x2c] sm:$0xf]
        %v3769 = vld [vmem:[%s3756 + $0x30] sm:$0xf]
        %v3770 = vld [vmem:[%s3756 + $0x34] sm:$0xf]
        %v3771 = vld [vmem:[%s3756 + $0x38] sm:$0xf]
        %v3772 = vld [vmem:[%s3756 + $0x3c] sm:$0xf]
        %v3789 = vunpack.c.l.b16 %v3757
        %v3790 = vunpack.c.l.b16 %v3758
        %v3791 = vunpack.c.l.b16 %v3759
        %v3792 = vunpack.c.l.b16 %v3760
        %v3793 = vunpack.c.l.b16 %v3761
        %v3794 = vunpack.c.l.b16 %v3762
        %v3795 = vunpack.c.l.b16 %v3763
        %v3796 = vunpack.c.l.b16 %v3764
        %v3797 = vunpack.c.l.b16 %v3765
        %v3798 = vunpack.c.l.b16 %v3766
        %v3799 = vunpack.c.l.b16 %v3767
        %v3800 = vunpack.c.l.b16 %v3768
        %v3801 = vunpack.c.l.b16 %v3769
        %v3802 = vunpack.c.l.b16 %v3770
        %v3803 = vunpack.c.l.b16 %v3771
        %v3804 = vunpack.c.l.b16 %v3772
        %v3805 = vpack.c.b16 %v3790, %v3789
        %v3806 = vpack.c.b16 %v3792, %v3791
        %v3807 = vpack.c.b16 %v3794, %v3793
        %v3808 = vpack.c.b16 %v3796, %v3795
        %v3809 = vpack.c.b16 %v3798, %v3797
        %v3810 = vpack.c.b16 %v3800, %v3799
        %v3811 = vpack.c.b16 %v3802, %v3801
        %v3812 = vpack.c.b16 %v3804, %v3803
        %3821 = vmatprep.subr.bf16.mxu0 0
        %3822 = vmatpush1.bf16.msra.mxu0 %v3805
        %3823 = vmatprep.subr.bf16.mxu0 0
        %3824 = vmatpush1.bf16.msra.mxu0 %v3806
        %3825 = vmatprep.subr.bf16.mxu0 0
        %3826 = vmatpush1.bf16.msra.mxu0 %v3807
        %3827 = vmatprep.subr.bf16.mxu0 0
        %3828 = vmatpush1.bf16.msra.mxu0 %v3808
        %3829 = vmatprep.subr.bf16.mxu0 0
        %3830 = vmatpush1.bf16.msra.mxu0 %v3809
        %3831 = vmatprep.subr.bf16.mxu0 0
        %3832 = vmatpush1.bf16.msra.mxu0 %v3810
        %3833 = vmatprep.subr.bf16.mxu0 0
        %3834 = vmatpush1.bf16.msra.mxu0 %v3811
        %3835 = vmatprep.subr.bf16.mxu0 0
        %3836 = vmatpush1.bf16.msra.mxu0 %v3812
        %3837 = vmatprep.subr.bf16.mxu0 0
        %3838 = vmatpush1.bf16.msra.mxu0 0
        %3839 = vmatprep.subr.bf16.mxu0 0
        %3840 = vmatpush1.bf16.msra.mxu0 0
        %3841 = vmatprep.subr.bf16.mxu0 0
        %3842 = vmatpush1.bf16.msra.mxu0 0
        %3843 = vmatprep.subr.bf16.mxu0 0
        %3844 = vmatpush1.bf16.msra.mxu0 0
        %3845 = vmatprep.subr.bf16.mxu0 0
        %3846 = vmatpush1.bf16.msra.mxu0 0
        %3847 = vmatprep.subr.bf16.mxu0 0
        %3848 = vmatpush1.bf16.msra.mxu0 0
        %3849 = vmatprep.subr.bf16.mxu0 0
        %3850 = vmatpush1.bf16.msra.mxu0 0
        %3851 = vmatprep.subr.bf16.mxu0 0
        %3852 = vmatpush1.bf16.msra.mxu0 0
        %3853 = vmatprep.mubr.bf16.mxu0 0
        %3854 = vmatmul.mubr.bf16.gmra.mrb[0].mxu0 %v3722
        %v3855 = vpop.f32.mrb[0].mxu0
        %v3856 = vadd.f32 0.0, %v3855
        %v3857 = vpop.f32.mrb[0].mxu0
        %v3858 = vpop.f32.mrb[0].mxu0
        %v3859 = vadd.f32 0.0, %v3858
        %v3860 = vpop.f32.mrb[0].mxu0
        %3861 = vmatprep.mubr.bf16.mxu0 0
        %3862 = vmatmul.mubr.bf16.gmra.mrb[0].mxu0 %v3723
        %v3863 = vpop.f32.mrb[0].mxu0
        %v3864 = vadd.f32 0.0, %v3863
        %v3865 = vpop.f32.mrb[0].mxu0
        %v3866 = vpop.f32.mrb[0].mxu0
        %v3867 = vadd.f32 0.0, %v3866
        %v3868 = vpop.f32.mrb[0].mxu0
        %3869 = vmatprep.mubr.bf16.mxu0 0
        %3870 = vmatmul.mubr.bf16.gmra.mrb[0].mxu0 %v3724
        %v3871 = vpop.f32.mrb[0].mxu0
        %v3872 = vadd.f32 0.0, %v3871
        %v3873 = vpop.f32.mrb[0].mxu0
        %v3874 = vpop.f32.mrb[0].mxu0
        %v3875 = vadd.f32 0.0, %v3874
        %v3876 = vpop.f32.mrb[0].mxu0
        %3877 = vmatprep.mubr.bf16.mxu0 0
        %3878 = vmatmul.mubr.bf16.gmra.mrb[0].mxu0 %v3725
        %v3879 = vpop.f32.mrb[0].mxu0
        %v3880 = vadd.f32 0.0, %v3879
        %v3881 = vpop.f32.mrb[0].mxu0
        %v3882 = vpop.f32.mrb[0].mxu0
        %v3883 = vadd.f32 0.0, %v3882
        %v3884 = vpop.f32.mrb[0].mxu0
        %3885 = vmatprep.mubr.bf16.mxu0 0
        %3886 = vmatmul.mubr.bf16.gmra.mrb[0].mxu0 %v3726
        %v3887 = vpop.f32.mrb[0].mxu0
        %v3888 = vadd.f32 0.0, %v3887
        %v3889 = vpop.f32.mrb[0].mxu0
        %v3890 = vpop.f32.mrb[0].mxu0
        %v3891 = vadd.f32 0.0, %v3890
        %v3892 = vpop.f32.mrb[0].mxu0
        %3893 = vmatprep.mubr.bf16.mxu0 0
        %3894 = vmatmul.mubr.bf16.gmra.mrb[0].mxu0 %v3727
        %v3895 = vpop.f32.mrb[0].mxu0
        %v3896 = vadd.f32 0.0, %v3895
        %v3897 = vpop.f32.mrb[0].mxu0
        %v3898 = vpop.f32.mrb[0].mxu0
        %v3899 = vadd.f32 0.0, %v3898
        %v3900 = vpop.f32.mrb[0].mxu0
        %3901 = vmatprep.mubr.bf16.mxu0 0
        %3902 = vmatmul.mubr.bf16.gmra.mrb[0].mxu0 %v3728
        %v3903 = vpop.f32.mrb[0].mxu0
        %v3904 = vadd.f32 0.0, %v3903
        %v3905 = vpop.f32.mrb[0].mxu0
        %v3906 = vpop.f32.mrb[0].mxu0
        %v3907 = vadd.f32 0.0, %v3906
        %v3908 = vpop.f32.mrb[0].mxu0
        %3909 = vmatprep.mubr.bf16.mxu0 0
        %3910 = vmatmul.mubr.bf16.gmra.mrb[0].mxu0 %v3729
        %v3911 = vpop.f32.mrb[0].mxu0
        %v3912 = vadd.f32 0.0, %v3911
        %v3913 = vpop.f32.mrb[0].mxu0
        %v3914 = vpop.f32.mrb[0].mxu0
        %v3915 = vadd.f32 0.0, %v3914
        %v3916 = vpop.f32.mrb[0].mxu0
        %3917 = vmatprep.mubr.bf16.mxu0 0
        %3918 = vmatmul.mubr.bf16.gmra.mrb[0].mxu0 %v3730
        %v3919 = vpop.f32.mrb[0].mxu0
        %v3920 = vadd.f32 0.0, %v3919
        %v3921 = vpop.f32.mrb[0].mxu0
        %v3922 = vpop.f32.mrb[0].mxu0
        %v3923 = vadd.f32 0.0, %v3922
        %v3924 = vpop.f32.mrb[0].mxu0
        %3925 = vmatprep.mubr.bf16.mxu0 0
        %3926 = vmatmul.mubr.bf16.gmra.mrb[0].mxu0 %v3731
        %v3927 = vpop.f32.mrb[0].mxu0
        %v3928 = vadd.f32 0.0, %v3927
        %v3929 = vpop.f32.mrb[0].mxu0
        %v3930 = vpop.f32.mrb[0].mxu0
        %v3931 = vadd.f32 0.0, %v3930
        %v3932 = vpop.f32.mrb[0].mxu0
        %3933 = vmatprep.mubr.bf16.mxu0 0
        %3934 = vmatmul.mubr.bf16.gmra.mrb[0].mxu0 %v3732
        %v3935 = vpop.f32.mrb[0].mxu0
        %v3936 = vadd.f32 0.0, %v3935
        %v3937 = vpop.f32.mrb[0].mxu0
        %v3938 = vpop.f32.mrb[0].mxu0
        %v3939 = vadd.f32 0.0, %v3938
        %v3940 = vpop.f32.mrb[0].mxu0
        %3941 = vmatprep.mubr.bf16.mxu0 0
        %3942 = vmatmul.mubr.bf16.gmra.mrb[0].mxu0 %v3733
        %v3943 = vpop.f32.mrb[0].mxu0
        %v3944 = vadd.f32 0.0, %v3943
        %v3945 = vpop.f32.mrb[0].mxu0
        %v3946 = vpop.f32.mrb[0].mxu0
        %v3947 = vadd.f32 0.0, %v3946
        %v3948 = vpop.f32.mrb[0].mxu0
        %3949 = vmatprep.mubr.bf16.mxu0 0
        %3950 = vmatmul.mubr.bf16.gmra.mrb[0].mxu0 %v3734
        %v3951 = vpop.f32.mrb[0].mxu0
        %v3952 = vadd.f32 0.0, %v3951
        %v3953 = vpop.f32.mrb[0].mxu0
        %v3954 = vpop.f32.mrb[0].mxu0
        %v3955 = vadd.f32 0.0, %v3954
        %v3956 = vpop.f32.mrb[0].mxu0
        %3957 = vmatprep.mubr.bf16.mxu0 0
        %3958 = vmatmul.mubr.bf16.gmra.mrb[0].mxu0 %v3735
        %v3959 = vpop.f32.mrb[0].mxu0
        %v3960 = vadd.f32 0.0, %v3959
        %v3961 = vpop.f32.mrb[0].mxu0
        %v3962 = vpop.f32.mrb[0].mxu0
        %v3963 = vadd.f32 0.0, %v3962
        %v3964 = vpop.f32.mrb[0].mxu0
        %3965 = vmatprep.mubr.bf16.mxu0 0
        %3966 = vmatmul.mubr.bf16.gmra.mrb[0].mxu0 %v3736
        %v3967 = vpop.f32.mrb[0].mxu0
        %v3968 = vadd.f32 0.0, %v3967
        %v3969 = vpop.f32.mrb[0].mxu0
        %v3970 = vpop.f32.mrb[0].mxu0
        %v3971 = vadd.f32 0.0, %v3970
        %v3972 = vpop.f32.mrb[0].mxu0
        %3973 = vmatprep.mubr.bf16.mxu0 0
        %3974 = vmatmul.mubr.bf16.gmra.mrb[0].mxu0 %v3737
        %v3975 = vpop.f32.mrb[0].mxu0
        %v3976 = vadd.f32 0.0, %v3975
        %v3977 = vpop.f32.mrb[0].mxu0
        %v3978 = vpop.f32.mrb[0].mxu0
        %v3979 = vadd.f32 0.0, %v3978
        %v3980 = vpop.f32.mrb[0].mxu0
        %3981 = vmatprep.mubr.bf16.mxu0 0
        %3982 = vmatmul.mubr.bf16.gmra.mrb[0].mxu0 %v3738
        %v3983 = vpop.f32.mrb[0].mxu0
        %v3984 = vadd.f32 0.0, %v3983
        %v3985 = vpop.f32.mrb[0].mxu0
        %v3986 = vpop.f32.mrb[0].mxu0
        %v3987 = vadd.f32 0.0, %v3986
        %v3988 = vpop.f32.mrb[0].mxu0
        %3989 = vmatprep.mubr.bf16.mxu0 0
        %3990 = vmatmul.mubr.bf16.gmra.mrb[0].mxu0 %v3739
        %v3991 = vpop.f32.mrb[0].mxu0
        %v3992 = vadd.f32 0.0, %v3991
        %v3993 = vpop.f32.mrb[0].mxu0
        %v3994 = vpop.f32.mrb[0].mxu0
        %v3995 = vadd.f32 0.0, %v3994
        %v3996 = vpop.f32.mrb[0].mxu0
        %3997 = vmatprep.mubr.bf16.mxu0 0
        %3998 = vmatmul.mubr.bf16.gmra.mrb[0].mxu0 %v3740
        %v3999 = vpop.f32.mrb[0].mxu0
        %v4000 = vadd.f32 0.0, %v3999
        %v4001 = vpop.f32.mrb[0].mxu0
        %v4002 = vpop.f32.mrb[0].mxu0
        %v4003 = vadd.f32 0.0, %v4002
        %v4004 = vpop.f32.mrb[0].mxu0
        %4005 = vmatprep.mubr.bf16.mxu0 0
        %4006 = vmatmul.mubr.bf16.gmra.mrb[0].mxu0 %v3741
        %v4007 = vpop.f32.mrb[0].mxu0
        %v4008 = vadd.f32 0.0, %v4007
        %v4009 = vpop.f32.mrb[0].mxu0
        %v4010 = vpop.f32.mrb[0].mxu0
        %v4011 = vadd.f32 0.0, %v4010
        %v4012 = vpop.f32.mrb[0].mxu0
        %4013 = vmatprep.mubr.bf16.mxu0 0
        %4014 = vmatmul.mubr.bf16.gmra.mrb[0].mxu0 %v3742
        %v4015 = vpop.f32.mrb[0].mxu0
        %v4016 = vadd.f32 0.0, %v4015
        %v4017 = vpop.f32.mrb[0].mxu0
        %v4018 = vpop.f32.mrb[0].mxu0
        %v4019 = vadd.f32 0.0, %v4018
        %v4020 = vpop.f32.mrb[0].mxu0
        %4021 = vmatprep.mubr.bf16.mxu0 0
        %4022 = vmatmul.mubr.bf16.gmra.mrb[0].mxu0 %v3743
        %v4023 = vpop.f32.mrb[0].mxu0
        %v4024 = vadd.f32 0.0, %v4023
        %v4025 = vpop.f32.mrb[0].mxu0
        %v4026 = vpop.f32.mrb[0].mxu0
        %v4027 = vadd.f32 0.0, %v4026
        %v4028 = vpop.f32.mrb[0].mxu0
        %4029 = vmatprep.mubr.bf16.mxu0 0
        %4030 = vmatmul.mubr.bf16.gmra.mrb[0].mxu0 %v3744
        %v4031 = vpop.f32.mrb[0].mxu0
        %v4032 = vadd.f32 0.0, %v4031
        %v4033 = vpop.f32.mrb[0].mxu0
        %v4034 = vpop.f32.mrb[0].mxu0
        %v4035 = vadd.f32 0.0, %v4034
        %v4036 = vpop.f32.mrb[0].mxu0
        %4037 = vmatprep.mubr.bf16.mxu0 0
        %4038 = vmatmul.mubr.bf16.gmra.mrb[0].mxu0 %v3745
        %v4039 = vpop.f32.mrb[0].mxu0
        %v4040 = vadd.f32 0.0, %v4039
        %v4041 = vpop.f32.mrb[0].mxu0
        %v4042 = vpop.f32.mrb[0].mxu0
        %v4043 = vadd.f32 0.0, %v4042
        %v4044 = vpop.f32.mrb[0].mxu0
        %4045 = vmatprep.mubr.bf16.mxu0 0
        %4046 = vmatmul.mubr.bf16.gmra.mrb[0].mxu0 %v3746
        %v4047 = vpop.f32.mrb[0].mxu0
        %v4048 = vadd.f32 0.0, %v4047
        %v4049 = vpop.f32.mrb[0].mxu0
        %v4050 = vpop.f32.mrb[0].mxu0
        %v4051 = vadd.f32 0.0, %v4050
        %v4052 = vpop.f32.mrb[0].mxu0
        %4053 = vmatprep.mubr.bf16.mxu0 0
        %4054 = vmatmul.mubr.bf16.gmra.mrb[0].mxu0 %v3747
        %v4055 = vpop.f32.mrb[0].mxu0
        %v4056 = vadd.f32 0.0, %v4055
        %v4057 = vpop.f32.mrb[0].mxu0
        %v4058 = vpop.f32.mrb[0].mxu0
        %v4059 = vadd.f32 0.0, %v4058
        %v4060 = vpop.f32.mrb[0].mxu0
        %4061 = vmatprep.mubr.bf16.mxu0 0
        %4062 = vmatmul.mubr.bf16.gmra.mrb[0].mxu0 %v3748
        %v4063 = vpop.f32.mrb[0].mxu0
        %v4064 = vadd.f32 0.0, %v4063
        %v4065 = vpop.f32.mrb[0].mxu0
        %v4066 = vpop.f32.mrb[0].mxu0
        %v4067 = vadd.f32 0.0, %v4066
        %v4068 = vpop.f32.mrb[0].mxu0
        %4069 = vmatprep.mubr.bf16.mxu0 0
        %4070 = vmatmul.mubr.bf16.gmra.mrb[0].mxu0 %v3749
        %v4071 = vpop.f32.mrb[0].mxu0
        %v4072 = vadd.f32 0.0, %v4071
        %v4073 = vpop.f32.mrb[0].mxu0
        %v4074 = vpop.f32.mrb[0].mxu0
        %v4075 = vadd.f32 0.0, %v4074
        %v4076 = vpop.f32.mrb[0].mxu0
        %4077 = vmatprep.mubr.bf16.mxu0 0
        %4078 = vmatmul.mubr.bf16.gmra.mrb[0].mxu0 %v3750
        %v4079 = vpop.f32.mrb[0].mxu0
        %v4080 = vadd.f32 0.0, %v4079
        %v4081 = vpop.f32.mrb[0].mxu0
        %v4082 = vpop.f32.mrb[0].mxu0
        %v4083 = vadd.f32 0.0, %v4082
        %v4084 = vpop.f32.mrb[0].mxu0
        %4085 = vmatprep.mubr.bf16.mxu0 0
        %4086 = vmatmul.mubr.bf16.gmra.mrb[0].mxu0 %v3751
        %v4087 = vpop.f32.mrb[0].mxu0
        %v4088 = vadd.f32 0.0, %v4087
        %v4089 = vpop.f32.mrb[0].mxu0
        %v4090 = vpop.f32.mrb[0].mxu0
        %v4091 = vadd.f32 0.0, %v4090
        %v4092 = vpop.f32.mrb[0].mxu0
        %4093 = vmatprep.mubr.bf16.mxu0 0
        %4094 = vmatmul.mubr.bf16.gmra.mrb[0].mxu0 %v3752
        %v4095 = vpop.f32.mrb[0].mxu0
        %v4096 = vadd.f32 0.0, %v4095
        %v4097 = vpop.f32.mrb[0].mxu0
        %v4098 = vpop.f32.mrb[0].mxu0
        %v4099 = vadd.f32 0.0, %v4098
        %v4100 = vpop.f32.mrb[0].mxu0
        %4101 = vmatprep.mubr.bf16.mxu0 0
        %4102 = vmatmul.mubr.bf16.gmra.mrb[0].mxu0 %v3753
        %v4103 = vpop.f32.mrb[0].mxu0
        %v4104 = vadd.f32 0.0, %v4103
        %v4105 = vpop.f32.mrb[0].mxu0
        %v4106 = vpop.f32.mrb[0].mxu0
        %v4107 = vadd.f32 0.0, %v4106
        %v4108 = vpop.f32.mrb[0].mxu0
        %4109 = vmatprep.mubr.bf16.mxu0 0
        %4110 = vmatmul.mubr.bf16.gmra.mrb[0].mxu0 %v3754
        %v4111 = vpop.f32.mrb[0].mxu0
        %v4112 = vadd.f32 0.0, %v4111
        %v4113 = vpop.f32.mrb[0].mxu0
        %v4114 = vpop.f32.mrb[0].mxu0
        %v4115 = vadd.f32 0.0, %v4114
        %v4116 = vpop.f32.mrb[0].mxu0
        %4117 = vmatprep.mubr.bf16.mxu0 0
        %4118 = vmatmul.mubr.bf16.gmra.mrb[0].mxu0 %v3755
        %v4119 = vpop.f32.mrb[0].mxu0
        %v4120 = vadd.f32 0.0, %v4119
        %v4121 = vpop.f32.mrb[0].mxu0
        %v4122 = vpop.f32.mrb[0].mxu0
        %v4123 = vadd.f32 0.0, %v4122
        %v4124 = vpop.f32.mrb[0].mxu0
        %4125 = vdwg.mxu0
        %v4126 = vld [vmem:[#allocation4] sm:$0xff]
        %v4127 = vld [vmem:[#allocation4 + $0x8] sm:$0xff]
        %v4128 = vld [vmem:[#allocation4 + $0x10] sm:$0xff]
        %v4129 = vld [vmem:[#allocation4 + $0x18] sm:$0xff]
        %v4130 = vld [vmem:[#allocation4 + $0x20] sm:$0xff]
        %v4131 = vld [vmem:[#allocation4 + $0x28] sm:$0xff]
        %v4132 = vld [vmem:[#allocation4 + $0x30] sm:$0xff]
        %v4133 = vld [vmem:[#allocation4 + $0x38] sm:$0xff]
        %v4134 = vld [vmem:[#allocation4 + $0x40] sm:$0xff]
        %v4135 = vld [vmem:[#allocation4 + $0x48] sm:$0xff]
        %v4136 = vld [vmem:[#allocation4 + $0x50] sm:$0xff]
        %v4137 = vld [vmem:[#allocation4 + $0x58] sm:$0xff]
        %v4138 = vld [vmem:[#allocation4 + $0x60] sm:$0xff]
        %v4139 = vld [vmem:[#allocation4 + $0x68] sm:$0xff]
        %v4140 = vld [vmem:[#allocation4 + $0x70] sm:$0xff]
        %v4141 = vld [vmem:[#allocation4 + $0x78] sm:$0xff]
        %v4142 = vld [vmem:[#allocation4 + $0x80] sm:$0xff]
        %v4143 = vld [vmem:[#allocation4 + $0x88] sm:$0xff]
        %v4144 = vld [vmem:[#allocation4 + $0x90] sm:$0xff]
        %v4145 = vld [vmem:[#allocation4 + $0x98] sm:$0xff]
        %v4146 = vld [vmem:[#allocation4 + $0xa0] sm:$0xff]
        %v4147 = vld [vmem:[#allocation4 + $0xa8] sm:$0xff]
        %v4148 = vld [vmem:[#allocation4 + $0xb0] sm:$0xff]
        %v4149 = vld [vmem:[#allocation4 + $0xb8] sm:$0xff]
        %v4150 = vld [vmem:[#allocation4 + $0xc0] sm:$0xff]
        %v4151 = vld [vmem:[#allocation4 + $0xc8] sm:$0xff]
        %v4152 = vld [vmem:[#allocation4 + $0xd0] sm:$0xff]
        %v4153 = vld [vmem:[#allocation4 + $0xd8] sm:$0xff]
        %v4154 = vld [vmem:[#allocation4 + $0xe0] sm:$0xff]
        %v4155 = vld [vmem:[#allocation4 + $0xe8] sm:$0xff]
        %v4156 = vld [vmem:[#allocation4 + $0xf0] sm:$0xff]
        %v4157 = vld [vmem:[#allocation4 + $0xf8] sm:$0xff]
        %v4158 = vld [vmem:[#allocation4 + $0x100] sm:$0xff]
        %v4159 = vld [vmem:[#allocation4 + $0x108] sm:$0xff]
        %v4160 = vld [vmem:[#allocation4 + $0x110] sm:$0xff]
        %v4161 = vld [vmem:[#allocation4 + $0x118] sm:$0xff]
        %v4162 = vld [vmem:[#allocation4 + $0x120] sm:$0xff]
        %v4163 = vld [vmem:[#allocation4 + $0x128] sm:$0xff]
        %v4164 = vld [vmem:[#allocation4 + $0x130] sm:$0xff]
        %v4165 = vld [vmem:[#allocation4 + $0x138] sm:$0xff]
        %v4166 = vld [vmem:[#allocation4 + $0x140] sm:$0xff]
        %v4167 = vld [vmem:[#allocation4 + $0x148] sm:$0xff]
        %v4168 = vld [vmem:[#allocation4 + $0x150] sm:$0xff]
        %v4169 = vld [vmem:[#allocation4 + $0x158] sm:$0xff]
        %v4170 = vld [vmem:[#allocation4 + $0x160] sm:$0xff]
        %v4171 = vld [vmem:[#allocation4 + $0x168] sm:$0xff]
        %v4172 = vld [vmem:[#allocation4 + $0x170] sm:$0xff]
        %v4173 = vld [vmem:[#allocation4 + $0x178] sm:$0xff]
        %v4174 = vld [vmem:[#allocation4 + $0x180] sm:$0xff]
        %v4175 = vld [vmem:[#allocation4 + $0x188] sm:$0xff]
        %v4176 = vld [vmem:[#allocation4 + $0x190] sm:$0xff]
        %v4177 = vld [vmem:[#allocation4 + $0x198] sm:$0xff]
        %v4178 = vld [vmem:[#allocation4 + $0x1a0] sm:$0xff]
        %v4179 = vld [vmem:[#allocation4 + $0x1a8] sm:$0xff]
        %v4180 = vld [vmem:[#allocation4 + $0x1b0] sm:$0xff]
        %v4181 = vld [vmem:[#allocation4 + $0x1b8] sm:$0xff]
        %v4182 = vld [vmem:[#allocation4 + $0x1c0] sm:$0xff]
        %v4183 = vld [vmem:[#allocation4 + $0x1c8] sm:$0xff]
        %v4184 = vld [vmem:[#allocation4 + $0x1d0] sm:$0xff]
        %v4185 = vld [vmem:[#allocation4 + $0x1d8] sm:$0xff]
        %v4186 = vld [vmem:[#allocation4 + $0x1e0] sm:$0xff]
        %v4187 = vld [vmem:[#allocation4 + $0x1e8] sm:$0xff]
        %v4188 = vld [vmem:[#allocation4 + $0x1f0] sm:$0xff]
        %v4189 = vld [vmem:[#allocation4 + $0x1f8] sm:$0xff]
        %v4190 = vld [vmem:[#allocation4 + $0x200] sm:$0xff]
        %v4191 = vld [vmem:[#allocation4 + $0x208] sm:$0xff]
        %v4192 = vld [vmem:[#allocation4 + $0x210] sm:$0xff]
        %v4193 = vld [vmem:[#allocation4 + $0x218] sm:$0xff]
        %v4194 = vadd.f32 %v4126, %v3856
        %v4195 = vadd.f32 %v4127, %v3859
        %v4196 = vadd.f32 %v4128, %v3864
        %v4197 = vadd.f32 %v4129, %v3867
        %v4198 = vadd.f32 %v4130, %v3872
        %v4199 = vadd.f32 %v4131, %v3875
        %v4200 = vadd.f32 %v4132, %v3880
        %v4201 = vadd.f32 %v4133, %v3883
        %v4202 = vadd.f32 %v4134, %v3888
        %v4203 = vadd.f32 %v4135, %v3891
        %v4204 = vadd.f32 %v4136, %v3896
        %v4205 = vadd.f32 %v4137, %v3899
        %v4206 = vadd.f32 %v4138, %v3904
        %v4207 = vadd.f32 %v4139, %v3907
        %v4208 = vadd.f32 %v4140, %v3912
        %v4209 = vadd.f32 %v4141, %v3915
        %v4210 = vadd.f32 %v4142, %v3920
        %v4211 = vadd.f32 %v4143, %v3923
        %v4212 = vadd.f32 %v4144, %v3928
        %v4213 = vadd.f32 %v4145, %v3931
        %v4214 = vadd.f32 %v4146, %v3936
        %v4215 = vadd.f32 %v4147, %v3939
        %v4216 = vadd.f32 %v4148, %v3944
        %v4217 = vadd.f32 %v4149, %v3947
        %v4218 = vadd.f32 %v4150, %v3952
        %v4219 = vadd.f32 %v4151, %v3955
        %v4220 = vadd.f32 %v4152, %v3960
        %v4221 = vadd.f32 %v4153, %v3963
        %v4222 = vadd.f32 %v4154, %v3968
        %v4223 = vadd.f32 %v4155, %v3971
        %v4224 = vadd.f32 %v4156, %v3976
        %v4225 = vadd.f32 %v4157, %v3979
        %v4226 = vadd.f32 %v4158, %v3984
        %v4227 = vadd.f32 %v4159, %v3987
        %v4228 = vadd.f32 %v4160, %v3992
        %v4229 = vadd.f32 %v4161, %v3995
        %v4230 = vadd.f32 %v4162, %v4000
        %v4231 = vadd.f32 %v4163, %v4003
        %v4232 = vadd.f32 %v4164, %v4008
        %v4233 = vadd.f32 %v4165, %v4011
        %v4234 = vadd.f32 %v4166, %v4016
        %v4235 = vadd.f32 %v4167, %v4019
        %v4236 = vadd.f32 %v4168, %v4024
        %v4237 = vadd.f32 %v4169, %v4027
        %v4238 = vadd.f32 %v4170, %v4032
        %v4239 = vadd.f32 %v4171, %v4035
        %v4240 = vadd.f32 %v4172, %v4040
        %v4241 = vadd.f32 %v4173, %v4043
        %v4242 = vadd.f32 %v4174, %v4048
        %v4243 = vadd.f32 %v4175, %v4051
        %v4244 = vadd.f32 %v4176, %v4056
        %v4245 = vadd.f32 %v4177, %v4059
        %v4246 = vadd.f32 %v4178, %v4064
        %v4247 = vadd.f32 %v4179, %v4067
        %v4248 = vadd.f32 %v4180, %v4072
        %v4249 = vadd.f32 %v4181, %v4075
        %v4250 = vadd.f32 %v4182, %v4080
        %v4251 = vadd.f32 %v4183, %v4083
        %v4252 = vadd.f32 %v4184, %v4088
        %v4253 = vadd.f32 %v4185, %v4091
        %v4254 = vadd.f32 %v4186, %v4096
        %v4255 = vadd.f32 %v4187, %v4099
        %v4256 = vadd.f32 %v4188, %v4104
        %v4257 = vadd.f32 %v4189, %v4107
        %v4258 = vadd.f32 %v4190, %v4112
        %v4259 = vadd.f32 %v4191, %v4115
        %v4260 = vadd.f32 %v4192, %v4120
        %v4261 = vadd.f32 %v4193, %v4123
        %4262 = vst [vmem:[#allocation4] sm:$0xff] %v4194
        %4263 = vst [vmem:[#allocation4 + $0x8] sm:$0xff] %v4195
        %4264 = vst [vmem:[#allocation4 + $0x10] sm:$0xff] %v4196
        %4265 = vst [vmem:[#allocation4 + $0x18] sm:$0xff] %v4197
        %4266 = vst [vmem:[#allocation4 + $0x20] sm:$0xff] %v4198
        %4267 = vst [vmem:[#allocation4 + $0x28] sm:$0xff] %v4199
        %4268 = vst [vmem:[#allocation4 + $0x30] sm:$0xff] %v4200
        %4269 = vst [vmem:[#allocation4 + $0x38] sm:$0xff] %v4201
        %4270 = vst [vmem:[#allocation4 + $0x40] sm:$0xff] %v4202
        %4271 = vst [vmem:[#allocation4 + $0x48] sm:$0xff] %v4203
        %4272 = vst [vmem:[#allocation4 + $0x50] sm:$0xff] %v4204
        %4273 = vst [vmem:[#allocation4 + $0x58] sm:$0xff] %v4205
        %4274 = vst [vmem:[#allocation4 + $0x60] sm:$0xff] %v4206
        %4275 = vst [vmem:[#allocation4 + $0x68] sm:$0xff] %v4207
        %4276 = vst [vmem:[#allocation4 + $0x70] sm:$0xff] %v4208
        %4277 = vst [vmem:[#allocation4 + $0x78] sm:$0xff] %v4209
        %4278 = vst [vmem:[#allocation4 + $0x80] sm:$0xff] %v4210
        %4279 = vst [vmem:[#allocation4 + $0x88] sm:$0xff] %v4211
        %4280 = vst [vmem:[#allocation4 + $0x90] sm:$0xff] %v4212
        %4281 = vst [vmem:[#allocation4 + $0x98] sm:$0xff] %v4213
        %4282 = vst [vmem:[#allocation4 + $0xa0] sm:$0xff] %v4214
        %4283 = vst [vmem:[#allocation4 + $0xa8] sm:$0xff] %v4215
        %4284 = vst [vmem:[#allocation4 + $0xb0] sm:$0xff] %v4216
        %4285 = vst [vmem:[#allocation4 + $0xb8] sm:$0xff] %v4217
        %4286 = vst [vmem:[#allocation4 + $0xc0] sm:$0xff] %v4218
        %4287 = vst [vmem:[#allocation4 + $0xc8] sm:$0xff] %v4219
        %4288 = vst [vmem:[#allocation4 + $0xd0] sm:$0xff] %v4220
        %4289 = vst [vmem:[#allocation4 + $0xd8] sm:$0xff] %v4221
        %4290 = vst [vmem:[#allocation4 + $0xe0] sm:$0xff] %v4222
        %4291 = vst [vmem:[#allocation4 + $0xe8] sm:$0xff] %v4223
        %4292 = vst [vmem:[#allocation4 + $0xf0] sm:$0xff] %v4224
        %4293 = vst [vmem:[#allocation4 + $0xf8] sm:$0xff] %v4225
        %4294 = vst [vmem:[#allocation4 + $0x100] sm:$0xff] %v4226
        %4295 = vst [vmem:[#allocation4 + $0x108] sm:$0xff] %v4227
        %4296 = vst [vmem:[#allocation4 + $0x110] sm:$0xff] %v4228
        %4297 = vst [vmem:[#allocation4 + $0x118] sm:$0xff] %v4229
        %4298 = vst [vmem:[#allocation4 + $0x120] sm:$0xff] %v4230
        %4299 = vst [vmem:[#allocation4 + $0x128] sm:$0xff] %v4231
        %4300 = vst [vmem:[#allocation4 + $0x130] sm:$0xff] %v4232
        %4301 = vst [vmem:[#allocation4 + $0x138] sm:$0xff] %v4233
        %4302 = vst [vmem:[#allocation4 + $0x140] sm:$0xff] %v4234
        %4303 = vst [vmem:[#allocation4 + $0x148] sm:$0xff] %v4235
        %4304 = vst [vmem:[#allocation4 + $0x150] sm:$0xff] %v4236
        %4305 = vst [vmem:[#allocation4 + $0x158] sm:$0xff] %v4237
        %4306 = vst [vmem:[#allocation4 + $0x160] sm:$0xff] %v4238
        %4307 = vst [vmem:[#allocation4 + $0x168] sm:$0xff] %v4239
        %4308 = vst [vmem:[#allocation4 + $0x170] sm:$0xff] %v4240
        %4309 = vst [vmem:[#allocation4 + $0x178] sm:$0xff] %v4241
        %4310 = vst [vmem:[#allocation4 + $0x180] sm:$0xff] %v4242
        %4311 = vst [vmem:[#allocation4 + $0x188] sm:$0xff] %v4243
        %4312 = vst [vmem:[#allocation4 + $0x190] sm:$0xff] %v4244
        %4313 = vst [vmem:[#allocation4 + $0x198] sm:$0xff] %v4245
        %4314 = vst [vmem:[#allocation4 + $0x1a0] sm:$0xff] %v4246
        %4315 = vst [vmem:[#allocation4 + $0x1a8] sm:$0xff] %v4247
        %4316 = vst [vmem:[#allocation4 + $0x1b0] sm:$0xff] %v4248
        %4317 = vst [vmem:[#allocation4 + $0x1b8] sm:$0xff] %v4249
        %4318 = vst [vmem:[#allocation4 + $0x1c0] sm:$0xff] %v4250
        %4319 = vst [vmem:[#allocation4 + $0x1c8] sm:$0xff] %v4251
        %4320 = vst [vmem:[#allocation4 + $0x1d0] sm:$0xff] %v4252
        %4321 = vst [vmem:[#allocation4 + $0x1d8] sm:$0xff] %v4253
        %4322 = vst [vmem:[#allocation4 + $0x1e0] sm:$0xff] %v4254
        %4323 = vst [vmem:[#allocation4 + $0x1e8] sm:$0xff] %v4255
        %4324 = vst [vmem:[#allocation4 + $0x1f0] sm:$0xff] %v4256
        %4325 = vst [vmem:[#allocation4 + $0x1f8] sm:$0xff] %v4257
        %4326 = vst [vmem:[#allocation4 + $0x200] sm:$0xff] %v4258
        %4327 = vst [vmem:[#allocation4 + $0x208] sm:$0xff] %v4259
        %4328 = vst [vmem:[#allocation4 + $0x210] sm:$0xff] %v4260
        %4329 = vst [vmem:[#allocation4 + $0x218] sm:$0xff] %v4261
        %v4330 = vld [vmem:[#allocation2] sm:$0xff]
        %v4331 = vld [vmem:[#allocation2 + $0x8] sm:$0xff]
        %v4332 = vld [vmem:[#allocation2 + $0x10] sm:$0xff]
        %v4333 = vld [vmem:[#allocation2 + $0x18] sm:$0xff]
        %v4334 = vld [vmem:[#allocation2 + $0x20] sm:$0xff]
        %v4335 = vld [vmem:[#allocation2 + $0x28] sm:$0xff]
        %v4336 = vld [vmem:[#allocation2 + $0x30] sm:$0xff]
        %v4337 = vld [vmem:[#allocation2 + $0x38] sm:$0xff]
        %v4338 = vld [vmem:[#allocation2 + $0x40] sm:$0xff]
        %v4339 = vld [vmem:[#allocation2 + $0x48] sm:$0xff]
        %v4340 = vld [vmem:[#allocation2 + $0x50] sm:$0xff]
        %v4341 = vld [vmem:[#allocation2 + $0x58] sm:$0xff]
        %v4342 = vld [vmem:[#allocation2 + $0x60] sm:$0xff]
        %v4343 = vld [vmem:[#allocation2 + $0x68] sm:$0xff]
        %v4344 = vld [vmem:[#allocation2 + $0x70] sm:$0xff]
        %v4345 = vld [vmem:[#allocation2 + $0x78] sm:$0xff]
        %v4346 = vld [vmem:[#allocation2 + $0x80] sm:$0xff]
        %v4347 = vld [vmem:[#allocation2 + $0x88] sm:$0xff]
        %v4348 = vld [vmem:[#allocation2 + $0x90] sm:$0xff]
        %v4349 = vld [vmem:[#allocation2 + $0x98] sm:$0xff]
        %v4350 = vld [vmem:[#allocation2 + $0xa0] sm:$0xff]
        %v4351 = vld [vmem:[#allocation2 + $0xa8] sm:$0xff]
        %v4352 = vld [vmem:[#allocation2 + $0xb0] sm:$0xff]
        %v4353 = vld [vmem:[#allocation2 + $0xb8] sm:$0xff]
        %v4354 = vld [vmem:[#allocation2 + $0xc0] sm:$0xff]
        %v4355 = vld [vmem:[#allocation2 + $0xc8] sm:$0xff]
        %v4356 = vld [vmem:[#allocation2 + $0xd0] sm:$0xff]
        %v4357 = vld [vmem:[#allocation2 + $0xd8] sm:$0xff]
        %v4358 = vld [vmem:[#allocation2 + $0xe0] sm:$0xff]
        %v4359 = vld [vmem:[#allocation2 + $0xe8] sm:$0xff]
        %v4360 = vld [vmem:[#allocation2 + $0xf0] sm:$0xff]
        %v4361 = vld [vmem:[#allocation2 + $0xf8] sm:$0xff]
        %v4362 = vld [vmem:[#allocation2 + $0x100] sm:$0xff]
        %v4363 = vld [vmem:[#allocation2 + $0x108] sm:$0xff]
        %s4364 = scalar_lea.vmem %s8, 128
        %v4365 = vld [vmem:[%s4364] sm:$0xf]
        %v4366 = vld [vmem:[%s4364 + $0x4] sm:$0xf]
        %v4367 = vld [vmem:[%s4364 + $0x8] sm:$0xf]
        %v4368 = vld [vmem:[%s4364 + $0xc] sm:$0xf]
        %v4369 = vld [vmem:[%s4364 + $0x10] sm:$0xf]
        %v4370 = vld [vmem:[%s4364 + $0x14] sm:$0xf]
        %v4371 = vld [vmem:[%s4364 + $0x18] sm:$0xf]
        %v4372 = vld [vmem:[%s4364 + $0x1c] sm:$0xf]
        %v4373 = vld [vmem:[%s4364 + $0x20] sm:$0xf]
        %v4374 = vld [vmem:[%s4364 + $0x24] sm:$0xf]
        %v4375 = vld [vmem:[%s4364 + $0x28] sm:$0xf]
        %v4376 = vld [vmem:[%s4364 + $0x2c] sm:$0xf]
        %v4377 = vld [vmem:[%s4364 + $0x30] sm:$0xf]
        %v4378 = vld [vmem:[%s4364 + $0x34] sm:$0xf]
        %v4379 = vld [vmem:[%s4364 + $0x38] sm:$0xf]
        %v4380 = vld [vmem:[%s4364 + $0x3c] sm:$0xf]
        %v4397 = vunpack.c.l.b16 %v4365
        %v4398 = vunpack.c.l.b16 %v4366
        %v4399 = vunpack.c.l.b16 %v4367
        %v4400 = vunpack.c.l.b16 %v4368
        %v4401 = vunpack.c.l.b16 %v4369
        %v4402 = vunpack.c.l.b16 %v4370
        %v4403 = vunpack.c.l.b16 %v4371
        %v4404 = vunpack.c.l.b16 %v4372
        %v4405 = vunpack.c.l.b16 %v4373
        %v4406 = vunpack.c.l.b16 %v4374
        %v4407 = vunpack.c.l.b16 %v4375
        %v4408 = vunpack.c.l.b16 %v4376
        %v4409 = vunpack.c.l.b16 %v4377
        %v4410 = vunpack.c.l.b16 %v4378
        %v4411 = vunpack.c.l.b16 %v4379
        %v4412 = vunpack.c.l.b16 %v4380
        %v4413 = vpack.c.b16 %v4398, %v4397
        %v4414 = vpack.c.b16 %v4400, %v4399
        %v4415 = vpack.c.b16 %v4402, %v4401
        %v4416 = vpack.c.b16 %v4404, %v4403
        %v4417 = vpack.c.b16 %v4406, %v4405
        %v4418 = vpack.c.b16 %v4408, %v4407
        %v4419 = vpack.c.b16 %v4410, %v4409
        %v4420 = vpack.c.b16 %v4412, %v4411
        %4429 = vmatprep.subr.bf16.mxu0 0
        %4430 = vmatpush1.bf16.msra.mxu0 %v4413
        %4431 = vmatprep.subr.bf16.mxu0 0
        %4432 = vmatpush1.bf16.msra.mxu0 %v4414
        %4433 = vmatprep.subr.bf16.mxu0 0
        %4434 = vmatpush1.bf16.msra.mxu0 %v4415
        %4435 = vmatprep.subr.bf16.mxu0 0
        %4436 = vmatpush1.bf16.msra.mxu0 %v4416
        %4437 = vmatprep.subr.bf16.mxu0 0
        %4438 = vmatpush1.bf16.msra.mxu0 %v4417
        %4439 = vmatprep.subr.bf16.mxu0 0
        %4440 = vmatpush1.bf16.msra.mxu0 %v4418
        %4441 = vmatprep.subr.bf16.mxu0 0
        %4442 = vmatpush1.bf16.msra.mxu0 %v4419
        %4443 = vmatprep.subr.bf16.mxu0 0
        %4444 = vmatpush1.bf16.msra.mxu0 %v4420
        %4445 = vmatprep.subr.bf16.mxu0 0
        %4446 = vmatpush1.bf16.msra.mxu0 0
        %4447 = vmatprep.subr.bf16.mxu0 0
        %4448 = vmatpush1.bf16.msra.mxu0 0
        %4449 = vmatprep.subr.bf16.mxu0 0
        %4450 = vmatpush1.bf16.msra.mxu0 0
        %4451 = vmatprep.subr.bf16.mxu0 0
        %4452 = vmatpush1.bf16.msra.mxu0 0
        %4453 = vmatprep.subr.bf16.mxu0 0
        %4454 = vmatpush1.bf16.msra.mxu0 0
        %4455 = vmatprep.subr.bf16.mxu0 0
        %4456 = vmatpush1.bf16.msra.mxu0 0
        %4457 = vmatprep.subr.bf16.mxu0 0
        %4458 = vmatpush1.bf16.msra.mxu0 0
        %4459 = vmatprep.subr.bf16.mxu0 0
        %4460 = vmatpush1.bf16.msra.mxu0 0
        %4461 = vmatprep.mubr.bf16.mxu0 0
        %4462 = vmatmul.mubr.bf16.gmra.mrb[0].mxu0 %v4330
        %v4463 = vpop.f32.mrb[0].mxu0
        %v4464 = vadd.f32 0.0, %v4463
        %v4465 = vpop.f32.mrb[0].mxu0
        %v4466 = vpop.f32.mrb[0].mxu0
        %v4467 = vadd.f32 0.0, %v4466
        %v4468 = vpop.f32.mrb[0].mxu0
        %4469 = vmatprep.mubr.bf16.mxu0 0
        %4470 = vmatmul.mubr.bf16.gmra.mrb[0].mxu0 %v4331
        %v4471 = vpop.f32.mrb[0].mxu0
        %v4472 = vadd.f32 0.0, %v4471
        %v4473 = vpop.f32.mrb[0].mxu0
        %v4474 = vpop.f32.mrb[0].mxu0
        %v4475 = vadd.f32 0.0, %v4474
        %v4476 = vpop.f32.mrb[0].mxu0
        %4477 = vmatprep.mubr.bf16.mxu0 0
        %4478 = vmatmul.mubr.bf16.gmra.mrb[0].mxu0 %v4332
        %v4479 = vpop.f32.mrb[0].mxu0
        %v4480 = vadd.f32 0.0, %v4479
        %v4481 = vpop.f32.mrb[0].mxu0
        %v4482 = vpop.f32.mrb[0].mxu0
        %v4483 = vadd.f32 0.0, %v4482
        %v4484 = vpop.f32.mrb[0].mxu0
        %4485 = vmatprep.mubr.bf16.mxu0 0
        %4486 = vmatmul.mubr.bf16.gmra.mrb[0].mxu0 %v4333
        %v4487 = vpop.f32.mrb[0].mxu0
        %v4488 = vadd.f32 0.0, %v4487
        %v4489 = vpop.f32.mrb[0].mxu0
        %v4490 = vpop.f32.mrb[0].mxu0
        %v4491 = vadd.f32 0.0, %v4490
        %v4492 = vpop.f32.mrb[0].mxu0
        %4493 = vmatprep.mubr.bf16.mxu0 0
        %4494 = vmatmul.mubr.bf16.gmra.mrb[0].mxu0 %v4334
        %v4495 = vpop.f32.mrb[0].mxu0
        %v4496 = vadd.f32 0.0, %v4495
        %v4497 = vpop.f32.mrb[0].mxu0
        %v4498 = vpop.f32.mrb[0].mxu0
        %v4499 = vadd.f32 0.0, %v4498
        %v4500 = vpop.f32.mrb[0].mxu0
        %4501 = vmatprep.mubr.bf16.mxu0 0
        %4502 = vmatmul.mubr.bf16.gmra.mrb[0].mxu0 %v4335
        %v4503 = vpop.f32.mrb[0].mxu0
        %v4504 = vadd.f32 0.0, %v4503
        %v4505 = vpop.f32.mrb[0].mxu0
        %v4506 = vpop.f32.mrb[0].mxu0
        %v4507 = vadd.f32 0.0, %v4506
        %v4508 = vpop.f32.mrb[0].mxu0
        %4509 = vmatprep.mubr.bf16.mxu0 0
        %4510 = vmatmul.mubr.bf16.gmra.mrb[0].mxu0 %v4336
        %v4511 = vpop.f32.mrb[0].mxu0
        %v4512 = vadd.f32 0.0, %v4511
        %v4513 = vpop.f32.mrb[0].mxu0
        %v4514 = vpop.f32.mrb[0].mxu0
        %v4515 = vadd.f32 0.0, %v4514
        %v4516 = vpop.f32.mrb[0].mxu0
        %4517 = vmatprep.mubr.bf16.mxu0 0
        %4518 = vmatmul.mubr.bf16.gmra.mrb[0].mxu0 %v4337
        %v4519 = vpop.f32.mrb[0].mxu0
        %v4520 = vadd.f32 0.0, %v4519
        %v4521 = vpop.f32.mrb[0].mxu0
        %v4522 = vpop.f32.mrb[0].mxu0
        %v4523 = vadd.f32 0.0, %v4522
        %v4524 = vpop.f32.mrb[0].mxu0
        %4525 = vmatprep.mubr.bf16.mxu0 0
        %4526 = vmatmul.mubr.bf16.gmra.mrb[0].mxu0 %v4338
        %v4527 = vpop.f32.mrb[0].mxu0
        %v4528 = vadd.f32 0.0, %v4527
        %v4529 = vpop.f32.mrb[0].mxu0
        %v4530 = vpop.f32.mrb[0].mxu0
        %v4531 = vadd.f32 0.0, %v4530
        %v4532 = vpop.f32.mrb[0].mxu0
        %4533 = vmatprep.mubr.bf16.mxu0 0
        %4534 = vmatmul.mubr.bf16.gmra.mrb[0].mxu0 %v4339
        %v4535 = vpop.f32.mrb[0].mxu0
        %v4536 = vadd.f32 0.0, %v4535
        %v4537 = vpop.f32.mrb[0].mxu0
        %v4538 = vpop.f32.mrb[0].mxu0
        %v4539 = vadd.f32 0.0, %v4538
        %v4540 = vpop.f32.mrb[0].mxu0
        %4541 = vmatprep.mubr.bf16.mxu0 0
        %4542 = vmatmul.mubr.bf16.gmra.mrb[0].mxu0 %v4340
        %v4543 = vpop.f32.mrb[0].mxu0
        %v4544 = vadd.f32 0.0, %v4543
        %v4545 = vpop.f32.mrb[0].mxu0
        %v4546 = vpop.f32.mrb[0].mxu0
        %v4547 = vadd.f32 0.0, %v4546
        %v4548 = vpop.f32.mrb[0].mxu0
        %4549 = vmatprep.mubr.bf16.mxu0 0
        %4550 = vmatmul.mubr.bf16.gmra.mrb[0].mxu0 %v4341
        %v4551 = vpop.f32.mrb[0].mxu0
        %v4552 = vadd.f32 0.0, %v4551
        %v4553 = vpop.f32.mrb[0].mxu0
        %v4554 = vpop.f32.mrb[0].mxu0
        %v4555 = vadd.f32 0.0, %v4554
        %v4556 = vpop.f32.mrb[0].mxu0
        %4557 = vmatprep.mubr.bf16.mxu0 0
        %4558 = vmatmul.mubr.bf16.gmra.mrb[0].mxu0 %v4342
        %v4559 = vpop.f32.mrb[0].mxu0
        %v4560 = vadd.f32 0.0, %v4559
        %v4561 = vpop.f32.mrb[0].mxu0
        %v4562 = vpop.f32.mrb[0].mxu0
        %v4563 = vadd.f32 0.0, %v4562
        %v4564 = vpop.f32.mrb[0].mxu0
        %4565 = vmatprep.mubr.bf16.mxu0 0
        %4566 = vmatmul.mubr.bf16.gmra.mrb[0].mxu0 %v4343
        %v4567 = vpop.f32.mrb[0].mxu0
        %v4568 = vadd.f32 0.0, %v4567
        %v4569 = vpop.f32.mrb[0].mxu0
        %v4570 = vpop.f32.mrb[0].mxu0
        %v4571 = vadd.f32 0.0, %v4570
        %v4572 = vpop.f32.mrb[0].mxu0
        %4573 = vmatprep.mubr.bf16.mxu0 0
        %4574 = vmatmul.mubr.bf16.gmra.mrb[0].mxu0 %v4344
        %v4575 = vpop.f32.mrb[0].mxu0
        %v4576 = vadd.f32 0.0, %v4575
        %v4577 = vpop.f32.mrb[0].mxu0
        %v4578 = vpop.f32.mrb[0].mxu0
        %v4579 = vadd.f32 0.0, %v4578
        %v4580 = vpop.f32.mrb[0].mxu0
        %4581 = vmatprep.mubr.bf16.mxu0 0
        %4582 = vmatmul.mubr.bf16.gmra.mrb[0].mxu0 %v4345
        %v4583 = vpop.f32.mrb[0].mxu0
        %v4584 = vadd.f32 0.0, %v4583
        %v4585 = vpop.f32.mrb[0].mxu0
        %v4586 = vpop.f32.mrb[0].mxu0
        %v4587 = vadd.f32 0.0, %v4586
        %v4588 = vpop.f32.mrb[0].mxu0
        %4589 = vmatprep.mubr.bf16.mxu0 0
        %4590 = vmatmul.mubr.bf16.gmra.mrb[0].mxu0 %v4346
        %v4591 = vpop.f32.mrb[0].mxu0
        %v4592 = vadd.f32 0.0, %v4591
        %v4593 = vpop.f32.mrb[0].mxu0
        %v4594 = vpop.f32.mrb[0].mxu0
        %v4595 = vadd.f32 0.0, %v4594
        %v4596 = vpop.f32.mrb[0].mxu0
        %4597 = vmatprep.mubr.bf16.mxu0 0
        %4598 = vmatmul.mubr.bf16.gmra.mrb[0].mxu0 %v4347
        %v4599 = vpop.f32.mrb[0].mxu0
        %v4600 = vadd.f32 0.0, %v4599
        %v4601 = vpop.f32.mrb[0].mxu0
        %v4602 = vpop.f32.mrb[0].mxu0
        %v4603 = vadd.f32 0.0, %v4602
        %v4604 = vpop.f32.mrb[0].mxu0
        %4605 = vmatprep.mubr.bf16.mxu0 0
        %4606 = vmatmul.mubr.bf16.gmra.mrb[0].mxu0 %v4348
        %v4607 = vpop.f32.mrb[0].mxu0
        %v4608 = vadd.f32 0.0, %v4607
        %v4609 = vpop.f32.mrb[0].mxu0
        %v4610 = vpop.f32.mrb[0].mxu0
        %v4611 = vadd.f32 0.0, %v4610
        %v4612 = vpop.f32.mrb[0].mxu0
        %4613 = vmatprep.mubr.bf16.mxu0 0
        %4614 = vmatmul.mubr.bf16.gmra.mrb[0].mxu0 %v4349
        %v4615 = vpop.f32.mrb[0].mxu0
        %v4616 = vadd.f32 0.0, %v4615
        %v4617 = vpop.f32.mrb[0].mxu0
        %v4618 = vpop.f32.mrb[0].mxu0
        %v4619 = vadd.f32 0.0, %v4618
        %v4620 = vpop.f32.mrb[0].mxu0
        %4621 = vmatprep.mubr.bf16.mxu0 0
        %4622 = vmatmul.mubr.bf16.gmra.mrb[0].mxu0 %v4350
        %v4623 = vpop.f32.mrb[0].mxu0
        %v4624 = vadd.f32 0.0, %v4623
        %v4625 = vpop.f32.mrb[0].mxu0
        %v4626 = vpop.f32.mrb[0].mxu0
        %v4627 = vadd.f32 0.0, %v4626
        %v4628 = vpop.f32.mrb[0].mxu0
        %4629 = vmatprep.mubr.bf16.mxu0 0
        %4630 = vmatmul.mubr.bf16.gmra.mrb[0].mxu0 %v4351
        %v4631 = vpop.f32.mrb[0].mxu0
        %v4632 = vadd.f32 0.0, %v4631
        %v4633 = vpop.f32.mrb[0].mxu0
        %v4634 = vpop.f32.mrb[0].mxu0
        %v4635 = vadd.f32 0.0, %v4634
        %v4636 = vpop.f32.mrb[0].mxu0
        %4637 = vmatprep.mubr.bf16.mxu0 0
        %4638 = vmatmul.mubr.bf16.gmra.mrb[0].mxu0 %v4352
        %v4639 = vpop.f32.mrb[0].mxu0
        %v4640 = vadd.f32 0.0, %v4639
        %v4641 = vpop.f32.mrb[0].mxu0
        %v4642 = vpop.f32.mrb[0].mxu0
        %v4643 = vadd.f32 0.0, %v4642
        %v4644 = vpop.f32.mrb[0].mxu0
        %4645 = vmatprep.mubr.bf16.mxu0 0
        %4646 = vmatmul.mubr.bf16.gmra.mrb[0].mxu0 %v4353
        %v4647 = vpop.f32.mrb[0].mxu0
        %v4648 = vadd.f32 0.0, %v4647
        %v4649 = vpop.f32.mrb[0].mxu0
        %v4650 = vpop.f32.mrb[0].mxu0
        %v4651 = vadd.f32 0.0, %v4650
        %v4652 = vpop.f32.mrb[0].mxu0
        %4653 = vmatprep.mubr.bf16.mxu0 0
        %4654 = vmatmul.mubr.bf16.gmra.mrb[0].mxu0 %v4354
        %v4655 = vpop.f32.mrb[0].mxu0
        %v4656 = vadd.f32 0.0, %v4655
        %v4657 = vpop.f32.mrb[0].mxu0
        %v4658 = vpop.f32.mrb[0].mxu0
        %v4659 = vadd.f32 0.0, %v4658
        %v4660 = vpop.f32.mrb[0].mxu0
        %4661 = vmatprep.mubr.bf16.mxu0 0
        %4662 = vmatmul.mubr.bf16.gmra.mrb[0].mxu0 %v4355
        %v4663 = vpop.f32.mrb[0].mxu0
        %v4664 = vadd.f32 0.0, %v4663
        %v4665 = vpop.f32.mrb[0].mxu0
        %v4666 = vpop.f32.mrb[0].mxu0
        %v4667 = vadd.f32 0.0, %v4666
        %v4668 = vpop.f32.mrb[0].mxu0
        %4669 = vmatprep.mubr.bf16.mxu0 0
        %4670 = vmatmul.mubr.bf16.gmra.mrb[0].mxu0 %v4356
        %v4671 = vpop.f32.mrb[0].mxu0
        %v4672 = vadd.f32 0.0, %v4671
        %v4673 = vpop.f32.mrb[0].mxu0
        %v4674 = vpop.f32.mrb[0].mxu0
        %v4675 = vadd.f32 0.0, %v4674
        %v4676 = vpop.f32.mrb[0].mxu0
        %4677 = vmatprep.mubr.bf16.mxu0 0
        %4678 = vmatmul.mubr.bf16.gmra.mrb[0].mxu0 %v4357
        %v4679 = vpop.f32.mrb[0].mxu0
        %v4680 = vadd.f32 0.0, %v4679
        %v4681 = vpop.f32.mrb[0].mxu0
        %v4682 = vpop.f32.mrb[0].mxu0
        %v4683 = vadd.f32 0.0, %v4682
        %v4684 = vpop.f32.mrb[0].mxu0
        %4685 = vmatprep.mubr.bf16.mxu0 0
        %4686 = vmatmul.mubr.bf16.gmra.mrb[0].mxu0 %v4358
        %v4687 = vpop.f32.mrb[0].mxu0
        %v4688 = vadd.f32 0.0, %v4687
        %v4689 = vpop.f32.mrb[0].mxu0
        %v4690 = vpop.f32.mrb[0].mxu0
        %v4691 = vadd.f32 0.0, %v4690
        %v4692 = vpop.f32.mrb[0].mxu0
        %4693 = vmatprep.mubr.bf16.mxu0 0
        %4694 = vmatmul.mubr.bf16.gmra.mrb[0].mxu0 %v4359
        %v4695 = vpop.f32.mrb[0].mxu0
        %v4696 = vadd.f32 0.0, %v4695
        %v4697 = vpop.f32.mrb[0].mxu0
        %v4698 = vpop.f32.mrb[0].mxu0
        %v4699 = vadd.f32 0.0, %v4698
        %v4700 = vpop.f32.mrb[0].mxu0
        %4701 = vmatprep.mubr.bf16.mxu0 0
        %4702 = vmatmul.mubr.bf16.gmra.mrb[0].mxu0 %v4360
        %v4703 = vpop.f32.mrb[0].mxu0
        %v4704 = vadd.f32 0.0, %v4703
        %v4705 = vpop.f32.mrb[0].mxu0
        %v4706 = vpop.f32.mrb[0].mxu0
        %v4707 = vadd.f32 0.0, %v4706
        %v4708 = vpop.f32.mrb[0].mxu0
        %4709 = vmatprep.mubr.bf16.mxu0 0
        %4710 = vmatmul.mubr.bf16.gmra.mrb[0].mxu0 %v4361
        %v4711 = vpop.f32.mrb[0].mxu0
        %v4712 = vadd.f32 0.0, %v4711
        %v4713 = vpop.f32.mrb[0].mxu0
        %v4714 = vpop.f32.mrb[0].mxu0
        %v4715 = vadd.f32 0.0, %v4714
        %v4716 = vpop.f32.mrb[0].mxu0
        %4717 = vmatprep.mubr.bf16.mxu0 0
        %4718 = vmatmul.mubr.bf16.gmra.mrb[0].mxu0 %v4362
        %v4719 = vpop.f32.mrb[0].mxu0
        %v4720 = vadd.f32 0.0, %v4719
        %v4721 = vpop.f32.mrb[0].mxu0
        %v4722 = vpop.f32.mrb[0].mxu0
        %v4723 = vadd.f32 0.0, %v4722
        %v4724 = vpop.f32.mrb[0].mxu0
        %4725 = vmatprep.mubr.bf16.mxu0 0
        %4726 = vmatmul.mubr.bf16.gmra.mrb[0].mxu0 %v4363
        %v4727 = vpop.f32.mrb[0].mxu0
        %v4728 = vadd.f32 0.0, %v4727
        %v4729 = vpop.f32.mrb[0].mxu0
        %v4730 = vpop.f32.mrb[0].mxu0
        %v4731 = vadd.f32 0.0, %v4730
        %v4732 = vpop.f32.mrb[0].mxu0
        %4733 = vdwg.mxu0
        %4734 = vst [vmem:[#allocation5] sm:$0xff] %v4464
        %4735 = vst [vmem:[#allocation5 + $0x8] sm:$0xff] %v4467
        %4736 = vst [vmem:[#allocation5 + $0x10] sm:$0xff] %v4472
        %4737 = vst [vmem:[#allocation5 + $0x18] sm:$0xff] %v4475
        %4738 = vst [vmem:[#allocation5 + $0x20] sm:$0xff] %v4480
        %4739 = vst [vmem:[#allocation5 + $0x28] sm:$0xff] %v4483
        %4740 = vst [vmem:[#allocation5 + $0x30] sm:$0xff] %v4488
        %4741 = vst [vmem:[#allocation5 + $0x38] sm:$0xff] %v4491
        %4742 = vst [vmem:[#allocation5 + $0x40] sm:$0xff] %v4496
        %4743 = vst [vmem:[#allocation5 + $0x48] sm:$0xff] %v4499
        %4744 = vst [vmem:[#allocation5 + $0x50] sm:$0xff] %v4504
        %4745 = vst [vmem:[#allocation5 + $0x58] sm:$0xff] %v4507
        %4746 = vst [vmem:[#allocation5 + $0x60] sm:$0xff] %v4512
        %4747 = vst [vmem:[#allocation5 + $0x68] sm:$0xff] %v4515
        %4748 = vst [vmem:[#allocation5 + $0x70] sm:$0xff] %v4520
        %4749 = vst [vmem:[#allocation5 + $0x78] sm:$0xff] %v4523
        %4750 = vst [vmem:[#allocation5 + $0x80] sm:$0xff] %v4528
        %4751 = vst [vmem:[#allocation5 + $0x88] sm:$0xff] %v4531
        %4752 = vst [vmem:[#allocation5 + $0x90] sm:$0xff] %v4536
        %4753 = vst [vmem:[#allocation5 + $0x98] sm:$0xff] %v4539
        %4754 = vst [vmem:[#allocation5 + $0xa0] sm:$0xff] %v4544
        %4755 = vst [vmem:[#allocation5 + $0xa8] sm:$0xff] %v4547
        %4756 = vst [vmem:[#allocation5 + $0xb0] sm:$0xff] %v4552
        %4757 = vst [vmem:[#allocation5 + $0xb8] sm:$0xff] %v4555
        %4758 = vst [vmem:[#allocation5 + $0xc0] sm:$0xff] %v4560
        %4759 = vst [vmem:[#allocation5 + $0xc8] sm:$0xff] %v4563
        %4760 = vst [vmem:[#allocation5 + $0xd0] sm:$0xff] %v4568
        %4761 = vst [vmem:[#allocation5 + $0xd8] sm:$0xff] %v4571
        %4762 = vst [vmem:[#allocation5 + $0xe0] sm:$0xff] %v4576
        %4763 = vst [vmem:[#allocation5 + $0xe8] sm:$0xff] %v4579
        %4764 = vst [vmem:[#allocation5 + $0xf0] sm:$0xff] %v4584
        %4765 = vst [vmem:[#allocation5 + $0xf8] sm:$0xff] %v4587
        %4766 = vst [vmem:[#allocation5 + $0x100] sm:$0xff] %v4592
        %4767 = vst [vmem:[#allocation5 + $0x108] sm:$0xff] %v4595
        %4768 = vst [vmem:[#allocation5 + $0x110] sm:$0xff] %v4600
        %4769 = vst [vmem:[#allocation5 + $0x118] sm:$0xff] %v4603
        %4770 = vst [vmem:[#allocation5 + $0x120] sm:$0xff] %v4608
        %4771 = vst [vmem:[#allocation5 + $0x128] sm:$0xff] %v4611
        %4772 = vst [vmem:[#allocation5 + $0x130] sm:$0xff] %v4616
        %4773 = vst [vmem:[#allocation5 + $0x138] sm:$0xff] %v4619
        %4774 = vst [vmem:[#allocation5 + $0x140] sm:$0xff] %v4624
        %4775 = vst [vmem:[#allocation5 + $0x148] sm:$0xff] %v4627
        %4776 = vst [vmem:[#allocation5 + $0x150] sm:$0xff] %v4632
        %4777 = vst [vmem:[#allocation5 + $0x158] sm:$0xff] %v4635
        %4778 = vst [vmem:[#allocation5 + $0x160] sm:$0xff] %v4640
        %4779 = vst [vmem:[#allocation5 + $0x168] sm:$0xff] %v4643
        %4780 = vst [vmem:[#allocation5 + $0x170] sm:$0xff] %v4648
        %4781 = vst [vmem:[#allocation5 + $0x178] sm:$0xff] %v4651
        %4782 = vst [vmem:[#allocation5 + $0x180] sm:$0xff] %v4656
        %4783 = vst [vmem:[#allocation5 + $0x188] sm:$0xff] %v4659
        %4784 = vst [vmem:[#allocation5 + $0x190] sm:$0xff] %v4664
        %4785 = vst [vmem:[#allocation5 + $0x198] sm:$0xff] %v4667
        %4786 = vst [vmem:[#allocation5 + $0x1a0] sm:$0xff] %v4672
        %4787 = vst [vmem:[#allocation5 + $0x1a8] sm:$0xff] %v4675
        %4788 = vst [vmem:[#allocation5 + $0x1b0] sm:$0xff] %v4680
        %4789 = vst [vmem:[#allocation5 + $0x1b8] sm:$0xff] %v4683
        %4790 = vst [vmem:[#allocation5 + $0x1c0] sm:$0xff] %v4688
        %4791 = vst [vmem:[#allocation5 + $0x1c8] sm:$0xff] %v4691
        %4792 = vst [vmem:[#allocation5 + $0x1d0] sm:$0xff] %v4696
        %4793 = vst [vmem:[#allocation5 + $0x1d8] sm:$0xff] %v4699
        %4794 = vst [vmem:[#allocation5 + $0x1e0] sm:$0xff] %v4704
        %4795 = vst [vmem:[#allocation5 + $0x1e8] sm:$0xff] %v4707
        %4796 = vst [vmem:[#allocation5 + $0x1f0] sm:$0xff] %v4712
        %4797 = vst [vmem:[#allocation5 + $0x1f8] sm:$0xff] %v4715
        %4798 = vst [vmem:[#allocation5 + $0x200] sm:$0xff] %v4720
        %4799 = vst [vmem:[#allocation5 + $0x208] sm:$0xff] %v4723
        %4800 = vst [vmem:[#allocation5 + $0x210] sm:$0xff] %v4728
        %4801 = vst [vmem:[#allocation5 + $0x218] sm:$0xff] %v4731
        %v4802 = vld [vmem:[#allocation2 + $0x18] sm:$0xff]
        %v4803 = vld [vmem:[#allocation2 + $0x20] sm:$0xff]
        %v4804 = vld [vmem:[#allocation2 + $0x28] sm:$0xff]
        %v4805 = vld [vmem:[#allocation2 + $0x30] sm:$0xff]
        %v4806 = vld [vmem:[#allocation2 + $0x38] sm:$0xff]
        %v4807 = vld [vmem:[#allocation2 + $0x40] sm:$0xff]
        %v4808 = vld [vmem:[#allocation2 + $0x48] sm:$0xff]
        %v4809 = vld [vmem:[#allocation2 + $0x50] sm:$0xff]
        %v4810 = vld [vmem:[#allocation2 + $0x58] sm:$0xff]
        %v4811 = vld [vmem:[#allocation2 + $0x60] sm:$0xff]
        %v4812 = vld [vmem:[#allocation2 + $0x68] sm:$0xff]
        %v4813 = vld [vmem:[#allocation2 + $0x70] sm:$0xff]
        %v4814 = vld [vmem:[#allocation2 + $0x78] sm:$0xff]
        %v4815 = vld [vmem:[#allocation2 + $0x80] sm:$0xff]
        %v4816 = vld [vmem:[#allocation2 + $0x88] sm:$0xff]
        %v4817 = vld [vmem:[#allocation2 + $0x90] sm:$0xff]
        %v4818 = vld [vmem:[#allocation2 + $0x98] sm:$0xff]
        %v4819 = vld [vmem:[#allocation2 + $0xa0] sm:$0xff]
        %v4820 = vld [vmem:[#allocation2 + $0xa8] sm:$0xff]
        %v4821 = vld [vmem:[#allocation2 + $0xb0] sm:$0xff]
        %v4822 = vld [vmem:[#allocation2 + $0xb8] sm:$0xff]
        %v4823 = vld [vmem:[#allocation2 + $0xc0] sm:$0xff]
        %v4824 = vld [vmem:[#allocation2 + $0xc8] sm:$0xff]
        %v4825 = vld [vmem:[#allocation2 + $0xd0] sm:$0xff]
        %v4826 = vld [vmem:[#allocation2 + $0xd8] sm:$0xff]
        %v4827 = vld [vmem:[#allocation2 + $0xe0] sm:$0xff]
        %v4828 = vld [vmem:[#allocation2 + $0xe8] sm:$0xff]
        %v4829 = vld [vmem:[#allocation2 + $0xf0] sm:$0xff]
        %v4830 = vld [vmem:[#allocation2 + $0xf8] sm:$0xff]
        %v4831 = vld [vmem:[#allocation2 + $0x100] sm:$0xff]
        %v4832 = vld [vmem:[#allocation2 + $0x108] sm:$0xff]
        %v4833 = vld [vmem:[#allocation2 + $0x110] sm:$0xff]
        %v4834 = vld [vmem:[#allocation2 + $0x118] sm:$0xff]
        %v4835 = vld [vmem:[#allocation2 + $0x120] sm:$0xff]
        %s4836 = scalar_lea.vmem %s8, 320
        %v4837 = vld [vmem:[%s4836] sm:$0xf]
        %v4838 = vld [vmem:[%s4836 + $0x4] sm:$0xf]
        %v4839 = vld [vmem:[%s4836 + $0x8] sm:$0xf]
        %v4840 = vld [vmem:[%s4836 + $0xc] sm:$0xf]
        %v4841 = vld [vmem:[%s4836 + $0x10] sm:$0xf]
        %v4842 = vld [vmem:[%s4836 + $0x14] sm:$0xf]
        %v4843 = vld [vmem:[%s4836 + $0x18] sm:$0xf]
        %v4844 = vld [vmem:[%s4836 + $0x1c] sm:$0xf]
        %v4845 = vld [vmem:[%s4836 + $0x20] sm:$0xf]
        %v4846 = vld [vmem:[%s4836 + $0x24] sm:$0xf]
        %v4847 = vld [vmem:[%s4836 + $0x28] sm:$0xf]
        %v4848 = vld [vmem:[%s4836 + $0x2c] sm:$0xf]
        %v4849 = vld [vmem:[%s4836 + $0x30] sm:$0xf]
        %v4850 = vld [vmem:[%s4836 + $0x34] sm:$0xf]
        %v4851 = vld [vmem:[%s4836 + $0x38] sm:$0xf]
        %v4852 = vld [vmem:[%s4836 + $0x3c] sm:$0xf]
        %v4869 = vunpack.c.l.b16 %v4837
        %v4870 = vunpack.c.l.b16 %v4838
        %v4871 = vunpack.c.l.b16 %v4839
        %v4872 = vunpack.c.l.b16 %v4840
        %v4873 = vunpack.c.l.b16 %v4841
        %v4874 = vunpack.c.l.b16 %v4842
        %v4875 = vunpack.c.l.b16 %v4843
        %v4876 = vunpack.c.l.b16 %v4844
        %v4877 = vunpack.c.l.b16 %v4845
        %v4878 = vunpack.c.l.b16 %v4846
        %v4879 = vunpack.c.l.b16 %v4847
        %v4880 = vunpack.c.l.b16 %v4848
        %v4881 = vunpack.c.l.b16 %v4849
        %v4882 = vunpack.c.l.b16 %v4850
        %v4883 = vunpack.c.l.b16 %v4851
        %v4884 = vunpack.c.l.b16 %v4852
        %v4885 = vpack.c.b16 %v4870, %v4869
        %v4886 = vpack.c.b16 %v4872, %v4871
        %v4887 = vpack.c.b16 %v4874, %v4873
        %v4888 = vpack.c.b16 %v4876, %v4875
        %v4889 = vpack.c.b16 %v4878, %v4877
        %v4890 = vpack.c.b16 %v4880, %v4879
        %v4891 = vpack.c.b16 %v4882, %v4881
        %v4892 = vpack.c.b16 %v4884, %v4883
        %4901 = vmatprep.subr.bf16.mxu0 0
        %4902 = vmatpush1.bf16.msra.mxu0 %v4885
        %4903 = vmatprep.subr.bf16.mxu0 0
        %4904 = vmatpush1.bf16.msra.mxu0 %v4886
        %4905 = vmatprep.subr.bf16.mxu0 0
        %4906 = vmatpush1.bf16.msra.mxu0 %v4887
        %4907 = vmatprep.subr.bf16.mxu0 0
        %4908 = vmatpush1.bf16.msra.mxu0 %v4888
        %4909 = vmatprep.subr.bf16.mxu0 0
        %4910 = vmatpush1.bf16.msra.mxu0 %v4889
        %4911 = vmatprep.subr.bf16.mxu0 0
        %4912 = vmatpush1.bf16.msra.mxu0 %v4890
        %4913 = vmatprep.subr.bf16.mxu0 0
        %4914 = vmatpush1.bf16.msra.mxu0 %v4891
        %4915 = vmatprep.subr.bf16.mxu0 0
        %4916 = vmatpush1.bf16.msra.mxu0 %v4892
        %4917 = vmatprep.subr.bf16.mxu0 0
        %4918 = vmatpush1.bf16.msra.mxu0 0
        %4919 = vmatprep.subr.bf16.mxu0 0
        %4920 = vmatpush1.bf16.msra.mxu0 0
        %4921 = vmatprep.subr.bf16.mxu0 0
        %4922 = vmatpush1.bf16.msra.mxu0 0
        %4923 = vmatprep.subr.bf16.mxu0 0
        %4924 = vmatpush1.bf16.msra.mxu0 0
        %4925 = vmatprep.subr.bf16.mxu0 0
        %4926 = vmatpush1.bf16.msra.mxu0 0
        %4927 = vmatprep.subr.bf16.mxu0 0
        %4928 = vmatpush1.bf16.msra.mxu0 0
        %4929 = vmatprep.subr.bf16.mxu0 0
        %4930 = vmatpush1.bf16.msra.mxu0 0
        %4931 = vmatprep.subr.bf16.mxu0 0
        %4932 = vmatpush1.bf16.msra.mxu0 0
        %4933 = vmatprep.mubr.bf16.mxu0 0
        %4934 = vmatmul.mubr.bf16.gmra.mrb[0].mxu0 %v4802
        %v4935 = vpop.f32.mrb[0].mxu0
        %v4936 = vadd.f32 0.0, %v4935
        %v4937 = vpop.f32.mrb[0].mxu0
        %v4938 = vpop.f32.mrb[0].mxu0
        %v4939 = vadd.f32 0.0, %v4938
        %v4940 = vpop.f32.mrb[0].mxu0
        %4941 = vmatprep.mubr.bf16.mxu0 0
        %4942 = vmatmul.mubr.bf16.gmra.mrb[0].mxu0 %v4803
        %v4943 = vpop.f32.mrb[0].mxu0
        %v4944 = vadd.f32 0.0, %v4943
        %v4945 = vpop.f32.mrb[0].mxu0
        %v4946 = vpop.f32.mrb[0].mxu0
        %v4947 = vadd.f32 0.0, %v4946
        %v4948 = vpop.f32.mrb[0].mxu0
        %4949 = vmatprep.mubr.bf16.mxu0 0
        %4950 = vmatmul.mubr.bf16.gmra.mrb[0].mxu0 %v4804
        %v4951 = vpop.f32.mrb[0].mxu0
        %v4952 = vadd.f32 0.0, %v4951
        %v4953 = vpop.f32.mrb[0].mxu0
        %v4954 = vpop.f32.mrb[0].mxu0
        %v4955 = vadd.f32 0.0, %v4954
        %v4956 = vpop.f32.mrb[0].mxu0
        %4957 = vmatprep.mubr.bf16.mxu0 0
        %4958 = vmatmul.mubr.bf16.gmra.mrb[0].mxu0 %v4805
        %v4959 = vpop.f32.mrb[0].mxu0
        %v4960 = vadd.f32 0.0, %v4959
        %v4961 = vpop.f32.mrb[0].mxu0
        %v4962 = vpop.f32.mrb[0].mxu0
        %v4963 = vadd.f32 0.0, %v4962
        %v4964 = vpop.f32.mrb[0].mxu0
        %4965 = vmatprep.mubr.bf16.mxu0 0
        %4966 = vmatmul.mubr.bf16.gmra.mrb[0].mxu0 %v4806
        %v4967 = vpop.f32.mrb[0].mxu0
        %v4968 = vadd.f32 0.0, %v4967
        %v4969 = vpop.f32.mrb[0].mxu0
        %v4970 = vpop.f32.mrb[0].mxu0
        %v4971 = vadd.f32 0.0, %v4970
        %v4972 = vpop.f32.mrb[0].mxu0
        %4973 = vmatprep.mubr.bf16.mxu0 0
        %4974 = vmatmul.mubr.bf16.gmra.mrb[0].mxu0 %v4807
        %v4975 = vpop.f32.mrb[0].mxu0
        %v4976 = vadd.f32 0.0, %v4975
        %v4977 = vpop.f32.mrb[0].mxu0
        %v4978 = vpop.f32.mrb[0].mxu0
        %v4979 = vadd.f32 0.0, %v4978
        %v4980 = vpop.f32.mrb[0].mxu0
        %4981 = vmatprep.mubr.bf16.mxu0 0
        %4982 = vmatmul.mubr.bf16.gmra.mrb[0].mxu0 %v4808
        %v4983 = vpop.f32.mrb[0].mxu0
        %v4984 = vadd.f32 0.0, %v4983
        %v4985 = vpop.f32.mrb[0].mxu0
        %v4986 = vpop.f32.mrb[0].mxu0
        %v4987 = vadd.f32 0.0, %v4986
        %v4988 = vpop.f32.mrb[0].mxu0
        %4989 = vmatprep.mubr.bf16.mxu0 0
        %4990 = vmatmul.mubr.bf16.gmra.mrb[0].mxu0 %v4809
        %v4991 = vpop.f32.mrb[0].mxu0
        %v4992 = vadd.f32 0.0, %v4991
        %v4993 = vpop.f32.mrb[0].mxu0
        %v4994 = vpop.f32.mrb[0].mxu0
        %v4995 = vadd.f32 0.0, %v4994
        %v4996 = vpop.f32.mrb[0].mxu0
        %4997 = vmatprep.mubr.bf16.mxu0 0
        %4998 = vmatmul.mubr.bf16.gmra.mrb[0].mxu0 %v4810
        %v4999 = vpop.f32.mrb[0].mxu0
        %v5000 = vadd.f32 0.0, %v4999
        %v5001 = vpop.f32.mrb[0].mxu0
        %v5002 = vpop.f32.mrb[0].mxu0
        %v5003 = vadd.f32 0.0, %v5002
        %v5004 = vpop.f32.mrb[0].mxu0
        %5005 = vmatprep.mubr.bf16.mxu0 0
        %5006 = vmatmul.mubr.bf16.gmra.mrb[0].mxu0 %v4811
        %v5007 = vpop.f32.mrb[0].mxu0
        %v5008 = vadd.f32 0.0, %v5007
        %v5009 = vpop.f32.mrb[0].mxu0
        %v5010 = vpop.f32.mrb[0].mxu0
        %v5011 = vadd.f32 0.0, %v5010
        %v5012 = vpop.f32.mrb[0].mxu0
        %5013 = vmatprep.mubr.bf16.mxu0 0
        %5014 = vmatmul.mubr.bf16.gmra.mrb[0].mxu0 %v4812
        %v5015 = vpop.f32.mrb[0].mxu0
        %v5016 = vadd.f32 0.0, %v5015
        %v5017 = vpop.f32.mrb[0].mxu0
        %v5018 = vpop.f32.mrb[0].mxu0
        %v5019 = vadd.f32 0.0, %v5018
        %v5020 = vpop.f32.mrb[0].mxu0
        %5021 = vmatprep.mubr.bf16.mxu0 0
        %5022 = vmatmul.mubr.bf16.gmra.mrb[0].mxu0 %v4813
        %v5023 = vpop.f32.mrb[0].mxu0
        %v5024 = vadd.f32 0.0, %v5023
        %v5025 = vpop.f32.mrb[0].mxu0
        %v5026 = vpop.f32.mrb[0].mxu0
        %v5027 = vadd.f32 0.0, %v5026
        %v5028 = vpop.f32.mrb[0].mxu0
        %5029 = vmatprep.mubr.bf16.mxu0 0
        %5030 = vmatmul.mubr.bf16.gmra.mrb[0].mxu0 %v4814
        %v5031 = vpop.f32.mrb[0].mxu0
        %v5032 = vadd.f32 0.0, %v5031
        %v5033 = vpop.f32.mrb[0].mxu0
        %v5034 = vpop.f32.mrb[0].mxu0
        %v5035 = vadd.f32 0.0, %v5034
        %v5036 = vpop.f32.mrb[0].mxu0
        %5037 = vmatprep.mubr.bf16.mxu0 0
        %5038 = vmatmul.mubr.bf16.gmra.mrb[0].mxu0 %v4815
        %v5039 = vpop.f32.mrb[0].mxu0
        %v5040 = vadd.f32 0.0, %v5039
        %v5041 = vpop.f32.mrb[0].mxu0
        %v5042 = vpop.f32.mrb[0].mxu0
        %v5043 = vadd.f32 0.0, %v5042
        %v5044 = vpop.f32.mrb[0].mxu0
        %5045 = vmatprep.mubr.bf16.mxu0 0
        %5046 = vmatmul.mubr.bf16.gmra.mrb[0].mxu0 %v4816
        %v5047 = vpop.f32.mrb[0].mxu0
        %v5048 = vadd.f32 0.0, %v5047
        %v5049 = vpop.f32.mrb[0].mxu0
        %v5050 = vpop.f32.mrb[0].mxu0
        %v5051 = vadd.f32 0.0, %v5050
        %v5052 = vpop.f32.mrb[0].mxu0
        %5053 = vmatprep.mubr.bf16.mxu0 0
        %5054 = vmatmul.mubr.bf16.gmra.mrb[0].mxu0 %v4817
        %v5055 = vpop.f32.mrb[0].mxu0
        %v5056 = vadd.f32 0.0, %v5055
        %v5057 = vpop.f32.mrb[0].mxu0
        %v5058 = vpop.f32.mrb[0].mxu0
        %v5059 = vadd.f32 0.0, %v5058
        %v5060 = vpop.f32.mrb[0].mxu0
        %5061 = vmatprep.mubr.bf16.mxu0 0
        %5062 = vmatmul.mubr.bf16.gmra.mrb[0].mxu0 %v4818
        %v5063 = vpop.f32.mrb[0].mxu0
        %v5064 = vadd.f32 0.0, %v5063
        %v5065 = vpop.f32.mrb[0].mxu0
        %v5066 = vpop.f32.mrb[0].mxu0
        %v5067 = vadd.f32 0.0, %v5066
        %v5068 = vpop.f32.mrb[0].mxu0
        %5069 = vmatprep.mubr.bf16.mxu0 0
        %5070 = vmatmul.mubr.bf16.gmra.mrb[0].mxu0 %v4819
        %v5071 = vpop.f32.mrb[0].mxu0
        %v5072 = vadd.f32 0.0, %v5071
        %v5073 = vpop.f32.mrb[0].mxu0
        %v5074 = vpop.f32.mrb[0].mxu0
        %v5075 = vadd.f32 0.0, %v5074
        %v5076 = vpop.f32.mrb[0].mxu0
        %5077 = vmatprep.mubr.bf16.mxu0 0
        %5078 = vmatmul.mubr.bf16.gmra.mrb[0].mxu0 %v4820
        %v5079 = vpop.f32.mrb[0].mxu0
        %v5080 = vadd.f32 0.0, %v5079
        %v5081 = vpop.f32.mrb[0].mxu0
        %v5082 = vpop.f32.mrb[0].mxu0
        %v5083 = vadd.f32 0.0, %v5082
        %v5084 = vpop.f32.mrb[0].mxu0
        %5085 = vmatprep.mubr.bf16.mxu0 0
        %5086 = vmatmul.mubr.bf16.gmra.mrb[0].mxu0 %v4821
        %v5087 = vpop.f32.mrb[0].mxu0
        %v5088 = vadd.f32 0.0, %v5087
        %v5089 = vpop.f32.mrb[0].mxu0
        %v5090 = vpop.f32.mrb[0].mxu0
        %v5091 = vadd.f32 0.0, %v5090
        %v5092 = vpop.f32.mrb[0].mxu0
        %5093 = vmatprep.mubr.bf16.mxu0 0
        %5094 = vmatmul.mubr.bf16.gmra.mrb[0].mxu0 %v4822
        %v5095 = vpop.f32.mrb[0].mxu0
        %v5096 = vadd.f32 0.0, %v5095
        %v5097 = vpop.f32.mrb[0].mxu0
        %v5098 = vpop.f32.mrb[0].mxu0
        %v5099 = vadd.f32 0.0, %v5098
        %v5100 = vpop.f32.mrb[0].mxu0
        %5101 = vmatprep.mubr.bf16.mxu0 0
        %5102 = vmatmul.mubr.bf16.gmra.mrb[0].mxu0 %v4823
        %v5103 = vpop.f32.mrb[0].mxu0
        %v5104 = vadd.f32 0.0, %v5103
        %v5105 = vpop.f32.mrb[0].mxu0
        %v5106 = vpop.f32.mrb[0].mxu0
        %v5107 = vadd.f32 0.0, %v5106
        %v5108 = vpop.f32.mrb[0].mxu0
        %5109 = vmatprep.mubr.bf16.mxu0 0
        %5110 = vmatmul.mubr.bf16.gmra.mrb[0].mxu0 %v4824
        %v5111 = vpop.f32.mrb[0].mxu0
        %v5112 = vadd.f32 0.0, %v5111
        %v5113 = vpop.f32.mrb[0].mxu0
        %v5114 = vpop.f32.mrb[0].mxu0
        %v5115 = vadd.f32 0.0, %v5114
        %v5116 = vpop.f32.mrb[0].mxu0
        %5117 = vmatprep.mubr.bf16.mxu0 0
        %5118 = vmatmul.mubr.bf16.gmra.mrb[0].mxu0 %v4825
        %v5119 = vpop.f32.mrb[0].mxu0
        %v5120 = vadd.f32 0.0, %v5119
        %v5121 = vpop.f32.mrb[0].mxu0
        %v5122 = vpop.f32.mrb[0].mxu0
        %v5123 = vadd.f32 0.0, %v5122
        %v5124 = vpop.f32.mrb[0].mxu0
        %5125 = vmatprep.mubr.bf16.mxu0 0
        %5126 = vmatmul.mubr.bf16.gmra.mrb[0].mxu0 %v4826
        %v5127 = vpop.f32.mrb[0].mxu0
        %v5128 = vadd.f32 0.0, %v5127
        %v5129 = vpop.f32.mrb[0].mxu0
        %v5130 = vpop.f32.mrb[0].mxu0
        %v5131 = vadd.f32 0.0, %v5130
        %v5132 = vpop.f32.mrb[0].mxu0
        %5133 = vmatprep.mubr.bf16.mxu0 0
        %5134 = vmatmul.mubr.bf16.gmra.mrb[0].mxu0 %v4827
        %v5135 = vpop.f32.mrb[0].mxu0
        %v5136 = vadd.f32 0.0, %v5135
        %v5137 = vpop.f32.mrb[0].mxu0
        %v5138 = vpop.f32.mrb[0].mxu0
        %v5139 = vadd.f32 0.0, %v5138
        %v5140 = vpop.f32.mrb[0].mxu0
        %5141 = vmatprep.mubr.bf16.mxu0 0
        %5142 = vmatmul.mubr.bf16.gmra.mrb[0].mxu0 %v4828
        %v5143 = vpop.f32.mrb[0].mxu0
        %v5144 = vadd.f32 0.0, %v5143
        %v5145 = vpop.f32.mrb[0].mxu0
        %v5146 = vpop.f32.mrb[0].mxu0
        %v5147 = vadd.f32 0.0, %v5146
        %v5148 = vpop.f32.mrb[0].mxu0
        %5149 = vmatprep.mubr.bf16.mxu0 0
        %5150 = vmatmul.mubr.bf16.gmra.mrb[0].mxu0 %v4829
        %v5151 = vpop.f32.mrb[0].mxu0
        %v5152 = vadd.f32 0.0, %v5151
        %v5153 = vpop.f32.mrb[0].mxu0
        %v5154 = vpop.f32.mrb[0].mxu0
        %v5155 = vadd.f32 0.0, %v5154
        %v5156 = vpop.f32.mrb[0].mxu0
        %5157 = vmatprep.mubr.bf16.mxu0 0
        %5158 = vmatmul.mubr.bf16.gmra.mrb[0].mxu0 %v4830
        %v5159 = vpop.f32.mrb[0].mxu0
        %v5160 = vadd.f32 0.0, %v5159
        %v5161 = vpop.f32.mrb[0].mxu0
        %v5162 = vpop.f32.mrb[0].mxu0
        %v5163 = vadd.f32 0.0, %v5162
        %v5164 = vpop.f32.mrb[0].mxu0
        %5165 = vmatprep.mubr.bf16.mxu0 0
        %5166 = vmatmul.mubr.bf16.gmra.mrb[0].mxu0 %v4831
        %v5167 = vpop.f32.mrb[0].mxu0
        %v5168 = vadd.f32 0.0, %v5167
        %v5169 = vpop.f32.mrb[0].mxu0
        %v5170 = vpop.f32.mrb[0].mxu0
        %v5171 = vadd.f32 0.0, %v5170
        %v5172 = vpop.f32.mrb[0].mxu0
        %5173 = vmatprep.mubr.bf16.mxu0 0
        %5174 = vmatmul.mubr.bf16.gmra.mrb[0].mxu0 %v4832
        %v5175 = vpop.f32.mrb[0].mxu0
        %v5176 = vadd.f32 0.0, %v5175
        %v5177 = vpop.f32.mrb[0].mxu0
        %v5178 = vpop.f32.mrb[0].mxu0
        %v5179 = vadd.f32 0.0, %v5178
        %v5180 = vpop.f32.mrb[0].mxu0
        %5181 = vmatprep.mubr.bf16.mxu0 0
        %5182 = vmatmul.mubr.bf16.gmra.mrb[0].mxu0 %v4833
        %v5183 = vpop.f32.mrb[0].mxu0
        %v5184 = vadd.f32 0.0, %v5183
        %v5185 = vpop.f32.mrb[0].mxu0
        %v5186 = vpop.f32.mrb[0].mxu0
        %v5187 = vadd.f32 0.0, %v5186
        %v5188 = vpop.f32.mrb[0].mxu0
        %5189 = vmatprep.mubr.bf16.mxu0 0
        %5190 = vmatmul.mubr.bf16.gmra.mrb[0].mxu0 %v4834
        %v5191 = vpop.f32.mrb[0].mxu0
        %v5192 = vadd.f32 0.0, %v5191
        %v5193 = vpop.f32.mrb[0].mxu0
        %v5194 = vpop.f32.mrb[0].mxu0
        %v5195 = vadd.f32 0.0, %v5194
        %v5196 = vpop.f32.mrb[0].mxu0
        %5197 = vmatprep.mubr.bf16.mxu0 0
        %5198 = vmatmul.mubr.bf16.gmra.mrb[0].mxu0 %v4835
        %v5199 = vpop.f32.mrb[0].mxu0
        %v5200 = vadd.f32 0.0, %v5199
        %v5201 = vpop.f32.mrb[0].mxu0
        %v5202 = vpop.f32.mrb[0].mxu0
        %v5203 = vadd.f32 0.0, %v5202
        %v5204 = vpop.f32.mrb[0].mxu0
        %5205 = vdwg.mxu0
        %v5206 = vld [vmem:[#allocation5] sm:$0xff]
        %v5207 = vld [vmem:[#allocation5 + $0x8] sm:$0xff]
        %v5208 = vld [vmem:[#allocation5 + $0x10] sm:$0xff]
        %v5209 = vld [vmem:[#allocation5 + $0x18] sm:$0xff]
        %v5210 = vld [vmem:[#allocation5 + $0x20] sm:$0xff]
        %v5211 = vld [vmem:[#allocation5 + $0x28] sm:$0xff]
        %v5212 = vld [vmem:[#allocation5 + $0x30] sm:$0xff]
        %v5213 = vld [vmem:[#allocation5 + $0x38] sm:$0xff]
        %v5214 = vld [vmem:[#allocation5 + $0x40] sm:$0xff]
        %v5215 = vld [vmem:[#allocation5 + $0x48] sm:$0xff]
        %v5216 = vld [vmem:[#allocation5 + $0x50] sm:$0xff]
        %v5217 = vld [vmem:[#allocation5 + $0x58] sm:$0xff]
        %v5218 = vld [vmem:[#allocation5 + $0x60] sm:$0xff]
        %v5219 = vld [vmem:[#allocation5 + $0x68] sm:$0xff]
        %v5220 = vld [vmem:[#allocation5 + $0x70] sm:$0xff]
        %v5221 = vld [vmem:[#allocation5 + $0x78] sm:$0xff]
        %v5222 = vld [vmem:[#allocation5 + $0x80] sm:$0xff]
        %v5223 = vld [vmem:[#allocation5 + $0x88] sm:$0xff]
        %v5224 = vld [vmem:[#allocation5 + $0x90] sm:$0xff]
        %v5225 = vld [vmem:[#allocation5 + $0x98] sm:$0xff]
        %v5226 = vld [vmem:[#allocation5 + $0xa0] sm:$0xff]
        %v5227 = vld [vmem:[#allocation5 + $0xa8] sm:$0xff]
        %v5228 = vld [vmem:[#allocation5 + $0xb0] sm:$0xff]
        %v5229 = vld [vmem:[#allocation5 + $0xb8] sm:$0xff]
        %v5230 = vld [vmem:[#allocation5 + $0xc0] sm:$0xff]
        %v5231 = vld [vmem:[#allocation5 + $0xc8] sm:$0xff]
        %v5232 = vld [vmem:[#allocation5 + $0xd0] sm:$0xff]
        %v5233 = vld [vmem:[#allocation5 + $0xd8] sm:$0xff]
        %v5234 = vld [vmem:[#allocation5 + $0xe0] sm:$0xff]
        %v5235 = vld [vmem:[#allocation5 + $0xe8] sm:$0xff]
        %v5236 = vld [vmem:[#allocation5 + $0xf0] sm:$0xff]
        %v5237 = vld [vmem:[#allocation5 + $0xf8] sm:$0xff]
        %v5238 = vld [vmem:[#allocation5 + $0x100] sm:$0xff]
        %v5239 = vld [vmem:[#allocation5 + $0x108] sm:$0xff]
        %v5240 = vld [vmem:[#allocation5 + $0x110] sm:$0xff]
        %v5241 = vld [vmem:[#allocation5 + $0x118] sm:$0xff]
        %v5242 = vld [vmem:[#allocation5 + $0x120] sm:$0xff]
        %v5243 = vld [vmem:[#allocation5 + $0x128] sm:$0xff]
        %v5244 = vld [vmem:[#allocation5 + $0x130] sm:$0xff]
        %v5245 = vld [vmem:[#allocation5 + $0x138] sm:$0xff]
        %v5246 = vld [vmem:[#allocation5 + $0x140] sm:$0xff]
        %v5247 = vld [vmem:[#allocation5 + $0x148] sm:$0xff]
        %v5248 = vld [vmem:[#allocation5 + $0x150] sm:$0xff]
        %v5249 = vld [vmem:[#allocation5 + $0x158] sm:$0xff]
        %v5250 = vld [vmem:[#allocation5 + $0x160] sm:$0xff]
        %v5251 = vld [vmem:[#allocation5 + $0x168] sm:$0xff]
        %v5252 = vld [vmem:[#allocation5 + $0x170] sm:$0xff]
        %v5253 = vld [vmem:[#allocation5 + $0x178] sm:$0xff]
        %v5254 = vld [vmem:[#allocation5 + $0x180] sm:$0xff]
        %v5255 = vld [vmem:[#allocation5 + $0x188] sm:$0xff]
        %v5256 = vld [vmem:[#allocation5 + $0x190] sm:$0xff]
        %v5257 = vld [vmem:[#allocation5 + $0x198] sm:$0xff]
        %v5258 = vld [vmem:[#allocation5 + $0x1a0] sm:$0xff]
        %v5259 = vld [vmem:[#allocation5 + $0x1a8] sm:$0xff]
        %v5260 = vld [vmem:[#allocation5 + $0x1b0] sm:$0xff]
        %v5261 = vld [vmem:[#allocation5 + $0x1b8] sm:$0xff]
        %v5262 = vld [vmem:[#allocation5 + $0x1c0] sm:$0xff]
        %v5263 = vld [vmem:[#allocation5 + $0x1c8] sm:$0xff]
        %v5264 = vld [vmem:[#allocation5 + $0x1d0] sm:$0xff]
        %v5265 = vld [vmem:[#allocation5 + $0x1d8] sm:$0xff]
        %v5266 = vld [vmem:[#allocation5 + $0x1e0] sm:$0xff]
        %v5267 = vld [vmem:[#allocation5 + $0x1e8] sm:$0xff]
        %v5268 = vld [vmem:[#allocation5 + $0x1f0] sm:$0xff]
        %v5269 = vld [vmem:[#allocation5 + $0x1f8] sm:$0xff]
        %v5270 = vld [vmem:[#allocation5 + $0x200] sm:$0xff]
        %v5271 = vld [vmem:[#allocation5 + $0x208] sm:$0xff]
        %v5272 = vld [vmem:[#allocation5 + $0x210] sm:$0xff]
        %v5273 = vld [vmem:[#allocation5 + $0x218] sm:$0xff]
        %v5274 = vadd.f32 %v5206, %v4936
        %v5275 = vadd.f32 %v5207, %v4939
        %v5276 = vadd.f32 %v5208, %v4944
        %v5277 = vadd.f32 %v5209, %v4947
        %v5278 = vadd.f32 %v5210, %v4952
        %v5279 = vadd.f32 %v5211, %v4955
        %v5280 = vadd.f32 %v5212, %v4960
        %v5281 = vadd.f32 %v5213, %v4963
        %v5282 = vadd.f32 %v5214, %v4968
        %v5283 = vadd.f32 %v5215, %v4971
        %v5284 = vadd.f32 %v5216, %v4976
        %v5285 = vadd.f32 %v5217, %v4979
        %v5286 = vadd.f32 %v5218, %v4984
        %v5287 = vadd.f32 %v5219, %v4987
        %v5288 = vadd.f32 %v5220, %v4992
        %v5289 = vadd.f32 %v5221, %v4995
        %v5290 = vadd.f32 %v5222, %v5000
        %v5291 = vadd.f32 %v5223, %v5003
        %v5292 = vadd.f32 %v5224, %v5008
        %v5293 = vadd.f32 %v5225, %v5011
        %v5294 = vadd.f32 %v5226, %v5016
        %v5295 = vadd.f32 %v5227, %v5019
        %v5296 = vadd.f32 %v5228, %v5024
        %v5297 = vadd.f32 %v5229, %v5027
        %v5298 = vadd.f32 %v5230, %v5032
        %v5299 = vadd.f32 %v5231, %v5035
        %v5300 = vadd.f32 %v5232, %v5040
        %v5301 = vadd.f32 %v5233, %v5043
        %v5302 = vadd.f32 %v5234, %v5048
        %v5303 = vadd.f32 %v5235, %v5051
        %v5304 = vadd.f32 %v5236, %v5056
        %v5305 = vadd.f32 %v5237, %v5059
        %v5306 = vadd.f32 %v5238, %v5064
        %v5307 = vadd.f32 %v5239, %v5067
        %v5308 = vadd.f32 %v5240, %v5072
        %v5309 = vadd.f32 %v5241, %v5075
        %v5310 = vadd.f32 %v5242, %v5080
        %v5311 = vadd.f32 %v5243, %v5083
        %v5312 = vadd.f32 %v5244, %v5088
        %v5313 = vadd.f32 %v5245, %v5091
        %v5314 = vadd.f32 %v5246, %v5096
        %v5315 = vadd.f32 %v5247, %v5099
        %v5316 = vadd.f32 %v5248, %v5104
        %v5317 = vadd.f32 %v5249, %v5107
        %v5318 = vadd.f32 %v5250, %v5112
        %v5319 = vadd.f32 %v5251, %v5115
        %v5320 = vadd.f32 %v5252, %v5120
        %v5321 = vadd.f32 %v5253, %v5123
        %v5322 = vadd.f32 %v5254, %v5128
        %v5323 = vadd.f32 %v5255, %v5131
        %v5324 = vadd.f32 %v5256, %v5136
        %v5325 = vadd.f32 %v5257, %v5139
        %v5326 = vadd.f32 %v5258, %v5144
        %v5327 = vadd.f32 %v5259, %v5147
        %v5328 = vadd.f32 %v5260, %v5152
        %v5329 = vadd.f32 %v5261, %v5155
        %v5330 = vadd.f32 %v5262, %v5160
        %v5331 = vadd.f32 %v5263, %v5163
        %v5332 = vadd.f32 %v5264, %v5168
        %v5333 = vadd.f32 %v5265, %v5171
        %v5334 = vadd.f32 %v5266, %v5176
        %v5335 = vadd.f32 %v5267, %v5179
        %v5336 = vadd.f32 %v5268, %v5184
        %v5337 = vadd.f32 %v5269, %v5187
        %v5338 = vadd.f32 %v5270, %v5192
        %v5339 = vadd.f32 %v5271, %v5195
        %v5340 = vadd.f32 %v5272, %v5200
        %v5341 = vadd.f32 %v5273, %v5203
        %5342 = vst [vmem:[#allocation5] sm:$0xff] %v5274
        %5343 = vst [vmem:[#allocation5 + $0x8] sm:$0xff] %v5275
        %5344 = vst [vmem:[#allocation5 + $0x10] sm:$0xff] %v5276
        %5345 = vst [vmem:[#allocation5 + $0x18] sm:$0xff] %v5277
        %5346 = vst [vmem:[#allocation5 + $0x20] sm:$0xff] %v5278
        %5347 = vst [vmem:[#allocation5 + $0x28] sm:$0xff] %v5279
        %5348 = vst [vmem:[#allocation5 + $0x30] sm:$0xff] %v5280
        %5349 = vst [vmem:[#allocation5 + $0x38] sm:$0xff] %v5281
        %5350 = vst [vmem:[#allocation5 + $0x40] sm:$0xff] %v5282
        %5351 = vst [vmem:[#allocation5 + $0x48] sm:$0xff] %v5283
        %5352 = vst [vmem:[#allocation5 + $0x50] sm:$0xff] %v5284
        %5353 = vst [vmem:[#allocation5 + $0x58] sm:$0xff] %v5285
        %5354 = vst [vmem:[#allocation5 + $0x60] sm:$0xff] %v5286
        %5355 = vst [vmem:[#allocation5 + $0x68] sm:$0xff] %v5287
        %5356 = vst [vmem:[#allocation5 + $0x70] sm:$0xff] %v5288
        %5357 = vst [vmem:[#allocation5 + $0x78] sm:$0xff] %v5289
        %5358 = vst [vmem:[#allocation5 + $0x80] sm:$0xff] %v5290
        %5359 = vst [vmem:[#allocation5 + $0x88] sm:$0xff] %v5291
        %5360 = vst [vmem:[#allocation5 + $0x90] sm:$0xff] %v5292
        %5361 = vst [vmem:[#allocation5 + $0x98] sm:$0xff] %v5293
        %5362 = vst [vmem:[#allocation5 + $0xa0] sm:$0xff] %v5294
        %5363 = vst [vmem:[#allocation5 + $0xa8] sm:$0xff] %v5295
        %5364 = vst [vmem:[#allocation5 + $0xb0] sm:$0xff] %v5296
        %5365 = vst [vmem:[#allocation5 + $0xb8] sm:$0xff] %v5297
        %5366 = vst [vmem:[#allocation5 + $0xc0] sm:$0xff] %v5298
        %5367 = vst [vmem:[#allocation5 + $0xc8] sm:$0xff] %v5299
        %5368 = vst [vmem:[#allocation5 + $0xd0] sm:$0xff] %v5300
        %5369 = vst [vmem:[#allocation5 + $0xd8] sm:$0xff] %v5301
        %5370 = vst [vmem:[#allocation5 + $0xe0] sm:$0xff] %v5302
        %5371 = vst [vmem:[#allocation5 + $0xe8] sm:$0xff] %v5303
        %5372 = vst [vmem:[#allocation5 + $0xf0] sm:$0xff] %v5304
        %5373 = vst [vmem:[#allocation5 + $0xf8] sm:$0xff] %v5305
        %5374 = vst [vmem:[#allocation5 + $0x100] sm:$0xff] %v5306
        %5375 = vst [vmem:[#allocation5 + $0x108] sm:$0xff] %v5307
        %5376 = vst [vmem:[#allocation5 + $0x110] sm:$0xff] %v5308
        %5377 = vst [vmem:[#allocation5 + $0x118] sm:$0xff] %v5309
        %5378 = vst [vmem:[#allocation5 + $0x120] sm:$0xff] %v5310
        %5379 = vst [vmem:[#allocation5 + $0x128] sm:$0xff] %v5311
        %5380 = vst [vmem:[#allocation5 + $0x130] sm:$0xff] %v5312
        %5381 = vst [vmem:[#allocation5 + $0x138] sm:$0xff] %v5313
        %5382 = vst [vmem:[#allocation5 + $0x140] sm:$0xff] %v5314
        %5383 = vst [vmem:[#allocation5 + $0x148] sm:$0xff] %v5315
        %5384 = vst [vmem:[#allocation5 + $0x150] sm:$0xff] %v5316
        %5385 = vst [vmem:[#allocation5 + $0x158] sm:$0xff] %v5317
        %5386 = vst [vmem:[#allocation5 + $0x160] sm:$0xff] %v5318
        %5387 = vst [vmem:[#allocation5 + $0x168] sm:$0xff] %v5319
        %5388 = vst [vmem:[#allocation5 + $0x170] sm:$0xff] %v5320
        %5389 = vst [vmem:[#allocation5 + $0x178] sm:$0xff] %v5321
        %5390 = vst [vmem:[#allocation5 + $0x180] sm:$0xff] %v5322
        %5391 = vst [vmem:[#allocation5 + $0x188] sm:$0xff] %v5323
        %5392 = vst [vmem:[#allocation5 + $0x190] sm:$0xff] %v5324
        %5393 = vst [vmem:[#allocation5 + $0x198] sm:$0xff] %v5325
        %5394 = vst [vmem:[#allocation5 + $0x1a0] sm:$0xff] %v5326
        %5395 = vst [vmem:[#allocation5 + $0x1a8] sm:$0xff] %v5327
        %5396 = vst [vmem:[#allocation5 + $0x1b0] sm:$0xff] %v5328
        %5397 = vst [vmem:[#allocation5 + $0x1b8] sm:$0xff] %v5329
        %5398 = vst [vmem:[#allocation5 + $0x1c0] sm:$0xff] %v5330
        %5399 = vst [vmem:[#allocation5 + $0x1c8] sm:$0xff] %v5331
        %5400 = vst [vmem:[#allocation5 + $0x1d0] sm:$0xff] %v5332
        %5401 = vst [vmem:[#allocation5 + $0x1d8] sm:$0xff] %v5333
        %5402 = vst [vmem:[#allocation5 + $0x1e0] sm:$0xff] %v5334
        %5403 = vst [vmem:[#allocation5 + $0x1e8] sm:$0xff] %v5335
        %5404 = vst [vmem:[#allocation5 + $0x1f0] sm:$0xff] %v5336
        %5405 = vst [vmem:[#allocation5 + $0x1f8] sm:$0xff] %v5337
        %5406 = vst [vmem:[#allocation5 + $0x200] sm:$0xff] %v5338
        %5407 = vst [vmem:[#allocation5 + $0x208] sm:$0xff] %v5339
        %5408 = vst [vmem:[#allocation5 + $0x210] sm:$0xff] %v5340
        %5409 = vst [vmem:[#allocation5 + $0x218] sm:$0xff] %v5341
        %v5410 = vld [vmem:[#allocation2 + $0x30] sm:$0xff]
        %v5411 = vld [vmem:[#allocation2 + $0x38] sm:$0xff]
        %v5412 = vld [vmem:[#allocation2 + $0x40] sm:$0xff]
        %v5413 = vld [vmem:[#allocation2 + $0x48] sm:$0xff]
        %v5414 = vld [vmem:[#allocation2 + $0x50] sm:$0xff]
        %v5415 = vld [vmem:[#allocation2 + $0x58] sm:$0xff]
        %v5416 = vld [vmem:[#allocation2 + $0x60] sm:$0xff]
        %v5417 = vld [vmem:[#allocation2 + $0x68] sm:$0xff]
        %v5418 = vld [vmem:[#allocation2 + $0x70] sm:$0xff]
        %v5419 = vld [vmem:[#allocation2 + $0x78] sm:$0xff]
        %v5420 = vld [vmem:[#allocation2 + $0x80] sm:$0xff]
        %v5421 = vld [vmem:[#allocation2 + $0x88] sm:$0xff]
        %v5422 = vld [vmem:[#allocation2 + $0x90] sm:$0xff]
        %v5423 = vld [vmem:[#allocation2 + $0x98] sm:$0xff]
        %v5424 = vld [vmem:[#allocation2 + $0xa0] sm:$0xff]
        %v5425 = vld [vmem:[#allocation2 + $0xa8] sm:$0xff]
        %v5426 = vld [vmem:[#allocation2 + $0xb0] sm:$0xff]
        %v5427 = vld [vmem:[#allocation2 + $0xb8] sm:$0xff]
        %v5428 = vld [vmem:[#allocation2 + $0xc0] sm:$0xff]
        %v5429 = vld [vmem:[#allocation2 + $0xc8] sm:$0xff]
        %v5430 = vld [vmem:[#allocation2 + $0xd0] sm:$0xff]
        %v5431 = vld [vmem:[#allocation2 + $0xd8] sm:$0xff]
        %v5432 = vld [vmem:[#allocation2 + $0xe0] sm:$0xff]
        %v5433 = vld [vmem:[#allocation2 + $0xe8] sm:$0xff]
        %v5434 = vld [vmem:[#allocation2 + $0xf0] sm:$0xff]
        %v5435 = vld [vmem:[#allocation2 + $0xf8] sm:$0xff]
        %v5436 = vld [vmem:[#allocation2 + $0x100] sm:$0xff]
        %v5437 = vld [vmem:[#allocation2 + $0x108] sm:$0xff]
        %v5438 = vld [vmem:[#allocation2 + $0x110] sm:$0xff]
        %v5439 = vld [vmem:[#allocation2 + $0x118] sm:$0xff]
        %v5440 = vld [vmem:[#allocation2 + $0x120] sm:$0xff]
        %v5441 = vld [vmem:[#allocation2 + $0x128] sm:$0xff]
        %v5442 = vld [vmem:[#allocation2 + $0x130] sm:$0xff]
        %v5443 = vld [vmem:[#allocation2 + $0x138] sm:$0xff]
        %s5444 = scalar_lea.vmem %s8, 512
        %v5445 = vld [vmem:[%s5444] sm:$0xf]
        %v5446 = vld [vmem:[%s5444 + $0x4] sm:$0xf]
        %v5447 = vld [vmem:[%s5444 + $0x8] sm:$0xf]
        %v5448 = vld [vmem:[%s5444 + $0xc] sm:$0xf]
        %v5449 = vld [vmem:[%s5444 + $0x10] sm:$0xf]
        %v5450 = vld [vmem:[%s5444 + $0x14] sm:$0xf]
        %v5451 = vld [vmem:[%s5444 + $0x18] sm:$0xf]
        %v5452 = vld [vmem:[%s5444 + $0x1c] sm:$0xf]
        %v5453 = vld [vmem:[%s5444 + $0x20] sm:$0xf]
        %v5454 = vld [vmem:[%s5444 + $0x24] sm:$0xf]
        %v5455 = vld [vmem:[%s5444 + $0x28] sm:$0xf]
        %v5456 = vld [vmem:[%s5444 + $0x2c] sm:$0xf]
        %v5457 = vld [vmem:[%s5444 + $0x30] sm:$0xf]
        %v5458 = vld [vmem:[%s5444 + $0x34] sm:$0xf]
        %v5459 = vld [vmem:[%s5444 + $0x38] sm:$0xf]
        %v5460 = vld [vmem:[%s5444 + $0x3c] sm:$0xf]
        %v5477 = vunpack.c.l.b16 %v5445
        %v5478 = vunpack.c.l.b16 %v5446
        %v5479 = vunpack.c.l.b16 %v5447
        %v5480 = vunpack.c.l.b16 %v5448
        %v5481 = vunpack.c.l.b16 %v5449
        %v5482 = vunpack.c.l.b16 %v5450
        %v5483 = vunpack.c.l.b16 %v5451
        %v5484 = vunpack.c.l.b16 %v5452
        %v5485 = vunpack.c.l.b16 %v5453
        %v5486 = vunpack.c.l.b16 %v5454
        %v5487 = vunpack.c.l.b16 %v5455
        %v5488 = vunpack.c.l.b16 %v5456
        %v5489 = vunpack.c.l.b16 %v5457
        %v5490 = vunpack.c.l.b16 %v5458
        %v5491 = vunpack.c.l.b16 %v5459
        %v5492 = vunpack.c.l.b16 %v5460
        %v5493 = vpack.c.b16 %v5478, %v5477
        %v5494 = vpack.c.b16 %v5480, %v5479
        %v5495 = vpack.c.b16 %v5482, %v5481
        %v5496 = vpack.c.b16 %v5484, %v5483
        %v5497 = vpack.c.b16 %v5486, %v5485
        %v5498 = vpack.c.b16 %v5488, %v5487
        %v5499 = vpack.c.b16 %v5490, %v5489
        %v5500 = vpack.c.b16 %v5492, %v5491
        %5509 = vmatprep.subr.bf16.mxu0 0
        %5510 = vmatpush1.bf16.msra.mxu0 %v5493
        %5511 = vmatprep.subr.bf16.mxu0 0
        %5512 = vmatpush1.bf16.msra.mxu0 %v5494
        %5513 = vmatprep.subr.bf16.mxu0 0
        %5514 = vmatpush1.bf16.msra.mxu0 %v5495
        %5515 = vmatprep.subr.bf16.mxu0 0
        %5516 = vmatpush1.bf16.msra.mxu0 %v5496
        %5517 = vmatprep.subr.bf16.mxu0 0
        %5518 = vmatpush1.bf16.msra.mxu0 %v5497
        %5519 = vmatprep.subr.bf16.mxu0 0
        %5520 = vmatpush1.bf16.msra.mxu0 %v5498
        %5521 = vmatprep.subr.bf16.mxu0 0
        %5522 = vmatpush1.bf16.msra.mxu0 %v5499
        %5523 = vmatprep.subr.bf16.mxu0 0
        %5524 = vmatpush1.bf16.msra.mxu0 %v5500
        %5525 = vmatprep.subr.bf16.mxu0 0
        %5526 = vmatpush1.bf16.msra.mxu0 0
        %5527 = vmatprep.subr.bf16.mxu0 0
        %5528 = vmatpush1.bf16.msra.mxu0 0
        %5529 = vmatprep.subr.bf16.mxu0 0
        %5530 = vmatpush1.bf16.msra.mxu0 0
        %5531 = vmatprep.subr.bf16.mxu0 0
        %5532 = vmatpush1.bf16.msra.mxu0 0
        %5533 = vmatprep.subr.bf16.mxu0 0
        %5534 = vmatpush1.bf16.msra.mxu0 0
        %5535 = vmatprep.subr.bf16.mxu0 0
        %5536 = vmatpush1.bf16.msra.mxu0 0
        %5537 = vmatprep.subr.bf16.mxu0 0
        %5538 = vmatpush1.bf16.msra.mxu0 0
        %5539 = vmatprep.subr.bf16.mxu0 0
        %5540 = vmatpush1.bf16.msra.mxu0 0
        %5541 = vmatprep.mubr.bf16.mxu0 0
        %5542 = vmatmul.mubr.bf16.gmra.mrb[0].mxu0 %v5410
        %v5543 = vpop.f32.mrb[0].mxu0
        %v5544 = vadd.f32 0.0, %v5543
        %v5545 = vpop.f32.mrb[0].mxu0
        %v5546 = vpop.f32.mrb[0].mxu0
        %v5547 = vadd.f32 0.0, %v5546
        %v5548 = vpop.f32.mrb[0].mxu0
        %5549 = vmatprep.mubr.bf16.mxu0 0
        %5550 = vmatmul.mubr.bf16.gmra.mrb[0].mxu0 %v5411
        %v5551 = vpop.f32.mrb[0].mxu0
        %v5552 = vadd.f32 0.0, %v5551
        %v5553 = vpop.f32.mrb[0].mxu0
        %v5554 = vpop.f32.mrb[0].mxu0
        %v5555 = vadd.f32 0.0, %v5554
        %v5556 = vpop.f32.mrb[0].mxu0
        %5557 = vmatprep.mubr.bf16.mxu0 0
        %5558 = vmatmul.mubr.bf16.gmra.mrb[0].mxu0 %v5412
        %v5559 = vpop.f32.mrb[0].mxu0
        %v5560 = vadd.f32 0.0, %v5559
        %v5561 = vpop.f32.mrb[0].mxu0
        %v5562 = vpop.f32.mrb[0].mxu0
        %v5563 = vadd.f32 0.0, %v5562
        %v5564 = vpop.f32.mrb[0].mxu0
        %5565 = vmatprep.mubr.bf16.mxu0 0
        %5566 = vmatmul.mubr.bf16.gmra.mrb[0].mxu0 %v5413
        %v5567 = vpop.f32.mrb[0].mxu0
        %v5568 = vadd.f32 0.0, %v5567
        %v5569 = vpop.f32.mrb[0].mxu0
        %v5570 = vpop.f32.mrb[0].mxu0
        %v5571 = vadd.f32 0.0, %v5570
        %v5572 = vpop.f32.mrb[0].mxu0
        %5573 = vmatprep.mubr.bf16.mxu0 0
        %5574 = vmatmul.mubr.bf16.gmra.mrb[0].mxu0 %v5414
        %v5575 = vpop.f32.mrb[0].mxu0
        %v5576 = vadd.f32 0.0, %v5575
        %v5577 = vpop.f32.mrb[0].mxu0
        %v5578 = vpop.f32.mrb[0].mxu0
        %v5579 = vadd.f32 0.0, %v5578
        %v5580 = vpop.f32.mrb[0].mxu0
        %5581 = vmatprep.mubr.bf16.mxu0 0
        %5582 = vmatmul.mubr.bf16.gmra.mrb[0].mxu0 %v5415
        %v5583 = vpop.f32.mrb[0].mxu0
        %v5584 = vadd.f32 0.0, %v5583
        %v5585 = vpop.f32.mrb[0].mxu0
        %v5586 = vpop.f32.mrb[0].mxu0
        %v5587 = vadd.f32 0.0, %v5586
        %v5588 = vpop.f32.mrb[0].mxu0
        %5589 = vmatprep.mubr.bf16.mxu0 0
        %5590 = vmatmul.mubr.bf16.gmra.mrb[0].mxu0 %v5416
        %v5591 = vpop.f32.mrb[0].mxu0
        %v5592 = vadd.f32 0.0, %v5591
        %v5593 = vpop.f32.mrb[0].mxu0
        %v5594 = vpop.f32.mrb[0].mxu0
        %v5595 = vadd.f32 0.0, %v5594
        %v5596 = vpop.f32.mrb[0].mxu0
        %5597 = vmatprep.mubr.bf16.mxu0 0
        %5598 = vmatmul.mubr.bf16.gmra.mrb[0].mxu0 %v5417
        %v5599 = vpop.f32.mrb[0].mxu0
        %v5600 = vadd.f32 0.0, %v5599
        %v5601 = vpop.f32.mrb[0].mxu0
        %v5602 = vpop.f32.mrb[0].mxu0
        %v5603 = vadd.f32 0.0, %v5602
        %v5604 = vpop.f32.mrb[0].mxu0
        %5605 = vmatprep.mubr.bf16.mxu0 0
        %5606 = vmatmul.mubr.bf16.gmra.mrb[0].mxu0 %v5418
        %v5607 = vpop.f32.mrb[0].mxu0
        %v5608 = vadd.f32 0.0, %v5607
        %v5609 = vpop.f32.mrb[0].mxu0
        %v5610 = vpop.f32.mrb[0].mxu0
        %v5611 = vadd.f32 0.0, %v5610
        %v5612 = vpop.f32.mrb[0].mxu0
        %5613 = vmatprep.mubr.bf16.mxu0 0
        %5614 = vmatmul.mubr.bf16.gmra.mrb[0].mxu0 %v5419
        %v5615 = vpop.f32.mrb[0].mxu0
        %v5616 = vadd.f32 0.0, %v5615
        %v5617 = vpop.f32.mrb[0].mxu0
        %v5618 = vpop.f32.mrb[0].mxu0
        %v5619 = vadd.f32 0.0, %v5618
        %v5620 = vpop.f32.mrb[0].mxu0
        %5621 = vmatprep.mubr.bf16.mxu0 0
        %5622 = vmatmul.mubr.bf16.gmra.mrb[0].mxu0 %v5420
        %v5623 = vpop.f32.mrb[0].mxu0
        %v5624 = vadd.f32 0.0, %v5623
        %v5625 = vpop.f32.mrb[0].mxu0
        %v5626 = vpop.f32.mrb[0].mxu0
        %v5627 = vadd.f32 0.0, %v5626
        %v5628 = vpop.f32.mrb[0].mxu0
        %5629 = vmatprep.mubr.bf16.mxu0 0
        %5630 = vmatmul.mubr.bf16.gmra.mrb[0].mxu0 %v5421
        %v5631 = vpop.f32.mrb[0].mxu0
        %v5632 = vadd.f32 0.0, %v5631
        %v5633 = vpop.f32.mrb[0].mxu0
        %v5634 = vpop.f32.mrb[0].mxu0
        %v5635 = vadd.f32 0.0, %v5634
        %v5636 = vpop.f32.mrb[0].mxu0
        %5637 = vmatprep.mubr.bf16.mxu0 0
        %5638 = vmatmul.mubr.bf16.gmra.mrb[0].mxu0 %v5422
        %v5639 = vpop.f32.mrb[0].mxu0
        %v5640 = vadd.f32 0.0, %v5639
        %v5641 = vpop.f32.mrb[0].mxu0
        %v5642 = vpop.f32.mrb[0].mxu0
        %v5643 = vadd.f32 0.0, %v5642
        %v5644 = vpop.f32.mrb[0].mxu0
        %5645 = vmatprep.mubr.bf16.mxu0 0
        %5646 = vmatmul.mubr.bf16.gmra.mrb[0].mxu0 %v5423
        %v5647 = vpop.f32.mrb[0].mxu0
        %v5648 = vadd.f32 0.0, %v5647
        %v5649 = vpop.f32.mrb[0].mxu0
        %v5650 = vpop.f32.mrb[0].mxu0
        %v5651 = vadd.f32 0.0, %v5650
        %v5652 = vpop.f32.mrb[0].mxu0
        %5653 = vmatprep.mubr.bf16.mxu0 0
        %5654 = vmatmul.mubr.bf16.gmra.mrb[0].mxu0 %v5424
        %v5655 = vpop.f32.mrb[0].mxu0
        %v5656 = vadd.f32 0.0, %v5655
        %v5657 = vpop.f32.mrb[0].mxu0
        %v5658 = vpop.f32.mrb[0].mxu0
        %v5659 = vadd.f32 0.0, %v5658
        %v5660 = vpop.f32.mrb[0].mxu0
        %5661 = vmatprep.mubr.bf16.mxu0 0
        %5662 = vmatmul.mubr.bf16.gmra.mrb[0].mxu0 %v5425
        %v5663 = vpop.f32.mrb[0].mxu0
        %v5664 = vadd.f32 0.0, %v5663
        %v5665 = vpop.f32.mrb[0].mxu0
        %v5666 = vpop.f32.mrb[0].mxu0
        %v5667 = vadd.f32 0.0, %v5666
        %v5668 = vpop.f32.mrb[0].mxu0
        %5669 = vmatprep.mubr.bf16.mxu0 0
        %5670 = vmatmul.mubr.bf16.gmra.mrb[0].mxu0 %v5426
        %v5671 = vpop.f32.mrb[0].mxu0
        %v5672 = vadd.f32 0.0, %v5671
        %v5673 = vpop.f32.mrb[0].mxu0
        %v5674 = vpop.f32.mrb[0].mxu0
        %v5675 = vadd.f32 0.0, %v5674
        %v5676 = vpop.f32.mrb[0].mxu0
        %5677 = vmatprep.mubr.bf16.mxu0 0
        %5678 = vmatmul.mubr.bf16.gmra.mrb[0].mxu0 %v5427
        %v5679 = vpop.f32.mrb[0].mxu0
        %v5680 = vadd.f32 0.0, %v5679
        %v5681 = vpop.f32.mrb[0].mxu0
        %v5682 = vpop.f32.mrb[0].mxu0
        %v5683 = vadd.f32 0.0, %v5682
        %v5684 = vpop.f32.mrb[0].mxu0
        %5685 = vmatprep.mubr.bf16.mxu0 0
        %5686 = vmatmul.mubr.bf16.gmra.mrb[0].mxu0 %v5428
        %v5687 = vpop.f32.mrb[0].mxu0
        %v5688 = vadd.f32 0.0, %v5687
        %v5689 = vpop.f32.mrb[0].mxu0
        %v5690 = vpop.f32.mrb[0].mxu0
        %v5691 = vadd.f32 0.0, %v5690
        %v5692 = vpop.f32.mrb[0].mxu0
        %5693 = vmatprep.mubr.bf16.mxu0 0
        %5694 = vmatmul.mubr.bf16.gmra.mrb[0].mxu0 %v5429
        %v5695 = vpop.f32.mrb[0].mxu0
        %v5696 = vadd.f32 0.0, %v5695
        %v5697 = vpop.f32.mrb[0].mxu0
        %v5698 = vpop.f32.mrb[0].mxu0
        %v5699 = vadd.f32 0.0, %v5698
        %v5700 = vpop.f32.mrb[0].mxu0
        %5701 = vmatprep.mubr.bf16.mxu0 0
        %5702 = vmatmul.mubr.bf16.gmra.mrb[0].mxu0 %v5430
        %v5703 = vpop.f32.mrb[0].mxu0
        %v5704 = vadd.f32 0.0, %v5703
        %v5705 = vpop.f32.mrb[0].mxu0
        %v5706 = vpop.f32.mrb[0].mxu0
        %v5707 = vadd.f32 0.0, %v5706
        %v5708 = vpop.f32.mrb[0].mxu0
        %5709 = vmatprep.mubr.bf16.mxu0 0
        %5710 = vmatmul.mubr.bf16.gmra.mrb[0].mxu0 %v5431
        %v5711 = vpop.f32.mrb[0].mxu0
        %v5712 = vadd.f32 0.0, %v5711
        %v5713 = vpop.f32.mrb[0].mxu0
        %v5714 = vpop.f32.mrb[0].mxu0
        %v5715 = vadd.f32 0.0, %v5714
        %v5716 = vpop.f32.mrb[0].mxu0
        %5717 = vmatprep.mubr.bf16.mxu0 0
        %5718 = vmatmul.mubr.bf16.gmra.mrb[0].mxu0 %v5432
        %v5719 = vpop.f32.mrb[0].mxu0
        %v5720 = vadd.f32 0.0, %v5719
        %v5721 = vpop.f32.mrb[0].mxu0
        %v5722 = vpop.f32.mrb[0].mxu0
        %v5723 = vadd.f32 0.0, %v5722
        %v5724 = vpop.f32.mrb[0].mxu0
        %5725 = vmatprep.mubr.bf16.mxu0 0
        %5726 = vmatmul.mubr.bf16.gmra.mrb[0].mxu0 %v5433
        %v5727 = vpop.f32.mrb[0].mxu0
        %v5728 = vadd.f32 0.0, %v5727
        %v5729 = vpop.f32.mrb[0].mxu0
        %v5730 = vpop.f32.mrb[0].mxu0
        %v5731 = vadd.f32 0.0, %v5730
        %v5732 = vpop.f32.mrb[0].mxu0
        %5733 = vmatprep.mubr.bf16.mxu0 0
        %5734 = vmatmul.mubr.bf16.gmra.mrb[0].mxu0 %v5434
        %v5735 = vpop.f32.mrb[0].mxu0
        %v5736 = vadd.f32 0.0, %v5735
        %v5737 = vpop.f32.mrb[0].mxu0
        %v5738 = vpop.f32.mrb[0].mxu0
        %v5739 = vadd.f32 0.0, %v5738
        %v5740 = vpop.f32.mrb[0].mxu0
        %5741 = vmatprep.mubr.bf16.mxu0 0
        %5742 = vmatmul.mubr.bf16.gmra.mrb[0].mxu0 %v5435
        %v5743 = vpop.f32.mrb[0].mxu0
        %v5744 = vadd.f32 0.0, %v5743
        %v5745 = vpop.f32.mrb[0].mxu0
        %v5746 = vpop.f32.mrb[0].mxu0
        %v5747 = vadd.f32 0.0, %v5746
        %v5748 = vpop.f32.mrb[0].mxu0
        %5749 = vmatprep.mubr.bf16.mxu0 0
        %5750 = vmatmul.mubr.bf16.gmra.mrb[0].mxu0 %v5436
        %v5751 = vpop.f32.mrb[0].mxu0
        %v5752 = vadd.f32 0.0, %v5751
        %v5753 = vpop.f32.mrb[0].mxu0
        %v5754 = vpop.f32.mrb[0].mxu0
        %v5755 = vadd.f32 0.0, %v5754
        %v5756 = vpop.f32.mrb[0].mxu0
        %5757 = vmatprep.mubr.bf16.mxu0 0
        %5758 = vmatmul.mubr.bf16.gmra.mrb[0].mxu0 %v5437
        %v5759 = vpop.f32.mrb[0].mxu0
        %v5760 = vadd.f32 0.0, %v5759
        %v5761 = vpop.f32.mrb[0].mxu0
        %v5762 = vpop.f32.mrb[0].mxu0
        %v5763 = vadd.f32 0.0, %v5762
        %v5764 = vpop.f32.mrb[0].mxu0
        %5765 = vmatprep.mubr.bf16.mxu0 0
        %5766 = vmatmul.mubr.bf16.gmra.mrb[0].mxu0 %v5438
        %v5767 = vpop.f32.mrb[0].mxu0
        %v5768 = vadd.f32 0.0, %v5767
        %v5769 = vpop.f32.mrb[0].mxu0
        %v5770 = vpop.f32.mrb[0].mxu0
        %v5771 = vadd.f32 0.0, %v5770
        %v5772 = vpop.f32.mrb[0].mxu0
        %5773 = vmatprep.mubr.bf16.mxu0 0
        %5774 = vmatmul.mubr.bf16.gmra.mrb[0].mxu0 %v5439
        %v5775 = vpop.f32.mrb[0].mxu0
        %v5776 = vadd.f32 0.0, %v5775
        %v5777 = vpop.f32.mrb[0].mxu0
        %v5778 = vpop.f32.mrb[0].mxu0
        %v5779 = vadd.f32 0.0, %v5778
        %v5780 = vpop.f32.mrb[0].mxu0
        %5781 = vmatprep.mubr.bf16.mxu0 0
        %5782 = vmatmul.mubr.bf16.gmra.mrb[0].mxu0 %v5440
        %v5783 = vpop.f32.mrb[0].mxu0
        %v5784 = vadd.f32 0.0, %v5783
        %v5785 = vpop.f32.mrb[0].mxu0
        %v5786 = vpop.f32.mrb[0].mxu0
        %v5787 = vadd.f32 0.0, %v5786
        %v5788 = vpop.f32.mrb[0].mxu0
        %5789 = vmatprep.mubr.bf16.mxu0 0
        %5790 = vmatmul.mubr.bf16.gmra.mrb[0].mxu0 %v5441
        %v5791 = vpop.f32.mrb[0].mxu0
        %v5792 = vadd.f32 0.0, %v5791
        %v5793 = vpop.f32.mrb[0].mxu0
        %v5794 = vpop.f32.mrb[0].mxu0
        %v5795 = vadd.f32 0.0, %v5794
        %v5796 = vpop.f32.mrb[0].mxu0
        %5797 = vmatprep.mubr.bf16.mxu0 0
        %5798 = vmatmul.mubr.bf16.gmra.mrb[0].mxu0 %v5442
        %v5799 = vpop.f32.mrb[0].mxu0
        %v5800 = vadd.f32 0.0, %v5799
        %v5801 = vpop.f32.mrb[0].mxu0
        %v5802 = vpop.f32.mrb[0].mxu0
        %v5803 = vadd.f32 0.0, %v5802
        %v5804 = vpop.f32.mrb[0].mxu0
        %5805 = vmatprep.mubr.bf16.mxu0 0
        %5806 = vmatmul.mubr.bf16.gmra.mrb[0].mxu0 %v5443
        %v5807 = vpop.f32.mrb[0].mxu0
        %v5808 = vadd.f32 0.0, %v5807
        %v5809 = vpop.f32.mrb[0].mxu0
        %v5810 = vpop.f32.mrb[0].mxu0
        %v5811 = vadd.f32 0.0, %v5810
        %v5812 = vpop.f32.mrb[0].mxu0
        %5813 = vdwg.mxu0
        %v5814 = vld [vmem:[#allocation5] sm:$0xff]
        %v5815 = vld [vmem:[#allocation5 + $0x8] sm:$0xff]
        %v5816 = vld [vmem:[#allocation5 + $0x10] sm:$0xff]
        %v5817 = vld [vmem:[#allocation5 + $0x18] sm:$0xff]
        %v5818 = vld [vmem:[#allocation5 + $0x20] sm:$0xff]
        %v5819 = vld [vmem:[#allocation5 + $0x28] sm:$0xff]
        %v5820 = vld [vmem:[#allocation5 + $0x30] sm:$0xff]
        %v5821 = vld [vmem:[#allocation5 + $0x38] sm:$0xff]
        %v5822 = vld [vmem:[#allocation5 + $0x40] sm:$0xff]
        %v5823 = vld [vmem:[#allocation5 + $0x48] sm:$0xff]
        %v5824 = vld [vmem:[#allocation5 + $0x50] sm:$0xff]
        %v5825 = vld [vmem:[#allocation5 + $0x58] sm:$0xff]
        %v5826 = vld [vmem:[#allocation5 + $0x60] sm:$0xff]
        %v5827 = vld [vmem:[#allocation5 + $0x68] sm:$0xff]
        %v5828 = vld [vmem:[#allocation5 + $0x70] sm:$0xff]
        %v5829 = vld [vmem:[#allocation5 + $0x78] sm:$0xff]
        %v5830 = vld [vmem:[#allocation5 + $0x80] sm:$0xff]
        %v5831 = vld [vmem:[#allocation5 + $0x88] sm:$0xff]
        %v5832 = vld [vmem:[#allocation5 + $0x90] sm:$0xff]
        %v5833 = vld [vmem:[#allocation5 + $0x98] sm:$0xff]
        %v5834 = vld [vmem:[#allocation5 + $0xa0] sm:$0xff]
        %v5835 = vld [vmem:[#allocation5 + $0xa8] sm:$0xff]
        %v5836 = vld [vmem:[#allocation5 + $0xb0] sm:$0xff]
        %v5837 = vld [vmem:[#allocation5 + $0xb8] sm:$0xff]
        %v5838 = vld [vmem:[#allocation5 + $0xc0] sm:$0xff]
        %v5839 = vld [vmem:[#allocation5 + $0xc8] sm:$0xff]
        %v5840 = vld [vmem:[#allocation5 + $0xd0] sm:$0xff]
        %v5841 = vld [vmem:[#allocation5 + $0xd8] sm:$0xff]
        %v5842 = vld [vmem:[#allocation5 + $0xe0] sm:$0xff]
        %v5843 = vld [vmem:[#allocation5 + $0xe8] sm:$0xff]
        %v5844 = vld [vmem:[#allocation5 + $0xf0] sm:$0xff]
        %v5845 = vld [vmem:[#allocation5 + $0xf8] sm:$0xff]
        %v5846 = vld [vmem:[#allocation5 + $0x100] sm:$0xff]
        %v5847 = vld [vmem:[#allocation5 + $0x108] sm:$0xff]
        %v5848 = vld [vmem:[#allocation5 + $0x110] sm:$0xff]
        %v5849 = vld [vmem:[#allocation5 + $0x118] sm:$0xff]
        %v5850 = vld [vmem:[#allocation5 + $0x120] sm:$0xff]
        %v5851 = vld [vmem:[#allocation5 + $0x128] sm:$0xff]
        %v5852 = vld [vmem:[#allocation5 + $0x130] sm:$0xff]
        %v5853 = vld [vmem:[#allocation5 + $0x138] sm:$0xff]
        %v5854 = vld [vmem:[#allocation5 + $0x140] sm:$0xff]
        %v5855 = vld [vmem:[#allocation5 + $0x148] sm:$0xff]
        %v5856 = vld [vmem:[#allocation5 + $0x150] sm:$0xff]
        %v5857 = vld [vmem:[#allocation5 + $0x158] sm:$0xff]
        %v5858 = vld [vmem:[#allocation5 + $0x160] sm:$0xff]
        %v5859 = vld [vmem:[#allocation5 + $0x168] sm:$0xff]
        %v5860 = vld [vmem:[#allocation5 + $0x170] sm:$0xff]
        %v5861 = vld [vmem:[#allocation5 + $0x178] sm:$0xff]
        %v5862 = vld [vmem:[#allocation5 + $0x180] sm:$0xff]
        %v5863 = vld [vmem:[#allocation5 + $0x188] sm:$0xff]
        %v5864 = vld [vmem:[#allocation5 + $0x190] sm:$0xff]
        %v5865 = vld [vmem:[#allocation5 + $0x198] sm:$0xff]
        %v5866 = vld [vmem:[#allocation5 + $0x1a0] sm:$0xff]
        %v5867 = vld [vmem:[#allocation5 + $0x1a8] sm:$0xff]
        %v5868 = vld [vmem:[#allocation5 + $0x1b0] sm:$0xff]
        %v5869 = vld [vmem:[#allocation5 + $0x1b8] sm:$0xff]
        %v5870 = vld [vmem:[#allocation5 + $0x1c0] sm:$0xff]
        %v5871 = vld [vmem:[#allocation5 + $0x1c8] sm:$0xff]
        %v5872 = vld [vmem:[#allocation5 + $0x1d0] sm:$0xff]
        %v5873 = vld [vmem:[#allocation5 + $0x1d8] sm:$0xff]
        %v5874 = vld [vmem:[#allocation5 + $0x1e0] sm:$0xff]
        %v5875 = vld [vmem:[#allocation5 + $0x1e8] sm:$0xff]
        %v5876 = vld [vmem:[#allocation5 + $0x1f0] sm:$0xff]
        %v5877 = vld [vmem:[#allocation5 + $0x1f8] sm:$0xff]
        %v5878 = vld [vmem:[#allocation5 + $0x200] sm:$0xff]
        %v5879 = vld [vmem:[#allocation5 + $0x208] sm:$0xff]
        %v5880 = vld [vmem:[#allocation5 + $0x210] sm:$0xff]
        %v5881 = vld [vmem:[#allocation5 + $0x218] sm:$0xff]
        %v5882 = vadd.f32 %v5814, %v5544
        %v5883 = vadd.f32 %v5815, %v5547
        %v5884 = vadd.f32 %v5816, %v5552
        %v5885 = vadd.f32 %v5817, %v5555
        %v5886 = vadd.f32 %v5818, %v5560
        %v5887 = vadd.f32 %v5819, %v5563
        %v5888 = vadd.f32 %v5820, %v5568
        %v5889 = vadd.f32 %v5821, %v5571
        %v5890 = vadd.f32 %v5822, %v5576
        %v5891 = vadd.f32 %v5823, %v5579
        %v5892 = vadd.f32 %v5824, %v5584
        %v5893 = vadd.f32 %v5825, %v5587
        %v5894 = vadd.f32 %v5826, %v5592
        %v5895 = vadd.f32 %v5827, %v5595
        %v5896 = vadd.f32 %v5828, %v5600
        %v5897 = vadd.f32 %v5829, %v5603
        %v5898 = vadd.f32 %v5830, %v5608
        %v5899 = vadd.f32 %v5831, %v5611
        %v5900 = vadd.f32 %v5832, %v5616
        %v5901 = vadd.f32 %v5833, %v5619
        %v5902 = vadd.f32 %v5834, %v5624
        %v5903 = vadd.f32 %v5835, %v5627
        %v5904 = vadd.f32 %v5836, %v5632
        %v5905 = vadd.f32 %v5837, %v5635
        %v5906 = vadd.f32 %v5838, %v5640
        %v5907 = vadd.f32 %v5839, %v5643
        %v5908 = vadd.f32 %v5840, %v5648
        %v5909 = vadd.f32 %v5841, %v5651
        %v5910 = vadd.f32 %v5842, %v5656
        %v5911 = vadd.f32 %v5843, %v5659
        %v5912 = vadd.f32 %v5844, %v5664
        %v5913 = vadd.f32 %v5845, %v5667
        %v5914 = vadd.f32 %v5846, %v5672
        %v5915 = vadd.f32 %v5847, %v5675
        %v5916 = vadd.f32 %v5848, %v5680
        %v5917 = vadd.f32 %v5849, %v5683
        %v5918 = vadd.f32 %v5850, %v5688
        %v5919 = vadd.f32 %v5851, %v5691
        %v5920 = vadd.f32 %v5852, %v5696
        %v5921 = vadd.f32 %v5853, %v5699
        %v5922 = vadd.f32 %v5854, %v5704
        %v5923 = vadd.f32 %v5855, %v5707
        %v5924 = vadd.f32 %v5856, %v5712
        %v5925 = vadd.f32 %v5857, %v5715
        %v5926 = vadd.f32 %v5858, %v5720
        %v5927 = vadd.f32 %v5859, %v5723
        %v5928 = vadd.f32 %v5860, %v5728
        %v5929 = vadd.f32 %v5861, %v5731
        %v5930 = vadd.f32 %v5862, %v5736
        %v5931 = vadd.f32 %v5863, %v5739
        %v5932 = vadd.f32 %v5864, %v5744
        %v5933 = vadd.f32 %v5865, %v5747
        %v5934 = vadd.f32 %v5866, %v5752
        %v5935 = vadd.f32 %v5867, %v5755
        %v5936 = vadd.f32 %v5868, %v5760
        %v5937 = vadd.f32 %v5869, %v5763
        %v5938 = vadd.f32 %v5870, %v5768
        %v5939 = vadd.f32 %v5871, %v5771
        %v5940 = vadd.f32 %v5872, %v5776
        %v5941 = vadd.f32 %v5873, %v5779
        %v5942 = vadd.f32 %v5874, %v5784
        %v5943 = vadd.f32 %v5875, %v5787
        %v5944 = vadd.f32 %v5876, %v5792
        %v5945 = vadd.f32 %v5877, %v5795
        %v5946 = vadd.f32 %v5878, %v5800
        %v5947 = vadd.f32 %v5879, %v5803
        %v5948 = vadd.f32 %v5880, %v5808
        %v5949 = vadd.f32 %v5881, %v5811
        %5950 = vst [vmem:[#allocation5] sm:$0xff] %v5882
        %5951 = vst [vmem:[#allocation5 + $0x8] sm:$0xff] %v5883
        %5952 = vst [vmem:[#allocation5 + $0x10] sm:$0xff] %v5884
        %5953 = vst [vmem:[#allocation5 + $0x18] sm:$0xff] %v5885
        %5954 = vst [vmem:[#allocation5 + $0x20] sm:$0xff] %v5886
        %5955 = vst [vmem:[#allocation5 + $0x28] sm:$0xff] %v5887
        %5956 = vst [vmem:[#allocation5 + $0x30] sm:$0xff] %v5888
        %5957 = vst [vmem:[#allocation5 + $0x38] sm:$0xff] %v5889
        %5958 = vst [vmem:[#allocation5 + $0x40] sm:$0xff] %v5890
        %5959 = vst [vmem:[#allocation5 + $0x48] sm:$0xff] %v5891
        %5960 = vst [vmem:[#allocation5 + $0x50] sm:$0xff] %v5892
        %5961 = vst [vmem:[#allocation5 + $0x58] sm:$0xff] %v5893
        %5962 = vst [vmem:[#allocation5 + $0x60] sm:$0xff] %v5894
        %5963 = vst [vmem:[#allocation5 + $0x68] sm:$0xff] %v5895
        %5964 = vst [vmem:[#allocation5 + $0x70] sm:$0xff] %v5896
        %5965 = vst [vmem:[#allocation5 + $0x78] sm:$0xff] %v5897
        %5966 = vst [vmem:[#allocation5 + $0x80] sm:$0xff] %v5898
        %5967 = vst [vmem:[#allocation5 + $0x88] sm:$0xff] %v5899
        %5968 = vst [vmem:[#allocation5 + $0x90] sm:$0xff] %v5900
        %5969 = vst [vmem:[#allocation5 + $0x98] sm:$0xff] %v5901
        %5970 = vst [vmem:[#allocation5 + $0xa0] sm:$0xff] %v5902
        %5971 = vst [vmem:[#allocation5 + $0xa8] sm:$0xff] %v5903
        %5972 = vst [vmem:[#allocation5 + $0xb0] sm:$0xff] %v5904
        %5973 = vst [vmem:[#allocation5 + $0xb8] sm:$0xff] %v5905
        %5974 = vst [vmem:[#allocation5 + $0xc0] sm:$0xff] %v5906
        %5975 = vst [vmem:[#allocation5 + $0xc8] sm:$0xff] %v5907
        %5976 = vst [vmem:[#allocation5 + $0xd0] sm:$0xff] %v5908
        %5977 = vst [vmem:[#allocation5 + $0xd8] sm:$0xff] %v5909
        %5978 = vst [vmem:[#allocation5 + $0xe0] sm:$0xff] %v5910
        %5979 = vst [vmem:[#allocation5 + $0xe8] sm:$0xff] %v5911
        %5980 = vst [vmem:[#allocation5 + $0xf0] sm:$0xff] %v5912
        %5981 = vst [vmem:[#allocation5 + $0xf8] sm:$0xff] %v5913
        %5982 = vst [vmem:[#allocation5 + $0x100] sm:$0xff] %v5914
        %5983 = vst [vmem:[#allocation5 + $0x108] sm:$0xff] %v5915
        %5984 = vst [vmem:[#allocation5 + $0x110] sm:$0xff] %v5916
        %5985 = vst [vmem:[#allocation5 + $0x118] sm:$0xff] %v5917
        %5986 = vst [vmem:[#allocation5 + $0x120] sm:$0xff] %v5918
        %5987 = vst [vmem:[#allocation5 + $0x128] sm:$0xff] %v5919
        %5988 = vst [vmem:[#allocation5 + $0x130] sm:$0xff] %v5920
        %5989 = vst [vmem:[#allocation5 + $0x138] sm:$0xff] %v5921
        %5990 = vst [vmem:[#allocation5 + $0x140] sm:$0xff] %v5922
        %5991 = vst [vmem:[#allocation5 + $0x148] sm:$0xff] %v5923
        %5992 = vst [vmem:[#allocation5 + $0x150] sm:$0xff] %v5924
        %5993 = vst [vmem:[#allocation5 + $0x158] sm:$0xff] %v5925
        %5994 = vst [vmem:[#allocation5 + $0x160] sm:$0xff] %v5926
        %5995 = vst [vmem:[#allocation5 + $0x168] sm:$0xff] %v5927
        %5996 = vst [vmem:[#allocation5 + $0x170] sm:$0xff] %v5928
        %5997 = vst [vmem:[#allocation5 + $0x178] sm:$0xff] %v5929
        %5998 = vst [vmem:[#allocation5 + $0x180] sm:$0xff] %v5930
        %5999 = vst [vmem:[#allocation5 + $0x188] sm:$0xff] %v5931
        %6000 = vst [vmem:[#allocation5 + $0x190] sm:$0xff] %v5932
        %6001 = vst [vmem:[#allocation5 + $0x198] sm:$0xff] %v5933
        %6002 = vst [vmem:[#allocation5 + $0x1a0] sm:$0xff] %v5934
        %6003 = vst [vmem:[#allocation5 + $0x1a8] sm:$0xff] %v5935
        %6004 = vst [vmem:[#allocation5 + $0x1b0] sm:$0xff] %v5936
        %6005 = vst [vmem:[#allocation5 + $0x1b8] sm:$0xff] %v5937
        %6006 = vst [vmem:[#allocation5 + $0x1c0] sm:$0xff] %v5938
        %6007 = vst [vmem:[#allocation5 + $0x1c8] sm:$0xff] %v5939
        %6008 = vst [vmem:[#allocation5 + $0x1d0] sm:$0xff] %v5940
        %6009 = vst [vmem:[#allocation5 + $0x1d8] sm:$0xff] %v5941
        %6010 = vst [vmem:[#allocation5 + $0x1e0] sm:$0xff] %v5942
        %6011 = vst [vmem:[#allocation5 + $0x1e8] sm:$0xff] %v5943
        %6012 = vst [vmem:[#allocation5 + $0x1f0] sm:$0xff] %v5944
        %6013 = vst [vmem:[#allocation5 + $0x1f8] sm:$0xff] %v5945
        %6014 = vst [vmem:[#allocation5 + $0x200] sm:$0xff] %v5946
        %6015 = vst [vmem:[#allocation5 + $0x208] sm:$0xff] %v5947
        %6016 = vst [vmem:[#allocation5 + $0x210] sm:$0xff] %v5948
        %6017 = vst [vmem:[#allocation5 + $0x218] sm:$0xff] %v5949
        %v6018 = vld [vmem:[#allocation3 + $0xf] sm:$0xff]
        %v6019 = vld [vmem:[#allocation3 + $0x17] sm:$0xff]
        %v6020 = vld [vmem:[#allocation3 + $0x1f] sm:$0xff]
        %v6021 = vld [vmem:[#allocation3 + $0x27] sm:$0xff]
        %v6022 = vld [vmem:[#allocation3 + $0x2f] sm:$0xff]
        %v6023 = vld [vmem:[#allocation3 + $0x37] sm:$0xff]
        %v6024 = vld [vmem:[#allocation3 + $0x3f] sm:$0xff]
        %v6025 = vld [vmem:[#allocation3 + $0x47] sm:$0xff]
        %v6026 = vld [vmem:[#allocation4 + $0x10] sm:$0xff]
        %v6027 = vld [vmem:[#allocation4 + $0x18] sm:$0xff]
        %v6028 = vld [vmem:[#allocation4 + $0x20] sm:$0xff]
        %v6029 = vld [vmem:[#allocation4 + $0x28] sm:$0xff]
        %v6030 = vld [vmem:[#allocation4 + $0x30] sm:$0xff]
        %v6031 = vld [vmem:[#allocation4 + $0x38] sm:$0xff]
        %v6032 = vld [vmem:[#allocation4 + $0x40] sm:$0xff]
        %v6033 = vld [vmem:[#allocation4 + $0x48] sm:$0xff]
        %v6034 = vadd.f32 %v6018, %v6026
        %v6035 = vadd.f32 %v6019, %v6027
        %v6036 = vadd.f32 %v6020, %v6028
        %v6037 = vadd.f32 %v6021, %v6029
        %v6038 = vadd.f32 %v6022, %v6030
        %v6039 = vadd.f32 %v6023, %v6031
        %v6040 = vadd.f32 %v6024, %v6032
        %v6041 = vadd.f32 %v6025, %v6033
        %v6042 = vld [vmem:[#allocation5 + $0x11] sm:$0xff]
        %v6043 = vld [vmem:[#allocation5 + $0x19] sm:$0xff]
        %v6044 = vld [vmem:[#allocation5 + $0x21] sm:$0xff]
        %v6045 = vld [vmem:[#allocation5 + $0x29] sm:$0xff]
        %v6046 = vld [vmem:[#allocation5 + $0x31] sm:$0xff]
        %v6047 = vld [vmem:[#allocation5 + $0x39] sm:$0xff]
        %v6048 = vld [vmem:[#allocation5 + $0x41] sm:$0xff]
        %v6049 = vld [vmem:[#allocation5 + $0x49] sm:$0xff]
        %v6050 = vadd.f32 %v6034, %v6042
        %v6051 = vadd.f32 %v6035, %v6043
        %v6052 = vadd.f32 %v6036, %v6044
        %v6053 = vadd.f32 %v6037, %v6045
        %v6054 = vadd.f32 %v6038, %v6046
        %v6055 = vadd.f32 %v6039, %v6047
        %v6056 = vadd.f32 %v6040, %v6048
        %v6057 = vadd.f32 %v6041, %v6049
        %v6058 = vpack.c.bf16 %v6051, %v6050
        %v6059 = vpack.c.bf16 %v6053, %v6052
        %v6060 = vpack.c.bf16 %v6055, %v6054
        %v6061 = vpack.c.bf16 %v6057, %v6056
        %v6066 = vunpack.c.l.b16 %v6058
        %v6067 = vunpack.c.h.b16 %v6058
        %v6068 = vunpack.c.l.b16 %v6059
        %v6069 = vunpack.c.h.b16 %v6059
        %v6070 = vunpack.c.l.b16 %v6060
        %v6071 = vunpack.c.h.b16 %v6060
        %v6072 = vunpack.c.l.b16 %v6061
        %v6073 = vunpack.c.h.b16 %v6061
        %v6074 = vpack.c.b16 %v6066, %v6066
        %v6075 = vpack.c.b16 %v6067, %v6067
        %v6076 = vpack.c.b16 %v6068, %v6068
        %v6077 = vpack.c.b16 %v6069, %v6069
        %v6078 = vpack.c.b16 %v6070, %v6070
        %v6079 = vpack.c.b16 %v6071, %v6071
        %v6080 = vpack.c.b16 %v6072, %v6072
        %v6081 = vpack.c.b16 %v6073, %v6073
        %6090 = vst [vmem:[%s517] sm:$0xf] %v6074
        %6091 = vst [vmem:[%s517 + $0x4] sm:$0xf] %v6075
        %6092 = vst [vmem:[%s517 + $0x8] sm:$0xf] %v6076
        %6093 = vst [vmem:[%s517 + $0xc] sm:$0xf] %v6077
        %6094 = vst [vmem:[%s517 + $0x10] sm:$0xf] %v6078
        %6095 = vst [vmem:[%s517 + $0x14] sm:$0xf] %v6079
        %6096 = vst [vmem:[%s517 + $0x18] sm:$0xf] %v6080
        %6097 = vst [vmem:[%s517 + $0x1c] sm:$0xf] %v6081
        %v6098 = vunpack.c.l.bf16 %v6058
        %v6099 = vunpack.c.h.bf16 %v6058
        %v6100 = vunpack.c.l.bf16 %v6059
        %v6101 = vunpack.c.h.bf16 %v6059
        %v6102 = vunpack.c.l.bf16 %v6060
        %v6103 = vunpack.c.h.bf16 %v6060
        %v6104 = vunpack.c.l.bf16 %v6061
        %v6105 = vunpack.c.h.bf16 %v6061
        %v6106 = vld [vmem:[%s563] sm:$0xff]
        %v6107 = vld [vmem:[%s563 + $0x8] sm:$0xff]
        %v6108 = vld [vmem:[%s563 + $0x10] sm:$0xff]
        %v6109 = vld [vmem:[%s563 + $0x18] sm:$0xff]
        %v6110 = vld [vmem:[%s563 + $0x20] sm:$0xff]
        %v6111 = vld [vmem:[%s563 + $0x28] sm:$0xff]
        %v6112 = vld [vmem:[%s563 + $0x30] sm:$0xff]
        %v6113 = vld [vmem:[%s563 + $0x38] sm:$0xff]
        %6115 = vset.pattern.permute.xlu0 0
        %6116 = vperm.xlu0 %6115, %v6106
        %v6117 = vpop.permute.xlu0 %6116
        %6120 = vset.pattern.permute.xlu0 0
        %6121 = vperm.xlu0 %6120, %v6107
        %v6122 = vpop.permute.xlu0 %6121
        %6125 = vset.pattern.permute.xlu0 0
        %6126 = vperm.xlu0 %6125, %v6108
        %v6127 = vpop.permute.xlu0 %6126
        %6130 = vset.pattern.permute.xlu0 0
        %6131 = vperm.xlu0 %6130, %v6109
        %v6132 = vpop.permute.xlu0 %6131
        %6135 = vset.pattern.permute.xlu0 0
        %6136 = vperm.xlu0 %6135, %v6110
        %v6137 = vpop.permute.xlu0 %6136
        %6140 = vset.pattern.permute.xlu0 0
        %6141 = vperm.xlu0 %6140, %v6111
        %v6142 = vpop.permute.xlu0 %6141
        %6145 = vset.pattern.permute.xlu0 0
        %6146 = vperm.xlu0 %6145, %v6112
        %v6147 = vpop.permute.xlu0 %6146
        %6150 = vset.pattern.permute.xlu0 0
        %6151 = vperm.xlu0 %6150, %v6113
        %v6152 = vpop.permute.xlu0 %6151
        %v6154 = vmul.f32 %v6098, %v6117
        %v6155 = vmul.f32 %v6099, %v6122
        %v6156 = vmul.f32 %v6100, %v6127
        %v6157 = vmul.f32 %v6101, %v6132
        %v6158 = vmul.f32 %v6102, %v6137
        %v6159 = vmul.f32 %v6103, %v6142
        %v6160 = vmul.f32 %v6104, %v6147
        %v6161 = vmul.f32 %v6105, %v6152
        %v6162 = vadd.f32 %v6154, %v6155
        %v6163 = vadd.f32 %v6162, %v6156
        %v6164 = vadd.f32 %v6163, %v6157
        %v6165 = vadd.f32 %v6164, %v6158
        %v6166 = vadd.f32 %v6165, %v6159
        %v6167 = vadd.f32 %v6166, %v6160
        %v6168 = vadd.f32 %v6167, %v6161
        %v6169 = vrot.slane %v6168, 4
        %v6170 = vadd.f32 %v6168, %v6169
        %v6171 = vrot.slane %v6170, 2
        %v6172 = vadd.f32 %v6170, %v6171
        %v6173 = vrot.slane %v6172, 1
        %v6174 = vadd.f32 %v6172, %v6173
        %v6175 = vadd.f32 %v6174, 0.0
        %v6176 = vmul.f32 %v6154, %v6154
        %v6177 = vmul.f32 %v6155, %v6155
        %v6178 = vmul.f32 %v6156, %v6156
        %v6179 = vmul.f32 %v6157, %v6157
        %v6180 = vmul.f32 %v6158, %v6158
        %v6181 = vmul.f32 %v6159, %v6159
        %v6182 = vmul.f32 %v6160, %v6160
        %v6183 = vmul.f32 %v6161, %v6161
        %v6184 = vadd.f32 %v6176, %v6177
        %v6185 = vadd.f32 %v6184, %v6178
        %v6186 = vadd.f32 %v6185, %v6179
        %v6187 = vadd.f32 %v6186, %v6180
        %v6188 = vadd.f32 %v6187, %v6181
        %v6189 = vadd.f32 %v6188, %v6182
        %v6190 = vadd.f32 %v6189, %v6183
        %v6191 = vrot.slane %v6190, 4
        %v6192 = vadd.f32 %v6190, %v6191
        %v6193 = vrot.slane %v6192, 2
        %v6194 = vadd.f32 %v6192, %v6193
        %v6195 = vrot.slane %v6194, 1
        %v6196 = vadd.f32 %v6194, %v6195
        %v6197 = vadd.f32 %v6196, 0.0
        %v6198 = vld [vmem:[#allocation3 + $0x4f] sm:$0xff]
        %v6199 = vld [vmem:[#allocation3 + $0x57] sm:$0xff]
        %v6200 = vld [vmem:[#allocation3 + $0x5f] sm:$0xff]
        %v6201 = vld [vmem:[#allocation3 + $0x67] sm:$0xff]
        %v6202 = vld [vmem:[#allocation3 + $0x6f] sm:$0xff]
        %v6203 = vld [vmem:[#allocation3 + $0x77] sm:$0xff]
        %v6204 = vld [vmem:[#allocation3 + $0x7f] sm:$0xff]
        %v6205 = vld [vmem:[#allocation3 + $0x87] sm:$0xff]
        %v6206 = vld [vmem:[#allocation4 + $0x50] sm:$0xff]
        %v6207 = vld [vmem:[#allocation4 + $0x58] sm:$0xff]
        %v6208 = vld [vmem:[#allocation4 + $0x60] sm:$0xff]
        %v6209 = vld [vmem:[#allocation4 + $0x68] sm:$0xff]
        %v6210 = vld [vmem:[#allocation4 + $0x70] sm:$0xff]
        %v6211 = vld [vmem:[#allocation4 + $0x78] sm:$0xff]
        %v6212 = vld [vmem:[#allocation4 + $0x80] sm:$0xff]
        %v6213 = vld [vmem:[#allocation4 + $0x88] sm:$0xff]
        %v6214 = vadd.f32 %v6198, %v6206
        %v6215 = vadd.f32 %v6199, %v6207
        %v6216 = vadd.f32 %v6200, %v6208
        %v6217 = vadd.f32 %v6201, %v6209
        %v6218 = vadd.f32 %v6202, %v6210
        %v6219 = vadd.f32 %v6203, %v6211
        %v6220 = vadd.f32 %v6204, %v6212
        %v6221 = vadd.f32 %v6205, %v6213
        %v6222 = vld [vmem:[#allocation5 + $0x51] sm:$0xff]
        %v6223 = vld [vmem:[#allocation5 + $0x59] sm:$0xff]
        %v6224 = vld [vmem:[#allocation5 + $0x61] sm:$0xff]
        %v6225 = vld [vmem:[#allocation5 + $0x69] sm:$0xff]
        %v6226 = vld [vmem:[#allocation5 + $0x71] sm:$0xff]
        %v6227 = vld [vmem:[#allocation5 + $0x79] sm:$0xff]
        %v6228 = vld [vmem:[#allocation5 + $0x81] sm:$0xff]
        %v6229 = vld [vmem:[#allocation5 + $0x89] sm:$0xff]
        %v6230 = vadd.f32 %v6214, %v6222
        %v6231 = vadd.f32 %v6215, %v6223
        %v6232 = vadd.f32 %v6216, %v6224
        %v6233 = vadd.f32 %v6217, %v6225
        %v6234 = vadd.f32 %v6218, %v6226
        %v6235 = vadd.f32 %v6219, %v6227
        %v6236 = vadd.f32 %v6220, %v6228
        %v6237 = vadd.f32 %v6221, %v6229
        %v6238 = vpack.c.bf16 %v6231, %v6230
        %v6239 = vpack.c.bf16 %v6233, %v6232
        %v6240 = vpack.c.bf16 %v6235, %v6234
        %v6241 = vpack.c.bf16 %v6237, %v6236
        %v6246 = vunpack.c.l.b16 %v6238
        %v6247 = vunpack.c.h.b16 %v6238
        %v6248 = vunpack.c.l.b16 %v6239
        %v6249 = vunpack.c.h.b16 %v6239
        %v6250 = vunpack.c.l.b16 %v6240
        %v6251 = vunpack.c.h.b16 %v6240
        %v6252 = vunpack.c.l.b16 %v6241
        %v6253 = vunpack.c.h.b16 %v6241
        %v6254 = vpack.c.b16 %v6246, %v6246
        %v6255 = vpack.c.b16 %v6247, %v6247
        %v6256 = vpack.c.b16 %v6248, %v6248
        %v6257 = vpack.c.b16 %v6249, %v6249
        %v6258 = vpack.c.b16 %v6250, %v6250
        %v6259 = vpack.c.b16 %v6251, %v6251
        %v6260 = vpack.c.b16 %v6252, %v6252
        %v6261 = vpack.c.b16 %v6253, %v6253
        %6270 = vst [vmem:[%s517 + $0x20] sm:$0xf] %v6254
        %6271 = vst [vmem:[%s517 + $0x24] sm:$0xf] %v6255
        %6272 = vst [vmem:[%s517 + $0x28] sm:$0xf] %v6256
        %6273 = vst [vmem:[%s517 + $0x2c] sm:$0xf] %v6257
        %6274 = vst [vmem:[%s517 + $0x30] sm:$0xf] %v6258
        %6275 = vst [vmem:[%s517 + $0x34] sm:$0xf] %v6259
        %6276 = vst [vmem:[%s517 + $0x38] sm:$0xf] %v6260
        %6277 = vst [vmem:[%s517 + $0x3c] sm:$0xf] %v6261
        %v6278 = vunpack.c.l.bf16 %v6238
        %v6279 = vunpack.c.h.bf16 %v6238
        %v6280 = vunpack.c.l.bf16 %v6239
        %v6281 = vunpack.c.h.bf16 %v6239
        %v6282 = vunpack.c.l.bf16 %v6240
        %v6283 = vunpack.c.h.bf16 %v6240
        %v6284 = vunpack.c.l.bf16 %v6241
        %v6285 = vunpack.c.h.bf16 %v6241
        %v6286 = vld [vmem:[%s563 + $0x40] sm:$0xff]
        %v6287 = vld [vmem:[%s563 + $0x48] sm:$0xff]
        %v6288 = vld [vmem:[%s563 + $0x50] sm:$0xff]
        %v6289 = vld [vmem:[%s563 + $0x58] sm:$0xff]
        %v6290 = vld [vmem:[%s563 + $0x60] sm:$0xff]
        %v6291 = vld [vmem:[%s563 + $0x68] sm:$0xff]
        %v6292 = vld [vmem:[%s563 + $0x70] sm:$0xff]
        %v6293 = vld [vmem:[%s563 + $0x78] sm:$0xff]
        %6295 = vset.pattern.permute.xlu0 0
        %6296 = vperm.xlu0 %6295, %v6286
        %v6297 = vpop.permute.xlu0 %6296
        %6300 = vset.pattern.permute.xlu0 0
        %6301 = vperm.xlu0 %6300, %v6287
        %v6302 = vpop.permute.xlu0 %6301
        %6305 = vset.pattern.permute.xlu0 0
        %6306 = vperm.xlu0 %6305, %v6288
        %v6307 = vpop.permute.xlu0 %6306
        %6310 = vset.pattern.permute.xlu0 0
        %6311 = vperm.xlu0 %6310, %v6289
        %v6312 = vpop.permute.xlu0 %6311
        %6315 = vset.pattern.permute.xlu0 0
        %6316 = vperm.xlu0 %6315, %v6290
        %v6317 = vpop.permute.xlu0 %6316
        %6320 = vset.pattern.permute.xlu0 0
        %6321 = vperm.xlu0 %6320, %v6291
        %v6322 = vpop.permute.xlu0 %6321
        %6325 = vset.pattern.permute.xlu0 0
        %6326 = vperm.xlu0 %6325, %v6292
        %v6327 = vpop.permute.xlu0 %6326
        %6330 = vset.pattern.permute.xlu0 0
        %6331 = vperm.xlu0 %6330, %v6293
        %v6332 = vpop.permute.xlu0 %6331
        %v6334 = vmul.f32 %v6278, %v6297
        %v6335 = vmul.f32 %v6279, %v6302
        %v6336 = vmul.f32 %v6280, %v6307
        %v6337 = vmul.f32 %v6281, %v6312
        %v6338 = vmul.f32 %v6282, %v6317
        %v6339 = vmul.f32 %v6283, %v6322
        %v6340 = vmul.f32 %v6284, %v6327
        %v6341 = vmul.f32 %v6285, %v6332
        %v6342 = vadd.f32 %v6334, %v6335
        %v6343 = vadd.f32 %v6342, %v6336
        %v6344 = vadd.f32 %v6343, %v6337
        %v6345 = vadd.f32 %v6344, %v6338
        %v6346 = vadd.f32 %v6345, %v6339
        %v6347 = vadd.f32 %v6346, %v6340
        %v6348 = vadd.f32 %v6347, %v6341
        %v6349 = vrot.slane %v6348, 4
        %v6350 = vadd.f32 %v6348, %v6349
        %v6351 = vrot.slane %v6350, 2
        %v6352 = vadd.f32 %v6350, %v6351
        %v6353 = vrot.slane %v6352, 1
        %v6354 = vadd.f32 %v6352, %v6353
        %v6355 = vadd.f32 %v6175, %v6354
        %v6356 = vmul.f32 %v6334, %v6334
        %v6357 = vmul.f32 %v6335, %v6335
        %v6358 = vmul.f32 %v6336, %v6336
        %v6359 = vmul.f32 %v6337, %v6337
        %v6360 = vmul.f32 %v6338, %v6338
        %v6361 = vmul.f32 %v6339, %v6339
        %v6362 = vmul.f32 %v6340, %v6340
        %v6363 = vmul.f32 %v6341, %v6341
        %v6364 = vadd.f32 %v6356, %v6357
        %v6365 = vadd.f32 %v6364, %v6358
        %v6366 = vadd.f32 %v6365, %v6359
        %v6367 = vadd.f32 %v6366, %v6360
        %v6368 = vadd.f32 %v6367, %v6361
        %v6369 = vadd.f32 %v6368, %v6362
        %v6370 = vadd.f32 %v6369, %v6363
        %v6371 = vrot.slane %v6370, 4
        %v6372 = vadd.f32 %v6370, %v6371
        %v6373 = vrot.slane %v6372, 2
        %v6374 = vadd.f32 %v6372, %v6373
        %v6375 = vrot.slane %v6374, 1
        %v6376 = vadd.f32 %v6374, %v6375
        %v6377 = vadd.f32 %v6197, %v6376
        %v6378 = vld [vmem:[#allocation3 + $0x8f] sm:$0xff]
        %v6379 = vld [vmem:[#allocation3 + $0x97] sm:$0xff]
        %v6380 = vld [vmem:[#allocation3 + $0x9f] sm:$0xff]
        %v6381 = vld [vmem:[#allocation3 + $0xa7] sm:$0xff]
        %v6382 = vld [vmem:[#allocation3 + $0xaf] sm:$0xff]
        %v6383 = vld [vmem:[#allocation3 + $0xb7] sm:$0xff]
        %v6384 = vld [vmem:[#allocation3 + $0xbf] sm:$0xff]
        %v6385 = vld [vmem:[#allocation3 + $0xc7] sm:$0xff]
        %v6386 = vld [vmem:[#allocation4 + $0x90] sm:$0xff]
        %v6387 = vld [vmem:[#allocation4 + $0x98] sm:$0xff]
        %v6388 = vld [vmem:[#allocation4 + $0xa0] sm:$0xff]
        %v6389 = vld [vmem:[#allocation4 + $0xa8] sm:$0xff]
        %v6390 = vld [vmem:[#allocation4 + $0xb0] sm:$0xff]
        %v6391 = vld [vmem:[#allocation4 + $0xb8] sm:$0xff]
        %v6392 = vld [vmem:[#allocation4 + $0xc0] sm:$0xff]
        %v6393 = vld [vmem:[#allocation4 + $0xc8] sm:$0xff]
        %v6394 = vadd.f32 %v6378, %v6386
        %v6395 = vadd.f32 %v6379, %v6387
        %v6396 = vadd.f32 %v6380, %v6388
        %v6397 = vadd.f32 %v6381, %v6389
        %v6398 = vadd.f32 %v6382, %v6390
        %v6399 = vadd.f32 %v6383, %v6391
        %v6400 = vadd.f32 %v6384, %v6392
        %v6401 = vadd.f32 %v6385, %v6393
        %v6402 = vld [vmem:[#allocation5 + $0x91] sm:$0xff]
        %v6403 = vld [vmem:[#allocation5 + $0x99] sm:$0xff]
        %v6404 = vld [vmem:[#allocation5 + $0xa1] sm:$0xff]
        %v6405 = vld [vmem:[#allocation5 + $0xa9] sm:$0xff]
        %v6406 = vld [vmem:[#allocation5 + $0xb1] sm:$0xff]
        %v6407 = vld [vmem:[#allocation5 + $0xb9] sm:$0xff]
        %v6408 = vld [vmem:[#allocation5 + $0xc1] sm:$0xff]
        %v6409 = vld [vmem:[#allocation5 + $0xc9] sm:$0xff]
        %v6410 = vadd.f32 %v6394, %v6402
        %v6411 = vadd.f32 %v6395, %v6403
        %v6412 = vadd.f32 %v6396, %v6404
        %v6413 = vadd.f32 %v6397, %v6405
        %v6414 = vadd.f32 %v6398, %v6406
        %v6415 = vadd.f32 %v6399, %v6407
        %v6416 = vadd.f32 %v6400, %v6408
        %v6417 = vadd.f32 %v6401, %v6409
        %v6418 = vpack.c.bf16 %v6411, %v6410
        %v6419 = vpack.c.bf16 %v6413, %v6412
        %v6420 = vpack.c.bf16 %v6415, %v6414
        %v6421 = vpack.c.bf16 %v6417, %v6416
        %v6426 = vunpack.c.l.b16 %v6418
        %v6427 = vunpack.c.h.b16 %v6418
        %v6428 = vunpack.c.l.b16 %v6419
        %v6429 = vunpack.c.h.b16 %v6419
        %v6430 = vunpack.c.l.b16 %v6420
        %v6431 = vunpack.c.h.b16 %v6420
        %v6432 = vunpack.c.l.b16 %v6421
        %v6433 = vunpack.c.h.b16 %v6421
        %v6434 = vpack.c.b16 %v6426, %v6426
        %v6435 = vpack.c.b16 %v6427, %v6427
        %v6436 = vpack.c.b16 %v6428, %v6428
        %v6437 = vpack.c.b16 %v6429, %v6429
        %v6438 = vpack.c.b16 %v6430, %v6430
        %v6439 = vpack.c.b16 %v6431, %v6431
        %v6440 = vpack.c.b16 %v6432, %v6432
        %v6441 = vpack.c.b16 %v6433, %v6433
        %6450 = vst [vmem:[%s517 + $0x40] sm:$0xf] %v6434
        %6451 = vst [vmem:[%s517 + $0x44] sm:$0xf] %v6435
        %6452 = vst [vmem:[%s517 + $0x48] sm:$0xf] %v6436
        %6453 = vst [vmem:[%s517 + $0x4c] sm:$0xf] %v6437
        %6454 = vst [vmem:[%s517 + $0x50] sm:$0xf] %v6438
        %6455 = vst [vmem:[%s517 + $0x54] sm:$0xf] %v6439
        %6456 = vst [vmem:[%s517 + $0x58] sm:$0xf] %v6440
        %6457 = vst [vmem:[%s517 + $0x5c] sm:$0xf] %v6441
        %v6458 = vunpack.c.l.bf16 %v6418
        %v6459 = vunpack.c.h.bf16 %v6418
        %v6460 = vunpack.c.l.bf16 %v6419
        %v6461 = vunpack.c.h.bf16 %v6419
        %v6462 = vunpack.c.l.bf16 %v6420
        %v6463 = vunpack.c.h.bf16 %v6420
        %v6464 = vunpack.c.l.bf16 %v6421
        %v6465 = vunpack.c.h.bf16 %v6421
        %v6466 = vld [vmem:[%s563 + $0x80] sm:$0xff]
        %v6467 = vld [vmem:[%s563 + $0x88] sm:$0xff]
        %v6468 = vld [vmem:[%s563 + $0x90] sm:$0xff]
        %v6469 = vld [vmem:[%s563 + $0x98] sm:$0xff]
        %v6470 = vld [vmem:[%s563 + $0xa0] sm:$0xff]
        %v6471 = vld [vmem:[%s563 + $0xa8] sm:$0xff]
        %v6472 = vld [vmem:[%s563 + $0xb0] sm:$0xff]
        %v6473 = vld [vmem:[%s563 + $0xb8] sm:$0xff]
        %6475 = vset.pattern.permute.xlu0 0
        %6476 = vperm.xlu0 %6475, %v6466
        %v6477 = vpop.permute.xlu0 %6476
        %6480 = vset.pattern.permute.xlu0 0
        %6481 = vperm.xlu0 %6480, %v6467
        %v6482 = vpop.permute.xlu0 %6481
        %6485 = vset.pattern.permute.xlu0 0
        %6486 = vperm.xlu0 %6485, %v6468
        %v6487 = vpop.permute.xlu0 %6486
        %6490 = vset.pattern.permute.xlu0 0
        %6491 = vperm.xlu0 %6490, %v6469
        %v6492 = vpop.permute.xlu0 %6491
        %6495 = vset.pattern.permute.xlu0 0
        %6496 = vperm.xlu0 %6495, %v6470
        %v6497 = vpop.permute.xlu0 %6496
        %6500 = vset.pattern.permute.xlu0 0
        %6501 = vperm.xlu0 %6500, %v6471
        %v6502 = vpop.permute.xlu0 %6501
        %6505 = vset.pattern.permute.xlu0 0
        %6506 = vperm.xlu0 %6505, %v6472
        %v6507 = vpop.permute.xlu0 %6506
        %6510 = vset.pattern.permute.xlu0 0
        %6511 = vperm.xlu0 %6510, %v6473
        %v6512 = vpop.permute.xlu0 %6511
        %v6514 = vmul.f32 %v6458, %v6477
        %v6515 = vmul.f32 %v6459, %v6482
        %v6516 = vmul.f32 %v6460, %v6487
        %v6517 = vmul.f32 %v6461, %v6492
        %v6518 = vmul.f32 %v6462, %v6497
        %v6519 = vmul.f32 %v6463, %v6502
        %v6520 = vmul.f32 %v6464, %v6507
        %v6521 = vmul.f32 %v6465, %v6512
        %v6522 = vadd.f32 %v6514, %v6515
        %v6523 = vadd.f32 %v6522, %v6516
        %v6524 = vadd.f32 %v6523, %v6517
        %v6525 = vadd.f32 %v6524, %v6518
        %v6526 = vadd.f32 %v6525, %v6519
        %v6527 = vadd.f32 %v6526, %v6520
        %v6528 = vadd.f32 %v6527, %v6521
        %v6529 = vrot.slane %v6528, 4
        %v6530 = vadd.f32 %v6528, %v6529
        %v6531 = vrot.slane %v6530, 2
        %v6532 = vadd.f32 %v6530, %v6531
        %v6533 = vrot.slane %v6532, 1
        %v6534 = vadd.f32 %v6532, %v6533
        %v6535 = vadd.f32 %v6355, %v6534
        %v6536 = vmul.f32 %v6514, %v6514
        %v6537 = vmul.f32 %v6515, %v6515
        %v6538 = vmul.f32 %v6516, %v6516
        %v6539 = vmul.f32 %v6517, %v6517
        %v6540 = vmul.f32 %v6518, %v6518
        %v6541 = vmul.f32 %v6519, %v6519
        %v6542 = vmul.f32 %v6520, %v6520
        %v6543 = vmul.f32 %v6521, %v6521
        %v6544 = vadd.f32 %v6536, %v6537
        %v6545 = vadd.f32 %v6544, %v6538
        %v6546 = vadd.f32 %v6545, %v6539
        %v6547 = vadd.f32 %v6546, %v6540
        %v6548 = vadd.f32 %v6547, %v6541
        %v6549 = vadd.f32 %v6548, %v6542
        %v6550 = vadd.f32 %v6549, %v6543
        %v6551 = vrot.slane %v6550, 4
        %v6552 = vadd.f32 %v6550, %v6551
        %v6553 = vrot.slane %v6552, 2
        %v6554 = vadd.f32 %v6552, %v6553
        %v6555 = vrot.slane %v6554, 1
        %v6556 = vadd.f32 %v6554, %v6555
        %v6557 = vadd.f32 %v6377, %v6556
        %v6558 = vld [vmem:[#allocation3 + $0xcf] sm:$0xff]
        %v6559 = vld [vmem:[#allocation3 + $0xd7] sm:$0xff]
        %v6560 = vld [vmem:[#allocation3 + $0xdf] sm:$0xff]
        %v6561 = vld [vmem:[#allocation3 + $0xe7] sm:$0xff]
        %v6562 = vld [vmem:[#allocation3 + $0xef] sm:$0xff]
        %v6563 = vld [vmem:[#allocation3 + $0xf7] sm:$0xff]
        %v6564 = vld [vmem:[#allocation3 + $0xff] sm:$0xff]
        %v6565 = vld [vmem:[#allocation3 + $0x107] sm:$0xff]
        %v6566 = vld [vmem:[#allocation4 + $0xd0] sm:$0xff]
        %v6567 = vld [vmem:[#allocation4 + $0xd8] sm:$0xff]
        %v6568 = vld [vmem:[#allocation4 + $0xe0] sm:$0xff]
        %v6569 = vld [vmem:[#allocation4 + $0xe8] sm:$0xff]
        %v6570 = vld [vmem:[#allocation4 + $0xf0] sm:$0xff]
        %v6571 = vld [vmem:[#allocation4 + $0xf8] sm:$0xff]
        %v6572 = vld [vmem:[#allocation4 + $0x100] sm:$0xff]
        %v6573 = vld [vmem:[#allocation4 + $0x108] sm:$0xff]
        %v6574 = vadd.f32 %v6558, %v6566
        %v6575 = vadd.f32 %v6559, %v6567
        %v6576 = vadd.f32 %v6560, %v6568
        %v6577 = vadd.f32 %v6561, %v6569
        %v6578 = vadd.f32 %v6562, %v6570
        %v6579 = vadd.f32 %v6563, %v6571
        %v6580 = vadd.f32 %v6564, %v6572
        %v6581 = vadd.f32 %v6565, %v6573
        %v6582 = vld [vmem:[#allocation5 + $0xd1] sm:$0xff]
        %v6583 = vld [vmem:[#allocation5 + $0xd9] sm:$0xff]
        %v6584 = vld [vmem:[#allocation5 + $0xe1] sm:$0xff]
        %v6585 = vld [vmem:[#allocation5 + $0xe9] sm:$0xff]
        %v6586 = vld [vmem:[#allocation5 + $0xf1] sm:$0xff]
        %v6587 = vld [vmem:[#allocation5 + $0xf9] sm:$0xff]
        %v6588 = vld [vmem:[#allocation5 + $0x101] sm:$0xff]
        %v6589 = vld [vmem:[#allocation5 + $0x109] sm:$0xff]
        %v6590 = vadd.f32 %v6574, %v6582
        %v6591 = vadd.f32 %v6575, %v6583
        %v6592 = vadd.f32 %v6576, %v6584
        %v6593 = vadd.f32 %v6577, %v6585
        %v6594 = vadd.f32 %v6578, %v6586
        %v6595 = vadd.f32 %v6579, %v6587
        %v6596 = vadd.f32 %v6580, %v6588
        %v6597 = vadd.f32 %v6581, %v6589
        %v6598 = vpack.c.bf16 %v6591, %v6590
        %v6599 = vpack.c.bf16 %v6593, %v6592
        %v6600 = vpack.c.bf16 %v6595, %v6594
        %v6601 = vpack.c.bf16 %v6597, %v6596
        %v6606 = vunpack.c.l.b16 %v6598
        %v6607 = vunpack.c.h.b16 %v6598
        %v6608 = vunpack.c.l.b16 %v6599
        %v6609 = vunpack.c.h.b16 %v6599
        %v6610 = vunpack.c.l.b16 %v6600
        %v6611 = vunpack.c.h.b16 %v6600
        %v6612 = vunpack.c.l.b16 %v6601
        %v6613 = vunpack.c.h.b16 %v6601
        %v6614 = vpack.c.b16 %v6606, %v6606
        %v6615 = vpack.c.b16 %v6607, %v6607
        %v6616 = vpack.c.b16 %v6608, %v6608
        %v6617 = vpack.c.b16 %v6609, %v6609
        %v6618 = vpack.c.b16 %v6610, %v6610
        %v6619 = vpack.c.b16 %v6611, %v6611
        %v6620 = vpack.c.b16 %v6612, %v6612
        %v6621 = vpack.c.b16 %v6613, %v6613
        %6630 = vst [vmem:[%s517 + $0x60] sm:$0xf] %v6614
        %6631 = vst [vmem:[%s517 + $0x64] sm:$0xf] %v6615
        %6632 = vst [vmem:[%s517 + $0x68] sm:$0xf] %v6616
        %6633 = vst [vmem:[%s517 + $0x6c] sm:$0xf] %v6617
        %6634 = vst [vmem:[%s517 + $0x70] sm:$0xf] %v6618
        %6635 = vst [vmem:[%s517 + $0x74] sm:$0xf] %v6619
        %6636 = vst [vmem:[%s517 + $0x78] sm:$0xf] %v6620
        %6637 = vst [vmem:[%s517 + $0x7c] sm:$0xf] %v6621
        %v6638 = vunpack.c.l.bf16 %v6598
        %v6639 = vunpack.c.h.bf16 %v6598
        %v6640 = vunpack.c.l.bf16 %v6599
        %v6641 = vunpack.c.h.bf16 %v6599
        %v6642 = vunpack.c.l.bf16 %v6600
        %v6643 = vunpack.c.h.bf16 %v6600
        %v6644 = vunpack.c.l.bf16 %v6601
        %v6645 = vunpack.c.h.bf16 %v6601
        %v6646 = vld [vmem:[%s563 + $0xc0] sm:$0xff]
        %v6647 = vld [vmem:[%s563 + $0xc8] sm:$0xff]
        %v6648 = vld [vmem:[%s563 + $0xd0] sm:$0xff]
        %v6649 = vld [vmem:[%s563 + $0xd8] sm:$0xff]
        %v6650 = vld [vmem:[%s563 + $0xe0] sm:$0xff]
        %v6651 = vld [vmem:[%s563 + $0xe8] sm:$0xff]
        %v6652 = vld [vmem:[%s563 + $0xf0] sm:$0xff]
        %v6653 = vld [vmem:[%s563 + $0xf8] sm:$0xff]
        %6655 = vset.pattern.permute.xlu0 0
        %6656 = vperm.xlu0 %6655, %v6646
        %v6657 = vpop.permute.xlu0 %6656
        %6660 = vset.pattern.permute.xlu0 0
        %6661 = vperm.xlu0 %6660, %v6647
        %v6662 = vpop.permute.xlu0 %6661
        %6665 = vset.pattern.permute.xlu0 0
        %6666 = vperm.xlu0 %6665, %v6648
        %v6667 = vpop.permute.xlu0 %6666
        %6670 = vset.pattern.permute.xlu0 0
        %6671 = vperm.xlu0 %6670, %v6649
        %v6672 = vpop.permute.xlu0 %6671
        %6675 = vset.pattern.permute.xlu0 0
        %6676 = vperm.xlu0 %6675, %v6650
        %v6677 = vpop.permute.xlu0 %6676
        %6680 = vset.pattern.permute.xlu0 0
        %6681 = vperm.xlu0 %6680, %v6651
        %v6682 = vpop.permute.xlu0 %6681
        %6685 = vset.pattern.permute.xlu0 0
        %6686 = vperm.xlu0 %6685, %v6652
        %v6687 = vpop.permute.xlu0 %6686
        %6690 = vset.pattern.permute.xlu0 0
        %6691 = vperm.xlu0 %6690, %v6653
        %v6692 = vpop.permute.xlu0 %6691
        %v6694 = vmul.f32 %v6638, %v6657
        %v6695 = vmul.f32 %v6639, %v6662
        %v6696 = vmul.f32 %v6640, %v6667
        %v6697 = vmul.f32 %v6641, %v6672
        %v6698 = vmul.f32 %v6642, %v6677
        %v6699 = vmul.f32 %v6643, %v6682
        %v6700 = vmul.f32 %v6644, %v6687
        %v6701 = vmul.f32 %v6645, %v6692
        %v6702 = vadd.f32 %v6694, %v6695
        %v6703 = vadd.f32 %v6702, %v6696
        %v6704 = vadd.f32 %v6703, %v6697
        %v6705 = vadd.f32 %v6704, %v6698
        %v6706 = vadd.f32 %v6705, %v6699
        %v6707 = vadd.f32 %v6706, %v6700
        %v6708 = vadd.f32 %v6707, %v6701
        %v6709 = vrot.slane %v6708, 4
        %v6710 = vadd.f32 %v6708, %v6709
        %v6711 = vrot.slane %v6710, 2
        %v6712 = vadd.f32 %v6710, %v6711
        %v6713 = vrot.slane %v6712, 1
        %v6714 = vadd.f32 %v6712, %v6713
        %v6715 = vadd.f32 %v6535, %v6714
        %v6716 = vmul.f32 %v6694, %v6694
        %v6717 = vmul.f32 %v6695, %v6695
        %v6718 = vmul.f32 %v6696, %v6696
        %v6719 = vmul.f32 %v6697, %v6697
        %v6720 = vmul.f32 %v6698, %v6698
        %v6721 = vmul.f32 %v6699, %v6699
        %v6722 = vmul.f32 %v6700, %v6700
        %v6723 = vmul.f32 %v6701, %v6701
        %v6724 = vadd.f32 %v6716, %v6717
        %v6725 = vadd.f32 %v6724, %v6718
        %v6726 = vadd.f32 %v6725, %v6719
        %v6727 = vadd.f32 %v6726, %v6720
        %v6728 = vadd.f32 %v6727, %v6721
        %v6729 = vadd.f32 %v6728, %v6722
        %v6730 = vadd.f32 %v6729, %v6723
        %v6731 = vrot.slane %v6730, 4
        %v6732 = vadd.f32 %v6730, %v6731
        %v6733 = vrot.slane %v6732, 2
        %v6734 = vadd.f32 %v6732, %v6733
        %v6735 = vrot.slane %v6734, 1
        %v6736 = vadd.f32 %v6734, %v6735
        %v6737 = vadd.f32 %v6557, %v6736
        %v6738 = vld [vmem:[#allocation3 + $0x10f] sm:$0xff]
        %v6739 = vld [vmem:[#allocation3 + $0x117] sm:$0xff]
        %v6740 = vld [vmem:[#allocation3 + $0x11f] sm:$0xff]
        %v6741 = vld [vmem:[#allocation3 + $0x127] sm:$0xff]
        %v6742 = vld [vmem:[#allocation3 + $0x12f] sm:$0xff]
        %v6743 = vld [vmem:[#allocation3 + $0x137] sm:$0xff]
        %v6744 = vld [vmem:[#allocation3 + $0x13f] sm:$0xff]
        %v6745 = vld [vmem:[#allocation3 + $0x147] sm:$0xff]
        %v6746 = vld [vmem:[#allocation4 + $0x110] sm:$0xff]
        %v6747 = vld [vmem:[#allocation4 + $0x118] sm:$0xff]
        %v6748 = vld [vmem:[#allocation4 + $0x120] sm:$0xff]
        %v6749 = vld [vmem:[#allocation4 + $0x128] sm:$0xff]
        %v6750 = vld [vmem:[#allocation4 + $0x130] sm:$0xff]
        %v6751 = vld [vmem:[#allocation4 + $0x138] sm:$0xff]
        %v6752 = vld [vmem:[#allocation4 + $0x140] sm:$0xff]
        %v6753 = vld [vmem:[#allocation4 + $0x148] sm:$0xff]
        %v6754 = vadd.f32 %v6738, %v6746
        %v6755 = vadd.f32 %v6739, %v6747
        %v6756 = vadd.f32 %v6740, %v6748
        %v6757 = vadd.f32 %v6741, %v6749
        %v6758 = vadd.f32 %v6742, %v6750
        %v6759 = vadd.f32 %v6743, %v6751
        %v6760 = vadd.f32 %v6744, %v6752
        %v6761 = vadd.f32 %v6745, %v6753
        %v6762 = vld [vmem:[#allocation5 + $0x111] sm:$0xff]
        %v6763 = vld [vmem:[#allocation5 + $0x119] sm:$0xff]
        %v6764 = vld [vmem:[#allocation5 + $0x121] sm:$0xff]
        %v6765 = vld [vmem:[#allocation5 + $0x129] sm:$0xff]
        %v6766 = vld [vmem:[#allocation5 + $0x131] sm:$0xff]
        %v6767 = vld [vmem:[#allocation5 + $0x139] sm:$0xff]
        %v6768 = vld [vmem:[#allocation5 + $0x141] sm:$0xff]
        %v6769 = vld [vmem:[#allocation5 + $0x149] sm:$0xff]
        %v6770 = vadd.f32 %v6754, %v6762
        %v6771 = vadd.f32 %v6755, %v6763
        %v6772 = vadd.f32 %v6756, %v6764
        %v6773 = vadd.f32 %v6757, %v6765
        %v6774 = vadd.f32 %v6758, %v6766
        %v6775 = vadd.f32 %v6759, %v6767
        %v6776 = vadd.f32 %v6760, %v6768
        %v6777 = vadd.f32 %v6761, %v6769
        %v6778 = vpack.c.bf16 %v6771, %v6770
        %v6779 = vpack.c.bf16 %v6773, %v6772
        %v6780 = vpack.c.bf16 %v6775, %v6774
        %v6781 = vpack.c.bf16 %v6777, %v6776
        %v6786 = vunpack.c.l.b16 %v6778
        %v6787 = vunpack.c.h.b16 %v6778
        %v6788 = vunpack.c.l.b16 %v6779
        %v6789 = vunpack.c.h.b16 %v6779
        %v6790 = vunpack.c.l.b16 %v6780
        %v6791 = vunpack.c.h.b16 %v6780
        %v6792 = vunpack.c.l.b16 %v6781
        %v6793 = vunpack.c.h.b16 %v6781
        %v6794 = vpack.c.b16 %v6786, %v6786
        %v6795 = vpack.c.b16 %v6787, %v6787
        %v6796 = vpack.c.b16 %v6788, %v6788
        %v6797 = vpack.c.b16 %v6789, %v6789
        %v6798 = vpack.c.b16 %v6790, %v6790
        %v6799 = vpack.c.b16 %v6791, %v6791
        %v6800 = vpack.c.b16 %v6792, %v6792
        %v6801 = vpack.c.b16 %v6793, %v6793
        %6810 = vst [vmem:[%s517 + $0x80] sm:$0xf] %v6794
        %6811 = vst [vmem:[%s517 + $0x84] sm:$0xf] %v6795
        %6812 = vst [vmem:[%s517 + $0x88] sm:$0xf] %v6796
        %6813 = vst [vmem:[%s517 + $0x8c] sm:$0xf] %v6797
        %6814 = vst [vmem:[%s517 + $0x90] sm:$0xf] %v6798
        %6815 = vst [vmem:[%s517 + $0x94] sm:$0xf] %v6799
        %6816 = vst [vmem:[%s517 + $0x98] sm:$0xf] %v6800
        %6817 = vst [vmem:[%s517 + $0x9c] sm:$0xf] %v6801
        %v6818 = vunpack.c.l.bf16 %v6778
        %v6819 = vunpack.c.h.bf16 %v6778
        %v6820 = vunpack.c.l.bf16 %v6779
        %v6821 = vunpack.c.h.bf16 %v6779
        %v6822 = vunpack.c.l.bf16 %v6780
        %v6823 = vunpack.c.h.bf16 %v6780
        %v6824 = vunpack.c.l.bf16 %v6781
        %v6825 = vunpack.c.h.bf16 %v6781
        %v6826 = vld [vmem:[%s563 + $0x100] sm:$0xff]
        %v6827 = vld [vmem:[%s563 + $0x108] sm:$0xff]
        %v6828 = vld [vmem:[%s563 + $0x110] sm:$0xff]
        %v6829 = vld [vmem:[%s563 + $0x118] sm:$0xff]
        %v6830 = vld [vmem:[%s563 + $0x120] sm:$0xff]
        %v6831 = vld [vmem:[%s563 + $0x128] sm:$0xff]
        %v6832 = vld [vmem:[%s563 + $0x130] sm:$0xff]
        %v6833 = vld [vmem:[%s563 + $0x138] sm:$0xff]
        %6835 = vset.pattern.permute.xlu0 0
        %6836 = vperm.xlu0 %6835, %v6826
        %v6837 = vpop.permute.xlu0 %6836
        %6840 = vset.pattern.permute.xlu0 0
        %6841 = vperm.xlu0 %6840, %v6827
        %v6842 = vpop.permute.xlu0 %6841
        %6845 = vset.pattern.permute.xlu0 0
        %6846 = vperm.xlu0 %6845, %v6828
        %v6847 = vpop.permute.xlu0 %6846
        %6850 = vset.pattern.permute.xlu0 0
        %6851 = vperm.xlu0 %6850, %v6829
        %v6852 = vpop.permute.xlu0 %6851
        %6855 = vset.pattern.permute.xlu0 0
        %6856 = vperm.xlu0 %6855, %v6830
        %v6857 = vpop.permute.xlu0 %6856
        %6860 = vset.pattern.permute.xlu0 0
        %6861 = vperm.xlu0 %6860, %v6831
        %v6862 = vpop.permute.xlu0 %6861
        %6865 = vset.pattern.permute.xlu0 0
        %6866 = vperm.xlu0 %6865, %v6832
        %v6867 = vpop.permute.xlu0 %6866
        %6870 = vset.pattern.permute.xlu0 0
        %6871 = vperm.xlu0 %6870, %v6833
        %v6872 = vpop.permute.xlu0 %6871
        %v6874 = vmul.f32 %v6818, %v6837
        %v6875 = vmul.f32 %v6819, %v6842
        %v6876 = vmul.f32 %v6820, %v6847
        %v6877 = vmul.f32 %v6821, %v6852
        %v6878 = vmul.f32 %v6822, %v6857
        %v6879 = vmul.f32 %v6823, %v6862
        %v6880 = vmul.f32 %v6824, %v6867
        %v6881 = vmul.f32 %v6825, %v6872
        %v6882 = vadd.f32 %v6874, %v6875
        %v6883 = vadd.f32 %v6882, %v6876
        %v6884 = vadd.f32 %v6883, %v6877
        %v6885 = vadd.f32 %v6884, %v6878
        %v6886 = vadd.f32 %v6885, %v6879
        %v6887 = vadd.f32 %v6886, %v6880
        %v6888 = vadd.f32 %v6887, %v6881
        %v6889 = vrot.slane %v6888, 4
        %v6890 = vadd.f32 %v6888, %v6889
        %v6891 = vrot.slane %v6890, 2
        %v6892 = vadd.f32 %v6890, %v6891
        %v6893 = vrot.slane %v6892, 1
        %v6894 = vadd.f32 %v6892, %v6893
        %v6895 = vadd.f32 %v6715, %v6894
        %v6896 = vmul.f32 %v6874, %v6874
        %v6897 = vmul.f32 %v6875, %v6875
        %v6898 = vmul.f32 %v6876, %v6876
        %v6899 = vmul.f32 %v6877, %v6877
        %v6900 = vmul.f32 %v6878, %v6878
        %v6901 = vmul.f32 %v6879, %v6879
        %v6902 = vmul.f32 %v6880, %v6880
        %v6903 = vmul.f32 %v6881, %v6881
        %v6904 = vadd.f32 %v6896, %v6897
        %v6905 = vadd.f32 %v6904, %v6898
        %v6906 = vadd.f32 %v6905, %v6899
        %v6907 = vadd.f32 %v6906, %v6900
        %v6908 = vadd.f32 %v6907, %v6901
        %v6909 = vadd.f32 %v6908, %v6902
        %v6910 = vadd.f32 %v6909, %v6903
        %v6911 = vrot.slane %v6910, 4
        %v6912 = vadd.f32 %v6910, %v6911
        %v6913 = vrot.slane %v6912, 2
        %v6914 = vadd.f32 %v6912, %v6913
        %v6915 = vrot.slane %v6914, 1
        %v6916 = vadd.f32 %v6914, %v6915
        %v6917 = vadd.f32 %v6737, %v6916
        %v6918 = vld [vmem:[#allocation3 + $0x14f] sm:$0xff]
        %v6919 = vld [vmem:[#allocation3 + $0x157] sm:$0xff]
        %v6920 = vld [vmem:[#allocation3 + $0x15f] sm:$0xff]
        %v6921 = vld [vmem:[#allocation3 + $0x167] sm:$0xff]
        %v6922 = vld [vmem:[#allocation3 + $0x16f] sm:$0xff]
        %v6923 = vld [vmem:[#allocation3 + $0x177] sm:$0xff]
        %v6924 = vld [vmem:[#allocation3 + $0x17f] sm:$0xff]
        %v6925 = vld [vmem:[#allocation3 + $0x187] sm:$0xff]
        %v6926 = vld [vmem:[#allocation4 + $0x150] sm:$0xff]
        %v6927 = vld [vmem:[#allocation4 + $0x158] sm:$0xff]
        %v6928 = vld [vmem:[#allocation4 + $0x160] sm:$0xff]
        %v6929 = vld [vmem:[#allocation4 + $0x168] sm:$0xff]
        %v6930 = vld [vmem:[#allocation4 + $0x170] sm:$0xff]
        %v6931 = vld [vmem:[#allocation4 + $0x178] sm:$0xff]
        %v6932 = vld [vmem:[#allocation4 + $0x180] sm:$0xff]
        %v6933 = vld [vmem:[#allocation4 + $0x188] sm:$0xff]
        %v6934 = vadd.f32 %v6918, %v6926
        %v6935 = vadd.f32 %v6919, %v6927
        %v6936 = vadd.f32 %v6920, %v6928
        %v6937 = vadd.f32 %v6921, %v6929
        %v6938 = vadd.f32 %v6922, %v6930
        %v6939 = vadd.f32 %v6923, %v6931
        %v6940 = vadd.f32 %v6924, %v6932
        %v6941 = vadd.f32 %v6925, %v6933
        %v6942 = vld [vmem:[#allocation5 + $0x151] sm:$0xff]
        %v6943 = vld [vmem:[#allocation5 + $0x159] sm:$0xff]
        %v6944 = vld [vmem:[#allocation5 + $0x161] sm:$0xff]
        %v6945 = vld [vmem:[#allocation5 + $0x169] sm:$0xff]
        %v6946 = vld [vmem:[#allocation5 + $0x171] sm:$0xff]
        %v6947 = vld [vmem:[#allocation5 + $0x179] sm:$0xff]
        %v6948 = vld [vmem:[#allocation5 + $0x181] sm:$0xff]
        %v6949 = vld [vmem:[#allocation5 + $0x189] sm:$0xff]
        %v6950 = vadd.f32 %v6934, %v6942
        %v6951 = vadd.f32 %v6935, %v6943
        %v6952 = vadd.f32 %v6936, %v6944
        %v6953 = vadd.f32 %v6937, %v6945
        %v6954 = vadd.f32 %v6938, %v6946
        %v6955 = vadd.f32 %v6939, %v6947
        %v6956 = vadd.f32 %v6940, %v6948
        %v6957 = vadd.f32 %v6941, %v6949
        %v6958 = vpack.c.bf16 %v6951, %v6950
        %v6959 = vpack.c.bf16 %v6953, %v6952
        %v6960 = vpack.c.bf16 %v6955, %v6954
        %v6961 = vpack.c.bf16 %v6957, %v6956
        %v6966 = vunpack.c.l.b16 %v6958
        %v6967 = vunpack.c.h.b16 %v6958
        %v6968 = vunpack.c.l.b16 %v6959
        %v6969 = vunpack.c.h.b16 %v6959
        %v6970 = vunpack.c.l.b16 %v6960
        %v6971 = vunpack.c.h.b16 %v6960
        %v6972 = vunpack.c.l.b16 %v6961
        %v6973 = vunpack.c.h.b16 %v6961
        %v6974 = vpack.c.b16 %v6966, %v6966
        %v6975 = vpack.c.b16 %v6967, %v6967
        %v6976 = vpack.c.b16 %v6968, %v6968
        %v6977 = vpack.c.b16 %v6969, %v6969
        %v6978 = vpack.c.b16 %v6970, %v6970
        %v6979 = vpack.c.b16 %v6971, %v6971
        %v6980 = vpack.c.b16 %v6972, %v6972
        %v6981 = vpack.c.b16 %v6973, %v6973
        %6990 = vst [vmem:[%s517 + $0xa0] sm:$0xf] %v6974
        %6991 = vst [vmem:[%s517 + $0xa4] sm:$0xf] %v6975
        %6992 = vst [vmem:[%s517 + $0xa8] sm:$0xf] %v6976
        %6993 = vst [vmem:[%s517 + $0xac] sm:$0xf] %v6977
        %6994 = vst [vmem:[%s517 + $0xb0] sm:$0xf] %v6978
        %6995 = vst [vmem:[%s517 + $0xb4] sm:$0xf] %v6979
        %6996 = vst [vmem:[%s517 + $0xb8] sm:$0xf] %v6980
        %6997 = vst [vmem:[%s517 + $0xbc] sm:$0xf] %v6981
        %v6998 = vunpack.c.l.bf16 %v6958
        %v6999 = vunpack.c.h.bf16 %v6958
        %v7000 = vunpack.c.l.bf16 %v6959
        %v7001 = vunpack.c.h.bf16 %v6959
        %v7002 = vunpack.c.l.bf16 %v6960
        %v7003 = vunpack.c.h.bf16 %v6960
        %v7004 = vunpack.c.l.bf16 %v6961
        %v7005 = vunpack.c.h.bf16 %v6961
        %v7006 = vld [vmem:[%s563 + $0x140] sm:$0xff]
        %v7007 = vld [vmem:[%s563 + $0x148] sm:$0xff]
        %v7008 = vld [vmem:[%s563 + $0x150] sm:$0xff]
        %v7009 = vld [vmem:[%s563 + $0x158] sm:$0xff]
        %v7010 = vld [vmem:[%s563 + $0x160] sm:$0xff]
        %v7011 = vld [vmem:[%s563 + $0x168] sm:$0xff]
        %v7012 = vld [vmem:[%s563 + $0x170] sm:$0xff]
        %v7013 = vld [vmem:[%s563 + $0x178] sm:$0xff]
        %7015 = vset.pattern.permute.xlu0 0
        %7016 = vperm.xlu0 %7015, %v7006
        %v7017 = vpop.permute.xlu0 %7016
        %7020 = vset.pattern.permute.xlu0 0
        %7021 = vperm.xlu0 %7020, %v7007
        %v7022 = vpop.permute.xlu0 %7021
        %7025 = vset.pattern.permute.xlu0 0
        %7026 = vperm.xlu0 %7025, %v7008
        %v7027 = vpop.permute.xlu0 %7026
        %7030 = vset.pattern.permute.xlu0 0
        %7031 = vperm.xlu0 %7030, %v7009
        %v7032 = vpop.permute.xlu0 %7031
        %7035 = vset.pattern.permute.xlu0 0
        %7036 = vperm.xlu0 %7035, %v7010
        %v7037 = vpop.permute.xlu0 %7036
        %7040 = vset.pattern.permute.xlu0 0
        %7041 = vperm.xlu0 %7040, %v7011
        %v7042 = vpop.permute.xlu0 %7041
        %7045 = vset.pattern.permute.xlu0 0
        %7046 = vperm.xlu0 %7045, %v7012
        %v7047 = vpop.permute.xlu0 %7046
        %7050 = vset.pattern.permute.xlu0 0
        %7051 = vperm.xlu0 %7050, %v7013
        %v7052 = vpop.permute.xlu0 %7051
        %v7054 = vmul.f32 %v6998, %v7017
        %v7055 = vmul.f32 %v6999, %v7022
        %v7056 = vmul.f32 %v7000, %v7027
        %v7057 = vmul.f32 %v7001, %v7032
        %v7058 = vmul.f32 %v7002, %v7037
        %v7059 = vmul.f32 %v7003, %v7042
        %v7060 = vmul.f32 %v7004, %v7047
        %v7061 = vmul.f32 %v7005, %v7052
        %v7062 = vadd.f32 %v7054, %v7055
        %v7063 = vadd.f32 %v7062, %v7056
        %v7064 = vadd.f32 %v7063, %v7057
        %v7065 = vadd.f32 %v7064, %v7058
        %v7066 = vadd.f32 %v7065, %v7059
        %v7067 = vadd.f32 %v7066, %v7060
        %v7068 = vadd.f32 %v7067, %v7061
        %v7069 = vrot.slane %v7068, 4
        %v7070 = vadd.f32 %v7068, %v7069
        %v7071 = vrot.slane %v7070, 2
        %v7072 = vadd.f32 %v7070, %v7071
        %v7073 = vrot.slane %v7072, 1
        %v7074 = vadd.f32 %v7072, %v7073
        %v7075 = vadd.f32 %v6895, %v7074
        %v7076 = vmul.f32 %v7054, %v7054
        %v7077 = vmul.f32 %v7055, %v7055
        %v7078 = vmul.f32 %v7056, %v7056
        %v7079 = vmul.f32 %v7057, %v7057
        %v7080 = vmul.f32 %v7058, %v7058
        %v7081 = vmul.f32 %v7059, %v7059
        %v7082 = vmul.f32 %v7060, %v7060
        %v7083 = vmul.f32 %v7061, %v7061
        %v7084 = vadd.f32 %v7076, %v7077
        %v7085 = vadd.f32 %v7084, %v7078
        %v7086 = vadd.f32 %v7085, %v7079
        %v7087 = vadd.f32 %v7086, %v7080
        %v7088 = vadd.f32 %v7087, %v7081
        %v7089 = vadd.f32 %v7088, %v7082
        %v7090 = vadd.f32 %v7089, %v7083
        %v7091 = vrot.slane %v7090, 4
        %v7092 = vadd.f32 %v7090, %v7091
        %v7093 = vrot.slane %v7092, 2
        %v7094 = vadd.f32 %v7092, %v7093
        %v7095 = vrot.slane %v7094, 1
        %v7096 = vadd.f32 %v7094, %v7095
        %v7097 = vadd.f32 %v6917, %v7096
        %v7098 = vld [vmem:[#allocation3 + $0x18f] sm:$0xff]
        %v7099 = vld [vmem:[#allocation3 + $0x197] sm:$0xff]
        %v7100 = vld [vmem:[#allocation3 + $0x19f] sm:$0xff]
        %v7101 = vld [vmem:[#allocation3 + $0x1a7] sm:$0xff]
        %v7102 = vld [vmem:[#allocation3 + $0x1af] sm:$0xff]
        %v7103 = vld [vmem:[#allocation3 + $0x1b7] sm:$0xff]
        %v7104 = vld [vmem:[#allocation3 + $0x1bf] sm:$0xff]
        %v7105 = vld [vmem:[#allocation3 + $0x1c7] sm:$0xff]
        %v7106 = vld [vmem:[#allocation4 + $0x190] sm:$0xff]
        %v7107 = vld [vmem:[#allocation4 + $0x198] sm:$0xff]
        %v7108 = vld [vmem:[#allocation4 + $0x1a0] sm:$0xff]
        %v7109 = vld [vmem:[#allocation4 + $0x1a8] sm:$0xff]
        %v7110 = vld [vmem:[#allocation4 + $0x1b0] sm:$0xff]
        %v7111 = vld [vmem:[#allocation4 + $0x1b8] sm:$0xff]
        %v7112 = vld [vmem:[#allocation4 + $0x1c0] sm:$0xff]
        %v7113 = vld [vmem:[#allocation4 + $0x1c8] sm:$0xff]
        %v7114 = vadd.f32 %v7098, %v7106
        %v7115 = vadd.f32 %v7099, %v7107
        %v7116 = vadd.f32 %v7100, %v7108
        %v7117 = vadd.f32 %v7101, %v7109
        %v7118 = vadd.f32 %v7102, %v7110
        %v7119 = vadd.f32 %v7103, %v7111
        %v7120 = vadd.f32 %v7104, %v7112
        %v7121 = vadd.f32 %v7105, %v7113
        %v7122 = vld [vmem:[#allocation5 + $0x191] sm:$0xff]
        %v7123 = vld [vmem:[#allocation5 + $0x199] sm:$0xff]
        %v7124 = vld [vmem:[#allocation5 + $0x1a1] sm:$0xff]
        %v7125 = vld [vmem:[#allocation5 + $0x1a9] sm:$0xff]
        %v7126 = vld [vmem:[#allocation5 + $0x1b1] sm:$0xff]
        %v7127 = vld [vmem:[#allocation5 + $0x1b9] sm:$0xff]
        %v7128 = vld [vmem:[#allocation5 + $0x1c1] sm:$0xff]
        %v7129 = vld [vmem:[#allocation5 + $0x1c9] sm:$0xff]
        %v7130 = vadd.f32 %v7114, %v7122
        %v7131 = vadd.f32 %v7115, %v7123
        %v7132 = vadd.f32 %v7116, %v7124
        %v7133 = vadd.f32 %v7117, %v7125
        %v7134 = vadd.f32 %v7118, %v7126
        %v7135 = vadd.f32 %v7119, %v7127
        %v7136 = vadd.f32 %v7120, %v7128
        %v7137 = vadd.f32 %v7121, %v7129
        %v7138 = vpack.c.bf16 %v7131, %v7130
        %v7139 = vpack.c.bf16 %v7133, %v7132
        %v7140 = vpack.c.bf16 %v7135, %v7134
        %v7141 = vpack.c.bf16 %v7137, %v7136
        %v7146 = vunpack.c.l.b16 %v7138
        %v7147 = vunpack.c.h.b16 %v7138
        %v7148 = vunpack.c.l.b16 %v7139
        %v7149 = vunpack.c.h.b16 %v7139
        %v7150 = vunpack.c.l.b16 %v7140
        %v7151 = vunpack.c.h.b16 %v7140
        %v7152 = vunpack.c.l.b16 %v7141
        %v7153 = vunpack.c.h.b16 %v7141
        %v7154 = vpack.c.b16 %v7146, %v7146
        %v7155 = vpack.c.b16 %v7147, %v7147
        %v7156 = vpack.c.b16 %v7148, %v7148
        %v7157 = vpack.c.b16 %v7149, %v7149
        %v7158 = vpack.c.b16 %v7150, %v7150
        %v7159 = vpack.c.b16 %v7151, %v7151
        %v7160 = vpack.c.b16 %v7152, %v7152
        %v7161 = vpack.c.b16 %v7153, %v7153
        %7170 = vst [vmem:[%s517 + $0xc0] sm:$0xf] %v7154
        %7171 = vst [vmem:[%s517 + $0xc4] sm:$0xf] %v7155
        %7172 = vst [vmem:[%s517 + $0xc8] sm:$0xf] %v7156
        %7173 = vst [vmem:[%s517 + $0xcc] sm:$0xf] %v7157
        %7174 = vst [vmem:[%s517 + $0xd0] sm:$0xf] %v7158
        %7175 = vst [vmem:[%s517 + $0xd4] sm:$0xf] %v7159
        %7176 = vst [vmem:[%s517 + $0xd8] sm:$0xf] %v7160
        %7177 = vst [vmem:[%s517 + $0xdc] sm:$0xf] %v7161
        %v7178 = vunpack.c.l.bf16 %v7138
        %v7179 = vunpack.c.h.bf16 %v7138
        %v7180 = vunpack.c.l.bf16 %v7139
        %v7181 = vunpack.c.h.bf16 %v7139
        %v7182 = vunpack.c.l.bf16 %v7140
        %v7183 = vunpack.c.h.bf16 %v7140
        %v7184 = vunpack.c.l.bf16 %v7141
        %v7185 = vunpack.c.h.bf16 %v7141
        %v7186 = vld [vmem:[%s563 + $0x180] sm:$0xff]
        %v7187 = vld [vmem:[%s563 + $0x188] sm:$0xff]
        %v7188 = vld [vmem:[%s563 + $0x190] sm:$0xff]
        %v7189 = vld [vmem:[%s563 + $0x198] sm:$0xff]
        %v7190 = vld [vmem:[%s563 + $0x1a0] sm:$0xff]
        %v7191 = vld [vmem:[%s563 + $0x1a8] sm:$0xff]
        %v7192 = vld [vmem:[%s563 + $0x1b0] sm:$0xff]
        %v7193 = vld [vmem:[%s563 + $0x1b8] sm:$0xff]
        %7195 = vset.pattern.permute.xlu0 0
        %7196 = vperm.xlu0 %7195, %v7186
        %v7197 = vpop.permute.xlu0 %7196
        %7200 = vset.pattern.permute.xlu0 0
        %7201 = vperm.xlu0 %7200, %v7187
        %v7202 = vpop.permute.xlu0 %7201
        %7205 = vset.pattern.permute.xlu0 0
        %7206 = vperm.xlu0 %7205, %v7188
        %v7207 = vpop.permute.xlu0 %7206
        %7210 = vset.pattern.permute.xlu0 0
        %7211 = vperm.xlu0 %7210, %v7189
        %v7212 = vpop.permute.xlu0 %7211
        %7215 = vset.pattern.permute.xlu0 0
        %7216 = vperm.xlu0 %7215, %v7190
        %v7217 = vpop.permute.xlu0 %7216
        %7220 = vset.pattern.permute.xlu0 0
        %7221 = vperm.xlu0 %7220, %v7191
        %v7222 = vpop.permute.xlu0 %7221
        %7225 = vset.pattern.permute.xlu0 0
        %7226 = vperm.xlu0 %7225, %v7192
        %v7227 = vpop.permute.xlu0 %7226
        %7230 = vset.pattern.permute.xlu0 0
        %7231 = vperm.xlu0 %7230, %v7193
        %v7232 = vpop.permute.xlu0 %7231
        %v7234 = vmul.f32 %v7178, %v7197
        %v7235 = vmul.f32 %v7179, %v7202
        %v7236 = vmul.f32 %v7180, %v7207
        %v7237 = vmul.f32 %v7181, %v7212
        %v7238 = vmul.f32 %v7182, %v7217
        %v7239 = vmul.f32 %v7183, %v7222
        %v7240 = vmul.f32 %v7184, %v7227
        %v7241 = vmul.f32 %v7185, %v7232
        %v7242 = vadd.f32 %v7234, %v7235
        %v7243 = vadd.f32 %v7242, %v7236
        %v7244 = vadd.f32 %v7243, %v7237
        %v7245 = vadd.f32 %v7244, %v7238
        %v7246 = vadd.f32 %v7245, %v7239
        %v7247 = vadd.f32 %v7246, %v7240
        %v7248 = vadd.f32 %v7247, %v7241
        %v7249 = vrot.slane %v7248, 4
        %v7250 = vadd.f32 %v7248, %v7249
        %v7251 = vrot.slane %v7250, 2
        %v7252 = vadd.f32 %v7250, %v7251
        %v7253 = vrot.slane %v7252, 1
        %v7254 = vadd.f32 %v7252, %v7253
        %v7255 = vadd.f32 %v7075, %v7254
        %v7256 = vmul.f32 %v7234, %v7234
        %v7257 = vmul.f32 %v7235, %v7235
        %v7258 = vmul.f32 %v7236, %v7236
        %v7259 = vmul.f32 %v7237, %v7237
        %v7260 = vmul.f32 %v7238, %v7238
        %v7261 = vmul.f32 %v7239, %v7239
        %v7262 = vmul.f32 %v7240, %v7240
        %v7263 = vmul.f32 %v7241, %v7241
        %v7264 = vadd.f32 %v7256, %v7257
        %v7265 = vadd.f32 %v7264, %v7258
        %v7266 = vadd.f32 %v7265, %v7259
        %v7267 = vadd.f32 %v7266, %v7260
        %v7268 = vadd.f32 %v7267, %v7261
        %v7269 = vadd.f32 %v7268, %v7262
        %v7270 = vadd.f32 %v7269, %v7263
        %v7271 = vrot.slane %v7270, 4
        %v7272 = vadd.f32 %v7270, %v7271
        %v7273 = vrot.slane %v7272, 2
        %v7274 = vadd.f32 %v7272, %v7273
        %v7275 = vrot.slane %v7274, 1
        %v7276 = vadd.f32 %v7274, %v7275
        %v7277 = vadd.f32 %v7097, %v7276
        %v7278 = vld [vmem:[#allocation3 + $0x1cf] sm:$0xff]
        %v7279 = vld [vmem:[#allocation3 + $0x1d7] sm:$0xff]
        %v7280 = vld [vmem:[#allocation3 + $0x1df] sm:$0xff]
        %v7281 = vld [vmem:[#allocation3 + $0x1e7] sm:$0xff]
        %v7282 = vld [vmem:[#allocation3 + $0x1ef] sm:$0xff]
        %v7283 = vld [vmem:[#allocation3 + $0x1f7] sm:$0xff]
        %v7284 = vld [vmem:[#allocation3 + $0x1ff] sm:$0xff]
        %v7285 = vld [vmem:[#allocation3 + $0x207] sm:$0xff]
        %v7286 = vld [vmem:[#allocation4 + $0x1d0] sm:$0xff]
        %v7287 = vld [vmem:[#allocation4 + $0x1d8] sm:$0xff]
        %v7288 = vld [vmem:[#allocation4 + $0x1e0] sm:$0xff]
        %v7289 = vld [vmem:[#allocation4 + $0x1e8] sm:$0xff]
        %v7290 = vld [vmem:[#allocation4 + $0x1f0] sm:$0xff]
        %v7291 = vld [vmem:[#allocation4 + $0x1f8] sm:$0xff]
        %v7292 = vld [vmem:[#allocation4 + $0x200] sm:$0xff]
        %v7293 = vld [vmem:[#allocation4 + $0x208] sm:$0xff]
        %v7294 = vadd.f32 %v7278, %v7286
        %v7295 = vadd.f32 %v7279, %v7287
        %v7296 = vadd.f32 %v7280, %v7288
        %v7297 = vadd.f32 %v7281, %v7289
        %v7298 = vadd.f32 %v7282, %v7290
        %v7299 = vadd.f32 %v7283, %v7291
        %v7300 = vadd.f32 %v7284, %v7292
        %v7301 = vadd.f32 %v7285, %v7293
        %v7302 = vld [vmem:[#allocation5 + $0x1d1] sm:$0xff]
        %v7303 = vld [vmem:[#allocation5 + $0x1d9] sm:$0xff]
        %v7304 = vld [vmem:[#allocation5 + $0x1e1] sm:$0xff]
        %v7305 = vld [vmem:[#allocation5 + $0x1e9] sm:$0xff]
        %v7306 = vld [vmem:[#allocation5 + $0x1f1] sm:$0xff]
        %v7307 = vld [vmem:[#allocation5 + $0x1f9] sm:$0xff]
        %v7308 = vld [vmem:[#allocation5 + $0x201] sm:$0xff]
        %v7309 = vld [vmem:[#allocation5 + $0x209] sm:$0xff]
        %v7310 = vadd.f32 %v7294, %v7302
        %v7311 = vadd.f32 %v7295, %v7303
        %v7312 = vadd.f32 %v7296, %v7304
        %v7313 = vadd.f32 %v7297, %v7305
        %v7314 = vadd.f32 %v7298, %v7306
        %v7315 = vadd.f32 %v7299, %v7307
        %v7316 = vadd.f32 %v7300, %v7308
        %v7317 = vadd.f32 %v7301, %v7309
        %v7318 = vpack.c.bf16 %v7311, %v7310
        %v7319 = vpack.c.bf16 %v7313, %v7312
        %v7320 = vpack.c.bf16 %v7315, %v7314
        %v7321 = vpack.c.bf16 %v7317, %v7316
        %v7326 = vunpack.c.l.b16 %v7318
        %v7327 = vunpack.c.h.b16 %v7318
        %v7328 = vunpack.c.l.b16 %v7319
        %v7329 = vunpack.c.h.b16 %v7319
        %v7330 = vunpack.c.l.b16 %v7320
        %v7331 = vunpack.c.h.b16 %v7320
        %v7332 = vunpack.c.l.b16 %v7321
        %v7333 = vunpack.c.h.b16 %v7321
        %v7334 = vpack.c.b16 %v7326, %v7326
        %v7335 = vpack.c.b16 %v7327, %v7327
        %v7336 = vpack.c.b16 %v7328, %v7328
        %v7337 = vpack.c.b16 %v7329, %v7329
        %v7338 = vpack.c.b16 %v7330, %v7330
        %v7339 = vpack.c.b16 %v7331, %v7331
        %v7340 = vpack.c.b16 %v7332, %v7332
        %v7341 = vpack.c.b16 %v7333, %v7333
        %7350 = vst [vmem:[%s517 + $0xe0] sm:$0xf] %v7334
        %7351 = vst [vmem:[%s517 + $0xe4] sm:$0xf] %v7335
        %7352 = vst [vmem:[%s517 + $0xe8] sm:$0xf] %v7336
        %7353 = vst [vmem:[%s517 + $0xec] sm:$0xf] %v7337
        %7354 = vst [vmem:[%s517 + $0xf0] sm:$0xf] %v7338
        %7355 = vst [vmem:[%s517 + $0xf4] sm:$0xf] %v7339
        %7356 = vst [vmem:[%s517 + $0xf8] sm:$0xf] %v7340
        %7357 = vst [vmem:[%s517 + $0xfc] sm:$0xf] %v7341
        %v7358 = vunpack.c.l.bf16 %v7318
        %v7359 = vunpack.c.h.bf16 %v7318
        %v7360 = vunpack.c.l.bf16 %v7319
        %v7361 = vunpack.c.h.bf16 %v7319
        %v7362 = vunpack.c.l.bf16 %v7320
        %v7363 = vunpack.c.h.bf16 %v7320
        %v7364 = vunpack.c.l.bf16 %v7321
        %v7365 = vunpack.c.h.bf16 %v7321
        %v7366 = vld [vmem:[%s563 + $0x1c0] sm:$0xff]
        %v7367 = vld [vmem:[%s563 + $0x1c8] sm:$0xff]
        %v7368 = vld [vmem:[%s563 + $0x1d0] sm:$0xff]
        %v7369 = vld [vmem:[%s563 + $0x1d8] sm:$0xff]
        %v7370 = vld [vmem:[%s563 + $0x1e0] sm:$0xff]
        %v7371 = vld [vmem:[%s563 + $0x1e8] sm:$0xff]
        %v7372 = vld [vmem:[%s563 + $0x1f0] sm:$0xff]
        %v7373 = vld [vmem:[%s563 + $0x1f8] sm:$0xff]
        %7375 = vset.pattern.permute.xlu0 0
        %7376 = vperm.xlu0 %7375, %v7366
        %v7377 = vpop.permute.xlu0 %7376
        %7380 = vset.pattern.permute.xlu0 0
        %7381 = vperm.xlu0 %7380, %v7367
        %v7382 = vpop.permute.xlu0 %7381
        %7385 = vset.pattern.permute.xlu0 0
        %7386 = vperm.xlu0 %7385, %v7368
        %v7387 = vpop.permute.xlu0 %7386
        %7390 = vset.pattern.permute.xlu0 0
        %7391 = vperm.xlu0 %7390, %v7369
        %v7392 = vpop.permute.xlu0 %7391
        %7395 = vset.pattern.permute.xlu0 0
        %7396 = vperm.xlu0 %7395, %v7370
        %v7397 = vpop.permute.xlu0 %7396
        %7400 = vset.pattern.permute.xlu0 0
        %7401 = vperm.xlu0 %7400, %v7371
        %v7402 = vpop.permute.xlu0 %7401
        %7405 = vset.pattern.permute.xlu0 0
        %7406 = vperm.xlu0 %7405, %v7372
        %v7407 = vpop.permute.xlu0 %7406
        %7410 = vset.pattern.permute.xlu0 0
        %7411 = vperm.xlu0 %7410, %v7373
        %v7412 = vpop.permute.xlu0 %7411
        %v7414 = vmul.f32 %v7358, %v7377
        %v7415 = vmul.f32 %v7359, %v7382
        %v7416 = vmul.f32 %v7360, %v7387
        %v7417 = vmul.f32 %v7361, %v7392
        %v7418 = vmul.f32 %v7362, %v7397
        %v7419 = vmul.f32 %v7363, %v7402
        %v7420 = vmul.f32 %v7364, %v7407
        %v7421 = vmul.f32 %v7365, %v7412
        %v7422 = vadd.f32 %v7414, %v7415
        %v7423 = vadd.f32 %v7422, %v7416
        %v7424 = vadd.f32 %v7423, %v7417
        %v7425 = vadd.f32 %v7424, %v7418
        %v7426 = vadd.f32 %v7425, %v7419
        %v7427 = vadd.f32 %v7426, %v7420
        %v7428 = vadd.f32 %v7427, %v7421
        %v7429 = vrot.slane %v7428, 4
        %v7430 = vadd.f32 %v7428, %v7429
        %v7431 = vrot.slane %v7430, 2
        %v7432 = vadd.f32 %v7430, %v7431
        %v7433 = vrot.slane %v7432, 1
        %v7434 = vadd.f32 %v7432, %v7433
        %v7435 = vadd.f32 %v7255, %v7434
        %v7436 = vmul.f32 %v7414, %v7414
        %v7437 = vmul.f32 %v7415, %v7415
        %v7438 = vmul.f32 %v7416, %v7416
        %v7439 = vmul.f32 %v7417, %v7417
        %v7440 = vmul.f32 %v7418, %v7418
        %v7441 = vmul.f32 %v7419, %v7419
        %v7442 = vmul.f32 %v7420, %v7420
        %v7443 = vmul.f32 %v7421, %v7421
        %v7444 = vadd.f32 %v7436, %v7437
        %v7445 = vadd.f32 %v7444, %v7438
        %v7446 = vadd.f32 %v7445, %v7439
        %v7447 = vadd.f32 %v7446, %v7440
        %v7448 = vadd.f32 %v7447, %v7441
        %v7449 = vadd.f32 %v7448, %v7442
        %v7450 = vadd.f32 %v7449, %v7443
        %v7451 = vrot.slane %v7450, 4
        %v7452 = vadd.f32 %v7450, %v7451
        %v7453 = vrot.slane %v7452, 2
        %v7454 = vadd.f32 %v7452, %v7453
        %v7455 = vrot.slane %v7454, 1
        %v7456 = vadd.f32 %v7454, %v7455
        %v7457 = vadd.f32 %v7277, %v7456
        %7458 = vst [vmem:[%s524] sm:$0x1] %v7435
        %7459 = vst [vmem:[%s524 + $0x1] sm:$0x1] %v7457
        %s7460 = sand.u32 %s287, 1
        %s7461 = scalar_lea.sflag [#allocation7], %s7460
        %s7462 = sand.u32 %s287, 1
        %s7463 = smul.addr %s7462, 256
        %s7464 = scalar_lea.vmem [#allocation6], %s7463
        %s7465 = sand.u32 %s313, 1
        %s7466 = scalar_lea.sflag [#allocation9], %s7465
        %s7467 = sand.u32 %s313, 1
        %s7468 = smul.addr %s7467, 2
        %s7469 = scalar_lea.vmem [#allocation8], %s7468
        // Predicated region
        $region57: #{tpu_custom_call.1} parent=55 // pred_check
          %p7470 = pneg %p297
        $region58: #{tpu_custom_call.1} parent=55 // pred_check_branch
          %7472 = sbr.rel (%p7470) target = $region60
        $region59: #{tpu_custom_call.1} parent=55 // pred_region
          %s7473 = smul.u32 64, %s28
          %s7475 = ssub.s32 4096, 4096
          %7476 = vsyncadd %s7461, %s7475
          %s7477 = smul.addr %s7473, 64
          %s7478 = scalar_lea.hbm %s9, %s7477
          %s7479 = sshll.u32 %s7464, 4
          %s7480 = int_to_ptr.vmem [resolvable:$true] %s7479
          %7485 = dma.vmem_to_hbm [thread:$0]  %s7480, 4096, %s7478, %s7461, 64, 64, 4
        $region60: #{tpu_custom_call.1} parent=55 // pred_fallthru
          _
        // Predicated region
        $region61: #{tpu_custom_call.1} parent=55 // pred_check
          %p7486 = pneg %p323
        $region62: #{tpu_custom_call.1} parent=55 // pred_check_branch
          %7488 = sbr.rel (%p7486) target = $region64
        $region63: #{tpu_custom_call.1} parent=55 // pred_region
          %s7490 = ssub.s32 32, 32
          %7491 = vsyncadd %s7466, %s7490
          %s7492 = smul.addr %s28, 32
          %s7493 = scalar_lea.hbm %s10, %s7492
          %s7495 = sshll.u32 %s7469, 4
          %s7496 = int_to_ptr.vmem [resolvable:$true] %s7495
          %7498 = dma.vmem_to_hbm [thread:$0]  %s7496, 32, %s7493, %s7466
        $region64: #{tpu_custom_call.1} parent=55 // pred_fallthru
          _
      $region56: #{tpu_custom_call.1} parent=5 // pred_fallthru
        _
      %p7499 = scmp.le.s32.totalorder 2, %s23
      // Predicated region
      $region65: #{tpu_custom_call.1} parent=5 // pred_check
        %p7500 = pneg %p7499
      $region66: #{tpu_custom_call.1} parent=5 // pred_check_branch
        %7502 = sbr.rel (%p7500) target = $region68
      $region67: #{tpu_custom_call.1} parent=5 // pred_region
        %s7503 = ssub.s32 %s23, 2
        // Predicated region
        $region69: #{tpu_custom_call.1} parent=67 // pred_check
          %p7504 = pneg %p303
        $region70: #{tpu_custom_call.1} parent=67 // pred_check_branch
          %7506 = sbr.rel (%p7504) target = $region72
        $region71: #{tpu_custom_call.1} parent=67 // pred_region
          %s7507 = sand.u32 %s288, 1
          %s7508 = scalar_lea.sflag [#allocation7], %s7507
          %s7509 = sand.u32 %s288, 1
          %s7510 = smul.addr %s7509, 256
          %s7511 = scalar_lea.vmem [#allocation6], %s7510
          %7512 = dma.done %s7508, 4096
        $region72: #{tpu_custom_call.1} parent=67 // pred_fallthru
          _
        // Predicated region
        $region73: #{tpu_custom_call.1} parent=67 // pred_check
          %p7513 = pneg %p329
        $region74: #{tpu_custom_call.1} parent=67 // pred_check_branch
          %7515 = sbr.rel (%p7513) target = $region76
        $region75: #{tpu_custom_call.1} parent=67 // pred_region
          %s7516 = sand.u32 %s314, 1
          %s7517 = scalar_lea.sflag [#allocation9], %s7516
          %s7518 = sand.u32 %s314, 1
          %s7519 = smul.addr %s7518, 2
          %s7520 = scalar_lea.vmem [#allocation8], %s7519
          %7521 = dma.done %s7517, 32
        $region76: #{tpu_custom_call.1} parent=67 // pred_fallthru
          _
      $region68: #{tpu_custom_call.1} parent=5 // pred_fallthru
        _
    $region6: #{tpu_custom_call.1} parent=1 // loop_footer
      %s27 = sadd.s32 1, %s23
    $region7: #{tpu_custom_call.1} parent=1 // loop_footer_branch
      %22 = sbr.rel target = $region3
    $region8: #{tpu_custom_call.1} parent=1 // loop_exit
      _
    %7522 = vsyncpa [#allocation7], 1
    %s7523 = scalar_lea.sflag [#allocation7], 1
    %7524 = vsyncpa %s7523, 1
    %7525 = vsyncpa [#allocation9], 1
    %s7526 = scalar_lea.sflag [#allocation9], 1
    %7527 = vsyncpa %s7526, 1

</llo_original>
